<compile_context>
chip_gen: v6e
topology: v6e:2x2x1
jax: 0.10.0
libtpu: 0.0.40
codegen_flags: <defaults>
</compile_context>

<pallas_src>
import jax
import jax.numpy as jnp
import numpy as np
from jax.experimental import pallas as pl
from jax.experimental.pallas import tpu as pltpu

NEG_SLOPE = 0.01   # nn.LeakyReLU default negative_slope
BN_EPS = 1e-5      # nn.BatchNorm2d default eps

# TODO(synk): the nn.Upsample(bilinear) / asymmetric-kernel branch is not implemented --
#             with kernel_asym_dim=None the PyTorch module disables it.
# TODO(synk): BatchNorm uses train-mode batch statistics; the running-stat update
#             (a training-time side effect) is not modeled.


# ---------------------------------------------------------------------------
# Pass 1: all four branches fused into one chained MXU accumulation per image.
# ---------------------------------------------------------------------------
def _make_conv_kernel(H, W, Cin, Cout):
    HW = H * W
    C4 = 4 * Cout

    def kernel(xc_ref, xm_ref, wt_ref, wmp_ref, bias_ref, y_ref, stats_ref):
        # xc_ref   : (H+4, W+4, Cin) f32, zero padded (pad=2)  -- conv branches
        # xm_ref   : (H+2, W+2, Cin) f32, -inf padded (pad=1)  -- maxpool branch
        # wt_ref   : (25, Cin, 4*Cout) bf16 composed tap weights
        # wmp_ref  : (Cin, 4*Cout) bf16 maxpool-reduce weight (zeros outside its slot)
        # bias_ref : (HW, 4*Cout) f32 per-pixel bias planes (border-corrected)
        # y_ref    : (HW, 4*Cout) f32 pre-BN concatenated output
        # stats_ref: (2, 4*Cout) f32 per-image [channel sum, channel sum of squares]

        acc = jnp.zeros((HW, C4), jnp.float32)

        # 25 taps, each one bf16 (HW, Cin) @ (Cin, 4*Cout) matmul, single chained
        # accumulator (MRB-friendly on v7x).
        for t in range(25):
            dy, dx = t // 5, t % 5
            patch = xc_ref[dy:dy + H, dx:dx + W, :].reshape(HW, Cin)
            acc = acc + jnp.dot(patch.astype(jnp.bfloat16), wt_ref[t],
                                preferred_element_type=jnp.float32)

        # branch 4: 3x3 / stride-1 maxpool, separable (horizontal max, then vertical).
        rmax = jnp.maximum(jnp.maximum(xm_ref[:, 0:W, :], xm_ref[:, 1:W + 1, :]),
                           xm_ref[:, 2:W + 2, :])                       # (H+2, W, Cin)
        xm = jnp.maximum(jnp.maximum(rmax[0:H], rmax[1:H + 1]),
                         rmax[2:H + 2])                                 # (H, W, Cin)
        acc = acc + jnp.dot(xm.reshape(HW, Cin).astype(jnp.bfloat16), wmp_ref[...],
                            preferred_element_type=jnp.float32)

        y = acc + bias_ref[...]
        y_ref[...] = y
        stats_ref[0:1, :] = jnp.sum(y, axis=0, keepdims=True)
        stats_ref[1:2, :] = jnp.sum(y * y, axis=0, keepdims=True)

    return kernel


# ---------------------------------------------------------------------------
# Pass 2: BatchNorm2d (batch statistics) + LeakyReLU, element-wise per image.
# ---------------------------------------------------------------------------
def _make_bn_kernel(N, HW):
    inv_count = 1.0 / float(N * HW)

    def kernel(y_ref, stats_ref, gamma_ref, beta_ref, o_ref):
        # y_ref: (HW, 4*Cout) f32; stats_ref: (N, 2, 4*Cout) f32 (all images);
        # gamma/beta: (1, 4*Cout) f32; o_ref: (HW, 4*Cout) f32.
        tot = stats_ref[0]                      # (2, 4*Cout)
        for i in range(1, N):
            tot = tot + stats_ref[i]
        mean = tot[0:1, :] * inv_count          # (1, 4*Cout)
        var = tot[1:2, :] * inv_count - mean * mean
        scale = gamma_ref[...] * jax.lax.rsqrt(var + BN_EPS)
        shift = beta_ref[...] - mean * scale
        yn = y_ref[...] * scale + shift
        o_ref[...] = jnp.where(yn >= 0, yn, NEG_SLOPE * yn)

    return kernel


def inception_block_forward(x_nchw, p):
    """x_nchw: (N, Cin, H, W) float32; returns (N, 4*Cout, H, W) float32."""
    N, Cin, H, W = x_nchw.shape
    Cout = p["conv1x1_w"].shape[0]
    C4 = 4 * Cout
    HW = H * W

    if p["bn_gamma"].shape[0] != C4:
        raise ValueError(
            "InceptionBlock reduce path uses BatchNorm2d(in_channels); it only matches "
            "the concat width when in_channels == 4*out_channels.")

    x_nhwc = jnp.transpose(x_nchw, (0, 2, 3, 1)).astype(jnp.float32)
    xpad_c = jnp.pad(x_nhwc, ((0, 0), (2, 2), (2, 2), (0, 0)))            # zero pad (convs)
    xpad_m = jnp.pad(x_nhwc, ((0, 0), (1, 1), (1, 1), (0, 0)),
                     constant_values=-jnp.inf)                            # -inf pad (maxpool)

    # --- compose reduce-1x1 weights into the 3x3/5x5 taps and stack all branches of
    #     the same spatial tap along the output dim: (25, Cin, 4*Cout). ---
    w1 = p["conv1x1_w"][:, :, 0, 0]      # (Cout, Cin)
    wr3 = p["reduce3_w"][:, :, 0, 0]     # (Cout, Cin)
    wr5 = p["reduce5_w"][:, :, 0, 0]
    wmp = p["mpred_w"][:, :, 0, 0]
    w3 = p["conv3x3_w"]                  # (Cout, Cout, 3, 3)
    w5 = p["conv5x5_w"]                  # (Cout, Cout, 5, 5)

    w3eff = jnp.einsum('ck,ocij->ijko', wr3, w3)   # (3, 3, Cin, Cout)
    w5eff = jnp.einsum('ck,ocij->ijko', wr5, w5)   # (5, 5, Cin, Cout)

    w_taps = jnp.zeros((5, 5, Cin, C4), jnp.float32)
    w_taps = w_taps.at[2, 2, :, 0:Cout].set(w1.T)                  # 1x1 branch (center tap)
    w_taps = w_taps.at[1:4, 1:4, :, Cout:2 * Cout].set(w3eff)      # 3x3 branch
    w_taps = w_taps.at[:, :, :, 2 * Cout:3 * Cout].set(w5eff)      # 5x5 branch
    w_taps = w_taps.reshape(25, Cin, C4).astype(jnp.bfloat16)

    wmp_pad = jnp.zeros((Cin, C4), jnp.float32)
    wmp_pad = wmp_pad.at[:, 3 * Cout:].set(wmp.T).astype(jnp.bfloat16)

    # --- per-pixel bias planes.  The composed-weight trick needs a border-corrected
    #     reduce-bias term because PyTorch zero-pads the *post-bias* reduced map. ---
    def reduce_bias_map(wk, br, pad):
        K = wk.shape[2]
        s = jnp.einsum('ocij,c->oij', wk, br)                       # (Cout, K, K)
        offs = jnp.arange(K) - pad
        inb_y = ((jnp.arange(H)[None, :] + offs[:, None] >= 0)
                 & (jnp.arange(H)[None, :] + offs[:, None] < H)).astype(jnp.float32)
        inb_x = ((jnp.arange(W)[None, :] + offs[:, None] >= 0)
                 & (jnp.arange(W)[None, :] + offs[:, None] < W)).astype(jnp.float32)
        return jnp.einsum('oij,ih,jw->hwo', s, inb_y, inb_x)        # (H, W, Cout)

    bias_planes = jnp.concatenate([
        jnp.broadcast_to(p["conv1x1_b"], (H, W, Cout)),
        reduce_bias_map(w3, p["reduce3_b"], 1) + p["conv3x3_b"],
        reduce_bias_map(w5, p["reduce5_b"], 2) + p["conv5x5_b"],
        jnp.broadcast_to(p["mpred_b"], (H, W, Cout)),
    ], axis=-1).reshape(HW, C4).astype(jnp.float32)

    # --- pass 1: fused conv/maxpool branches, grid over the batch (parallel). ---
    conv_out, stats = pl.pallas_call(
        _make_conv_kernel(H, W, Cin, Cout),
        out_shape=(jax.ShapeDtypeStruct((N, HW, C4), jnp.float32),
                   jax.ShapeDtypeStruct((N, 2, C4), jnp.float32)),
        grid=(N,),
        in_specs=[
            pl.BlockSpec((None, H + 4, W + 4, Cin), lambda n: (n, 0, 0, 0)),
            pl.BlockSpec((None, H + 2, W + 2, Cin), lambda n: (n, 0, 0, 0)),
            pl.BlockSpec((25, Cin, C4), lambda n: (0, 0, 0)),
            pl.BlockSpec((Cin, C4), lambda n: (0, 0)),
            pl.BlockSpec((HW, C4), lambda n: (0, 0)),
        ],
        out_specs=(
            pl.BlockSpec((None, HW, C4), lambda n: (n, 0, 0)),
            pl.BlockSpec((None, 2, C4), lambda n: (n, 0, 0)),
        ),
        compiler_params=pltpu.CompilerParams(dimension_semantics=("parallel",)),
    )(xpad_c, xpad_m, w_taps, wmp_pad, bias_planes)

    # --- pass 2: BatchNorm (batch stats from pass-1 partial sums) + LeakyReLU. ---
    out = pl.pallas_call(
        _make_bn_kernel(N, HW),
        out_shape=jax.ShapeDtypeStruct((N, HW, C4), jnp.float32),
        grid=(N,),
        in_specs=[
            pl.BlockSpec((None, HW, C4), lambda n: (n, 0, 0)),
            pl.BlockSpec((N, 2, C4), lambda n: (0, 0, 0)),
            pl.BlockSpec((1, C4), lambda n: (0, 0)),
            pl.BlockSpec((1, C4), lambda n: (0, 0)),
        ],
        out_specs=pl.BlockSpec((None, HW, C4), lambda n: (n, 0, 0)),
        compiler_params=pltpu.CompilerParams(dimension_semantics=("parallel",)),
    )(conv_out, stats, p["bn_gamma"].reshape(1, C4), p["bn_beta"].reshape(1, C4))

    out_nhwc = out.reshape(N, H, W, C4)
    return jnp.transpose(out_nhwc, (0, 3, 1, 2))   # back to NCHW


def init_params(key, in_channels, out_channels):
    ks = jax.random.split(key, 14)

    def conv_w(k, o, i, kh, kw):
        return jax.random.normal(k, (o, i, kh, kw), jnp.float32) / np.sqrt(i * kh * kw)

    def conv_b(k, o):
        return 0.1 * jax.random.normal(k, (o,), jnp.float32)

    p = {
        "conv1x1_w": conv_w(ks[0], out_channels, in_channels, 1, 1),
        "conv1x1_b": conv_b(ks[1], out_channels),
        "reduce3_w": conv_w(ks[2], out_channels, in_channels, 1, 1),
        "reduce3_b": conv_b(ks[3], out_channels),
        "reduce5_w": conv_w(ks[4], out_channels, in_channels, 1, 1),
        "reduce5_b": conv_b(ks[5], out_channels),
        "mpred_w":   conv_w(ks[6], out_channels, in_channels, 1, 1),
        "mpred_b":   conv_b(ks[7], out_channels),
        "conv3x3_w": conv_w(ks[8], out_channels, out_channels, 3, 3),
        "conv3x3_b": conv_b(ks[9], out_channels),
        "conv5x5_w": conv_w(ks[10], out_channels, out_channels, 5, 5),
        "conv5x5_b": conv_b(ks[11], out_channels),
        # BatchNorm2d(in_channels): in the reduce path of the original module this
        # only matches the concat width when in_channels == 4*out_channels.
        "bn_gamma": 1.0 + 0.1 * jax.random.normal(ks[12], (in_channels,), jnp.float32),
        "bn_beta":  0.1 * jax.random.normal(ks[13], (in_channels,), jnp.float32),
    }
    return p


def reference_forward(x, p):
    """Pure-JAX (XLA conv) reference mirroring the PyTorch forward (train-mode BN)."""
    def conv(x, w, b, pad):
        y = jax.lax.conv_general_dilated(
            x, w, window_strides=(1, 1), padding=((pad, pad), (pad, pad)),
            dimension_numbers=('NCHW', 'OIHW', 'NCHW'),
            precision=jax.lax.Precision.HIGHEST)
        return y + b[None, :, None, None]

    x1 = conv(x, p["conv1x1_w"], p["conv1x1_b"], 0)
    x2 = conv(conv(x, p["reduce3_w"], p["reduce3_b"], 0), p["conv3x3_w"], p["conv3x3_b"], 1)
    x3 = conv(conv(x, p["reduce5_w"], p["reduce5_b"], 0), p["conv5x5_w"], p["conv5x5_b"], 2)
    xm = jax.lax.reduce_window(x, -jnp.inf, jax.lax.max,
                               (1, 1, 3, 3), (1, 1, 1, 1),
                               ((0, 0), (0, 0), (1, 1), (1, 1)))
    x4 = conv(xm, p["mpred_w"], p["mpred_b"], 0)
    out = jnp.concatenate([x1, x2, x3, x4], axis=1)
    mean = out.mean(axis=(0, 2, 3), keepdims=True)
    var = ((out - mean) ** 2).mean(axis=(0, 2, 3), keepdims=True)
    out = (out - mean) / jnp.sqrt(var + BN_EPS)
    out = out * p["bn_gamma"][None, :, None, None] + p["bn_beta"][None, :, None, None]
    return jnp.where(out >= 0, out, NEG_SLOPE * out)


if __name__ == "__main__":
    key = jax.random.PRNGKey(0)
    k_x, k_p = jax.random.split(key)

    # reduce path active (Cin != Cout); BN(in_channels) matches 4*Cout since 16 == 4*4
    N, Cin, H, W = 2, 16, 16, 16
    Cout = 4

    x = jax.random.normal(k_x, (N, Cin, H, W), jnp.float32)
    params = init_params(k_p, Cin, Cout)

    out = inception_block_forward(x, params)
    out = jax.block_until_ready(out)

    ref = reference_forward(x, params)
    np.testing.assert_allclose(np.asarray(out), np.asarray(ref), atol=3e-2, rtol=3e-2)

    print("KERNEL_OK")
</pallas_src>

<mosaic_0001>
module attributes {stable_mosaic.version = 11 : i64} {
  func.func @kernel(%arg0: i32, %arg1: memref<1x20x20x16xf32, #tpu.memory_space<vmem>>, %arg2: memref<1x18x18x16xf32, #tpu.memory_space<vmem>>, %arg3: memref<25x16x16xbf16, #tpu.memory_space<vmem>>, %arg4: memref<16x16xbf16, #tpu.memory_space<vmem>>, %arg5: memref<256x16xf32, #tpu.memory_space<vmem>>, %arg6: memref<1x256x16xf32, #tpu.memory_space<vmem>>, %arg7: memref<1x2x16xf32, #tpu.memory_space<vmem>>) attributes {dimension_semantics = [#tpu.dimension_semantics<parallel>], iteration_bounds = array<i64: 2>, scalar_prefetch = 0 : i64, scratch_operands = 0 : i64, tpu.core_type = #tpu.core_type<tc>, window_params = [{transform_indices = @transform_0, window_bounds = array<i64: 1, 20, 20, 16>}, {transform_indices = @transform_1, window_bounds = array<i64: 1, 18, 18, 16>}, {pipeline_mode = #tpu.pipeline_mode<synchronous>, transform_indices = @transform_2, window_bounds = array<i64: 25, 16, 16>}, {pipeline_mode = #tpu.pipeline_mode<synchronous>, transform_indices = @transform_3, window_bounds = array<i64: 16, 16>}, {pipeline_mode = #tpu.pipeline_mode<synchronous>, transform_indices = @transform_4, window_bounds = array<i64: 256, 16>}, {transform_indices = @transform_5, window_bounds = array<i64: 1, 256, 16>}, {transform_indices = @transform_6, window_bounds = array<i64: 1, 2, 16>}]} {
    %cst = arith.constant 0.000000e+00 : f32
    %0 = vector.broadcast %cst : f32 to vector<256x16xf32>
    %c0 = arith.constant 0 : index
    %c0_0 = arith.constant 0 : index
    %c0_1 = arith.constant 0 : index
    %c0_2 = arith.constant 0 : index
    %1 = vector.load %arg1[%c0, %c0_0, %c0_1, %c0_2] : memref<1x20x20x16xf32, #tpu.memory_space<vmem>>, vector<1x16x16x16xf32>
    %2 = vector.shape_cast %1 : vector<1x16x16x16xf32> to vector<16x16x16xf32>
    %3 = vector.shape_cast %2 : vector<16x16x16xf32> to vector<256x16xf32>
    %4 = arith.truncf %3 : vector<256x16xf32> to vector<256x16xbf16>
    %c0_3 = arith.constant 0 : index
    %c0_4 = arith.constant 0 : index
    %c0_5 = arith.constant 0 : index
    %5 = vector.load %arg3[%c0_3, %c0_4, %c0_5] : memref<25x16x16xbf16, #tpu.memory_space<vmem>>, vector<1x16x16xbf16>
    %6 = vector.shape_cast %5 : vector<1x16x16xbf16> to vector<16x16xbf16>
    %cst_6 = arith.constant dense<0.000000e+00> : vector<256x16xf32>
    %7 = tpu.matmul %4, %6, %cst_6 {dimension_numbers = #tpu.dot_dimension_numbers<[1], [0], [0], [1], [0, 0, 1, 1], [], []>} : vector<256x16xbf16>, vector<16x16xbf16>, vector<256x16xf32> -> vector<256x16xf32>
    %8 = arith.addf %0, %7 : vector<256x16xf32>
    %c0_7 = arith.constant 0 : index
    %c0_8 = arith.constant 0 : index
    %c1 = arith.constant 1 : index
    %c0_9 = arith.constant 0 : index
    %9 = vector.load %arg1[%c0_7, %c0_8, %c1, %c0_9] : memref<1x20x20x16xf32, #tpu.memory_space<vmem>>, vector<1x16x16x16xf32>
    %10 = vector.shape_cast %9 : vector<1x16x16x16xf32> to vector<16x16x16xf32>
    %11 = vector.shape_cast %10 : vector<16x16x16xf32> to vector<256x16xf32>
    %12 = arith.truncf %11 : vector<256x16xf32> to vector<256x16xbf16>
    %c1_10 = arith.constant 1 : index
    %c0_11 = arith.constant 0 : index
    %c0_12 = arith.constant 0 : index
    %13 = vector.load %arg3[%c1_10, %c0_11, %c0_12] : memref<25x16x16xbf16, #tpu.memory_space<vmem>>, vector<1x16x16xbf16>
    %14 = vector.shape_cast %13 : vector<1x16x16xbf16> to vector<16x16xbf16>
    %cst_13 = arith.constant dense<0.000000e+00> : vector<256x16xf32>
    %15 = tpu.matmul %12, %14, %cst_13 {dimension_numbers = #tpu.dot_dimension_numbers<[1], [0], [0], [1], [0, 0, 1, 1], [], []>} : vector<256x16xbf16>, vector<16x16xbf16>, vector<256x16xf32> -> vector<256x16xf32>
    %16 = arith.addf %8, %15 : vector<256x16xf32>
    %c0_14 = arith.constant 0 : index
    %c0_15 = arith.constant 0 : index
    %c2 = arith.constant 2 : index
    %c0_16 = arith.constant 0 : index
    %17 = vector.load %arg1[%c0_14, %c0_15, %c2, %c0_16] : memref<1x20x20x16xf32, #tpu.memory_space<vmem>>, vector<1x16x16x16xf32>
    %18 = vector.shape_cast %17 : vector<1x16x16x16xf32> to vector<16x16x16xf32>
    %19 = vector.shape_cast %18 : vector<16x16x16xf32> to vector<256x16xf32>
    %20 = arith.truncf %19 : vector<256x16xf32> to vector<256x16xbf16>
    %c2_17 = arith.constant 2 : index
    %c0_18 = arith.constant 0 : index
    %c0_19 = arith.constant 0 : index
    %21 = vector.load %arg3[%c2_17, %c0_18, %c0_19] : memref<25x16x16xbf16, #tpu.memory_space<vmem>>, vector<1x16x16xbf16>
    %22 = vector.shape_cast %21 : vector<1x16x16xbf16> to vector<16x16xbf16>
    %cst_20 = arith.constant dense<0.000000e+00> : vector<256x16xf32>
    %23 = tpu.matmul %20, %22, %cst_20 {dimension_numbers = #tpu.dot_dimension_numbers<[1], [0], [0], [1], [0, 0, 1, 1], [], []>} : vector<256x16xbf16>, vector<16x16xbf16>, vector<256x16xf32> -> vector<256x16xf32>
    %24 = arith.addf %16, %23 : vector<256x16xf32>
    %c0_21 = arith.constant 0 : index
    %c0_22 = arith.constant 0 : index
    %c3 = arith.constant 3 : index
    %c0_23 = arith.constant 0 : index
    %25 = vector.load %arg1[%c0_21, %c0_22, %c3, %c0_23] : memref<1x20x20x16xf32, #tpu.memory_space<vmem>>, vector<1x16x16x16xf32>
    %26 = vector.shape_cast %25 : vector<1x16x16x16xf32> to vector<16x16x16xf32>
    %27 = vector.shape_cast %26 : vector<16x16x16xf32> to vector<256x16xf32>
    %28 = arith.truncf %27 : vector<256x16xf32> to vector<256x16xbf16>
    %c3_24 = arith.constant 3 : index
    %c0_25 = arith.constant 0 : index
    %c0_26 = arith.constant 0 : index
    %29 = vector.load %arg3[%c3_24, %c0_25, %c0_26] : memref<25x16x16xbf16, #tpu.memory_space<vmem>>, vector<1x16x16xbf16>
    %30 = vector.shape_cast %29 : vector<1x16x16xbf16> to vector<16x16xbf16>
    %cst_27 = arith.constant dense<0.000000e+00> : vector<256x16xf32>
    %31 = tpu.matmul %28, %30, %cst_27 {dimension_numbers = #tpu.dot_dimension_numbers<[1], [0], [0], [1], [0, 0, 1, 1], [], []>} : vector<256x16xbf16>, vector<16x16xbf16>, vector<256x16xf32> -> vector<256x16xf32>
    %32 = arith.addf %24, %31 : vector<256x16xf32>
    %c0_28 = arith.constant 0 : index
    %c0_29 = arith.constant 0 : index
    %c4 = arith.constant 4 : index
    %c0_30 = arith.constant 0 : index
    %33 = vector.load %arg1[%c0_28, %c0_29, %c4, %c0_30] : memref<1x20x20x16xf32, #tpu.memory_space<vmem>>, vector<1x16x16x16xf32>
    %34 = vector.shape_cast %33 : vector<1x16x16x16xf32> to vector<16x16x16xf32>
    %35 = vector.shape_cast %34 : vector<16x16x16xf32> to vector<256x16xf32>
    %36 = arith.truncf %35 : vector<256x16xf32> to vector<256x16xbf16>
    %c4_31 = arith.constant 4 : index
    %c0_32 = arith.constant 0 : index
    %c0_33 = arith.constant 0 : index
    %37 = vector.load %arg3[%c4_31, %c0_32, %c0_33] : memref<25x16x16xbf16, #tpu.memory_space<vmem>>, vector<1x16x16xbf16>
    %38 = vector.shape_cast %37 : vector<1x16x16xbf16> to vector<16x16xbf16>
    %cst_34 = arith.constant dense<0.000000e+00> : vector<256x16xf32>
    %39 = tpu.matmul %36, %38, %cst_34 {dimension_numbers = #tpu.dot_dimension_numbers<[1], [0], [0], [1], [0, 0, 1, 1], [], []>} : vector<256x16xbf16>, vector<16x16xbf16>, vector<256x16xf32> -> vector<256x16xf32>
    %40 = arith.addf %32, %39 : vector<256x16xf32>
    %c0_35 = arith.constant 0 : index
    %c1_36 = arith.constant 1 : index
    %c0_37 = arith.constant 0 : index
    %c0_38 = arith.constant 0 : index
    %41 = vector.load %arg1[%c0_35, %c1_36, %c0_37, %c0_38] : memref<1x20x20x16xf32, #tpu.memory_space<vmem>>, vector<1x16x16x16xf32>
    %42 = vector.shape_cast %41 : vector<1x16x16x16xf32> to vector<16x16x16xf32>
    %43 = vector.shape_cast %42 : vector<16x16x16xf32> to vector<256x16xf32>
    %44 = arith.truncf %43 : vector<256x16xf32> to vector<256x16xbf16>
    %c5 = arith.constant 5 : index
    %c0_39 = arith.constant 0 : index
    %c0_40 = arith.constant 0 : index
    %45 = vector.load %arg3[%c5, %c0_39, %c0_40] : memref<25x16x16xbf16, #tpu.memory_space<vmem>>, vector<1x16x16xbf16>
    %46 = vector.shape_cast %45 : vector<1x16x16xbf16> to vector<16x16xbf16>
    %cst_41 = arith.constant dense<0.000000e+00> : vector<256x16xf32>
    %47 = tpu.matmul %44, %46, %cst_41 {dimension_numbers = #tpu.dot_dimension_numbers<[1], [0], [0], [1], [0, 0, 1, 1], [], []>} : vector<256x16xbf16>, vector<16x16xbf16>, vector<256x16xf32> -> vector<256x16xf32>
    %48 = arith.addf %40, %47 : vector<256x16xf32>
    %c0_42 = arith.constant 0 : index
    %c1_43 = arith.constant 1 : index
    %c1_44 = arith.constant 1 : index
    %c0_45 = arith.constant 0 : index
    %49 = vector.load %arg1[%c0_42, %c1_43, %c1_44, %c0_45] : memref<1x20x20x16xf32, #tpu.memory_space<vmem>>, vector<1x16x16x16xf32>
    %50 = vector.shape_cast %49 : vector<1x16x16x16xf32> to vector<16x16x16xf32>
    %51 = vector.shape_cast %50 : vector<16x16x16xf32> to vector<256x16xf32>
    %52 = arith.truncf %51 : vector<256x16xf32> to vector<256x16xbf16>
    %c6 = arith.constant 6 : index
    %c0_46 = arith.constant 0 : index
    %c0_47 = arith.constant 0 : index
    %53 = vector.load %arg3[%c6, %c0_46, %c0_47] : memref<25x16x16xbf16, #tpu.memory_space<vmem>>, vector<1x16x16xbf16>
    %54 = vector.shape_cast %53 : vector<1x16x16xbf16> to vector<16x16xbf16>
    %cst_48 = arith.constant dense<0.000000e+00> : vector<256x16xf32>
    %55 = tpu.matmul %52, %54, %cst_48 {dimension_numbers = #tpu.dot_dimension_numbers<[1], [0], [0], [1], [0, 0, 1, 1], [], []>} : vector<256x16xbf16>, vector<16x16xbf16>, vector<256x16xf32> -> vector<256x16xf32>
    %56 = arith.addf %48, %55 : vector<256x16xf32>
    %c0_49 = arith.constant 0 : index
    %c1_50 = arith.constant 1 : index
    %c2_51 = arith.constant 2 : index
    %c0_52 = arith.constant 0 : index
    %57 = vector.load %arg1[%c0_49, %c1_50, %c2_51, %c0_52] : memref<1x20x20x16xf32, #tpu.memory_space<vmem>>, vector<1x16x16x16xf32>
    %58 = vector.shape_cast %57 : vector<1x16x16x16xf32> to vector<16x16x16xf32>
    %59 = vector.shape_cast %58 : vector<16x16x16xf32> to vector<256x16xf32>
    %60 = arith.truncf %59 : vector<256x16xf32> to vector<256x16xbf16>
    %c7 = arith.constant 7 : index
    %c0_53 = arith.constant 0 : index
    %c0_54 = arith.constant 0 : index
    %61 = vector.load %arg3[%c7, %c0_53, %c0_54] : memref<25x16x16xbf16, #tpu.memory_space<vmem>>, vector<1x16x16xbf16>
    %62 = vector.shape_cast %61 : vector<1x16x16xbf16> to vector<16x16xbf16>
    %cst_55 = arith.constant dense<0.000000e+00> : vector<256x16xf32>
    %63 = tpu.matmul %60, %62, %cst_55 {dimension_numbers = #tpu.dot_dimension_numbers<[1], [0], [0], [1], [0, 0, 1, 1], [], []>} : vector<256x16xbf16>, vector<16x16xbf16>, vector<256x16xf32> -> vector<256x16xf32>
    %64 = arith.addf %56, %63 : vector<256x16xf32>
    %c0_56 = arith.constant 0 : index
    %c1_57 = arith.constant 1 : index
    %c3_58 = arith.constant 3 : index
    %c0_59 = arith.constant 0 : index
    %65 = vector.load %arg1[%c0_56, %c1_57, %c3_58, %c0_59] : memref<1x20x20x16xf32, #tpu.memory_space<vmem>>, vector<1x16x16x16xf32>
    %66 = vector.shape_cast %65 : vector<1x16x16x16xf32> to vector<16x16x16xf32>
    %67 = vector.shape_cast %66 : vector<16x16x16xf32> to vector<256x16xf32>
    %68 = arith.truncf %67 : vector<256x16xf32> to vector<256x16xbf16>
    %c8 = arith.constant 8 : index
    %c0_60 = arith.constant 0 : index
    %c0_61 = arith.constant 0 : index
    %69 = vector.load %arg3[%c8, %c0_60, %c0_61] : memref<25x16x16xbf16, #tpu.memory_space<vmem>>, vector<1x16x16xbf16>
    %70 = vector.shape_cast %69 : vector<1x16x16xbf16> to vector<16x16xbf16>
    %cst_62 = arith.constant dense<0.000000e+00> : vector<256x16xf32>
    %71 = tpu.matmul %68, %70, %cst_62 {dimension_numbers = #tpu.dot_dimension_numbers<[1], [0], [0], [1], [0, 0, 1, 1], [], []>} : vector<256x16xbf16>, vector<16x16xbf16>, vector<256x16xf32> -> vector<256x16xf32>
    %72 = arith.addf %64, %71 : vector<256x16xf32>
    %c0_63 = arith.constant 0 : index
    %c1_64 = arith.constant 1 : index
    %c4_65 = arith.constant 4 : index
    %c0_66 = arith.constant 0 : index
    %73 = vector.load %arg1[%c0_63, %c1_64, %c4_65, %c0_66] : memref<1x20x20x16xf32, #tpu.memory_space<vmem>>, vector<1x16x16x16xf32>
    %74 = vector.shape_cast %73 : vector<1x16x16x16xf32> to vector<16x16x16xf32>
    %75 = vector.shape_cast %74 : vector<16x16x16xf32> to vector<256x16xf32>
    %76 = arith.truncf %75 : vector<256x16xf32> to vector<256x16xbf16>
    %c9 = arith.constant 9 : index
    %c0_67 = arith.constant 0 : index
    %c0_68 = arith.constant 0 : index
    %77 = vector.load %arg3[%c9, %c0_67, %c0_68] : memref<25x16x16xbf16, #tpu.memory_space<vmem>>, vector<1x16x16xbf16>
    %78 = vector.shape_cast %77 : vector<1x16x16xbf16> to vector<16x16xbf16>
    %cst_69 = arith.constant dense<0.000000e+00> : vector<256x16xf32>
    %79 = tpu.matmul %76, %78, %cst_69 {dimension_numbers = #tpu.dot_dimension_numbers<[1], [0], [0], [1], [0, 0, 1, 1], [], []>} : vector<256x16xbf16>, vector<16x16xbf16>, vector<256x16xf32> -> vector<256x16xf32>
    %80 = arith.addf %72, %79 : vector<256x16xf32>
    %c0_70 = arith.constant 0 : index
    %c2_71 = arith.constant 2 : index
    %c0_72 = arith.constant 0 : index
    %c0_73 = arith.constant 0 : index
    %81 = vector.load %arg1[%c0_70, %c2_71, %c0_72, %c0_73] : memref<1x20x20x16xf32, #tpu.memory_space<vmem>>, vector<1x16x16x16xf32>
    %82 = vector.shape_cast %81 : vector<1x16x16x16xf32> to vector<16x16x16xf32>
    %83 = vector.shape_cast %82 : vector<16x16x16xf32> to vector<256x16xf32>
    %84 = arith.truncf %83 : vector<256x16xf32> to vector<256x16xbf16>
    %c10 = arith.constant 10 : index
    %c0_74 = arith.constant 0 : index
    %c0_75 = arith.constant 0 : index
    %85 = vector.load %arg3[%c10, %c0_74, %c0_75] : memref<25x16x16xbf16, #tpu.memory_space<vmem>>, vector<1x16x16xbf16>
    %86 = vector.shape_cast %85 : vector<1x16x16xbf16> to vector<16x16xbf16>
    %cst_76 = arith.constant dense<0.000000e+00> : vector<256x16xf32>
    %87 = tpu.matmul %84, %86, %cst_76 {dimension_numbers = #tpu.dot_dimension_numbers<[1], [0], [0], [1], [0, 0, 1, 1], [], []>} : vector<256x16xbf16>, vector<16x16xbf16>, vector<256x16xf32> -> vector<256x16xf32>
    %88 = arith.addf %80, %87 : vector<256x16xf32>
    %c0_77 = arith.constant 0 : index
    %c2_78 = arith.constant 2 : index
    %c1_79 = arith.constant 1 : index
    %c0_80 = arith.constant 0 : index
    %89 = vector.load %arg1[%c0_77, %c2_78, %c1_79, %c0_80] : memref<1x20x20x16xf32, #tpu.memory_space<vmem>>, vector<1x16x16x16xf32>
    %90 = vector.shape_cast %89 : vector<1x16x16x16xf32> to vector<16x16x16xf32>
    %91 = vector.shape_cast %90 : vector<16x16x16xf32> to vector<256x16xf32>
    %92 = arith.truncf %91 : vector<256x16xf32> to vector<256x16xbf16>
    %c11 = arith.constant 11 : index
    %c0_81 = arith.constant 0 : index
    %c0_82 = arith.constant 0 : index
    %93 = vector.load %arg3[%c11, %c0_81, %c0_82] : memref<25x16x16xbf16, #tpu.memory_space<vmem>>, vector<1x16x16xbf16>
    %94 = vector.shape_cast %93 : vector<1x16x16xbf16> to vector<16x16xbf16>
    %cst_83 = arith.constant dense<0.000000e+00> : vector<256x16xf32>
    %95 = tpu.matmul %92, %94, %cst_83 {dimension_numbers = #tpu.dot_dimension_numbers<[1], [0], [0], [1], [0, 0, 1, 1], [], []>} : vector<256x16xbf16>, vector<16x16xbf16>, vector<256x16xf32> -> vector<256x16xf32>
    %96 = arith.addf %88, %95 : vector<256x16xf32>
    %c0_84 = arith.constant 0 : index
    %c2_85 = arith.constant 2 : index
    %c2_86 = arith.constant 2 : index
    %c0_87 = arith.constant 0 : index
    %97 = vector.load %arg1[%c0_84, %c2_85, %c2_86, %c0_87] : memref<1x20x20x16xf32, #tpu.memory_space<vmem>>, vector<1x16x16x16xf32>
    %98 = vector.shape_cast %97 : vector<1x16x16x16xf32> to vector<16x16x16xf32>
    %99 = vector.shape_cast %98 : vector<16x16x16xf32> to vector<256x16xf32>
    %100 = arith.truncf %99 : vector<256x16xf32> to vector<256x16xbf16>
    %c12 = arith.constant 12 : index
    %c0_88 = arith.constant 0 : index
    %c0_89 = arith.constant 0 : index
    %101 = vector.load %arg3[%c12, %c0_88, %c0_89] : memref<25x16x16xbf16, #tpu.memory_space<vmem>>, vector<1x16x16xbf16>
    %102 = vector.shape_cast %101 : vector<1x16x16xbf16> to vector<16x16xbf16>
    %cst_90 = arith.constant dense<0.000000e+00> : vector<256x16xf32>
    %103 = tpu.matmul %100, %102, %cst_90 {dimension_numbers = #tpu.dot_dimension_numbers<[1], [0], [0], [1], [0, 0, 1, 1], [], []>} : vector<256x16xbf16>, vector<16x16xbf16>, vector<256x16xf32> -> vector<256x16xf32>
    %104 = arith.addf %96, %103 : vector<256x16xf32>
    %c0_91 = arith.constant 0 : index
    %c2_92 = arith.constant 2 : index
    %c3_93 = arith.constant 3 : index
    %c0_94 = arith.constant 0 : index
    %105 = vector.load %arg1[%c0_91, %c2_92, %c3_93, %c0_94] : memref<1x20x20x16xf32, #tpu.memory_space<vmem>>, vector<1x16x16x16xf32>
    %106 = vector.shape_cast %105 : vector<1x16x16x16xf32> to vector<16x16x16xf32>
    %107 = vector.shape_cast %106 : vector<16x16x16xf32> to vector<256x16xf32>
    %108 = arith.truncf %107 : vector<256x16xf32> to vector<256x16xbf16>
    %c13 = arith.constant 13 : index
    %c0_95 = arith.constant 0 : index
    %c0_96 = arith.constant 0 : index
    %109 = vector.load %arg3[%c13, %c0_95, %c0_96] : memref<25x16x16xbf16, #tpu.memory_space<vmem>>, vector<1x16x16xbf16>
    %110 = vector.shape_cast %109 : vector<1x16x16xbf16> to vector<16x16xbf16>
    %cst_97 = arith.constant dense<0.000000e+00> : vector<256x16xf32>
    %111 = tpu.matmul %108, %110, %cst_97 {dimension_numbers = #tpu.dot_dimension_numbers<[1], [0], [0], [1], [0, 0, 1, 1], [], []>} : vector<256x16xbf16>, vector<16x16xbf16>, vector<256x16xf32> -> vector<256x16xf32>
    %112 = arith.addf %104, %111 : vector<256x16xf32>
    %c0_98 = arith.constant 0 : index
    %c2_99 = arith.constant 2 : index
    %c4_100 = arith.constant 4 : index
    %c0_101 = arith.constant 0 : index
    %113 = vector.load %arg1[%c0_98, %c2_99, %c4_100, %c0_101] : memref<1x20x20x16xf32, #tpu.memory_space<vmem>>, vector<1x16x16x16xf32>
    %114 = vector.shape_cast %113 : vector<1x16x16x16xf32> to vector<16x16x16xf32>
    %115 = vector.shape_cast %114 : vector<16x16x16xf32> to vector<256x16xf32>
    %116 = arith.truncf %115 : vector<256x16xf32> to vector<256x16xbf16>
    %c14 = arith.constant 14 : index
    %c0_102 = arith.constant 0 : index
    %c0_103 = arith.constant 0 : index
    %117 = vector.load %arg3[%c14, %c0_102, %c0_103] : memref<25x16x16xbf16, #tpu.memory_space<vmem>>, vector<1x16x16xbf16>
    %118 = vector.shape_cast %117 : vector<1x16x16xbf16> to vector<16x16xbf16>
    %cst_104 = arith.constant dense<0.000000e+00> : vector<256x16xf32>
    %119 = tpu.matmul %116, %118, %cst_104 {dimension_numbers = #tpu.dot_dimension_numbers<[1], [0], [0], [1], [0, 0, 1, 1], [], []>} : vector<256x16xbf16>, vector<16x16xbf16>, vector<256x16xf32> -> vector<256x16xf32>
    %120 = arith.addf %112, %119 : vector<256x16xf32>
    %c0_105 = arith.constant 0 : index
    %c3_106 = arith.constant 3 : index
    %c0_107 = arith.constant 0 : index
    %c0_108 = arith.constant 0 : index
    %121 = vector.load %arg1[%c0_105, %c3_106, %c0_107, %c0_108] : memref<1x20x20x16xf32, #tpu.memory_space<vmem>>, vector<1x16x16x16xf32>
    %122 = vector.shape_cast %121 : vector<1x16x16x16xf32> to vector<16x16x16xf32>
    %123 = vector.shape_cast %122 : vector<16x16x16xf32> to vector<256x16xf32>
    %124 = arith.truncf %123 : vector<256x16xf32> to vector<256x16xbf16>
    %c15 = arith.constant 15 : index
    %c0_109 = arith.constant 0 : index
    %c0_110 = arith.constant 0 : index
    %125 = vector.load %arg3[%c15, %c0_109, %c0_110] : memref<25x16x16xbf16, #tpu.memory_space<vmem>>, vector<1x16x16xbf16>
    %126 = vector.shape_cast %125 : vector<1x16x16xbf16> to vector<16x16xbf16>
    %cst_111 = arith.constant dense<0.000000e+00> : vector<256x16xf32>
    %127 = tpu.matmul %124, %126, %cst_111 {dimension_numbers = #tpu.dot_dimension_numbers<[1], [0], [0], [1], [0, 0, 1, 1], [], []>} : vector<256x16xbf16>, vector<16x16xbf16>, vector<256x16xf32> -> vector<256x16xf32>
    %128 = arith.addf %120, %127 : vector<256x16xf32>
    %c0_112 = arith.constant 0 : index
    %c3_113 = arith.constant 3 : index
    %c1_114 = arith.constant 1 : index
    %c0_115 = arith.constant 0 : index
    %129 = vector.load %arg1[%c0_112, %c3_113, %c1_114, %c0_115] : memref<1x20x20x16xf32, #tpu.memory_space<vmem>>, vector<1x16x16x16xf32>
    %130 = vector.shape_cast %129 : vector<1x16x16x16xf32> to vector<16x16x16xf32>
    %131 = vector.shape_cast %130 : vector<16x16x16xf32> to vector<256x16xf32>
    %132 = arith.truncf %131 : vector<256x16xf32> to vector<256x16xbf16>
    %c16 = arith.constant 16 : index
    %c0_116 = arith.constant 0 : index
    %c0_117 = arith.constant 0 : index
    %133 = vector.load %arg3[%c16, %c0_116, %c0_117] : memref<25x16x16xbf16, #tpu.memory_space<vmem>>, vector<1x16x16xbf16>
    %134 = vector.shape_cast %133 : vector<1x16x16xbf16> to vector<16x16xbf16>
    %cst_118 = arith.constant dense<0.000000e+00> : vector<256x16xf32>
    %135 = tpu.matmul %132, %134, %cst_118 {dimension_numbers = #tpu.dot_dimension_numbers<[1], [0], [0], [1], [0, 0, 1, 1], [], []>} : vector<256x16xbf16>, vector<16x16xbf16>, vector<256x16xf32> -> vector<256x16xf32>
    %136 = arith.addf %128, %135 : vector<256x16xf32>
    %c0_119 = arith.constant 0 : index
    %c3_120 = arith.constant 3 : index
    %c2_121 = arith.constant 2 : index
    %c0_122 = arith.constant 0 : index
    %137 = vector.load %arg1[%c0_119, %c3_120, %c2_121, %c0_122] : memref<1x20x20x16xf32, #tpu.memory_space<vmem>>, vector<1x16x16x16xf32>
    %138 = vector.shape_cast %137 : vector<1x16x16x16xf32> to vector<16x16x16xf32>
    %139 = vector.shape_cast %138 : vector<16x16x16xf32> to vector<256x16xf32>
    %140 = arith.truncf %139 : vector<256x16xf32> to vector<256x16xbf16>
    %c17 = arith.constant 17 : index
    %c0_123 = arith.constant 0 : index
    %c0_124 = arith.constant 0 : index
    %141 = vector.load %arg3[%c17, %c0_123, %c0_124] : memref<25x16x16xbf16, #tpu.memory_space<vmem>>, vector<1x16x16xbf16>
    %142 = vector.shape_cast %141 : vector<1x16x16xbf16> to vector<16x16xbf16>
    %cst_125 = arith.constant dense<0.000000e+00> : vector<256x16xf32>
    %143 = tpu.matmul %140, %142, %cst_125 {dimension_numbers = #tpu.dot_dimension_numbers<[1], [0], [0], [1], [0, 0, 1, 1], [], []>} : vector<256x16xbf16>, vector<16x16xbf16>, vector<256x16xf32> -> vector<256x16xf32>
    %144 = arith.addf %136, %143 : vector<256x16xf32>
    %c0_126 = arith.constant 0 : index
    %c3_127 = arith.constant 3 : index
    %c3_128 = arith.constant 3 : index
    %c0_129 = arith.constant 0 : index
    %145 = vector.load %arg1[%c0_126, %c3_127, %c3_128, %c0_129] : memref<1x20x20x16xf32, #tpu.memory_space<vmem>>, vector<1x16x16x16xf32>
    %146 = vector.shape_cast %145 : vector<1x16x16x16xf32> to vector<16x16x16xf32>
    %147 = vector.shape_cast %146 : vector<16x16x16xf32> to vector<256x16xf32>
    %148 = arith.truncf %147 : vector<256x16xf32> to vector<256x16xbf16>
    %c18 = arith.constant 18 : index
    %c0_130 = arith.constant 0 : index
    %c0_131 = arith.constant 0 : index
    %149 = vector.load %arg3[%c18, %c0_130, %c0_131] : memref<25x16x16xbf16, #tpu.memory_space<vmem>>, vector<1x16x16xbf16>
    %150 = vector.shape_cast %149 : vector<1x16x16xbf16> to vector<16x16xbf16>
    %cst_132 = arith.constant dense<0.000000e+00> : vector<256x16xf32>
    %151 = tpu.matmul %148, %150, %cst_132 {dimension_numbers = #tpu.dot_dimension_numbers<[1], [0], [0], [1], [0, 0, 1, 1], [], []>} : vector<256x16xbf16>, vector<16x16xbf16>, vector<256x16xf32> -> vector<256x16xf32>
    %152 = arith.addf %144, %151 : vector<256x16xf32>
    %c0_133 = arith.constant 0 : index
    %c3_134 = arith.constant 3 : index
    %c4_135 = arith.constant 4 : index
    %c0_136 = arith.constant 0 : index
    %153 = vector.load %arg1[%c0_133, %c3_134, %c4_135, %c0_136] : memref<1x20x20x16xf32, #tpu.memory_space<vmem>>, vector<1x16x16x16xf32>
    %154 = vector.shape_cast %153 : vector<1x16x16x16xf32> to vector<16x16x16xf32>
    %155 = vector.shape_cast %154 : vector<16x16x16xf32> to vector<256x16xf32>
    %156 = arith.truncf %155 : vector<256x16xf32> to vector<256x16xbf16>
    %c19 = arith.constant 19 : index
    %c0_137 = arith.constant 0 : index
    %c0_138 = arith.constant 0 : index
    %157 = vector.load %arg3[%c19, %c0_137, %c0_138] : memref<25x16x16xbf16, #tpu.memory_space<vmem>>, vector<1x16x16xbf16>
    %158 = vector.shape_cast %157 : vector<1x16x16xbf16> to vector<16x16xbf16>
    %cst_139 = arith.constant dense<0.000000e+00> : vector<256x16xf32>
    %159 = tpu.matmul %156, %158, %cst_139 {dimension_numbers = #tpu.dot_dimension_numbers<[1], [0], [0], [1], [0, 0, 1, 1], [], []>} : vector<256x16xbf16>, vector<16x16xbf16>, vector<256x16xf32> -> vector<256x16xf32>
    %160 = arith.addf %152, %159 : vector<256x16xf32>
    %c0_140 = arith.constant 0 : index
    %c4_141 = arith.constant 4 : index
    %c0_142 = arith.constant 0 : index
    %c0_143 = arith.constant 0 : index
    %161 = vector.load %arg1[%c0_140, %c4_141, %c0_142, %c0_143] : memref<1x20x20x16xf32, #tpu.memory_space<vmem>>, vector<1x16x16x16xf32>
    %162 = vector.shape_cast %161 : vector<1x16x16x16xf32> to vector<16x16x16xf32>
    %163 = vector.shape_cast %162 : vector<16x16x16xf32> to vector<256x16xf32>
    %164 = arith.truncf %163 : vector<256x16xf32> to vector<256x16xbf16>
    %c20 = arith.constant 20 : index
    %c0_144 = arith.constant 0 : index
    %c0_145 = arith.constant 0 : index
    %165 = vector.load %arg3[%c20, %c0_144, %c0_145] : memref<25x16x16xbf16, #tpu.memory_space<vmem>>, vector<1x16x16xbf16>
    %166 = vector.shape_cast %165 : vector<1x16x16xbf16> to vector<16x16xbf16>
    %cst_146 = arith.constant dense<0.000000e+00> : vector<256x16xf32>
    %167 = tpu.matmul %164, %166, %cst_146 {dimension_numbers = #tpu.dot_dimension_numbers<[1], [0], [0], [1], [0, 0, 1, 1], [], []>} : vector<256x16xbf16>, vector<16x16xbf16>, vector<256x16xf32> -> vector<256x16xf32>
    %168 = arith.addf %160, %167 : vector<256x16xf32>
    %c0_147 = arith.constant 0 : index
    %c4_148 = arith.constant 4 : index
    %c1_149 = arith.constant 1 : index
    %c0_150 = arith.constant 0 : index
    %169 = vector.load %arg1[%c0_147, %c4_148, %c1_149, %c0_150] : memref<1x20x20x16xf32, #tpu.memory_space<vmem>>, vector<1x16x16x16xf32>
    %170 = vector.shape_cast %169 : vector<1x16x16x16xf32> to vector<16x16x16xf32>
    %171 = vector.shape_cast %170 : vector<16x16x16xf32> to vector<256x16xf32>
    %172 = arith.truncf %171 : vector<256x16xf32> to vector<256x16xbf16>
    %c21 = arith.constant 21 : index
    %c0_151 = arith.constant 0 : index
    %c0_152 = arith.constant 0 : index
    %173 = vector.load %arg3[%c21, %c0_151, %c0_152] : memref<25x16x16xbf16, #tpu.memory_space<vmem>>, vector<1x16x16xbf16>
    %174 = vector.shape_cast %173 : vector<1x16x16xbf16> to vector<16x16xbf16>
    %cst_153 = arith.constant dense<0.000000e+00> : vector<256x16xf32>
    %175 = tpu.matmul %172, %174, %cst_153 {dimension_numbers = #tpu.dot_dimension_numbers<[1], [0], [0], [1], [0, 0, 1, 1], [], []>} : vector<256x16xbf16>, vector<16x16xbf16>, vector<256x16xf32> -> vector<256x16xf32>
    %176 = arith.addf %168, %175 : vector<256x16xf32>
    %c0_154 = arith.constant 0 : index
    %c4_155 = arith.constant 4 : index
    %c2_156 = arith.constant 2 : index
    %c0_157 = arith.constant 0 : index
    %177 = vector.load %arg1[%c0_154, %c4_155, %c2_156, %c0_157] : memref<1x20x20x16xf32, #tpu.memory_space<vmem>>, vector<1x16x16x16xf32>
    %178 = vector.shape_cast %177 : vector<1x16x16x16xf32> to vector<16x16x16xf32>
    %179 = vector.shape_cast %178 : vector<16x16x16xf32> to vector<256x16xf32>
    %180 = arith.truncf %179 : vector<256x16xf32> to vector<256x16xbf16>
    %c22 = arith.constant 22 : index
    %c0_158 = arith.constant 0 : index
    %c0_159 = arith.constant 0 : index
    %181 = vector.load %arg3[%c22, %c0_158, %c0_159] : memref<25x16x16xbf16, #tpu.memory_space<vmem>>, vector<1x16x16xbf16>
    %182 = vector.shape_cast %181 : vector<1x16x16xbf16> to vector<16x16xbf16>
    %cst_160 = arith.constant dense<0.000000e+00> : vector<256x16xf32>
    %183 = tpu.matmul %180, %182, %cst_160 {dimension_numbers = #tpu.dot_dimension_numbers<[1], [0], [0], [1], [0, 0, 1, 1], [], []>} : vector<256x16xbf16>, vector<16x16xbf16>, vector<256x16xf32> -> vector<256x16xf32>
    %184 = arith.addf %176, %183 : vector<256x16xf32>
    %c0_161 = arith.constant 0 : index
    %c4_162 = arith.constant 4 : index
    %c3_163 = arith.constant 3 : index
    %c0_164 = arith.constant 0 : index
    %185 = vector.load %arg1[%c0_161, %c4_162, %c3_163, %c0_164] : memref<1x20x20x16xf32, #tpu.memory_space<vmem>>, vector<1x16x16x16xf32>
    %186 = vector.shape_cast %185 : vector<1x16x16x16xf32> to vector<16x16x16xf32>
    %187 = vector.shape_cast %186 : vector<16x16x16xf32> to vector<256x16xf32>
    %188 = arith.truncf %187 : vector<256x16xf32> to vector<256x16xbf16>
    %c23 = arith.constant 23 : index
    %c0_165 = arith.constant 0 : index
    %c0_166 = arith.constant 0 : index
    %189 = vector.load %arg3[%c23, %c0_165, %c0_166] : memref<25x16x16xbf16, #tpu.memory_space<vmem>>, vector<1x16x16xbf16>
    %190 = vector.shape_cast %189 : vector<1x16x16xbf16> to vector<16x16xbf16>
    %cst_167 = arith.constant dense<0.000000e+00> : vector<256x16xf32>
    %191 = tpu.matmul %188, %190, %cst_167 {dimension_numbers = #tpu.dot_dimension_numbers<[1], [0], [0], [1], [0, 0, 1, 1], [], []>} : vector<256x16xbf16>, vector<16x16xbf16>, vector<256x16xf32> -> vector<256x16xf32>
    %192 = arith.addf %184, %191 : vector<256x16xf32>
    %c0_168 = arith.constant 0 : index
    %c4_169 = arith.constant 4 : index
    %c4_170 = arith.constant 4 : index
    %c0_171 = arith.constant 0 : index
    %193 = vector.load %arg1[%c0_168, %c4_169, %c4_170, %c0_171] : memref<1x20x20x16xf32, #tpu.memory_space<vmem>>, vector<1x16x16x16xf32>
    %194 = vector.shape_cast %193 : vector<1x16x16x16xf32> to vector<16x16x16xf32>
    %195 = vector.shape_cast %194 : vector<16x16x16xf32> to vector<256x16xf32>
    %196 = arith.truncf %195 : vector<256x16xf32> to vector<256x16xbf16>
    %c24 = arith.constant 24 : index
    %c0_172 = arith.constant 0 : index
    %c0_173 = arith.constant 0 : index
    %197 = vector.load %arg3[%c24, %c0_172, %c0_173] : memref<25x16x16xbf16, #tpu.memory_space<vmem>>, vector<1x16x16xbf16>
    %198 = vector.shape_cast %197 : vector<1x16x16xbf16> to vector<16x16xbf16>
    %cst_174 = arith.constant dense<0.000000e+00> : vector<256x16xf32>
    %199 = tpu.matmul %196, %198, %cst_174 {dimension_numbers = #tpu.dot_dimension_numbers<[1], [0], [0], [1], [0, 0, 1, 1], [], []>} : vector<256x16xbf16>, vector<16x16xbf16>, vector<256x16xf32> -> vector<256x16xf32>
    %200 = arith.addf %192, %199 : vector<256x16xf32>
    %c0_175 = arith.constant 0 : index
    %c0_176 = arith.constant 0 : index
    %c0_177 = arith.constant 0 : index
    %c0_178 = arith.constant 0 : index
    %201 = vector.load %arg2[%c0_175, %c0_176, %c0_177, %c0_178] : memref<1x18x18x16xf32, #tpu.memory_space<vmem>>, vector<1x18x16x16xf32>
    %202 = vector.shape_cast %201 : vector<1x18x16x16xf32> to vector<18x16x16xf32>
    %c0_179 = arith.constant 0 : index
    %c0_180 = arith.constant 0 : index
    %c1_181 = arith.constant 1 : index
    %c0_182 = arith.constant 0 : index
    %203 = vector.load %arg2[%c0_179, %c0_180, %c1_181, %c0_182] : memref<1x18x18x16xf32, #tpu.memory_space<vmem>>, vector<1x18x16x16xf32>
    %204 = vector.shape_cast %203 : vector<1x18x16x16xf32> to vector<18x16x16xf32>
    %205 = arith.maximumf %202, %204 : vector<18x16x16xf32>
    %c0_183 = arith.constant 0 : index
    %c0_184 = arith.constant 0 : index
    %c2_185 = arith.constant 2 : index
    %c0_186 = arith.constant 0 : index
    %206 = vector.load %arg2[%c0_183, %c0_184, %c2_185, %c0_186] : memref<1x18x18x16xf32, #tpu.memory_space<vmem>>, vector<1x18x16x16xf32>
    %207 = vector.shape_cast %206 : vector<1x18x16x16xf32> to vector<18x16x16xf32>
    %208 = arith.maximumf %205, %207 : vector<18x16x16xf32>
    %209 = vector.extract_strided_slice %208 {offsets = [0, 0, 0], sizes = [16, 16, 16], strides = [1, 1, 1]} : vector<18x16x16xf32> to vector<16x16x16xf32>
    %210 = vector.extract_strided_slice %208 {offsets = [1, 0, 0], sizes = [16, 16, 16], strides = [1, 1, 1]} : vector<18x16x16xf32> to vector<16x16x16xf32>
    %211 = arith.maximumf %209, %210 : vector<16x16x16xf32>
    %212 = vector.extract_strided_slice %208 {offsets = [2, 0, 0], sizes = [16, 16, 16], strides = [1, 1, 1]} : vector<18x16x16xf32> to vector<16x16x16xf32>
    %213 = arith.maximumf %211, %212 : vector<16x16x16xf32>
    %214 = vector.shape_cast %213 : vector<16x16x16xf32> to vector<256x16xf32>
    %215 = arith.truncf %214 : vector<256x16xf32> to vector<256x16xbf16>
    %c0_187 = arith.constant 0 : index
    %c0_188 = arith.constant 0 : index
    %216 = vector.load %arg4[%c0_187, %c0_188] : memref<16x16xbf16, #tpu.memory_space<vmem>>, vector<16x16xbf16>
    %cst_189 = arith.constant dense<0.000000e+00> : vector<256x16xf32>
    %217 = tpu.matmul %215, %216, %cst_189 {dimension_numbers = #tpu.dot_dimension_numbers<[1], [0], [0], [1], [0, 0, 1, 1], [], []>} : vector<256x16xbf16>, vector<16x16xbf16>, vector<256x16xf32> -> vector<256x16xf32>
    %218 = arith.addf %200, %217 : vector<256x16xf32>
    %c0_190 = arith.constant 0 : index
    %c0_191 = arith.constant 0 : index
    %219 = vector.load %arg5[%c0_190, %c0_191] : memref<256x16xf32, #tpu.memory_space<vmem>>, vector<256x16xf32>
    %220 = arith.addf %218, %219 : vector<256x16xf32>
    %c0_192 = arith.constant 0 : index
    %c0_193 = arith.constant 0 : index
    %c0_194 = arith.constant 0 : index
    %221 = vector.load %arg6[%c0_192, %c0_193, %c0_194] : memref<1x256x16xf32, #tpu.memory_space<vmem>>, vector<1x256x16xf32>
    %222 = vector.shape_cast %221 : vector<1x256x16xf32> to vector<256x16xf32>
    %223 = vector.shape_cast %220 : vector<256x16xf32> to vector<1x256x16xf32>
    tpu.vector_store %arg6[%c0_192, %c0_193, %c0_194], %223 {strides = array<i32>} : memref<1x256x16xf32, #tpu.memory_space<vmem>>, vector<1x256x16xf32>,
    %cst_195 = arith.constant dense<0.000000e+00> : vector<16xf32>
    %224 = vector.multi_reduction <add>, %220, %cst_195 [0] : vector<256x16xf32> to vector<16xf32>
    %225 = vector.shape_cast %224 : vector<16xf32> to vector<1x16xf32>
    %c0_196 = arith.constant 0 : index
    %c0_197 = arith.constant 0 : index
    %c0_198 = arith.constant 0 : index
    %226 = vector.load %arg7[%c0_196, %c0_197, %c0_198] : memref<1x2x16xf32, #tpu.memory_space<vmem>>, vector<1x1x16xf32>
    %227 = vector.shape_cast %226 : vector<1x1x16xf32> to vector<1x16xf32>
    %228 = vector.shape_cast %225 : vector<1x16xf32> to vector<1x1x16xf32>
    tpu.vector_store %arg7[%c0_196, %c0_197, %c0_198], %228 {strides = array<i32>} : memref<1x2x16xf32, #tpu.memory_space<vmem>>, vector<1x1x16xf32>,
    %229 = arith.mulf %220, %220 : vector<256x16xf32>
    %cst_199 = arith.constant dense<0.000000e+00> : vector<16xf32>
    %230 = vector.multi_reduction <add>, %229, %cst_199 [0] : vector<256x16xf32> to vector<16xf32>
    %231 = vector.shape_cast %230 : vector<16xf32> to vector<1x16xf32>
    %c0_200 = arith.constant 0 : index
    %c1_201 = arith.constant 1 : index
    %c0_202 = arith.constant 0 : index
    %232 = vector.load %arg7[%c0_200, %c1_201, %c0_202] : memref<1x2x16xf32, #tpu.memory_space<vmem>>, vector<1x1x16xf32>
    %233 = vector.shape_cast %232 : vector<1x1x16xf32> to vector<1x16xf32>
    %234 = vector.shape_cast %231 : vector<1x16xf32> to vector<1x1x16xf32>
    tpu.vector_store %arg7[%c0_200, %c1_201, %c0_202], %234 {strides = array<i32>} : memref<1x2x16xf32, #tpu.memory_space<vmem>>, vector<1x1x16xf32>,
    return
  }
  func.func @transform_0(%arg0: i32) -> (i32, i32, i32, i32) {
    %c0_i32 = arith.constant 0 : i32
    %c0_i32_0 = arith.constant 0 : i32
    %c0_i32_1 = arith.constant 0 : i32
    %c0_i32_2 = arith.constant 0 : i32
    return %arg0, %c0_i32, %c0_i32_0, %c0_i32_1 : i32, i32, i32, i32
  }
  func.func @transform_1(%arg0: i32) -> (i32, i32, i32, i32) {
    %c0_i32 = arith.constant 0 : i32
    %c0_i32_0 = arith.constant 0 : i32
    %c0_i32_1 = arith.constant 0 : i32
    %c0_i32_2 = arith.constant 0 : i32
    return %arg0, %c0_i32, %c0_i32_0, %c0_i32_1 : i32, i32, i32, i32
  }
  func.func @transform_2(%arg0: i32) -> (i32, i32, i32) {
    %c0_i32 = arith.constant 0 : i32
    %c0_i32_0 = arith.constant 0 : i32
    %c0_i32_1 = arith.constant 0 : i32
    %c0_i32_2 = arith.constant 0 : i32
    return %c0_i32, %c0_i32_0, %c0_i32_1 : i32, i32, i32
  }
  func.func @transform_3(%arg0: i32) -> (i32, i32) {
    %c0_i32 = arith.constant 0 : i32
    %c0_i32_0 = arith.constant 0 : i32
    %c0_i32_1 = arith.constant 0 : i32
    return %c0_i32, %c0_i32_0 : i32, i32
  }
  func.func @transform_4(%arg0: i32) -> (i32, i32) {
    %c0_i32 = arith.constant 0 : i32
    %c0_i32_0 = arith.constant 0 : i32
    %c0_i32_1 = arith.constant 0 : i32
    return %c0_i32, %c0_i32_0 : i32, i32
  }
  func.func @transform_5(%arg0: i32) -> (i32, i32, i32) {
    %c0_i32 = arith.constant 0 : i32
    %c0_i32_0 = arith.constant 0 : i32
    %c0_i32_1 = arith.constant 0 : i32
    return %arg0, %c0_i32, %c0_i32_0 : i32, i32, i32
  }
  func.func @transform_6(%arg0: i32) -> (i32, i32, i32) {
    %c0_i32 = arith.constant 0 : i32
    %c0_i32_0 = arith.constant 0 : i32
    %c0_i32_1 = arith.constant 0 : i32
    return %arg0, %c0_i32, %c0_i32_0 : i32, i32, i32
  }
}

</mosaic_0001>

<llo_original>
// kernel: tpu_custom_call.1
$region0: #{tpu_custom_call.1}
  #allocation0 [shape = 'u32[]', space=smem, size = 0x4, offset = 0x4, fixed_abs, tag = 'smem constant byte address 0x4 - core index']
  #allocation1 [shape = 'u32[144,128]{1,0:T(1,128)}', space=vmem, size = 0x12000, scoped, tag = 'internal scratch']
  %s0 = inlined_call_operand.vmem [shape: f32[2,20,20,16], index: 0, kind: input, shape index: {}]
  %s1 = inlined_call_operand.vmem [shape: f32[2,18,18,16], index: 1, kind: input, shape index: {}]
  %s2 = inlined_call_operand.vmem [shape: bf16[25,16,16], index: 2, kind: input, shape index: {}]
  %s3 = inlined_call_operand.vmem [shape: bf16[16,16], index: 3, kind: input, shape index: {}]
  %s4 = inlined_call_operand.vmem [shape: f32[256,16], index: 4, kind: input, shape index: {}]
  %s5 = inlined_call_operand.vmem [shape: f32[2,256,16], index: 5, kind: output, shape index: {0}]
  %s6 = inlined_call_operand.hbm [shape: f32[2,2,16], index: 6, kind: output, shape index: {1}]
  %7 = xla_tuple %s5, %s6
  %s8 = sld [smem:[#allocation0]]
  $region61: #{tpu_custom_call.1} parent=0
    _
  %s10 = ssub.s32 1, %s8
  %s11 = scalar_select 0, %s10, %s8
  $region1: #{tpu_custom_call.1} parent=0
    #allocation2 [shape = 'u8[2048]{0}', space=vmem, size = 0x800, scoped, tag = 'output window, operand 1']
    #allocation3 [shape = 's32[2]{0}', space=sflag, size = 0x8, scoped, tag = 'scoped memory for tpu_custom_call.1']
    %12 = vsyncpa [#allocation3], 0
    %s13 = scalar_lea.sflag [#allocation3], 1
    %14 = vsyncpa %s13, 0
    loop: start=0, step=1, limit=4
    $region2: #{tpu_custom_call.1} parent=1 // loop_pre_header
      _
    $region3: #{tpu_custom_call.1} parent=1 // loop_header
      %s16 = sphi 0, %s20
      %p17 = scmp.ge.s32.totalorder %s16, 4
      %s26 = sphi 0, %s28
      %s29 = sphi 0, %s26
      %s30 = sphi 0, %s29
      %s46 = sphi 0, %s30
      %s52 = sphi 0, %s54
      %s55 = sphi 0, %s52
      %s56 = sphi 0, %s55
      %s72 = sphi 0, %s56
      %s76 = sphi 0, %s76
      %s78 = sphi 0, %s76
      %s79 = sphi 0, %s78
      %s93 = sphi 0, %s79
      %s97 = sphi 0, %s97
      %s99 = sphi 0, %s97
      %s100 = sphi 0, %s99
      %s114 = sphi 0, %s100
      %s118 = sphi 0, %s118
      %s120 = sphi 0, %s118
      %s121 = sphi 0, %s120
      %s135 = sphi 0, %s121
      %s141 = sphi 0, %s143
      %s144 = sphi 0, %s141
      %s145 = sphi 0, %s144
      %s161 = sphi 0, %s145
      %s167 = sphi 0, %s169
      %s170 = sphi 0, %s167
      %s171 = sphi 0, %s170
      %s187 = sphi 0, %s171
    $region4: #{tpu_custom_call.1} parent=1 // loop_header_branch
      %19 = sbr.rel (%p17) target = $region8
    $region5: #{tpu_custom_call.1} parent=1 // loop_body
      %s21 = ssub.s32 %s16, 1
      %s22 = ssub.s32 %s16, 2
      %s23 = sadd.s32 %s16, 1
      %s24 = ssub.s32 %s16, %s23
      %p25 = scmp.eq.s32.totalorder %s24, 0
      %s27 = sadd.s32 %s26, 1
      %s28 = scalar_select %p25, %s26, %s27
      %p31 = pneg %p25
      %p32 = scmp.eq.s32.totalorder %s16, 1
      %p33 = por %p31, %p32
      %p34 = scmp.ne.s32.totalorder %s26, %s29
      %p35 = scmp.eq.s32.totalorder %s16, 0
      %p36 = por %p34, %p35
      %p37 = scmp.ne.s32.totalorder %s26, %s29
      %p38 = scmp.eq.s32.totalorder %s21, 1
      %p39 = por %p37, %p38
      %p40 = scmp.ne.s32.totalorder %s29, %s30
      %p41 = scmp.eq.s32.totalorder %s21, 0
      %p42 = por %p40, %p41
      %p43 = scmp.ne.s32.totalorder %s29, %s30
      %p44 = scmp.eq.s32.totalorder %s22, 1
      %p45 = por %p43, %p44
      %p47 = scmp.ne.s32.totalorder %s30, %s46
      %p48 = scmp.eq.s32.totalorder %s22, 0
      %p49 = por %p47, %p48
      %s50 = ssub.s32 %s16, %s23
      %p51 = scmp.eq.s32.totalorder %s50, 0
      %s53 = sadd.s32 %s52, 1
      %s54 = scalar_select %p51, %s52, %s53
      %p57 = pneg %p51
      %p58 = scmp.eq.s32.totalorder %s16, 1
      %p59 = por %p57, %p58
      %p60 = scmp.ne.s32.totalorder %s52, %s55
      %p61 = scmp.eq.s32.totalorder %s16, 0
      %p62 = por %p60, %p61
      %p63 = scmp.ne.s32.totalorder %s52, %s55
      %p64 = scmp.eq.s32.totalorder %s21, 1
      %p65 = por %p63, %p64
      %p66 = scmp.ne.s32.totalorder %s55, %s56
      %p67 = scmp.eq.s32.totalorder %s21, 0
      %p68 = por %p66, %p67
      %p69 = scmp.ne.s32.totalorder %s55, %s56
      %p70 = scmp.eq.s32.totalorder %s22, 1
      %p71 = por %p69, %p70
      %p73 = scmp.ne.s32.totalorder %s56, %s72
      %p74 = scmp.eq.s32.totalorder %s22, 0
      %p75 = por %p73, %p74
      %s77 = sadd.s32 %s76, 1
      %p80 = scmp.eq.s32.totalorder %s16, 1
      %p81 = scmp.ne.s32.totalorder %s76, %s78
      %p82 = scmp.eq.s32.totalorder %s16, 0
      %p83 = por %p81, %p82
      %p84 = scmp.ne.s32.totalorder %s76, %s78
      %p85 = scmp.eq.s32.totalorder %s21, 1
      %p86 = por %p84, %p85
      %p87 = scmp.ne.s32.totalorder %s78, %s79
      %p88 = scmp.eq.s32.totalorder %s21, 0
      %p89 = por %p87, %p88
      %p90 = scmp.ne.s32.totalorder %s78, %s79
      %p91 = scmp.eq.s32.totalorder %s22, 1
      %p92 = por %p90, %p91
      %p94 = scmp.ne.s32.totalorder %s79, %s93
      %p95 = scmp.eq.s32.totalorder %s22, 0
      %p96 = por %p94, %p95
      %s98 = sadd.s32 %s97, 1
      %p101 = scmp.eq.s32.totalorder %s16, 1
      %p102 = scmp.ne.s32.totalorder %s97, %s99
      %p103 = scmp.eq.s32.totalorder %s16, 0
      %p104 = por %p102, %p103
      %p105 = scmp.ne.s32.totalorder %s97, %s99
      %p106 = scmp.eq.s32.totalorder %s21, 1
      %p107 = por %p105, %p106
      %p108 = scmp.ne.s32.totalorder %s99, %s100
      %p109 = scmp.eq.s32.totalorder %s21, 0
      %p110 = por %p108, %p109
      %p111 = scmp.ne.s32.totalorder %s99, %s100
      %p112 = scmp.eq.s32.totalorder %s22, 1
      %p113 = por %p111, %p112
      %p115 = scmp.ne.s32.totalorder %s100, %s114
      %p116 = scmp.eq.s32.totalorder %s22, 0
      %p117 = por %p115, %p116
      %s119 = sadd.s32 %s118, 1
      %p122 = scmp.eq.s32.totalorder %s16, 1
      %p123 = scmp.ne.s32.totalorder %s118, %s120
      %p124 = scmp.eq.s32.totalorder %s16, 0
      %p125 = por %p123, %p124
      %p126 = scmp.ne.s32.totalorder %s118, %s120
      %p127 = scmp.eq.s32.totalorder %s21, 1
      %p128 = por %p126, %p127
      %p129 = scmp.ne.s32.totalorder %s120, %s121
      %p130 = scmp.eq.s32.totalorder %s21, 0
      %p131 = por %p129, %p130
      %p132 = scmp.ne.s32.totalorder %s120, %s121
      %p133 = scmp.eq.s32.totalorder %s22, 1
      %p134 = por %p132, %p133
      %p136 = scmp.ne.s32.totalorder %s121, %s135
      %p137 = scmp.eq.s32.totalorder %s22, 0
      %p138 = por %p136, %p137
      %s139 = ssub.s32 %s16, %s23
      %p140 = scmp.eq.s32.totalorder %s139, 0
      %s142 = sadd.s32 %s141, 1
      %s143 = scalar_select %p140, %s141, %s142
      %p146 = pneg %p140
      %p147 = scmp.eq.s32.totalorder %s16, 1
      %p148 = por %p146, %p147
      %p149 = scmp.ne.s32.totalorder %s141, %s144
      %p150 = scmp.eq.s32.totalorder %s16, 0
      %p151 = por %p149, %p150
      %p152 = scmp.ne.s32.totalorder %s141, %s144
      %p153 = scmp.eq.s32.totalorder %s21, 1
      %p154 = por %p152, %p153
      %p155 = scmp.ne.s32.totalorder %s144, %s145
      %p156 = scmp.eq.s32.totalorder %s21, 0
      %p157 = por %p155, %p156
      %p158 = scmp.ne.s32.totalorder %s144, %s145
      %p159 = scmp.eq.s32.totalorder %s22, 1
      %p160 = por %p158, %p159
      %p162 = scmp.ne.s32.totalorder %s145, %s161
      %p163 = scmp.eq.s32.totalorder %s22, 0
      %p164 = por %p162, %p163
      %s165 = ssub.s32 %s16, %s23
      %p166 = scmp.eq.s32.totalorder %s165, 0
      %s168 = sadd.s32 %s167, 1
      %s169 = scalar_select %p166, %s167, %s168
      %p172 = pneg %p166
      %p173 = scmp.eq.s32.totalorder %s16, 1
      %p174 = por %p172, %p173
      %p175 = scmp.ne.s32.totalorder %s167, %s170
      %p176 = scmp.eq.s32.totalorder %s16, 0
      %p177 = por %p175, %p176
      %p178 = scmp.ne.s32.totalorder %s167, %s170
      %p179 = scmp.eq.s32.totalorder %s21, 1
      %p180 = por %p178, %p179
      %p181 = scmp.ne.s32.totalorder %s170, %s171
      %p182 = scmp.eq.s32.totalorder %s21, 0
      %p183 = por %p181, %p182
      %p184 = scmp.ne.s32.totalorder %s170, %s171
      %p185 = scmp.eq.s32.totalorder %s22, 1
      %p186 = por %p184, %p185
      %p188 = scmp.ne.s32.totalorder %s171, %s187
      %p189 = scmp.eq.s32.totalorder %s22, 0
      %p190 = por %p188, %p189
      %p191 = scmp.le.s32.totalorder 1, %s16
      %p192 = scmp.lt.s32.totalorder %s16, 3
      %p193 = pnand %p191, %p192
      %p194 = pneg %p193
      // Predicated region
      $region9: #{tpu_custom_call.1} parent=5 // pred_check
        _
      $region10: #{tpu_custom_call.1} parent=5 // pred_check_branch
        %196 = sbr.rel (%p193) target = $region12
      $region11: #{tpu_custom_call.1} parent=5 // pred_region
        %s197 = ssub.s32 %s16, 1
        // Predicated region
        $region13: #{tpu_custom_call.1} parent=11 // pred_check
          %p198 = pneg %p89
        $region14: #{tpu_custom_call.1} parent=11 // pred_check_branch
          %200 = sbr.rel (%p198) target = $region16
        $region15: #{tpu_custom_call.1} parent=11 // pred_region
          _
        $region16: #{tpu_custom_call.1} parent=11 // pred_fallthru
          _
        // Predicated region
        $region17: #{tpu_custom_call.1} parent=11 // pred_check
          %p201 = pneg %p110
        $region18: #{tpu_custom_call.1} parent=11 // pred_check_branch
          %203 = sbr.rel (%p201) target = $region20
        $region19: #{tpu_custom_call.1} parent=11 // pred_region
          _
        $region20: #{tpu_custom_call.1} parent=11 // pred_fallthru
          _
        // Predicated region
        $region21: #{tpu_custom_call.1} parent=11 // pred_check
          %p204 = pneg %p131
        $region22: #{tpu_custom_call.1} parent=11 // pred_check_branch
          %206 = sbr.rel (%p204) target = $region24
        $region23: #{tpu_custom_call.1} parent=11 // pred_region
          _
        $region24: #{tpu_custom_call.1} parent=11 // pred_fallthru
          _
      $region12: #{tpu_custom_call.1} parent=5 // pred_fallthru
        _
      %p207 = scmp.lt.s32.totalorder %s16, 2
      // Predicated region
      $region25: #{tpu_custom_call.1} parent=5 // pred_check
        %p208 = pneg %p207
      $region26: #{tpu_custom_call.1} parent=5 // pred_check_branch
        %210 = sbr.rel (%p208) target = $region28
      $region27: #{tpu_custom_call.1} parent=5 // pred_region
        // Predicated region
        $region29: #{tpu_custom_call.1} parent=27 // pred_check
          %p211 = pneg %p36
        $region30: #{tpu_custom_call.1} parent=27 // pred_check_branch
          %213 = sbr.rel (%p211) target = $region32
        $region31: #{tpu_custom_call.1} parent=27 // pred_region
          %p214 = scmp.lt.s32.totalorder %s16, 1
          %s215 = scalar_select %p214, %s16, 1
          %s216 = smul.addr %s215, 60
          %s217 = smul.addr %s216, 8
          %s218 = scalar_lea.vmem %s0, %s217
        $region32: #{tpu_custom_call.1} parent=27 // pred_fallthru
          _
        // Predicated region
        $region33: #{tpu_custom_call.1} parent=27 // pred_check
          %p219 = pneg %p62
        $region34: #{tpu_custom_call.1} parent=27 // pred_check_branch
          %221 = sbr.rel (%p219) target = $region36
        $region35: #{tpu_custom_call.1} parent=27 // pred_region
          %p222 = scmp.lt.s32.totalorder %s16, 1
          %s223 = scalar_select %p222, %s16, 1
          %s224 = smul.addr %s223, 54
          %s225 = smul.addr %s224, 8
          %s226 = scalar_lea.vmem %s1, %s225
        $region36: #{tpu_custom_call.1} parent=27 // pred_fallthru
          _
      $region28: #{tpu_custom_call.1} parent=5 // pred_fallthru
        _
      %p227 = scmp.le.s32.totalorder 1, %s16
      %p228 = scmp.lt.s32.totalorder %s16, 3
      %p229 = pnand %p227, %p228
      %p230 = pneg %p229
      // Predicated region
      $region37: #{tpu_custom_call.1} parent=5 // pred_check
        _
      $region38: #{tpu_custom_call.1} parent=5 // pred_check_branch
        %232 = sbr.rel (%p229) target = $region40
      $region39: #{tpu_custom_call.1} parent=5 // pred_region
        %s233 = ssub.s32 %s16, 1
        %p234 = scmp.lt.s32.totalorder %s21, 1
        %s235 = scalar_select %p234, %s21, 1
        %s236 = smul.addr %s235, 60
        %s237 = smul.addr %s236, 8
        %s238 = scalar_lea.vmem %s0, %s237
        %p239 = pneg %p42
        %p240 = pneg %p39
        %p241 = scmp.lt.s32.totalorder %s21, 1
        %s242 = scalar_select %p241, %s21, 1
        %s243 = smul.addr %s242, 54
        %s244 = smul.addr %s243, 8
        %s245 = scalar_lea.vmem %s1, %s244
        %p246 = pneg %p68
        %p247 = pneg %p65
        %p248 = pneg %p89
        %p249 = pneg %p86
        %p250 = pneg %p110
        %p251 = pneg %p107
        %p252 = pneg %p131
        %p253 = pneg %p128
        %p254 = pneg %p157
        %p255 = pneg %p154
        %p256 = scmp.lt.s32.totalorder %s21, 1
        %s257 = scalar_select %p256, %s21, 1
        %s258 = smul.addr %s257, 32
        %s259 = smul.addr %s258, 8
        %s260 = scalar_lea.vmem %s5, %s259
        %p261 = pneg %p183
        %p262 = pneg %p180
        %s263 = sand.u32 %s170, 1
        %s264 = scalar_lea.sflag [#allocation3], %s263
        %s265 = sand.u32 %s170, 1
        %s266 = smul.addr %s265, 2
        %s267 = scalar_lea.vmem [#allocation2], %s266
        %p268 = scmp.lt.s32.totalorder %s21, 1
        %s269 = scalar_select %p268, %s21, 1
        %s270 = smul.addr %s269, 60
        %s271 = smul.addr %s270, 8
        %s272 = scalar_lea.vmem %s0, %s271
        %p273 = scmp.lt.s32.totalorder %s21, 1
        %s274 = scalar_select %p273, %s21, 1
        %s275 = smul.addr %s274, 54
        %s276 = smul.addr %s275, 8
        %s277 = scalar_lea.vmem %s1, %s276
        %p278 = scmp.lt.s32.totalorder %s21, 1
        %s279 = scalar_select %p278, %s21, 1
        %s280 = smul.addr %s279, 32
        %s281 = smul.addr %s280, 8
        %s282 = scalar_lea.vmem %s5, %s281
        %v284 = vld [vmem:[%s272] sm:$0xff]
        %v285 = vld [vmem:[%s272 + $0x8] sm:$0xff]
        %v286 = vld [vmem:[%s272 + $0x18] sm:$0xff]
        %v287 = vld [vmem:[%s272 + $0x20] sm:$0xff]
        %v288 = vld [vmem:[%s272 + $0x30] sm:$0xff]
        %v289 = vld [vmem:[%s272 + $0x38] sm:$0xff]
        %v290 = vld [vmem:[%s272 + $0x48] sm:$0xff]
        %v291 = vld [vmem:[%s272 + $0x50] sm:$0xff]
        %v292 = vld [vmem:[%s272 + $0x60] sm:$0xff]
        %v293 = vld [vmem:[%s272 + $0x68] sm:$0xff]
        %v294 = vld [vmem:[%s272 + $0x78] sm:$0xff]
        %v295 = vld [vmem:[%s272 + $0x80] sm:$0xff]
        %v296 = vld [vmem:[%s272 + $0x90] sm:$0xff]
        %v297 = vld [vmem:[%s272 + $0x98] sm:$0xff]
        %v298 = vld [vmem:[%s272 + $0xa8] sm:$0xff]
        %v299 = vld [vmem:[%s272 + $0xb0] sm:$0xff]
        %v300 = vld [vmem:[%s272 + $0xc0] sm:$0xff]
        %v301 = vld [vmem:[%s272 + $0xc8] sm:$0xff]
        %v302 = vld [vmem:[%s272 + $0xd8] sm:$0xff]
        %v303 = vld [vmem:[%s272 + $0xe0] sm:$0xff]
        %v304 = vld [vmem:[%s272 + $0xf0] sm:$0xff]
        %v305 = vld [vmem:[%s272 + $0xf8] sm:$0xff]
        %v306 = vld [vmem:[%s272 + $0x108] sm:$0xff]
        %v307 = vld [vmem:[%s272 + $0x110] sm:$0xff]
        %v308 = vld [vmem:[%s272 + $0x120] sm:$0xff]
        %v309 = vld [vmem:[%s272 + $0x128] sm:$0xff]
        %v310 = vld [vmem:[%s272 + $0x138] sm:$0xff]
        %v311 = vld [vmem:[%s272 + $0x140] sm:$0xff]
        %v312 = vld [vmem:[%s272 + $0x150] sm:$0xff]
        %v313 = vld [vmem:[%s272 + $0x158] sm:$0xff]
        %v314 = vld [vmem:[%s272 + $0x168] sm:$0xff]
        %v315 = vld [vmem:[%s272 + $0x170] sm:$0xff]
        %v316 = vpack.c.bf16 %v285, %v284
        %v317 = vpack.c.bf16 %v287, %v286
        %v318 = vpack.c.bf16 %v289, %v288
        %v319 = vpack.c.bf16 %v291, %v290
        %v320 = vpack.c.bf16 %v293, %v292
        %v321 = vpack.c.bf16 %v295, %v294
        %v322 = vpack.c.bf16 %v297, %v296
        %v323 = vpack.c.bf16 %v299, %v298
        %v324 = vpack.c.bf16 %v301, %v300
        %v325 = vpack.c.bf16 %v303, %v302
        %v326 = vpack.c.bf16 %v305, %v304
        %v327 = vpack.c.bf16 %v307, %v306
        %v328 = vpack.c.bf16 %v309, %v308
        %v329 = vpack.c.bf16 %v311, %v310
        %v330 = vpack.c.bf16 %v313, %v312
        %v331 = vpack.c.bf16 %v315, %v314
        %v332 = vld [vmem:[%s2] sm:$0xf]
        %v333 = vld [vmem:[%s2 + $0x4] sm:$0xf]
        %v334 = vld [vmem:[%s272 + $0x1] sm:$0xff]
        %v335 = vld [vmem:[%s272 + $0x9] sm:$0xff]
        %v336 = vld [vmem:[%s272 + $0x19] sm:$0xff]
        %v337 = vld [vmem:[%s272 + $0x21] sm:$0xff]
        %v338 = vld [vmem:[%s272 + $0x31] sm:$0xff]
        %v339 = vld [vmem:[%s272 + $0x39] sm:$0xff]
        %v340 = vld [vmem:[%s272 + $0x49] sm:$0xff]
        %v341 = vld [vmem:[%s272 + $0x51] sm:$0xff]
        %v342 = vld [vmem:[%s272 + $0x61] sm:$0xff]
        %v343 = vld [vmem:[%s272 + $0x69] sm:$0xff]
        %v344 = vld [vmem:[%s272 + $0x79] sm:$0xff]
        %v345 = vld [vmem:[%s272 + $0x81] sm:$0xff]
        %v346 = vld [vmem:[%s272 + $0x91] sm:$0xff]
        %v347 = vld [vmem:[%s272 + $0x99] sm:$0xff]
        %v348 = vld [vmem:[%s272 + $0xa9] sm:$0xff]
        %v349 = vld [vmem:[%s272 + $0xb1] sm:$0xff]
        %v350 = vld [vmem:[%s272 + $0xc1] sm:$0xff]
        %v351 = vld [vmem:[%s272 + $0xc9] sm:$0xff]
        %v352 = vld [vmem:[%s272 + $0xd9] sm:$0xff]
        %v353 = vld [vmem:[%s272 + $0xe1] sm:$0xff]
        %v354 = vld [vmem:[%s272 + $0xf1] sm:$0xff]
        %v355 = vld [vmem:[%s272 + $0xf9] sm:$0xff]
        %v356 = vld [vmem:[%s272 + $0x109] sm:$0xff]
        %v357 = vld [vmem:[%s272 + $0x111] sm:$0xff]
        %v358 = vld [vmem:[%s272 + $0x121] sm:$0xff]
        %v359 = vld [vmem:[%s272 + $0x129] sm:$0xff]
        %v360 = vld [vmem:[%s272 + $0x139] sm:$0xff]
        %v361 = vld [vmem:[%s272 + $0x141] sm:$0xff]
        %v362 = vld [vmem:[%s272 + $0x151] sm:$0xff]
        %v363 = vld [vmem:[%s272 + $0x159] sm:$0xff]
        %v364 = vld [vmem:[%s272 + $0x169] sm:$0xff]
        %v365 = vld [vmem:[%s272 + $0x171] sm:$0xff]
        %v366 = vpack.c.bf16 %v335, %v334
        %v367 = vpack.c.bf16 %v337, %v336
        %v368 = vpack.c.bf16 %v339, %v338
        %v369 = vpack.c.bf16 %v341, %v340
        %v370 = vpack.c.bf16 %v343, %v342
        %v371 = vpack.c.bf16 %v345, %v344
        %v372 = vpack.c.bf16 %v347, %v346
        %v373 = vpack.c.bf16 %v349, %v348
        %v374 = vpack.c.bf16 %v351, %v350
        %v375 = vpack.c.bf16 %v353, %v352
        %v376 = vpack.c.bf16 %v355, %v354
        %v377 = vpack.c.bf16 %v357, %v356
        %v378 = vpack.c.bf16 %v359, %v358
        %v379 = vpack.c.bf16 %v361, %v360
        %v380 = vpack.c.bf16 %v363, %v362
        %v381 = vpack.c.bf16 %v365, %v364
        %s382 = scalar_lea.vmem %s2, 8
        %v383 = vld [vmem:[%s382] sm:$0xf]
        %v384 = vld [vmem:[%s382 + $0x4] sm:$0xf]
        %v387 = vunpack.c.l.b16 %v383
        %v388 = vunpack.c.l.b16 %v384
        %v389 = vpack.c.b16 %v388, %v387
        %vm391 = vcmask 130048
        %v393 = vsel %vm391, %v366, 0
        %v396 = vsel %vm391, %v367, 0
        %v399 = vsel %vm391, %v368, 0
        %v402 = vsel %vm391, %v369, 0
        %v405 = vsel %vm391, %v370, 0
        %v408 = vsel %vm391, %v371, 0
        %v411 = vsel %vm391, %v372, 0
        %v414 = vsel %vm391, %v373, 0
        %v417 = vsel %vm391, %v374, 0
        %v420 = vsel %vm391, %v375, 0
        %v423 = vsel %vm391, %v376, 0
        %v426 = vsel %vm391, %v377, 0
        %v429 = vsel %vm391, %v378, 0
        %v432 = vsel %vm391, %v379, 0
        %v435 = vsel %vm391, %v380, 0
        %v438 = vsel %vm391, %v381, 0
        %440 = vmatprep.subr.bf16.mxu0 0
        %441 = vmatpush1.bf16.msra.mxu0 0
        %442 = vmatprep.subr.bf16.mxu0 0
        %443 = vmatpush1.bf16.msra.mxu0 0
        %444 = vmatprep.subr.bf16.mxu0 0
        %445 = vmatpush1.bf16.msra.mxu0 0
        %446 = vmatprep.subr.bf16.mxu0 0
        %447 = vmatpush1.bf16.msra.mxu0 0
        %448 = vmatprep.subr.bf16.mxu0 0
        %449 = vmatpush1.bf16.msra.mxu0 0
        %450 = vmatprep.subr.bf16.mxu0 0
        %451 = vmatpush1.bf16.msra.mxu0 0
        %452 = vmatprep.subr.bf16.mxu0 0
        %453 = vmatpush1.bf16.msra.mxu0 0
        %454 = vmatprep.subr.bf16.mxu0 0
        %455 = vmatpush1.bf16.msra.mxu0 %v389
        %456 = vmatprep.subr.bf16.mxu0 0
        %457 = vmatpush2.bf16.msra.mxu0 0
        %458 = vmatprep.subr.bf16.mxu0 0
        %459 = vmatpush2.bf16.msra.mxu0 0
        %460 = vmatprep.subr.bf16.mxu0 0
        %461 = vmatpush2.bf16.msra.mxu0 0
        %462 = vmatprep.subr.bf16.mxu0 0
        %463 = vmatpush2.bf16.msra.mxu0 0
        %464 = vmatprep.subr.bf16.mxu0 0
        %465 = vmatpush2.bf16.msra.mxu0 0
        %466 = vmatprep.subr.bf16.mxu0 0
        %467 = vmatpush2.bf16.msra.mxu0 0
        %468 = vmatprep.subr.bf16.mxu0 0
        %469 = vmatpush2.bf16.msra.mxu0 0
        %470 = vmatprep.subr.bf16.mxu0 0
        %471 = vmatpush2.bf16.msra.mxu0 0
        %472 = vmatprep.mubr.bf16.mxu0 0
        %473 = vmatmul.mubr.bf16.gmra.mxu0 %v393
        %v474 = vpop.f32.mrf.mxu0
        %v475 = vadd.f32 0.0, %v474
        %v476 = vpop.f32.mrf.mxu0
        %v477 = vpop.f32.mrf.mxu0
        %v478 = vadd.f32 0.0, %v477
        %v479 = vpop.f32.mrf.mxu0
        %480 = vmatprep.mubr.bf16.mxu0 0
        %481 = vmatmul.mubr.bf16.gmra.mxu0 %v396
        %v482 = vpop.f32.mrf.mxu0
        %v483 = vadd.f32 0.0, %v482
        %v484 = vpop.f32.mrf.mxu0
        %v485 = vpop.f32.mrf.mxu0
        %v486 = vadd.f32 0.0, %v485
        %v487 = vpop.f32.mrf.mxu0
        %488 = vmatprep.mubr.bf16.mxu0 0
        %489 = vmatmul.mubr.bf16.gmra.mxu0 %v399
        %v490 = vpop.f32.mrf.mxu0
        %v491 = vadd.f32 0.0, %v490
        %v492 = vpop.f32.mrf.mxu0
        %v493 = vpop.f32.mrf.mxu0
        %v494 = vadd.f32 0.0, %v493
        %v495 = vpop.f32.mrf.mxu0
        %496 = vmatprep.mubr.bf16.mxu0 0
        %497 = vmatmul.mubr.bf16.gmra.mxu0 %v402
        %v498 = vpop.f32.mrf.mxu0
        %v499 = vadd.f32 0.0, %v498
        %v500 = vpop.f32.mrf.mxu0
        %v501 = vpop.f32.mrf.mxu0
        %v502 = vadd.f32 0.0, %v501
        %v503 = vpop.f32.mrf.mxu0
        %504 = vmatprep.mubr.bf16.mxu0 0
        %505 = vmatmul.mubr.bf16.gmra.mxu0 %v405
        %v506 = vpop.f32.mrf.mxu0
        %v507 = vadd.f32 0.0, %v506
        %v508 = vpop.f32.mrf.mxu0
        %v509 = vpop.f32.mrf.mxu0
        %v510 = vadd.f32 0.0, %v509
        %v511 = vpop.f32.mrf.mxu0
        %512 = vmatprep.mubr.bf16.mxu0 0
        %513 = vmatmul.mubr.bf16.gmra.mxu0 %v408
        %v514 = vpop.f32.mrf.mxu0
        %v515 = vadd.f32 0.0, %v514
        %v516 = vpop.f32.mrf.mxu0
        %v517 = vpop.f32.mrf.mxu0
        %v518 = vadd.f32 0.0, %v517
        %v519 = vpop.f32.mrf.mxu0
        %520 = vmatprep.mubr.bf16.mxu0 0
        %521 = vmatmul.mubr.bf16.gmra.mxu0 %v411
        %v522 = vpop.f32.mrf.mxu0
        %v523 = vadd.f32 0.0, %v522
        %v524 = vpop.f32.mrf.mxu0
        %v525 = vpop.f32.mrf.mxu0
        %v526 = vadd.f32 0.0, %v525
        %v527 = vpop.f32.mrf.mxu0
        %528 = vmatprep.mubr.bf16.mxu0 0
        %529 = vmatmul.mubr.bf16.gmra.mxu0 %v414
        %v530 = vpop.f32.mrf.mxu0
        %v531 = vadd.f32 0.0, %v530
        %v532 = vpop.f32.mrf.mxu0
        %v533 = vpop.f32.mrf.mxu0
        %v534 = vadd.f32 0.0, %v533
        %v535 = vpop.f32.mrf.mxu0
        %536 = vmatprep.mubr.bf16.mxu0 0
        %537 = vmatmul.mubr.bf16.gmra.mxu0 %v417
        %v538 = vpop.f32.mrf.mxu0
        %v539 = vadd.f32 0.0, %v538
        %v540 = vpop.f32.mrf.mxu0
        %v541 = vpop.f32.mrf.mxu0
        %v542 = vadd.f32 0.0, %v541
        %v543 = vpop.f32.mrf.mxu0
        %544 = vmatprep.mubr.bf16.mxu0 0
        %545 = vmatmul.mubr.bf16.gmra.mxu0 %v420
        %v546 = vpop.f32.mrf.mxu0
        %v547 = vadd.f32 0.0, %v546
        %v548 = vpop.f32.mrf.mxu0
        %v549 = vpop.f32.mrf.mxu0
        %v550 = vadd.f32 0.0, %v549
        %v551 = vpop.f32.mrf.mxu0
        %552 = vmatprep.mubr.bf16.mxu0 0
        %553 = vmatmul.mubr.bf16.gmra.mxu0 %v423
        %v554 = vpop.f32.mrf.mxu0
        %v555 = vadd.f32 0.0, %v554
        %v556 = vpop.f32.mrf.mxu0
        %v557 = vpop.f32.mrf.mxu0
        %v558 = vadd.f32 0.0, %v557
        %v559 = vpop.f32.mrf.mxu0
        %560 = vmatprep.mubr.bf16.mxu0 0
        %561 = vmatmul.mubr.bf16.gmra.mxu0 %v426
        %v562 = vpop.f32.mrf.mxu0
        %v563 = vadd.f32 0.0, %v562
        %v564 = vpop.f32.mrf.mxu0
        %v565 = vpop.f32.mrf.mxu0
        %v566 = vadd.f32 0.0, %v565
        %v567 = vpop.f32.mrf.mxu0
        %568 = vmatprep.mubr.bf16.mxu0 0
        %569 = vmatmul.mubr.bf16.gmra.mxu0 %v429
        %v570 = vpop.f32.mrf.mxu0
        %v571 = vadd.f32 0.0, %v570
        %v572 = vpop.f32.mrf.mxu0
        %v573 = vpop.f32.mrf.mxu0
        %v574 = vadd.f32 0.0, %v573
        %v575 = vpop.f32.mrf.mxu0
        %576 = vmatprep.mubr.bf16.mxu0 0
        %577 = vmatmul.mubr.bf16.gmra.mxu0 %v432
        %v578 = vpop.f32.mrf.mxu0
        %v579 = vadd.f32 0.0, %v578
        %v580 = vpop.f32.mrf.mxu0
        %v581 = vpop.f32.mrf.mxu0
        %v582 = vadd.f32 0.0, %v581
        %v583 = vpop.f32.mrf.mxu0
        %584 = vmatprep.mubr.bf16.mxu0 0
        %585 = vmatmul.mubr.bf16.gmra.mxu0 %v435
        %v586 = vpop.f32.mrf.mxu0
        %v587 = vadd.f32 0.0, %v586
        %v588 = vpop.f32.mrf.mxu0
        %v589 = vpop.f32.mrf.mxu0
        %v590 = vadd.f32 0.0, %v589
        %v591 = vpop.f32.mrf.mxu0
        %592 = vmatprep.mubr.bf16.mxu0 0
        %593 = vmatmul.mubr.bf16.gmra.mxu0 %v438
        %v594 = vpop.f32.mrf.mxu0
        %v595 = vadd.f32 0.0, %v594
        %v596 = vpop.f32.mrf.mxu0
        %v597 = vpop.f32.mrf.mxu0
        %v598 = vadd.f32 0.0, %v597
        %v599 = vpop.f32.mrf.mxu0
        %600 = vdwg.mxu0
        %v603 = vunpack.c.l.b16 %v332
        %v604 = vunpack.c.l.b16 %v333
        %v605 = vpack.c.b16 %v604, %v603
        %v608 = vsel %vm391, %v316, 0
        %v611 = vsel %vm391, %v317, 0
        %v614 = vsel %vm391, %v318, 0
        %v617 = vsel %vm391, %v319, 0
        %v620 = vsel %vm391, %v320, 0
        %v623 = vsel %vm391, %v321, 0
        %v626 = vsel %vm391, %v322, 0
        %v629 = vsel %vm391, %v323, 0
        %v632 = vsel %vm391, %v324, 0
        %v635 = vsel %vm391, %v325, 0
        %v638 = vsel %vm391, %v326, 0
        %v641 = vsel %vm391, %v327, 0
        %v644 = vsel %vm391, %v328, 0
        %v647 = vsel %vm391, %v329, 0
        %v650 = vsel %vm391, %v330, 0
        %v653 = vsel %vm391, %v331, 0
        %655 = vmatprep.subr.bf16.mxu0 0
        %656 = vmatpush1.bf16.msra.mxu0 0
        %657 = vmatprep.subr.bf16.mxu0 0
        %658 = vmatpush1.bf16.msra.mxu0 0
        %659 = vmatprep.subr.bf16.mxu0 0
        %660 = vmatpush1.bf16.msra.mxu0 0
        %661 = vmatprep.subr.bf16.mxu0 0
        %662 = vmatpush1.bf16.msra.mxu0 0
        %663 = vmatprep.subr.bf16.mxu0 0
        %664 = vmatpush1.bf16.msra.mxu0 0
        %665 = vmatprep.subr.bf16.mxu0 0
        %666 = vmatpush1.bf16.msra.mxu0 0
        %667 = vmatprep.subr.bf16.mxu0 0
        %668 = vmatpush1.bf16.msra.mxu0 0
        %669 = vmatprep.subr.bf16.mxu0 0
        %670 = vmatpush1.bf16.msra.mxu0 %v605
        %671 = vmatprep.subr.bf16.mxu0 0
        %672 = vmatpush2.bf16.msra.mxu0 0
        %673 = vmatprep.subr.bf16.mxu0 0
        %674 = vmatpush2.bf16.msra.mxu0 0
        %675 = vmatprep.subr.bf16.mxu0 0
        %676 = vmatpush2.bf16.msra.mxu0 0
        %677 = vmatprep.subr.bf16.mxu0 0
        %678 = vmatpush2.bf16.msra.mxu0 0
        %679 = vmatprep.subr.bf16.mxu0 0
        %680 = vmatpush2.bf16.msra.mxu0 0
        %681 = vmatprep.subr.bf16.mxu0 0
        %682 = vmatpush2.bf16.msra.mxu0 0
        %683 = vmatprep.subr.bf16.mxu0 0
        %684 = vmatpush2.bf16.msra.mxu0 0
        %685 = vmatprep.subr.bf16.mxu0 0
        %686 = vmatpush2.bf16.msra.mxu0 0
        %687 = vmatprep.mubr.bf16.mxu0 0
        %688 = vmatmul.mubr.bf16.gmra.mxu0 %v608
        %v689 = vpop.f32.mrf.mxu0
        %v690 = vadd.f32 %v475, %v689
        %v691 = vpop.f32.mrf.mxu0
        %v692 = vpop.f32.mrf.mxu0
        %v693 = vadd.f32 %v478, %v692
        %v694 = vpop.f32.mrf.mxu0
        %695 = vmatprep.mubr.bf16.mxu0 0
        %696 = vmatmul.mubr.bf16.gmra.mxu0 %v611
        %v697 = vpop.f32.mrf.mxu0
        %v698 = vadd.f32 %v483, %v697
        %v699 = vpop.f32.mrf.mxu0
        %v700 = vpop.f32.mrf.mxu0
        %v701 = vadd.f32 %v486, %v700
        %v702 = vpop.f32.mrf.mxu0
        %703 = vmatprep.mubr.bf16.mxu0 0
        %704 = vmatmul.mubr.bf16.gmra.mxu0 %v614
        %v705 = vpop.f32.mrf.mxu0
        %v706 = vadd.f32 %v491, %v705
        %v707 = vpop.f32.mrf.mxu0
        %v708 = vpop.f32.mrf.mxu0
        %v709 = vadd.f32 %v494, %v708
        %v710 = vpop.f32.mrf.mxu0
        %711 = vmatprep.mubr.bf16.mxu0 0
        %712 = vmatmul.mubr.bf16.gmra.mxu0 %v617
        %v713 = vpop.f32.mrf.mxu0
        %v714 = vadd.f32 %v499, %v713
        %v715 = vpop.f32.mrf.mxu0
        %v716 = vpop.f32.mrf.mxu0
        %v717 = vadd.f32 %v502, %v716
        %v718 = vpop.f32.mrf.mxu0
        %719 = vmatprep.mubr.bf16.mxu0 0
        %720 = vmatmul.mubr.bf16.gmra.mxu0 %v620
        %v721 = vpop.f32.mrf.mxu0
        %v722 = vadd.f32 %v507, %v721
        %v723 = vpop.f32.mrf.mxu0
        %v724 = vpop.f32.mrf.mxu0
        %v725 = vadd.f32 %v510, %v724
        %v726 = vpop.f32.mrf.mxu0
        %727 = vmatprep.mubr.bf16.mxu0 0
        %728 = vmatmul.mubr.bf16.gmra.mxu0 %v623
        %v729 = vpop.f32.mrf.mxu0
        %v730 = vadd.f32 %v515, %v729
        %v731 = vpop.f32.mrf.mxu0
        %v732 = vpop.f32.mrf.mxu0
        %v733 = vadd.f32 %v518, %v732
        %v734 = vpop.f32.mrf.mxu0
        %735 = vmatprep.mubr.bf16.mxu0 0
        %736 = vmatmul.mubr.bf16.gmra.mxu0 %v626
        %v737 = vpop.f32.mrf.mxu0
        %v738 = vadd.f32 %v523, %v737
        %v739 = vpop.f32.mrf.mxu0
        %v740 = vpop.f32.mrf.mxu0
        %v741 = vadd.f32 %v526, %v740
        %v742 = vpop.f32.mrf.mxu0
        %743 = vmatprep.mubr.bf16.mxu0 0
        %744 = vmatmul.mubr.bf16.gmra.mxu0 %v629
        %v745 = vpop.f32.mrf.mxu0
        %v746 = vadd.f32 %v531, %v745
        %v747 = vpop.f32.mrf.mxu0
        %v748 = vpop.f32.mrf.mxu0
        %v749 = vadd.f32 %v534, %v748
        %v750 = vpop.f32.mrf.mxu0
        %751 = vmatprep.mubr.bf16.mxu0 0
        %752 = vmatmul.mubr.bf16.gmra.mxu0 %v632
        %v753 = vpop.f32.mrf.mxu0
        %v754 = vadd.f32 %v539, %v753
        %v755 = vpop.f32.mrf.mxu0
        %v756 = vpop.f32.mrf.mxu0
        %v757 = vadd.f32 %v542, %v756
        %v758 = vpop.f32.mrf.mxu0
        %759 = vmatprep.mubr.bf16.mxu0 0
        %760 = vmatmul.mubr.bf16.gmra.mxu0 %v635
        %v761 = vpop.f32.mrf.mxu0
        %v762 = vadd.f32 %v547, %v761
        %v763 = vpop.f32.mrf.mxu0
        %v764 = vpop.f32.mrf.mxu0
        %v765 = vadd.f32 %v550, %v764
        %v766 = vpop.f32.mrf.mxu0
        %767 = vmatprep.mubr.bf16.mxu0 0
        %768 = vmatmul.mubr.bf16.gmra.mxu0 %v638
        %v769 = vpop.f32.mrf.mxu0
        %v770 = vadd.f32 %v555, %v769
        %v771 = vpop.f32.mrf.mxu0
        %v772 = vpop.f32.mrf.mxu0
        %v773 = vadd.f32 %v558, %v772
        %v774 = vpop.f32.mrf.mxu0
        %775 = vmatprep.mubr.bf16.mxu0 0
        %776 = vmatmul.mubr.bf16.gmra.mxu0 %v641
        %v777 = vpop.f32.mrf.mxu0
        %v778 = vadd.f32 %v563, %v777
        %v779 = vpop.f32.mrf.mxu0
        %v780 = vpop.f32.mrf.mxu0
        %v781 = vadd.f32 %v566, %v780
        %v782 = vpop.f32.mrf.mxu0
        %783 = vmatprep.mubr.bf16.mxu0 0
        %784 = vmatmul.mubr.bf16.gmra.mxu0 %v644
        %v785 = vpop.f32.mrf.mxu0
        %v786 = vadd.f32 %v571, %v785
        %v787 = vpop.f32.mrf.mxu0
        %v788 = vpop.f32.mrf.mxu0
        %v789 = vadd.f32 %v574, %v788
        %v790 = vpop.f32.mrf.mxu0
        %791 = vmatprep.mubr.bf16.mxu0 0
        %792 = vmatmul.mubr.bf16.gmra.mxu0 %v647
        %v793 = vpop.f32.mrf.mxu0
        %v794 = vadd.f32 %v579, %v793
        %v795 = vpop.f32.mrf.mxu0
        %v796 = vpop.f32.mrf.mxu0
        %v797 = vadd.f32 %v582, %v796
        %v798 = vpop.f32.mrf.mxu0
        %799 = vmatprep.mubr.bf16.mxu0 0
        %800 = vmatmul.mubr.bf16.gmra.mxu0 %v650
        %v801 = vpop.f32.mrf.mxu0
        %v802 = vadd.f32 %v587, %v801
        %v803 = vpop.f32.mrf.mxu0
        %v804 = vpop.f32.mrf.mxu0
        %v805 = vadd.f32 %v590, %v804
        %v806 = vpop.f32.mrf.mxu0
        %807 = vmatprep.mubr.bf16.mxu0 0
        %808 = vmatmul.mubr.bf16.gmra.mxu0 %v653
        %v809 = vpop.f32.mrf.mxu0
        %v810 = vadd.f32 %v595, %v809
        %v811 = vpop.f32.mrf.mxu0
        %v812 = vpop.f32.mrf.mxu0
        %v813 = vadd.f32 %v598, %v812
        %v814 = vpop.f32.mrf.mxu0
        %815 = vdwg.mxu0
        %v816 = vld [vmem:[%s272 + $0x2] sm:$0xff]
        %v817 = vld [vmem:[%s272 + $0xa] sm:$0xff]
        %v818 = vld [vmem:[%s272 + $0x1a] sm:$0xff]
        %v819 = vld [vmem:[%s272 + $0x22] sm:$0xff]
        %v820 = vld [vmem:[%s272 + $0x32] sm:$0xff]
        %v821 = vld [vmem:[%s272 + $0x3a] sm:$0xff]
        %v822 = vld [vmem:[%s272 + $0x4a] sm:$0xff]
        %v823 = vld [vmem:[%s272 + $0x52] sm:$0xff]
        %v824 = vld [vmem:[%s272 + $0x62] sm:$0xff]
        %v825 = vld [vmem:[%s272 + $0x6a] sm:$0xff]
        %v826 = vld [vmem:[%s272 + $0x7a] sm:$0xff]
        %v827 = vld [vmem:[%s272 + $0x82] sm:$0xff]
        %v828 = vld [vmem:[%s272 + $0x92] sm:$0xff]
        %v829 = vld [vmem:[%s272 + $0x9a] sm:$0xff]
        %v830 = vld [vmem:[%s272 + $0xaa] sm:$0xff]
        %v831 = vld [vmem:[%s272 + $0xb2] sm:$0xff]
        %v832 = vld [vmem:[%s272 + $0xc2] sm:$0xff]
        %v833 = vld [vmem:[%s272 + $0xca] sm:$0xff]
        %v834 = vld [vmem:[%s272 + $0xda] sm:$0xff]
        %v835 = vld [vmem:[%s272 + $0xe2] sm:$0xff]
        %v836 = vld [vmem:[%s272 + $0xf2] sm:$0xff]
        %v837 = vld [vmem:[%s272 + $0xfa] sm:$0xff]
        %v838 = vld [vmem:[%s272 + $0x10a] sm:$0xff]
        %v839 = vld [vmem:[%s272 + $0x112] sm:$0xff]
        %v840 = vld [vmem:[%s272 + $0x122] sm:$0xff]
        %v841 = vld [vmem:[%s272 + $0x12a] sm:$0xff]
        %v842 = vld [vmem:[%s272 + $0x13a] sm:$0xff]
        %v843 = vld [vmem:[%s272 + $0x142] sm:$0xff]
        %v844 = vld [vmem:[%s272 + $0x152] sm:$0xff]
        %v845 = vld [vmem:[%s272 + $0x15a] sm:$0xff]
        %v846 = vld [vmem:[%s272 + $0x16a] sm:$0xff]
        %v847 = vld [vmem:[%s272 + $0x172] sm:$0xff]
        %v848 = vpack.c.bf16 %v817, %v816
        %v849 = vpack.c.bf16 %v819, %v818
        %v850 = vpack.c.bf16 %v821, %v820
        %v851 = vpack.c.bf16 %v823, %v822
        %v852 = vpack.c.bf16 %v825, %v824
        %v853 = vpack.c.bf16 %v827, %v826
        %v854 = vpack.c.bf16 %v829, %v828
        %v855 = vpack.c.bf16 %v831, %v830
        %v856 = vpack.c.bf16 %v833, %v832
        %v857 = vpack.c.bf16 %v835, %v834
        %v858 = vpack.c.bf16 %v837, %v836
        %v859 = vpack.c.bf16 %v839, %v838
        %v860 = vpack.c.bf16 %v841, %v840
        %v861 = vpack.c.bf16 %v843, %v842
        %v862 = vpack.c.bf16 %v845, %v844
        %v863 = vpack.c.bf16 %v847, %v846
        %s864 = scalar_lea.vmem %s2, 16
        %v865 = vld [vmem:[%s864] sm:$0xf]
        %v866 = vld [vmem:[%s864 + $0x4] sm:$0xf]
        %v869 = vunpack.c.l.b16 %v865
        %v870 = vunpack.c.l.b16 %v866
        %v871 = vpack.c.b16 %v870, %v869
        %v874 = vsel %vm391, %v848, 0
        %v877 = vsel %vm391, %v849, 0
        %v880 = vsel %vm391, %v850, 0
        %v883 = vsel %vm391, %v851, 0
        %v886 = vsel %vm391, %v852, 0
        %v889 = vsel %vm391, %v853, 0
        %v892 = vsel %vm391, %v854, 0
        %v895 = vsel %vm391, %v855, 0
        %v898 = vsel %vm391, %v856, 0
        %v901 = vsel %vm391, %v857, 0
        %v904 = vsel %vm391, %v858, 0
        %v907 = vsel %vm391, %v859, 0
        %v910 = vsel %vm391, %v860, 0
        %v913 = vsel %vm391, %v861, 0
        %v916 = vsel %vm391, %v862, 0
        %v919 = vsel %vm391, %v863, 0
        %921 = vmatprep.subr.bf16.mxu0 0
        %922 = vmatpush1.bf16.msra.mxu0 0
        %923 = vmatprep.subr.bf16.mxu0 0
        %924 = vmatpush1.bf16.msra.mxu0 0
        %925 = vmatprep.subr.bf16.mxu0 0
        %926 = vmatpush1.bf16.msra.mxu0 0
        %927 = vmatprep.subr.bf16.mxu0 0
        %928 = vmatpush1.bf16.msra.mxu0 0
        %929 = vmatprep.subr.bf16.mxu0 0
        %930 = vmatpush1.bf16.msra.mxu0 0
        %931 = vmatprep.subr.bf16.mxu0 0
        %932 = vmatpush1.bf16.msra.mxu0 0
        %933 = vmatprep.subr.bf16.mxu0 0
        %934 = vmatpush1.bf16.msra.mxu0 0
        %935 = vmatprep.subr.bf16.mxu0 0
        %936 = vmatpush1.bf16.msra.mxu0 %v871
        %937 = vmatprep.subr.bf16.mxu0 0
        %938 = vmatpush2.bf16.msra.mxu0 0
        %939 = vmatprep.subr.bf16.mxu0 0
        %940 = vmatpush2.bf16.msra.mxu0 0
        %941 = vmatprep.subr.bf16.mxu0 0
        %942 = vmatpush2.bf16.msra.mxu0 0
        %943 = vmatprep.subr.bf16.mxu0 0
        %944 = vmatpush2.bf16.msra.mxu0 0
        %945 = vmatprep.subr.bf16.mxu0 0
        %946 = vmatpush2.bf16.msra.mxu0 0
        %947 = vmatprep.subr.bf16.mxu0 0
        %948 = vmatpush2.bf16.msra.mxu0 0
        %949 = vmatprep.subr.bf16.mxu0 0
        %950 = vmatpush2.bf16.msra.mxu0 0
        %951 = vmatprep.subr.bf16.mxu0 0
        %952 = vmatpush2.bf16.msra.mxu0 0
        %953 = vmatprep.mubr.bf16.mxu0 0
        %954 = vmatmul.mubr.bf16.gmra.mxu0 %v874
        %v955 = vpop.f32.mrf.mxu0
        %v956 = vadd.f32 0.0, %v955
        %v957 = vpop.f32.mrf.mxu0
        %v958 = vpop.f32.mrf.mxu0
        %v959 = vadd.f32 0.0, %v958
        %v960 = vpop.f32.mrf.mxu0
        %961 = vmatprep.mubr.bf16.mxu0 0
        %962 = vmatmul.mubr.bf16.gmra.mxu0 %v877
        %v963 = vpop.f32.mrf.mxu0
        %v964 = vadd.f32 0.0, %v963
        %v965 = vpop.f32.mrf.mxu0
        %v966 = vpop.f32.mrf.mxu0
        %v967 = vadd.f32 0.0, %v966
        %v968 = vpop.f32.mrf.mxu0
        %969 = vmatprep.mubr.bf16.mxu0 0
        %970 = vmatmul.mubr.bf16.gmra.mxu0 %v880
        %v971 = vpop.f32.mrf.mxu0
        %v972 = vadd.f32 0.0, %v971
        %v973 = vpop.f32.mrf.mxu0
        %v974 = vpop.f32.mrf.mxu0
        %v975 = vadd.f32 0.0, %v974
        %v976 = vpop.f32.mrf.mxu0
        %977 = vmatprep.mubr.bf16.mxu0 0
        %978 = vmatmul.mubr.bf16.gmra.mxu0 %v883
        %v979 = vpop.f32.mrf.mxu0
        %v980 = vadd.f32 0.0, %v979
        %v981 = vpop.f32.mrf.mxu0
        %v982 = vpop.f32.mrf.mxu0
        %v983 = vadd.f32 0.0, %v982
        %v984 = vpop.f32.mrf.mxu0
        %985 = vmatprep.mubr.bf16.mxu0 0
        %986 = vmatmul.mubr.bf16.gmra.mxu0 %v886
        %v987 = vpop.f32.mrf.mxu0
        %v988 = vadd.f32 0.0, %v987
        %v989 = vpop.f32.mrf.mxu0
        %v990 = vpop.f32.mrf.mxu0
        %v991 = vadd.f32 0.0, %v990
        %v992 = vpop.f32.mrf.mxu0
        %993 = vmatprep.mubr.bf16.mxu0 0
        %994 = vmatmul.mubr.bf16.gmra.mxu0 %v889
        %v995 = vpop.f32.mrf.mxu0
        %v996 = vadd.f32 0.0, %v995
        %v997 = vpop.f32.mrf.mxu0
        %v998 = vpop.f32.mrf.mxu0
        %v999 = vadd.f32 0.0, %v998
        %v1000 = vpop.f32.mrf.mxu0
        %1001 = vmatprep.mubr.bf16.mxu0 0
        %1002 = vmatmul.mubr.bf16.gmra.mxu0 %v892
        %v1003 = vpop.f32.mrf.mxu0
        %v1004 = vadd.f32 0.0, %v1003
        %v1005 = vpop.f32.mrf.mxu0
        %v1006 = vpop.f32.mrf.mxu0
        %v1007 = vadd.f32 0.0, %v1006
        %v1008 = vpop.f32.mrf.mxu0
        %1009 = vmatprep.mubr.bf16.mxu0 0
        %1010 = vmatmul.mubr.bf16.gmra.mxu0 %v895
        %v1011 = vpop.f32.mrf.mxu0
        %v1012 = vadd.f32 0.0, %v1011
        %v1013 = vpop.f32.mrf.mxu0
        %v1014 = vpop.f32.mrf.mxu0
        %v1015 = vadd.f32 0.0, %v1014
        %v1016 = vpop.f32.mrf.mxu0
        %1017 = vmatprep.mubr.bf16.mxu0 0
        %1018 = vmatmul.mubr.bf16.gmra.mxu0 %v898
        %v1019 = vpop.f32.mrf.mxu0
        %v1020 = vadd.f32 0.0, %v1019
        %v1021 = vpop.f32.mrf.mxu0
        %v1022 = vpop.f32.mrf.mxu0
        %v1023 = vadd.f32 0.0, %v1022
        %v1024 = vpop.f32.mrf.mxu0
        %1025 = vmatprep.mubr.bf16.mxu0 0
        %1026 = vmatmul.mubr.bf16.gmra.mxu0 %v901
        %v1027 = vpop.f32.mrf.mxu0
        %v1028 = vadd.f32 0.0, %v1027
        %v1029 = vpop.f32.mrf.mxu0
        %v1030 = vpop.f32.mrf.mxu0
        %v1031 = vadd.f32 0.0, %v1030
        %v1032 = vpop.f32.mrf.mxu0
        %1033 = vmatprep.mubr.bf16.mxu0 0
        %1034 = vmatmul.mubr.bf16.gmra.mxu0 %v904
        %v1035 = vpop.f32.mrf.mxu0
        %v1036 = vadd.f32 0.0, %v1035
        %v1037 = vpop.f32.mrf.mxu0
        %v1038 = vpop.f32.mrf.mxu0
        %v1039 = vadd.f32 0.0, %v1038
        %v1040 = vpop.f32.mrf.mxu0
        %1041 = vmatprep.mubr.bf16.mxu0 0
        %1042 = vmatmul.mubr.bf16.gmra.mxu0 %v907
        %v1043 = vpop.f32.mrf.mxu0
        %v1044 = vadd.f32 0.0, %v1043
        %v1045 = vpop.f32.mrf.mxu0
        %v1046 = vpop.f32.mrf.mxu0
        %v1047 = vadd.f32 0.0, %v1046
        %v1048 = vpop.f32.mrf.mxu0
        %1049 = vmatprep.mubr.bf16.mxu0 0
        %1050 = vmatmul.mubr.bf16.gmra.mxu0 %v910
        %v1051 = vpop.f32.mrf.mxu0
        %v1052 = vadd.f32 0.0, %v1051
        %v1053 = vpop.f32.mrf.mxu0
        %v1054 = vpop.f32.mrf.mxu0
        %v1055 = vadd.f32 0.0, %v1054
        %v1056 = vpop.f32.mrf.mxu0
        %1057 = vmatprep.mubr.bf16.mxu0 0
        %1058 = vmatmul.mubr.bf16.gmra.mxu0 %v913
        %v1059 = vpop.f32.mrf.mxu0
        %v1060 = vadd.f32 0.0, %v1059
        %v1061 = vpop.f32.mrf.mxu0
        %v1062 = vpop.f32.mrf.mxu0
        %v1063 = vadd.f32 0.0, %v1062
        %v1064 = vpop.f32.mrf.mxu0
        %1065 = vmatprep.mubr.bf16.mxu0 0
        %1066 = vmatmul.mubr.bf16.gmra.mxu0 %v916
        %v1067 = vpop.f32.mrf.mxu0
        %v1068 = vadd.f32 0.0, %v1067
        %v1069 = vpop.f32.mrf.mxu0
        %v1070 = vpop.f32.mrf.mxu0
        %v1071 = vadd.f32 0.0, %v1070
        %v1072 = vpop.f32.mrf.mxu0
        %1073 = vmatprep.mubr.bf16.mxu0 0
        %1074 = vmatmul.mubr.bf16.gmra.mxu0 %v919
        %v1075 = vpop.f32.mrf.mxu0
        %v1076 = vadd.f32 0.0, %v1075
        %v1077 = vpop.f32.mrf.mxu0
        %v1078 = vpop.f32.mrf.mxu0
        %v1079 = vadd.f32 0.0, %v1078
        %v1080 = vpop.f32.mrf.mxu0
        %1081 = vdwg.mxu0
        %v1082 = vadd.f32 %v690, %v956
        %v1083 = vadd.f32 %v693, %v959
        %v1084 = vadd.f32 %v698, %v964
        %v1085 = vadd.f32 %v701, %v967
        %v1086 = vadd.f32 %v706, %v972
        %v1087 = vadd.f32 %v709, %v975
        %v1088 = vadd.f32 %v714, %v980
        %v1089 = vadd.f32 %v717, %v983
        %v1090 = vadd.f32 %v722, %v988
        %v1091 = vadd.f32 %v725, %v991
        %v1092 = vadd.f32 %v730, %v996
        %v1093 = vadd.f32 %v733, %v999
        %v1094 = vadd.f32 %v738, %v1004
        %v1095 = vadd.f32 %v741, %v1007
        %v1096 = vadd.f32 %v746, %v1012
        %v1097 = vadd.f32 %v749, %v1015
        %v1098 = vadd.f32 %v754, %v1020
        %v1099 = vadd.f32 %v757, %v1023
        %v1100 = vadd.f32 %v762, %v1028
        %v1101 = vadd.f32 %v765, %v1031
        %v1102 = vadd.f32 %v770, %v1036
        %v1103 = vadd.f32 %v773, %v1039
        %v1104 = vadd.f32 %v778, %v1044
        %v1105 = vadd.f32 %v781, %v1047
        %v1106 = vadd.f32 %v786, %v1052
        %v1107 = vadd.f32 %v789, %v1055
        %v1108 = vadd.f32 %v794, %v1060
        %v1109 = vadd.f32 %v797, %v1063
        %v1110 = vadd.f32 %v802, %v1068
        %v1111 = vadd.f32 %v805, %v1071
        %v1112 = vadd.f32 %v810, %v1076
        %v1113 = vadd.f32 %v813, %v1079
        %v1114 = vld [vmem:[%s272 + $0x3] sm:$0xff]
        %v1115 = vld [vmem:[%s272 + $0xb] sm:$0xff]
        %v1116 = vld [vmem:[%s272 + $0x1b] sm:$0xff]
        %v1117 = vld [vmem:[%s272 + $0x23] sm:$0xff]
        %v1118 = vld [vmem:[%s272 + $0x33] sm:$0xff]
        %v1119 = vld [vmem:[%s272 + $0x3b] sm:$0xff]
        %v1120 = vld [vmem:[%s272 + $0x4b] sm:$0xff]
        %v1121 = vld [vmem:[%s272 + $0x53] sm:$0xff]
        %v1122 = vld [vmem:[%s272 + $0x63] sm:$0xff]
        %v1123 = vld [vmem:[%s272 + $0x6b] sm:$0xff]
        %v1124 = vld [vmem:[%s272 + $0x7b] sm:$0xff]
        %v1125 = vld [vmem:[%s272 + $0x83] sm:$0xff]
        %v1126 = vld [vmem:[%s272 + $0x93] sm:$0xff]
        %v1127 = vld [vmem:[%s272 + $0x9b] sm:$0xff]
        %v1128 = vld [vmem:[%s272 + $0xab] sm:$0xff]
        %v1129 = vld [vmem:[%s272 + $0xb3] sm:$0xff]
        %v1130 = vld [vmem:[%s272 + $0xc3] sm:$0xff]
        %v1131 = vld [vmem:[%s272 + $0xcb] sm:$0xff]
        %v1132 = vld [vmem:[%s272 + $0xdb] sm:$0xff]
        %v1133 = vld [vmem:[%s272 + $0xe3] sm:$0xff]
        %v1134 = vld [vmem:[%s272 + $0xf3] sm:$0xff]
        %v1135 = vld [vmem:[%s272 + $0xfb] sm:$0xff]
        %v1136 = vld [vmem:[%s272 + $0x10b] sm:$0xff]
        %v1137 = vld [vmem:[%s272 + $0x113] sm:$0xff]
        %v1138 = vld [vmem:[%s272 + $0x123] sm:$0xff]
        %v1139 = vld [vmem:[%s272 + $0x12b] sm:$0xff]
        %v1140 = vld [vmem:[%s272 + $0x13b] sm:$0xff]
        %v1141 = vld [vmem:[%s272 + $0x143] sm:$0xff]
        %v1142 = vld [vmem:[%s272 + $0x153] sm:$0xff]
        %v1143 = vld [vmem:[%s272 + $0x15b] sm:$0xff]
        %v1144 = vld [vmem:[%s272 + $0x16b] sm:$0xff]
        %v1145 = vld [vmem:[%s272 + $0x173] sm:$0xff]
        %v1146 = vpack.c.bf16 %v1115, %v1114
        %v1147 = vpack.c.bf16 %v1117, %v1116
        %v1148 = vpack.c.bf16 %v1119, %v1118
        %v1149 = vpack.c.bf16 %v1121, %v1120
        %v1150 = vpack.c.bf16 %v1123, %v1122
        %v1151 = vpack.c.bf16 %v1125, %v1124
        %v1152 = vpack.c.bf16 %v1127, %v1126
        %v1153 = vpack.c.bf16 %v1129, %v1128
        %v1154 = vpack.c.bf16 %v1131, %v1130
        %v1155 = vpack.c.bf16 %v1133, %v1132
        %v1156 = vpack.c.bf16 %v1135, %v1134
        %v1157 = vpack.c.bf16 %v1137, %v1136
        %v1158 = vpack.c.bf16 %v1139, %v1138
        %v1159 = vpack.c.bf16 %v1141, %v1140
        %v1160 = vpack.c.bf16 %v1143, %v1142
        %v1161 = vpack.c.bf16 %v1145, %v1144
        %s1162 = scalar_lea.vmem %s2, 24
        %v1163 = vld [vmem:[%s1162] sm:$0xf]
        %v1164 = vld [vmem:[%s1162 + $0x4] sm:$0xf]
        %v1167 = vunpack.c.l.b16 %v1163
        %v1168 = vunpack.c.l.b16 %v1164
        %v1169 = vpack.c.b16 %v1168, %v1167
        %v1172 = vsel %vm391, %v1146, 0
        %v1175 = vsel %vm391, %v1147, 0
        %v1178 = vsel %vm391, %v1148, 0
        %v1181 = vsel %vm391, %v1149, 0
        %v1184 = vsel %vm391, %v1150, 0
        %v1187 = vsel %vm391, %v1151, 0
        %v1190 = vsel %vm391, %v1152, 0
        %v1193 = vsel %vm391, %v1153, 0
        %v1196 = vsel %vm391, %v1154, 0
        %v1199 = vsel %vm391, %v1155, 0
        %v1202 = vsel %vm391, %v1156, 0
        %v1205 = vsel %vm391, %v1157, 0
        %v1208 = vsel %vm391, %v1158, 0
        %v1211 = vsel %vm391, %v1159, 0
        %v1214 = vsel %vm391, %v1160, 0
        %v1217 = vsel %vm391, %v1161, 0
        %1219 = vmatprep.subr.bf16.mxu0 0
        %1220 = vmatpush1.bf16.msra.mxu0 0
        %1221 = vmatprep.subr.bf16.mxu0 0
        %1222 = vmatpush1.bf16.msra.mxu0 0
        %1223 = vmatprep.subr.bf16.mxu0 0
        %1224 = vmatpush1.bf16.msra.mxu0 0
        %1225 = vmatprep.subr.bf16.mxu0 0
        %1226 = vmatpush1.bf16.msra.mxu0 0
        %1227 = vmatprep.subr.bf16.mxu0 0
        %1228 = vmatpush1.bf16.msra.mxu0 0
        %1229 = vmatprep.subr.bf16.mxu0 0
        %1230 = vmatpush1.bf16.msra.mxu0 0
        %1231 = vmatprep.subr.bf16.mxu0 0
        %1232 = vmatpush1.bf16.msra.mxu0 0
        %1233 = vmatprep.subr.bf16.mxu0 0
        %1234 = vmatpush1.bf16.msra.mxu0 %v1169
        %1235 = vmatprep.subr.bf16.mxu0 0
        %1236 = vmatpush2.bf16.msra.mxu0 0
        %1237 = vmatprep.subr.bf16.mxu0 0
        %1238 = vmatpush2.bf16.msra.mxu0 0
        %1239 = vmatprep.subr.bf16.mxu0 0
        %1240 = vmatpush2.bf16.msra.mxu0 0
        %1241 = vmatprep.subr.bf16.mxu0 0
        %1242 = vmatpush2.bf16.msra.mxu0 0
        %1243 = vmatprep.subr.bf16.mxu0 0
        %1244 = vmatpush2.bf16.msra.mxu0 0
        %1245 = vmatprep.subr.bf16.mxu0 0
        %1246 = vmatpush2.bf16.msra.mxu0 0
        %1247 = vmatprep.subr.bf16.mxu0 0
        %1248 = vmatpush2.bf16.msra.mxu0 0
        %1249 = vmatprep.subr.bf16.mxu0 0
        %1250 = vmatpush2.bf16.msra.mxu0 0
        %1251 = vmatprep.mubr.bf16.mxu0 0
        %1252 = vmatmul.mubr.bf16.gmra.mxu0 %v1172
        %v1253 = vpop.f32.mrf.mxu0
        %v1254 = vadd.f32 0.0, %v1253
        %v1255 = vpop.f32.mrf.mxu0
        %v1256 = vpop.f32.mrf.mxu0
        %v1257 = vadd.f32 0.0, %v1256
        %v1258 = vpop.f32.mrf.mxu0
        %1259 = vmatprep.mubr.bf16.mxu0 0
        %1260 = vmatmul.mubr.bf16.gmra.mxu0 %v1175
        %v1261 = vpop.f32.mrf.mxu0
        %v1262 = vadd.f32 0.0, %v1261
        %v1263 = vpop.f32.mrf.mxu0
        %v1264 = vpop.f32.mrf.mxu0
        %v1265 = vadd.f32 0.0, %v1264
        %v1266 = vpop.f32.mrf.mxu0
        %1267 = vmatprep.mubr.bf16.mxu0 0
        %1268 = vmatmul.mubr.bf16.gmra.mxu0 %v1178
        %v1269 = vpop.f32.mrf.mxu0
        %v1270 = vadd.f32 0.0, %v1269
        %v1271 = vpop.f32.mrf.mxu0
        %v1272 = vpop.f32.mrf.mxu0
        %v1273 = vadd.f32 0.0, %v1272
        %v1274 = vpop.f32.mrf.mxu0
        %1275 = vmatprep.mubr.bf16.mxu0 0
        %1276 = vmatmul.mubr.bf16.gmra.mxu0 %v1181
        %v1277 = vpop.f32.mrf.mxu0
        %v1278 = vadd.f32 0.0, %v1277
        %v1279 = vpop.f32.mrf.mxu0
        %v1280 = vpop.f32.mrf.mxu0
        %v1281 = vadd.f32 0.0, %v1280
        %v1282 = vpop.f32.mrf.mxu0
        %1283 = vmatprep.mubr.bf16.mxu0 0
        %1284 = vmatmul.mubr.bf16.gmra.mxu0 %v1184
        %v1285 = vpop.f32.mrf.mxu0
        %v1286 = vadd.f32 0.0, %v1285
        %v1287 = vpop.f32.mrf.mxu0
        %v1288 = vpop.f32.mrf.mxu0
        %v1289 = vadd.f32 0.0, %v1288
        %v1290 = vpop.f32.mrf.mxu0
        %1291 = vmatprep.mubr.bf16.mxu0 0
        %1292 = vmatmul.mubr.bf16.gmra.mxu0 %v1187
        %v1293 = vpop.f32.mrf.mxu0
        %v1294 = vadd.f32 0.0, %v1293
        %v1295 = vpop.f32.mrf.mxu0
        %v1296 = vpop.f32.mrf.mxu0
        %v1297 = vadd.f32 0.0, %v1296
        %v1298 = vpop.f32.mrf.mxu0
        %1299 = vmatprep.mubr.bf16.mxu0 0
        %1300 = vmatmul.mubr.bf16.gmra.mxu0 %v1190
        %v1301 = vpop.f32.mrf.mxu0
        %v1302 = vadd.f32 0.0, %v1301
        %v1303 = vpop.f32.mrf.mxu0
        %v1304 = vpop.f32.mrf.mxu0
        %v1305 = vadd.f32 0.0, %v1304
        %v1306 = vpop.f32.mrf.mxu0
        %1307 = vmatprep.mubr.bf16.mxu0 0
        %1308 = vmatmul.mubr.bf16.gmra.mxu0 %v1193
        %v1309 = vpop.f32.mrf.mxu0
        %v1310 = vadd.f32 0.0, %v1309
        %v1311 = vpop.f32.mrf.mxu0
        %v1312 = vpop.f32.mrf.mxu0
        %v1313 = vadd.f32 0.0, %v1312
        %v1314 = vpop.f32.mrf.mxu0
        %1315 = vmatprep.mubr.bf16.mxu0 0
        %1316 = vmatmul.mubr.bf16.gmra.mxu0 %v1196
        %v1317 = vpop.f32.mrf.mxu0
        %v1318 = vadd.f32 0.0, %v1317
        %v1319 = vpop.f32.mrf.mxu0
        %v1320 = vpop.f32.mrf.mxu0
        %v1321 = vadd.f32 0.0, %v1320
        %v1322 = vpop.f32.mrf.mxu0
        %1323 = vmatprep.mubr.bf16.mxu0 0
        %1324 = vmatmul.mubr.bf16.gmra.mxu0 %v1199
        %v1325 = vpop.f32.mrf.mxu0
        %v1326 = vadd.f32 0.0, %v1325
        %v1327 = vpop.f32.mrf.mxu0
        %v1328 = vpop.f32.mrf.mxu0
        %v1329 = vadd.f32 0.0, %v1328
        %v1330 = vpop.f32.mrf.mxu0
        %1331 = vmatprep.mubr.bf16.mxu0 0
        %1332 = vmatmul.mubr.bf16.gmra.mxu0 %v1202
        %v1333 = vpop.f32.mrf.mxu0
        %v1334 = vadd.f32 0.0, %v1333
        %v1335 = vpop.f32.mrf.mxu0
        %v1336 = vpop.f32.mrf.mxu0
        %v1337 = vadd.f32 0.0, %v1336
        %v1338 = vpop.f32.mrf.mxu0
        %1339 = vmatprep.mubr.bf16.mxu0 0
        %1340 = vmatmul.mubr.bf16.gmra.mxu0 %v1205
        %v1341 = vpop.f32.mrf.mxu0
        %v1342 = vadd.f32 0.0, %v1341
        %v1343 = vpop.f32.mrf.mxu0
        %v1344 = vpop.f32.mrf.mxu0
        %v1345 = vadd.f32 0.0, %v1344
        %v1346 = vpop.f32.mrf.mxu0
        %1347 = vmatprep.mubr.bf16.mxu0 0
        %1348 = vmatmul.mubr.bf16.gmra.mxu0 %v1208
        %v1349 = vpop.f32.mrf.mxu0
        %v1350 = vadd.f32 0.0, %v1349
        %v1351 = vpop.f32.mrf.mxu0
        %v1352 = vpop.f32.mrf.mxu0
        %v1353 = vadd.f32 0.0, %v1352
        %v1354 = vpop.f32.mrf.mxu0
        %1355 = vmatprep.mubr.bf16.mxu0 0
        %1356 = vmatmul.mubr.bf16.gmra.mxu0 %v1211
        %v1357 = vpop.f32.mrf.mxu0
        %v1358 = vadd.f32 0.0, %v1357
        %v1359 = vpop.f32.mrf.mxu0
        %v1360 = vpop.f32.mrf.mxu0
        %v1361 = vadd.f32 0.0, %v1360
        %v1362 = vpop.f32.mrf.mxu0
        %1363 = vmatprep.mubr.bf16.mxu0 0
        %1364 = vmatmul.mubr.bf16.gmra.mxu0 %v1214
        %v1365 = vpop.f32.mrf.mxu0
        %v1366 = vadd.f32 0.0, %v1365
        %v1367 = vpop.f32.mrf.mxu0
        %v1368 = vpop.f32.mrf.mxu0
        %v1369 = vadd.f32 0.0, %v1368
        %v1370 = vpop.f32.mrf.mxu0
        %1371 = vmatprep.mubr.bf16.mxu0 0
        %1372 = vmatmul.mubr.bf16.gmra.mxu0 %v1217
        %v1373 = vpop.f32.mrf.mxu0
        %v1374 = vadd.f32 0.0, %v1373
        %v1375 = vpop.f32.mrf.mxu0
        %v1376 = vpop.f32.mrf.mxu0
        %v1377 = vadd.f32 0.0, %v1376
        %v1378 = vpop.f32.mrf.mxu0
        %1379 = vdwg.mxu0
        %v1380 = vadd.f32 %v1082, %v1254
        %v1381 = vadd.f32 %v1083, %v1257
        %v1382 = vadd.f32 %v1084, %v1262
        %v1383 = vadd.f32 %v1085, %v1265
        %v1384 = vadd.f32 %v1086, %v1270
        %v1385 = vadd.f32 %v1087, %v1273
        %v1386 = vadd.f32 %v1088, %v1278
        %v1387 = vadd.f32 %v1089, %v1281
        %v1388 = vadd.f32 %v1090, %v1286
        %v1389 = vadd.f32 %v1091, %v1289
        %v1390 = vadd.f32 %v1092, %v1294
        %v1391 = vadd.f32 %v1093, %v1297
        %v1392 = vadd.f32 %v1094, %v1302
        %v1393 = vadd.f32 %v1095, %v1305
        %v1394 = vadd.f32 %v1096, %v1310
        %v1395 = vadd.f32 %v1097, %v1313
        %v1396 = vadd.f32 %v1098, %v1318
        %v1397 = vadd.f32 %v1099, %v1321
        %v1398 = vadd.f32 %v1100, %v1326
        %v1399 = vadd.f32 %v1101, %v1329
        %v1400 = vadd.f32 %v1102, %v1334
        %v1401 = vadd.f32 %v1103, %v1337
        %v1402 = vadd.f32 %v1104, %v1342
        %v1403 = vadd.f32 %v1105, %v1345
        %v1404 = vadd.f32 %v1106, %v1350
        %v1405 = vadd.f32 %v1107, %v1353
        %v1406 = vadd.f32 %v1108, %v1358
        %v1407 = vadd.f32 %v1109, %v1361
        %v1408 = vadd.f32 %v1110, %v1366
        %v1409 = vadd.f32 %v1111, %v1369
        %v1410 = vadd.f32 %v1112, %v1374
        %v1411 = vadd.f32 %v1113, %v1377
        %v1412 = vld [vmem:[%s272 + $0x4] sm:$0xff]
        %v1413 = vld [vmem:[%s272 + $0xc] sm:$0xff]
        %v1414 = vld [vmem:[%s272 + $0x1c] sm:$0xff]
        %v1415 = vld [vmem:[%s272 + $0x24] sm:$0xff]
        %v1416 = vld [vmem:[%s272 + $0x34] sm:$0xff]
        %v1417 = vld [vmem:[%s272 + $0x3c] sm:$0xff]
        %v1418 = vld [vmem:[%s272 + $0x4c] sm:$0xff]
        %v1419 = vld [vmem:[%s272 + $0x54] sm:$0xff]
        %v1420 = vld [vmem:[%s272 + $0x64] sm:$0xff]
        %v1421 = vld [vmem:[%s272 + $0x6c] sm:$0xff]
        %v1422 = vld [vmem:[%s272 + $0x7c] sm:$0xff]
        %v1423 = vld [vmem:[%s272 + $0x84] sm:$0xff]
        %v1424 = vld [vmem:[%s272 + $0x94] sm:$0xff]
        %v1425 = vld [vmem:[%s272 + $0x9c] sm:$0xff]
        %v1426 = vld [vmem:[%s272 + $0xac] sm:$0xff]
        %v1427 = vld [vmem:[%s272 + $0xb4] sm:$0xff]
        %v1428 = vld [vmem:[%s272 + $0xc4] sm:$0xff]
        %v1429 = vld [vmem:[%s272 + $0xcc] sm:$0xff]
        %v1430 = vld [vmem:[%s272 + $0xdc] sm:$0xff]
        %v1431 = vld [vmem:[%s272 + $0xe4] sm:$0xff]
        %v1432 = vld [vmem:[%s272 + $0xf4] sm:$0xff]
        %v1433 = vld [vmem:[%s272 + $0xfc] sm:$0xff]
        %v1434 = vld [vmem:[%s272 + $0x10c] sm:$0xff]
        %v1435 = vld [vmem:[%s272 + $0x114] sm:$0xff]
        %v1436 = vld [vmem:[%s272 + $0x124] sm:$0xff]
        %v1437 = vld [vmem:[%s272 + $0x12c] sm:$0xff]
        %v1438 = vld [vmem:[%s272 + $0x13c] sm:$0xff]
        %v1439 = vld [vmem:[%s272 + $0x144] sm:$0xff]
        %v1440 = vld [vmem:[%s272 + $0x154] sm:$0xff]
        %v1441 = vld [vmem:[%s272 + $0x15c] sm:$0xff]
        %v1442 = vld [vmem:[%s272 + $0x16c] sm:$0xff]
        %v1443 = vld [vmem:[%s272 + $0x174] sm:$0xff]
        %v1444 = vpack.c.bf16 %v1413, %v1412
        %v1445 = vpack.c.bf16 %v1415, %v1414
        %v1446 = vpack.c.bf16 %v1417, %v1416
        %v1447 = vpack.c.bf16 %v1419, %v1418
        %v1448 = vpack.c.bf16 %v1421, %v1420
        %v1449 = vpack.c.bf16 %v1423, %v1422
        %v1450 = vpack.c.bf16 %v1425, %v1424
        %v1451 = vpack.c.bf16 %v1427, %v1426
        %v1452 = vpack.c.bf16 %v1429, %v1428
        %v1453 = vpack.c.bf16 %v1431, %v1430
        %v1454 = vpack.c.bf16 %v1433, %v1432
        %v1455 = vpack.c.bf16 %v1435, %v1434
        %v1456 = vpack.c.bf16 %v1437, %v1436
        %v1457 = vpack.c.bf16 %v1439, %v1438
        %v1458 = vpack.c.bf16 %v1441, %v1440
        %v1459 = vpack.c.bf16 %v1443, %v1442
        %s1460 = scalar_lea.vmem %s2, 32
        %v1461 = vld [vmem:[%s1460] sm:$0xf]
        %v1462 = vld [vmem:[%s1460 + $0x4] sm:$0xf]
        %v1465 = vunpack.c.l.b16 %v1461
        %v1466 = vunpack.c.l.b16 %v1462
        %v1467 = vpack.c.b16 %v1466, %v1465
        %v1470 = vsel %vm391, %v1444, 0
        %v1473 = vsel %vm391, %v1445, 0
        %v1476 = vsel %vm391, %v1446, 0
        %v1479 = vsel %vm391, %v1447, 0
        %v1482 = vsel %vm391, %v1448, 0
        %v1485 = vsel %vm391, %v1449, 0
        %v1488 = vsel %vm391, %v1450, 0
        %v1491 = vsel %vm391, %v1451, 0
        %v1494 = vsel %vm391, %v1452, 0
        %v1497 = vsel %vm391, %v1453, 0
        %v1500 = vsel %vm391, %v1454, 0
        %v1503 = vsel %vm391, %v1455, 0
        %v1506 = vsel %vm391, %v1456, 0
        %v1509 = vsel %vm391, %v1457, 0
        %v1512 = vsel %vm391, %v1458, 0
        %v1515 = vsel %vm391, %v1459, 0
        %1517 = vmatprep.subr.bf16.mxu0 0
        %1518 = vmatpush1.bf16.msra.mxu0 0
        %1519 = vmatprep.subr.bf16.mxu0 0
        %1520 = vmatpush1.bf16.msra.mxu0 0
        %1521 = vmatprep.subr.bf16.mxu0 0
        %1522 = vmatpush1.bf16.msra.mxu0 0
        %1523 = vmatprep.subr.bf16.mxu0 0
        %1524 = vmatpush1.bf16.msra.mxu0 0
        %1525 = vmatprep.subr.bf16.mxu0 0
        %1526 = vmatpush1.bf16.msra.mxu0 0
        %1527 = vmatprep.subr.bf16.mxu0 0
        %1528 = vmatpush1.bf16.msra.mxu0 0
        %1529 = vmatprep.subr.bf16.mxu0 0
        %1530 = vmatpush1.bf16.msra.mxu0 0
        %1531 = vmatprep.subr.bf16.mxu0 0
        %1532 = vmatpush1.bf16.msra.mxu0 %v1467
        %1533 = vmatprep.subr.bf16.mxu0 0
        %1534 = vmatpush2.bf16.msra.mxu0 0
        %1535 = vmatprep.subr.bf16.mxu0 0
        %1536 = vmatpush2.bf16.msra.mxu0 0
        %1537 = vmatprep.subr.bf16.mxu0 0
        %1538 = vmatpush2.bf16.msra.mxu0 0
        %1539 = vmatprep.subr.bf16.mxu0 0
        %1540 = vmatpush2.bf16.msra.mxu0 0
        %1541 = vmatprep.subr.bf16.mxu0 0
        %1542 = vmatpush2.bf16.msra.mxu0 0
        %1543 = vmatprep.subr.bf16.mxu0 0
        %1544 = vmatpush2.bf16.msra.mxu0 0
        %1545 = vmatprep.subr.bf16.mxu0 0
        %1546 = vmatpush2.bf16.msra.mxu0 0
        %1547 = vmatprep.subr.bf16.mxu0 0
        %1548 = vmatpush2.bf16.msra.mxu0 0
        %1549 = vmatprep.mubr.bf16.mxu0 0
        %1550 = vmatmul.mubr.bf16.gmra.mxu0 %v1470
        %v1551 = vpop.f32.mrf.mxu0
        %v1552 = vadd.f32 0.0, %v1551
        %v1553 = vpop.f32.mrf.mxu0
        %v1554 = vpop.f32.mrf.mxu0
        %v1555 = vadd.f32 0.0, %v1554
        %v1556 = vpop.f32.mrf.mxu0
        %1557 = vmatprep.mubr.bf16.mxu0 0
        %1558 = vmatmul.mubr.bf16.gmra.mxu0 %v1473
        %v1559 = vpop.f32.mrf.mxu0
        %v1560 = vadd.f32 0.0, %v1559
        %v1561 = vpop.f32.mrf.mxu0
        %v1562 = vpop.f32.mrf.mxu0
        %v1563 = vadd.f32 0.0, %v1562
        %v1564 = vpop.f32.mrf.mxu0
        %1565 = vmatprep.mubr.bf16.mxu0 0
        %1566 = vmatmul.mubr.bf16.gmra.mxu0 %v1476
        %v1567 = vpop.f32.mrf.mxu0
        %v1568 = vadd.f32 0.0, %v1567
        %v1569 = vpop.f32.mrf.mxu0
        %v1570 = vpop.f32.mrf.mxu0
        %v1571 = vadd.f32 0.0, %v1570
        %v1572 = vpop.f32.mrf.mxu0
        %1573 = vmatprep.mubr.bf16.mxu0 0
        %1574 = vmatmul.mubr.bf16.gmra.mxu0 %v1479
        %v1575 = vpop.f32.mrf.mxu0
        %v1576 = vadd.f32 0.0, %v1575
        %v1577 = vpop.f32.mrf.mxu0
        %v1578 = vpop.f32.mrf.mxu0
        %v1579 = vadd.f32 0.0, %v1578
        %v1580 = vpop.f32.mrf.mxu0
        %1581 = vmatprep.mubr.bf16.mxu0 0
        %1582 = vmatmul.mubr.bf16.gmra.mxu0 %v1482
        %v1583 = vpop.f32.mrf.mxu0
        %v1584 = vadd.f32 0.0, %v1583
        %v1585 = vpop.f32.mrf.mxu0
        %v1586 = vpop.f32.mrf.mxu0
        %v1587 = vadd.f32 0.0, %v1586
        %v1588 = vpop.f32.mrf.mxu0
        %1589 = vmatprep.mubr.bf16.mxu0 0
        %1590 = vmatmul.mubr.bf16.gmra.mxu0 %v1485
        %v1591 = vpop.f32.mrf.mxu0
        %v1592 = vadd.f32 0.0, %v1591
        %v1593 = vpop.f32.mrf.mxu0
        %v1594 = vpop.f32.mrf.mxu0
        %v1595 = vadd.f32 0.0, %v1594
        %v1596 = vpop.f32.mrf.mxu0
        %1597 = vmatprep.mubr.bf16.mxu0 0
        %1598 = vmatmul.mubr.bf16.gmra.mxu0 %v1488
        %v1599 = vpop.f32.mrf.mxu0
        %v1600 = vadd.f32 0.0, %v1599
        %v1601 = vpop.f32.mrf.mxu0
        %v1602 = vpop.f32.mrf.mxu0
        %v1603 = vadd.f32 0.0, %v1602
        %v1604 = vpop.f32.mrf.mxu0
        %1605 = vmatprep.mubr.bf16.mxu0 0
        %1606 = vmatmul.mubr.bf16.gmra.mxu0 %v1491
        %v1607 = vpop.f32.mrf.mxu0
        %v1608 = vadd.f32 0.0, %v1607
        %v1609 = vpop.f32.mrf.mxu0
        %v1610 = vpop.f32.mrf.mxu0
        %v1611 = vadd.f32 0.0, %v1610
        %v1612 = vpop.f32.mrf.mxu0
        %1613 = vmatprep.mubr.bf16.mxu0 0
        %1614 = vmatmul.mubr.bf16.gmra.mxu0 %v1494
        %v1615 = vpop.f32.mrf.mxu0
        %v1616 = vadd.f32 0.0, %v1615
        %v1617 = vpop.f32.mrf.mxu0
        %v1618 = vpop.f32.mrf.mxu0
        %v1619 = vadd.f32 0.0, %v1618
        %v1620 = vpop.f32.mrf.mxu0
        %1621 = vmatprep.mubr.bf16.mxu0 0
        %1622 = vmatmul.mubr.bf16.gmra.mxu0 %v1497
        %v1623 = vpop.f32.mrf.mxu0
        %v1624 = vadd.f32 0.0, %v1623
        %v1625 = vpop.f32.mrf.mxu0
        %v1626 = vpop.f32.mrf.mxu0
        %v1627 = vadd.f32 0.0, %v1626
        %v1628 = vpop.f32.mrf.mxu0
        %1629 = vmatprep.mubr.bf16.mxu0 0
        %1630 = vmatmul.mubr.bf16.gmra.mxu0 %v1500
        %v1631 = vpop.f32.mrf.mxu0
        %v1632 = vadd.f32 0.0, %v1631
        %v1633 = vpop.f32.mrf.mxu0
        %v1634 = vpop.f32.mrf.mxu0
        %v1635 = vadd.f32 0.0, %v1634
        %v1636 = vpop.f32.mrf.mxu0
        %1637 = vmatprep.mubr.bf16.mxu0 0
        %1638 = vmatmul.mubr.bf16.gmra.mxu0 %v1503
        %v1639 = vpop.f32.mrf.mxu0
        %v1640 = vadd.f32 0.0, %v1639
        %v1641 = vpop.f32.mrf.mxu0
        %v1642 = vpop.f32.mrf.mxu0
        %v1643 = vadd.f32 0.0, %v1642
        %v1644 = vpop.f32.mrf.mxu0
        %1645 = vmatprep.mubr.bf16.mxu0 0
        %1646 = vmatmul.mubr.bf16.gmra.mxu0 %v1506
        %v1647 = vpop.f32.mrf.mxu0
        %v1648 = vadd.f32 0.0, %v1647
        %v1649 = vpop.f32.mrf.mxu0
        %v1650 = vpop.f32.mrf.mxu0
        %v1651 = vadd.f32 0.0, %v1650
        %v1652 = vpop.f32.mrf.mxu0
        %1653 = vmatprep.mubr.bf16.mxu0 0
        %1654 = vmatmul.mubr.bf16.gmra.mxu0 %v1509
        %v1655 = vpop.f32.mrf.mxu0
        %v1656 = vadd.f32 0.0, %v1655
        %v1657 = vpop.f32.mrf.mxu0
        %v1658 = vpop.f32.mrf.mxu0
        %v1659 = vadd.f32 0.0, %v1658
        %v1660 = vpop.f32.mrf.mxu0
        %1661 = vmatprep.mubr.bf16.mxu0 0
        %1662 = vmatmul.mubr.bf16.gmra.mxu0 %v1512
        %v1663 = vpop.f32.mrf.mxu0
        %v1664 = vadd.f32 0.0, %v1663
        %v1665 = vpop.f32.mrf.mxu0
        %v1666 = vpop.f32.mrf.mxu0
        %v1667 = vadd.f32 0.0, %v1666
        %v1668 = vpop.f32.mrf.mxu0
        %1669 = vmatprep.mubr.bf16.mxu0 0
        %1670 = vmatmul.mubr.bf16.gmra.mxu0 %v1515
        %v1671 = vpop.f32.mrf.mxu0
        %v1672 = vadd.f32 0.0, %v1671
        %v1673 = vpop.f32.mrf.mxu0
        %v1674 = vpop.f32.mrf.mxu0
        %v1675 = vadd.f32 0.0, %v1674
        %v1676 = vpop.f32.mrf.mxu0
        %1677 = vdwg.mxu0
        %v1678 = vadd.f32 %v1380, %v1552
        %v1679 = vadd.f32 %v1381, %v1555
        %v1680 = vadd.f32 %v1382, %v1560
        %v1681 = vadd.f32 %v1383, %v1563
        %v1682 = vadd.f32 %v1384, %v1568
        %v1683 = vadd.f32 %v1385, %v1571
        %v1684 = vadd.f32 %v1386, %v1576
        %v1685 = vadd.f32 %v1387, %v1579
        %v1686 = vadd.f32 %v1388, %v1584
        %v1687 = vadd.f32 %v1389, %v1587
        %v1688 = vadd.f32 %v1390, %v1592
        %v1689 = vadd.f32 %v1391, %v1595
        %v1690 = vadd.f32 %v1392, %v1600
        %v1691 = vadd.f32 %v1393, %v1603
        %v1692 = vadd.f32 %v1394, %v1608
        %v1693 = vadd.f32 %v1395, %v1611
        %v1694 = vadd.f32 %v1396, %v1616
        %v1695 = vadd.f32 %v1397, %v1619
        %v1696 = vadd.f32 %v1398, %v1624
        %v1697 = vadd.f32 %v1399, %v1627
        %v1698 = vadd.f32 %v1400, %v1632
        %v1699 = vadd.f32 %v1401, %v1635
        %v1700 = vadd.f32 %v1402, %v1640
        %v1701 = vadd.f32 %v1403, %v1643
        %v1702 = vadd.f32 %v1404, %v1648
        %v1703 = vadd.f32 %v1405, %v1651
        %v1704 = vadd.f32 %v1406, %v1656
        %v1705 = vadd.f32 %v1407, %v1659
        %v1706 = vadd.f32 %v1408, %v1664
        %v1707 = vadd.f32 %v1409, %v1667
        %v1708 = vadd.f32 %v1410, %v1672
        %v1709 = vadd.f32 %v1411, %v1675
        %s1710 = scalar_lea.vmem %s272, 24
        %v1711 = vld [vmem:[%s1710] sm:$0xff]
        %v1712 = vld [vmem:[%s1710 + $0x8] sm:$0xff]
        %v1713 = vld [vmem:[%s1710 + $0x18] sm:$0xff]
        %v1714 = vld [vmem:[%s1710 + $0x20] sm:$0xff]
        %v1715 = vld [vmem:[%s1710 + $0x30] sm:$0xff]
        %v1716 = vld [vmem:[%s1710 + $0x38] sm:$0xff]
        %v1717 = vld [vmem:[%s1710 + $0x48] sm:$0xff]
        %v1718 = vld [vmem:[%s1710 + $0x50] sm:$0xff]
        %v1719 = vld [vmem:[%s1710 + $0x60] sm:$0xff]
        %v1720 = vld [vmem:[%s1710 + $0x68] sm:$0xff]
        %v1721 = vld [vmem:[%s1710 + $0x78] sm:$0xff]
        %v1722 = vld [vmem:[%s1710 + $0x80] sm:$0xff]
        %v1723 = vld [vmem:[%s1710 + $0x90] sm:$0xff]
        %v1724 = vld [vmem:[%s1710 + $0x98] sm:$0xff]
        %v1725 = vld [vmem:[%s1710 + $0xa8] sm:$0xff]
        %v1726 = vld [vmem:[%s1710 + $0xb0] sm:$0xff]
        %v1727 = vld [vmem:[%s1710 + $0xc0] sm:$0xff]
        %v1728 = vld [vmem:[%s1710 + $0xc8] sm:$0xff]
        %v1729 = vld [vmem:[%s1710 + $0xd8] sm:$0xff]
        %v1730 = vld [vmem:[%s1710 + $0xe0] sm:$0xff]
        %v1731 = vld [vmem:[%s1710 + $0xf0] sm:$0xff]
        %v1732 = vld [vmem:[%s1710 + $0xf8] sm:$0xff]
        %v1733 = vld [vmem:[%s1710 + $0x108] sm:$0xff]
        %v1734 = vld [vmem:[%s1710 + $0x110] sm:$0xff]
        %v1735 = vld [vmem:[%s1710 + $0x120] sm:$0xff]
        %v1736 = vld [vmem:[%s1710 + $0x128] sm:$0xff]
        %v1737 = vld [vmem:[%s1710 + $0x138] sm:$0xff]
        %v1738 = vld [vmem:[%s1710 + $0x140] sm:$0xff]
        %v1739 = vld [vmem:[%s1710 + $0x150] sm:$0xff]
        %v1740 = vld [vmem:[%s1710 + $0x158] sm:$0xff]
        %v1741 = vld [vmem:[%s1710 + $0x168] sm:$0xff]
        %v1742 = vld [vmem:[%s1710 + $0x170] sm:$0xff]
        %v1743 = vpack.c.bf16 %v1712, %v1711
        %v1744 = vpack.c.bf16 %v1714, %v1713
        %v1745 = vpack.c.bf16 %v1716, %v1715
        %v1746 = vpack.c.bf16 %v1718, %v1717
        %v1747 = vpack.c.bf16 %v1720, %v1719
        %v1748 = vpack.c.bf16 %v1722, %v1721
        %v1749 = vpack.c.bf16 %v1724, %v1723
        %v1750 = vpack.c.bf16 %v1726, %v1725
        %v1751 = vpack.c.bf16 %v1728, %v1727
        %v1752 = vpack.c.bf16 %v1730, %v1729
        %v1753 = vpack.c.bf16 %v1732, %v1731
        %v1754 = vpack.c.bf16 %v1734, %v1733
        %v1755 = vpack.c.bf16 %v1736, %v1735
        %v1756 = vpack.c.bf16 %v1738, %v1737
        %v1757 = vpack.c.bf16 %v1740, %v1739
        %v1758 = vpack.c.bf16 %v1742, %v1741
        %s1759 = scalar_lea.vmem %s2, 40
        %v1760 = vld [vmem:[%s1759] sm:$0xf]
        %v1761 = vld [vmem:[%s1759 + $0x4] sm:$0xf]
        %v1764 = vunpack.c.l.b16 %v1760
        %v1765 = vunpack.c.l.b16 %v1761
        %v1766 = vpack.c.b16 %v1765, %v1764
        %v1769 = vsel %vm391, %v1743, 0
        %v1772 = vsel %vm391, %v1744, 0
        %v1775 = vsel %vm391, %v1745, 0
        %v1778 = vsel %vm391, %v1746, 0
        %v1781 = vsel %vm391, %v1747, 0
        %v1784 = vsel %vm391, %v1748, 0
        %v1787 = vsel %vm391, %v1749, 0
        %v1790 = vsel %vm391, %v1750, 0
        %v1793 = vsel %vm391, %v1751, 0
        %v1796 = vsel %vm391, %v1752, 0
        %v1799 = vsel %vm391, %v1753, 0
        %v1802 = vsel %vm391, %v1754, 0
        %v1805 = vsel %vm391, %v1755, 0
        %v1808 = vsel %vm391, %v1756, 0
        %v1811 = vsel %vm391, %v1757, 0
        %v1814 = vsel %vm391, %v1758, 0
        %1816 = vmatprep.subr.bf16.mxu0 0
        %1817 = vmatpush1.bf16.msra.mxu0 0
        %1818 = vmatprep.subr.bf16.mxu0 0
        %1819 = vmatpush1.bf16.msra.mxu0 0
        %1820 = vmatprep.subr.bf16.mxu0 0
        %1821 = vmatpush1.bf16.msra.mxu0 0
        %1822 = vmatprep.subr.bf16.mxu0 0
        %1823 = vmatpush1.bf16.msra.mxu0 0
        %1824 = vmatprep.subr.bf16.mxu0 0
        %1825 = vmatpush1.bf16.msra.mxu0 0
        %1826 = vmatprep.subr.bf16.mxu0 0
        %1827 = vmatpush1.bf16.msra.mxu0 0
        %1828 = vmatprep.subr.bf16.mxu0 0
        %1829 = vmatpush1.bf16.msra.mxu0 0
        %1830 = vmatprep.subr.bf16.mxu0 0
        %1831 = vmatpush1.bf16.msra.mxu0 %v1766
        %1832 = vmatprep.subr.bf16.mxu0 0
        %1833 = vmatpush2.bf16.msra.mxu0 0
        %1834 = vmatprep.subr.bf16.mxu0 0
        %1835 = vmatpush2.bf16.msra.mxu0 0
        %1836 = vmatprep.subr.bf16.mxu0 0
        %1837 = vmatpush2.bf16.msra.mxu0 0
        %1838 = vmatprep.subr.bf16.mxu0 0
        %1839 = vmatpush2.bf16.msra.mxu0 0
        %1840 = vmatprep.subr.bf16.mxu0 0
        %1841 = vmatpush2.bf16.msra.mxu0 0
        %1842 = vmatprep.subr.bf16.mxu0 0
        %1843 = vmatpush2.bf16.msra.mxu0 0
        %1844 = vmatprep.subr.bf16.mxu0 0
        %1845 = vmatpush2.bf16.msra.mxu0 0
        %1846 = vmatprep.subr.bf16.mxu0 0
        %1847 = vmatpush2.bf16.msra.mxu0 0
        %1848 = vmatprep.mubr.bf16.mxu0 0
        %1849 = vmatmul.mubr.bf16.gmra.mxu0 %v1769
        %v1850 = vpop.f32.mrf.mxu0
        %v1851 = vadd.f32 0.0, %v1850
        %v1852 = vpop.f32.mrf.mxu0
        %v1853 = vpop.f32.mrf.mxu0
        %v1854 = vadd.f32 0.0, %v1853
        %v1855 = vpop.f32.mrf.mxu0
        %1856 = vmatprep.mubr.bf16.mxu0 0
        %1857 = vmatmul.mubr.bf16.gmra.mxu0 %v1772
        %v1858 = vpop.f32.mrf.mxu0
        %v1859 = vadd.f32 0.0, %v1858
        %v1860 = vpop.f32.mrf.mxu0
        %v1861 = vpop.f32.mrf.mxu0
        %v1862 = vadd.f32 0.0, %v1861
        %v1863 = vpop.f32.mrf.mxu0
        %1864 = vmatprep.mubr.bf16.mxu0 0
        %1865 = vmatmul.mubr.bf16.gmra.mxu0 %v1775
        %v1866 = vpop.f32.mrf.mxu0
        %v1867 = vadd.f32 0.0, %v1866
        %v1868 = vpop.f32.mrf.mxu0
        %v1869 = vpop.f32.mrf.mxu0
        %v1870 = vadd.f32 0.0, %v1869
        %v1871 = vpop.f32.mrf.mxu0
        %1872 = vmatprep.mubr.bf16.mxu0 0
        %1873 = vmatmul.mubr.bf16.gmra.mxu0 %v1778
        %v1874 = vpop.f32.mrf.mxu0
        %v1875 = vadd.f32 0.0, %v1874
        %v1876 = vpop.f32.mrf.mxu0
        %v1877 = vpop.f32.mrf.mxu0
        %v1878 = vadd.f32 0.0, %v1877
        %v1879 = vpop.f32.mrf.mxu0
        %1880 = vmatprep.mubr.bf16.mxu0 0
        %1881 = vmatmul.mubr.bf16.gmra.mxu0 %v1781
        %v1882 = vpop.f32.mrf.mxu0
        %v1883 = vadd.f32 0.0, %v1882
        %v1884 = vpop.f32.mrf.mxu0
        %v1885 = vpop.f32.mrf.mxu0
        %v1886 = vadd.f32 0.0, %v1885
        %v1887 = vpop.f32.mrf.mxu0
        %1888 = vmatprep.mubr.bf16.mxu0 0
        %1889 = vmatmul.mubr.bf16.gmra.mxu0 %v1784
        %v1890 = vpop.f32.mrf.mxu0
        %v1891 = vadd.f32 0.0, %v1890
        %v1892 = vpop.f32.mrf.mxu0
        %v1893 = vpop.f32.mrf.mxu0
        %v1894 = vadd.f32 0.0, %v1893
        %v1895 = vpop.f32.mrf.mxu0
        %1896 = vmatprep.mubr.bf16.mxu0 0
        %1897 = vmatmul.mubr.bf16.gmra.mxu0 %v1787
        %v1898 = vpop.f32.mrf.mxu0
        %v1899 = vadd.f32 0.0, %v1898
        %v1900 = vpop.f32.mrf.mxu0
        %v1901 = vpop.f32.mrf.mxu0
        %v1902 = vadd.f32 0.0, %v1901
        %v1903 = vpop.f32.mrf.mxu0
        %1904 = vmatprep.mubr.bf16.mxu0 0
        %1905 = vmatmul.mubr.bf16.gmra.mxu0 %v1790
        %v1906 = vpop.f32.mrf.mxu0
        %v1907 = vadd.f32 0.0, %v1906
        %v1908 = vpop.f32.mrf.mxu0
        %v1909 = vpop.f32.mrf.mxu0
        %v1910 = vadd.f32 0.0, %v1909
        %v1911 = vpop.f32.mrf.mxu0
        %1912 = vmatprep.mubr.bf16.mxu0 0
        %1913 = vmatmul.mubr.bf16.gmra.mxu0 %v1793
        %v1914 = vpop.f32.mrf.mxu0
        %v1915 = vadd.f32 0.0, %v1914
        %v1916 = vpop.f32.mrf.mxu0
        %v1917 = vpop.f32.mrf.mxu0
        %v1918 = vadd.f32 0.0, %v1917
        %v1919 = vpop.f32.mrf.mxu0
        %1920 = vmatprep.mubr.bf16.mxu0 0
        %1921 = vmatmul.mubr.bf16.gmra.mxu0 %v1796
        %v1922 = vpop.f32.mrf.mxu0
        %v1923 = vadd.f32 0.0, %v1922
        %v1924 = vpop.f32.mrf.mxu0
        %v1925 = vpop.f32.mrf.mxu0
        %v1926 = vadd.f32 0.0, %v1925
        %v1927 = vpop.f32.mrf.mxu0
        %1928 = vmatprep.mubr.bf16.mxu0 0
        %1929 = vmatmul.mubr.bf16.gmra.mxu0 %v1799
        %v1930 = vpop.f32.mrf.mxu0
        %v1931 = vadd.f32 0.0, %v1930
        %v1932 = vpop.f32.mrf.mxu0
        %v1933 = vpop.f32.mrf.mxu0
        %v1934 = vadd.f32 0.0, %v1933
        %v1935 = vpop.f32.mrf.mxu0
        %1936 = vmatprep.mubr.bf16.mxu0 0
        %1937 = vmatmul.mubr.bf16.gmra.mxu0 %v1802
        %v1938 = vpop.f32.mrf.mxu0
        %v1939 = vadd.f32 0.0, %v1938
        %v1940 = vpop.f32.mrf.mxu0
        %v1941 = vpop.f32.mrf.mxu0
        %v1942 = vadd.f32 0.0, %v1941
        %v1943 = vpop.f32.mrf.mxu0
        %1944 = vmatprep.mubr.bf16.mxu0 0
        %1945 = vmatmul.mubr.bf16.gmra.mxu0 %v1805
        %v1946 = vpop.f32.mrf.mxu0
        %v1947 = vadd.f32 0.0, %v1946
        %v1948 = vpop.f32.mrf.mxu0
        %v1949 = vpop.f32.mrf.mxu0
        %v1950 = vadd.f32 0.0, %v1949
        %v1951 = vpop.f32.mrf.mxu0
        %1952 = vmatprep.mubr.bf16.mxu0 0
        %1953 = vmatmul.mubr.bf16.gmra.mxu0 %v1808
        %v1954 = vpop.f32.mrf.mxu0
        %v1955 = vadd.f32 0.0, %v1954
        %v1956 = vpop.f32.mrf.mxu0
        %v1957 = vpop.f32.mrf.mxu0
        %v1958 = vadd.f32 0.0, %v1957
        %v1959 = vpop.f32.mrf.mxu0
        %1960 = vmatprep.mubr.bf16.mxu0 0
        %1961 = vmatmul.mubr.bf16.gmra.mxu0 %v1811
        %v1962 = vpop.f32.mrf.mxu0
        %v1963 = vadd.f32 0.0, %v1962
        %v1964 = vpop.f32.mrf.mxu0
        %v1965 = vpop.f32.mrf.mxu0
        %v1966 = vadd.f32 0.0, %v1965
        %v1967 = vpop.f32.mrf.mxu0
        %1968 = vmatprep.mubr.bf16.mxu0 0
        %1969 = vmatmul.mubr.bf16.gmra.mxu0 %v1814
        %v1970 = vpop.f32.mrf.mxu0
        %v1971 = vadd.f32 0.0, %v1970
        %v1972 = vpop.f32.mrf.mxu0
        %v1973 = vpop.f32.mrf.mxu0
        %v1974 = vadd.f32 0.0, %v1973
        %v1975 = vpop.f32.mrf.mxu0
        %1976 = vdwg.mxu0
        %v1977 = vadd.f32 %v1678, %v1851
        %v1978 = vadd.f32 %v1679, %v1854
        %v1979 = vadd.f32 %v1680, %v1859
        %v1980 = vadd.f32 %v1681, %v1862
        %v1981 = vadd.f32 %v1682, %v1867
        %v1982 = vadd.f32 %v1683, %v1870
        %v1983 = vadd.f32 %v1684, %v1875
        %v1984 = vadd.f32 %v1685, %v1878
        %v1985 = vadd.f32 %v1686, %v1883
        %v1986 = vadd.f32 %v1687, %v1886
        %v1987 = vadd.f32 %v1688, %v1891
        %v1988 = vadd.f32 %v1689, %v1894
        %v1989 = vadd.f32 %v1690, %v1899
        %v1990 = vadd.f32 %v1691, %v1902
        %v1991 = vadd.f32 %v1692, %v1907
        %v1992 = vadd.f32 %v1693, %v1910
        %v1993 = vadd.f32 %v1694, %v1915
        %v1994 = vadd.f32 %v1695, %v1918
        %v1995 = vadd.f32 %v1696, %v1923
        %v1996 = vadd.f32 %v1697, %v1926
        %v1997 = vadd.f32 %v1698, %v1931
        %v1998 = vadd.f32 %v1699, %v1934
        %v1999 = vadd.f32 %v1700, %v1939
        %v2000 = vadd.f32 %v1701, %v1942
        %v2001 = vadd.f32 %v1702, %v1947
        %v2002 = vadd.f32 %v1703, %v1950
        %v2003 = vadd.f32 %v1704, %v1955
        %v2004 = vadd.f32 %v1705, %v1958
        %v2005 = vadd.f32 %v1706, %v1963
        %v2006 = vadd.f32 %v1707, %v1966
        %v2007 = vadd.f32 %v1708, %v1971
        %v2008 = vadd.f32 %v1709, %v1974
        %v2009 = vld [vmem:[%s1710 + $0x1] sm:$0xff]
        %v2010 = vld [vmem:[%s1710 + $0x9] sm:$0xff]
        %v2011 = vld [vmem:[%s1710 + $0x19] sm:$0xff]
        %v2012 = vld [vmem:[%s1710 + $0x21] sm:$0xff]
        %v2013 = vld [vmem:[%s1710 + $0x31] sm:$0xff]
        %v2014 = vld [vmem:[%s1710 + $0x39] sm:$0xff]
        %v2015 = vld [vmem:[%s1710 + $0x49] sm:$0xff]
        %v2016 = vld [vmem:[%s1710 + $0x51] sm:$0xff]
        %v2017 = vld [vmem:[%s1710 + $0x61] sm:$0xff]
        %v2018 = vld [vmem:[%s1710 + $0x69] sm:$0xff]
        %v2019 = vld [vmem:[%s1710 + $0x79] sm:$0xff]
        %v2020 = vld [vmem:[%s1710 + $0x81] sm:$0xff]
        %v2021 = vld [vmem:[%s1710 + $0x91] sm:$0xff]
        %v2022 = vld [vmem:[%s1710 + $0x99] sm:$0xff]
        %v2023 = vld [vmem:[%s1710 + $0xa9] sm:$0xff]
        %v2024 = vld [vmem:[%s1710 + $0xb1] sm:$0xff]
        %v2025 = vld [vmem:[%s1710 + $0xc1] sm:$0xff]
        %v2026 = vld [vmem:[%s1710 + $0xc9] sm:$0xff]
        %v2027 = vld [vmem:[%s1710 + $0xd9] sm:$0xff]
        %v2028 = vld [vmem:[%s1710 + $0xe1] sm:$0xff]
        %v2029 = vld [vmem:[%s1710 + $0xf1] sm:$0xff]
        %v2030 = vld [vmem:[%s1710 + $0xf9] sm:$0xff]
        %v2031 = vld [vmem:[%s1710 + $0x109] sm:$0xff]
        %v2032 = vld [vmem:[%s1710 + $0x111] sm:$0xff]
        %v2033 = vld [vmem:[%s1710 + $0x121] sm:$0xff]
        %v2034 = vld [vmem:[%s1710 + $0x129] sm:$0xff]
        %v2035 = vld [vmem:[%s1710 + $0x139] sm:$0xff]
        %v2036 = vld [vmem:[%s1710 + $0x141] sm:$0xff]
        %v2037 = vld [vmem:[%s1710 + $0x151] sm:$0xff]
        %v2038 = vld [vmem:[%s1710 + $0x159] sm:$0xff]
        %v2039 = vld [vmem:[%s1710 + $0x169] sm:$0xff]
        %v2040 = vld [vmem:[%s1710 + $0x171] sm:$0xff]
        %v2041 = vpack.c.bf16 %v2010, %v2009
        %v2042 = vpack.c.bf16 %v2012, %v2011
        %v2043 = vpack.c.bf16 %v2014, %v2013
        %v2044 = vpack.c.bf16 %v2016, %v2015
        %v2045 = vpack.c.bf16 %v2018, %v2017
        %v2046 = vpack.c.bf16 %v2020, %v2019
        %v2047 = vpack.c.bf16 %v2022, %v2021
        %v2048 = vpack.c.bf16 %v2024, %v2023
        %v2049 = vpack.c.bf16 %v2026, %v2025
        %v2050 = vpack.c.bf16 %v2028, %v2027
        %v2051 = vpack.c.bf16 %v2030, %v2029
        %v2052 = vpack.c.bf16 %v2032, %v2031
        %v2053 = vpack.c.bf16 %v2034, %v2033
        %v2054 = vpack.c.bf16 %v2036, %v2035
        %v2055 = vpack.c.bf16 %v2038, %v2037
        %v2056 = vpack.c.bf16 %v2040, %v2039
        %s2057 = scalar_lea.vmem %s2, 48
        %v2058 = vld [vmem:[%s2057] sm:$0xf]
        %v2059 = vld [vmem:[%s2057 + $0x4] sm:$0xf]
        %v2062 = vunpack.c.l.b16 %v2058
        %v2063 = vunpack.c.l.b16 %v2059
        %v2064 = vpack.c.b16 %v2063, %v2062
        %v2067 = vsel %vm391, %v2041, 0
        %v2070 = vsel %vm391, %v2042, 0
        %v2073 = vsel %vm391, %v2043, 0
        %v2076 = vsel %vm391, %v2044, 0
        %v2079 = vsel %vm391, %v2045, 0
        %v2082 = vsel %vm391, %v2046, 0
        %v2085 = vsel %vm391, %v2047, 0
        %v2088 = vsel %vm391, %v2048, 0
        %v2091 = vsel %vm391, %v2049, 0
        %v2094 = vsel %vm391, %v2050, 0
        %v2097 = vsel %vm391, %v2051, 0
        %v2100 = vsel %vm391, %v2052, 0
        %v2103 = vsel %vm391, %v2053, 0
        %v2106 = vsel %vm391, %v2054, 0
        %v2109 = vsel %vm391, %v2055, 0
        %v2112 = vsel %vm391, %v2056, 0
        %2114 = vmatprep.subr.bf16.mxu0 0
        %2115 = vmatpush1.bf16.msra.mxu0 0
        %2116 = vmatprep.subr.bf16.mxu0 0
        %2117 = vmatpush1.bf16.msra.mxu0 0
        %2118 = vmatprep.subr.bf16.mxu0 0
        %2119 = vmatpush1.bf16.msra.mxu0 0
        %2120 = vmatprep.subr.bf16.mxu0 0
        %2121 = vmatpush1.bf16.msra.mxu0 0
        %2122 = vmatprep.subr.bf16.mxu0 0
        %2123 = vmatpush1.bf16.msra.mxu0 0
        %2124 = vmatprep.subr.bf16.mxu0 0
        %2125 = vmatpush1.bf16.msra.mxu0 0
        %2126 = vmatprep.subr.bf16.mxu0 0
        %2127 = vmatpush1.bf16.msra.mxu0 0
        %2128 = vmatprep.subr.bf16.mxu0 0
        %2129 = vmatpush1.bf16.msra.mxu0 %v2064
        %2130 = vmatprep.subr.bf16.mxu0 0
        %2131 = vmatpush2.bf16.msra.mxu0 0
        %2132 = vmatprep.subr.bf16.mxu0 0
        %2133 = vmatpush2.bf16.msra.mxu0 0
        %2134 = vmatprep.subr.bf16.mxu0 0
        %2135 = vmatpush2.bf16.msra.mxu0 0
        %2136 = vmatprep.subr.bf16.mxu0 0
        %2137 = vmatpush2.bf16.msra.mxu0 0
        %2138 = vmatprep.subr.bf16.mxu0 0
        %2139 = vmatpush2.bf16.msra.mxu0 0
        %2140 = vmatprep.subr.bf16.mxu0 0
        %2141 = vmatpush2.bf16.msra.mxu0 0
        %2142 = vmatprep.subr.bf16.mxu0 0
        %2143 = vmatpush2.bf16.msra.mxu0 0
        %2144 = vmatprep.subr.bf16.mxu0 0
        %2145 = vmatpush2.bf16.msra.mxu0 0
        %2146 = vmatprep.mubr.bf16.mxu0 0
        %2147 = vmatmul.mubr.bf16.gmra.mxu0 %v2067
        %v2148 = vpop.f32.mrf.mxu0
        %v2149 = vadd.f32 0.0, %v2148
        %v2150 = vpop.f32.mrf.mxu0
        %v2151 = vpop.f32.mrf.mxu0
        %v2152 = vadd.f32 0.0, %v2151
        %v2153 = vpop.f32.mrf.mxu0
        %2154 = vmatprep.mubr.bf16.mxu0 0
        %2155 = vmatmul.mubr.bf16.gmra.mxu0 %v2070
        %v2156 = vpop.f32.mrf.mxu0
        %v2157 = vadd.f32 0.0, %v2156
        %v2158 = vpop.f32.mrf.mxu0
        %v2159 = vpop.f32.mrf.mxu0
        %v2160 = vadd.f32 0.0, %v2159
        %v2161 = vpop.f32.mrf.mxu0
        %2162 = vmatprep.mubr.bf16.mxu0 0
        %2163 = vmatmul.mubr.bf16.gmra.mxu0 %v2073
        %v2164 = vpop.f32.mrf.mxu0
        %v2165 = vadd.f32 0.0, %v2164
        %v2166 = vpop.f32.mrf.mxu0
        %v2167 = vpop.f32.mrf.mxu0
        %v2168 = vadd.f32 0.0, %v2167
        %v2169 = vpop.f32.mrf.mxu0
        %2170 = vmatprep.mubr.bf16.mxu0 0
        %2171 = vmatmul.mubr.bf16.gmra.mxu0 %v2076
        %v2172 = vpop.f32.mrf.mxu0
        %v2173 = vadd.f32 0.0, %v2172
        %v2174 = vpop.f32.mrf.mxu0
        %v2175 = vpop.f32.mrf.mxu0
        %v2176 = vadd.f32 0.0, %v2175
        %v2177 = vpop.f32.mrf.mxu0
        %2178 = vmatprep.mubr.bf16.mxu0 0
        %2179 = vmatmul.mubr.bf16.gmra.mxu0 %v2079
        %v2180 = vpop.f32.mrf.mxu0
        %v2181 = vadd.f32 0.0, %v2180
        %v2182 = vpop.f32.mrf.mxu0
        %v2183 = vpop.f32.mrf.mxu0
        %v2184 = vadd.f32 0.0, %v2183
        %v2185 = vpop.f32.mrf.mxu0
        %2186 = vmatprep.mubr.bf16.mxu0 0
        %2187 = vmatmul.mubr.bf16.gmra.mxu0 %v2082
        %v2188 = vpop.f32.mrf.mxu0
        %v2189 = vadd.f32 0.0, %v2188
        %v2190 = vpop.f32.mrf.mxu0
        %v2191 = vpop.f32.mrf.mxu0
        %v2192 = vadd.f32 0.0, %v2191
        %v2193 = vpop.f32.mrf.mxu0
        %2194 = vmatprep.mubr.bf16.mxu0 0
        %2195 = vmatmul.mubr.bf16.gmra.mxu0 %v2085
        %v2196 = vpop.f32.mrf.mxu0
        %v2197 = vadd.f32 0.0, %v2196
        %v2198 = vpop.f32.mrf.mxu0
        %v2199 = vpop.f32.mrf.mxu0
        %v2200 = vadd.f32 0.0, %v2199
        %v2201 = vpop.f32.mrf.mxu0
        %2202 = vmatprep.mubr.bf16.mxu0 0
        %2203 = vmatmul.mubr.bf16.gmra.mxu0 %v2088
        %v2204 = vpop.f32.mrf.mxu0
        %v2205 = vadd.f32 0.0, %v2204
        %v2206 = vpop.f32.mrf.mxu0
        %v2207 = vpop.f32.mrf.mxu0
        %v2208 = vadd.f32 0.0, %v2207
        %v2209 = vpop.f32.mrf.mxu0
        %2210 = vmatprep.mubr.bf16.mxu0 0
        %2211 = vmatmul.mubr.bf16.gmra.mxu0 %v2091
        %v2212 = vpop.f32.mrf.mxu0
        %v2213 = vadd.f32 0.0, %v2212
        %v2214 = vpop.f32.mrf.mxu0
        %v2215 = vpop.f32.mrf.mxu0
        %v2216 = vadd.f32 0.0, %v2215
        %v2217 = vpop.f32.mrf.mxu0
        %2218 = vmatprep.mubr.bf16.mxu0 0
        %2219 = vmatmul.mubr.bf16.gmra.mxu0 %v2094
        %v2220 = vpop.f32.mrf.mxu0
        %v2221 = vadd.f32 0.0, %v2220
        %v2222 = vpop.f32.mrf.mxu0
        %v2223 = vpop.f32.mrf.mxu0
        %v2224 = vadd.f32 0.0, %v2223
        %v2225 = vpop.f32.mrf.mxu0
        %2226 = vmatprep.mubr.bf16.mxu0 0
        %2227 = vmatmul.mubr.bf16.gmra.mxu0 %v2097
        %v2228 = vpop.f32.mrf.mxu0
        %v2229 = vadd.f32 0.0, %v2228
        %v2230 = vpop.f32.mrf.mxu0
        %v2231 = vpop.f32.mrf.mxu0
        %v2232 = vadd.f32 0.0, %v2231
        %v2233 = vpop.f32.mrf.mxu0
        %2234 = vmatprep.mubr.bf16.mxu0 0
        %2235 = vmatmul.mubr.bf16.gmra.mxu0 %v2100
        %v2236 = vpop.f32.mrf.mxu0
        %v2237 = vadd.f32 0.0, %v2236
        %v2238 = vpop.f32.mrf.mxu0
        %v2239 = vpop.f32.mrf.mxu0
        %v2240 = vadd.f32 0.0, %v2239
        %v2241 = vpop.f32.mrf.mxu0
        %2242 = vmatprep.mubr.bf16.mxu0 0
        %2243 = vmatmul.mubr.bf16.gmra.mxu0 %v2103
        %v2244 = vpop.f32.mrf.mxu0
        %v2245 = vadd.f32 0.0, %v2244
        %v2246 = vpop.f32.mrf.mxu0
        %v2247 = vpop.f32.mrf.mxu0
        %v2248 = vadd.f32 0.0, %v2247
        %v2249 = vpop.f32.mrf.mxu0
        %2250 = vmatprep.mubr.bf16.mxu0 0
        %2251 = vmatmul.mubr.bf16.gmra.mxu0 %v2106
        %v2252 = vpop.f32.mrf.mxu0
        %v2253 = vadd.f32 0.0, %v2252
        %v2254 = vpop.f32.mrf.mxu0
        %v2255 = vpop.f32.mrf.mxu0
        %v2256 = vadd.f32 0.0, %v2255
        %v2257 = vpop.f32.mrf.mxu0
        %2258 = vmatprep.mubr.bf16.mxu0 0
        %2259 = vmatmul.mubr.bf16.gmra.mxu0 %v2109
        %v2260 = vpop.f32.mrf.mxu0
        %v2261 = vadd.f32 0.0, %v2260
        %v2262 = vpop.f32.mrf.mxu0
        %v2263 = vpop.f32.mrf.mxu0
        %v2264 = vadd.f32 0.0, %v2263
        %v2265 = vpop.f32.mrf.mxu0
        %2266 = vmatprep.mubr.bf16.mxu0 0
        %2267 = vmatmul.mubr.bf16.gmra.mxu0 %v2112
        %v2268 = vpop.f32.mrf.mxu0
        %v2269 = vadd.f32 0.0, %v2268
        %v2270 = vpop.f32.mrf.mxu0
        %v2271 = vpop.f32.mrf.mxu0
        %v2272 = vadd.f32 0.0, %v2271
        %v2273 = vpop.f32.mrf.mxu0
        %2274 = vdwg.mxu0
        %v2275 = vadd.f32 %v1977, %v2149
        %v2276 = vadd.f32 %v1978, %v2152
        %v2277 = vadd.f32 %v1979, %v2157
        %v2278 = vadd.f32 %v1980, %v2160
        %v2279 = vadd.f32 %v1981, %v2165
        %v2280 = vadd.f32 %v1982, %v2168
        %v2281 = vadd.f32 %v1983, %v2173
        %v2282 = vadd.f32 %v1984, %v2176
        %v2283 = vadd.f32 %v1985, %v2181
        %v2284 = vadd.f32 %v1986, %v2184
        %v2285 = vadd.f32 %v1987, %v2189
        %v2286 = vadd.f32 %v1988, %v2192
        %v2287 = vadd.f32 %v1989, %v2197
        %v2288 = vadd.f32 %v1990, %v2200
        %v2289 = vadd.f32 %v1991, %v2205
        %v2290 = vadd.f32 %v1992, %v2208
        %v2291 = vadd.f32 %v1993, %v2213
        %v2292 = vadd.f32 %v1994, %v2216
        %v2293 = vadd.f32 %v1995, %v2221
        %v2294 = vadd.f32 %v1996, %v2224
        %v2295 = vadd.f32 %v1997, %v2229
        %v2296 = vadd.f32 %v1998, %v2232
        %v2297 = vadd.f32 %v1999, %v2237
        %v2298 = vadd.f32 %v2000, %v2240
        %v2299 = vadd.f32 %v2001, %v2245
        %v2300 = vadd.f32 %v2002, %v2248
        %v2301 = vadd.f32 %v2003, %v2253
        %v2302 = vadd.f32 %v2004, %v2256
        %v2303 = vadd.f32 %v2005, %v2261
        %v2304 = vadd.f32 %v2006, %v2264
        %v2305 = vadd.f32 %v2007, %v2269
        %v2306 = vadd.f32 %v2008, %v2272
        %v2307 = vld [vmem:[%s1710 + $0x2] sm:$0xff]
        %v2308 = vld [vmem:[%s1710 + $0xa] sm:$0xff]
        %v2309 = vld [vmem:[%s1710 + $0x1a] sm:$0xff]
        %v2310 = vld [vmem:[%s1710 + $0x22] sm:$0xff]
        %v2311 = vld [vmem:[%s1710 + $0x32] sm:$0xff]
        %v2312 = vld [vmem:[%s1710 + $0x3a] sm:$0xff]
        %v2313 = vld [vmem:[%s1710 + $0x4a] sm:$0xff]
        %v2314 = vld [vmem:[%s1710 + $0x52] sm:$0xff]
        %v2315 = vld [vmem:[%s1710 + $0x62] sm:$0xff]
        %v2316 = vld [vmem:[%s1710 + $0x6a] sm:$0xff]
        %v2317 = vld [vmem:[%s1710 + $0x7a] sm:$0xff]
        %v2318 = vld [vmem:[%s1710 + $0x82] sm:$0xff]
        %v2319 = vld [vmem:[%s1710 + $0x92] sm:$0xff]
        %v2320 = vld [vmem:[%s1710 + $0x9a] sm:$0xff]
        %v2321 = vld [vmem:[%s1710 + $0xaa] sm:$0xff]
        %v2322 = vld [vmem:[%s1710 + $0xb2] sm:$0xff]
        %v2323 = vld [vmem:[%s1710 + $0xc2] sm:$0xff]
        %v2324 = vld [vmem:[%s1710 + $0xca] sm:$0xff]
        %v2325 = vld [vmem:[%s1710 + $0xda] sm:$0xff]
        %v2326 = vld [vmem:[%s1710 + $0xe2] sm:$0xff]
        %v2327 = vld [vmem:[%s1710 + $0xf2] sm:$0xff]
        %v2328 = vld [vmem:[%s1710 + $0xfa] sm:$0xff]
        %v2329 = vld [vmem:[%s1710 + $0x10a] sm:$0xff]
        %v2330 = vld [vmem:[%s1710 + $0x112] sm:$0xff]
        %v2331 = vld [vmem:[%s1710 + $0x122] sm:$0xff]
        %v2332 = vld [vmem:[%s1710 + $0x12a] sm:$0xff]
        %v2333 = vld [vmem:[%s1710 + $0x13a] sm:$0xff]
        %v2334 = vld [vmem:[%s1710 + $0x142] sm:$0xff]
        %v2335 = vld [vmem:[%s1710 + $0x152] sm:$0xff]
        %v2336 = vld [vmem:[%s1710 + $0x15a] sm:$0xff]
        %v2337 = vld [vmem:[%s1710 + $0x16a] sm:$0xff]
        %v2338 = vld [vmem:[%s1710 + $0x172] sm:$0xff]
        %v2339 = vpack.c.bf16 %v2308, %v2307
        %v2340 = vpack.c.bf16 %v2310, %v2309
        %v2341 = vpack.c.bf16 %v2312, %v2311
        %v2342 = vpack.c.bf16 %v2314, %v2313
        %v2343 = vpack.c.bf16 %v2316, %v2315
        %v2344 = vpack.c.bf16 %v2318, %v2317
        %v2345 = vpack.c.bf16 %v2320, %v2319
        %v2346 = vpack.c.bf16 %v2322, %v2321
        %v2347 = vpack.c.bf16 %v2324, %v2323
        %v2348 = vpack.c.bf16 %v2326, %v2325
        %v2349 = vpack.c.bf16 %v2328, %v2327
        %v2350 = vpack.c.bf16 %v2330, %v2329
        %v2351 = vpack.c.bf16 %v2332, %v2331
        %v2352 = vpack.c.bf16 %v2334, %v2333
        %v2353 = vpack.c.bf16 %v2336, %v2335
        %v2354 = vpack.c.bf16 %v2338, %v2337
        %s2355 = scalar_lea.vmem %s2, 56
        %v2356 = vld [vmem:[%s2355] sm:$0xf]
        %v2357 = vld [vmem:[%s2355 + $0x4] sm:$0xf]
        %v2360 = vunpack.c.l.b16 %v2356
        %v2361 = vunpack.c.l.b16 %v2357
        %v2362 = vpack.c.b16 %v2361, %v2360
        %v2365 = vsel %vm391, %v2339, 0
        %v2368 = vsel %vm391, %v2340, 0
        %v2371 = vsel %vm391, %v2341, 0
        %v2374 = vsel %vm391, %v2342, 0
        %v2377 = vsel %vm391, %v2343, 0
        %v2380 = vsel %vm391, %v2344, 0
        %v2383 = vsel %vm391, %v2345, 0
        %v2386 = vsel %vm391, %v2346, 0
        %v2389 = vsel %vm391, %v2347, 0
        %v2392 = vsel %vm391, %v2348, 0
        %v2395 = vsel %vm391, %v2349, 0
        %v2398 = vsel %vm391, %v2350, 0
        %v2401 = vsel %vm391, %v2351, 0
        %v2404 = vsel %vm391, %v2352, 0
        %v2407 = vsel %vm391, %v2353, 0
        %v2410 = vsel %vm391, %v2354, 0
        %2412 = vmatprep.subr.bf16.mxu0 0
        %2413 = vmatpush1.bf16.msra.mxu0 0
        %2414 = vmatprep.subr.bf16.mxu0 0
        %2415 = vmatpush1.bf16.msra.mxu0 0
        %2416 = vmatprep.subr.bf16.mxu0 0
        %2417 = vmatpush1.bf16.msra.mxu0 0
        %2418 = vmatprep.subr.bf16.mxu0 0
        %2419 = vmatpush1.bf16.msra.mxu0 0
        %2420 = vmatprep.subr.bf16.mxu0 0
        %2421 = vmatpush1.bf16.msra.mxu0 0
        %2422 = vmatprep.subr.bf16.mxu0 0
        %2423 = vmatpush1.bf16.msra.mxu0 0
        %2424 = vmatprep.subr.bf16.mxu0 0
        %2425 = vmatpush1.bf16.msra.mxu0 0
        %2426 = vmatprep.subr.bf16.mxu0 0
        %2427 = vmatpush1.bf16.msra.mxu0 %v2362
        %2428 = vmatprep.subr.bf16.mxu0 0
        %2429 = vmatpush2.bf16.msra.mxu0 0
        %2430 = vmatprep.subr.bf16.mxu0 0
        %2431 = vmatpush2.bf16.msra.mxu0 0
        %2432 = vmatprep.subr.bf16.mxu0 0
        %2433 = vmatpush2.bf16.msra.mxu0 0
        %2434 = vmatprep.subr.bf16.mxu0 0
        %2435 = vmatpush2.bf16.msra.mxu0 0
        %2436 = vmatprep.subr.bf16.mxu0 0
        %2437 = vmatpush2.bf16.msra.mxu0 0
        %2438 = vmatprep.subr.bf16.mxu0 0
        %2439 = vmatpush2.bf16.msra.mxu0 0
        %2440 = vmatprep.subr.bf16.mxu0 0
        %2441 = vmatpush2.bf16.msra.mxu0 0
        %2442 = vmatprep.subr.bf16.mxu0 0
        %2443 = vmatpush2.bf16.msra.mxu0 0
        %2444 = vmatprep.mubr.bf16.mxu0 0
        %2445 = vmatmul.mubr.bf16.gmra.mxu0 %v2365
        %v2446 = vpop.f32.mrf.mxu0
        %v2447 = vadd.f32 0.0, %v2446
        %v2448 = vpop.f32.mrf.mxu0
        %v2449 = vpop.f32.mrf.mxu0
        %v2450 = vadd.f32 0.0, %v2449
        %v2451 = vpop.f32.mrf.mxu0
        %2452 = vmatprep.mubr.bf16.mxu0 0
        %2453 = vmatmul.mubr.bf16.gmra.mxu0 %v2368
        %v2454 = vpop.f32.mrf.mxu0
        %v2455 = vadd.f32 0.0, %v2454
        %v2456 = vpop.f32.mrf.mxu0
        %v2457 = vpop.f32.mrf.mxu0
        %v2458 = vadd.f32 0.0, %v2457
        %v2459 = vpop.f32.mrf.mxu0
        %2460 = vmatprep.mubr.bf16.mxu0 0
        %2461 = vmatmul.mubr.bf16.gmra.mxu0 %v2371
        %v2462 = vpop.f32.mrf.mxu0
        %v2463 = vadd.f32 0.0, %v2462
        %v2464 = vpop.f32.mrf.mxu0
        %v2465 = vpop.f32.mrf.mxu0
        %v2466 = vadd.f32 0.0, %v2465
        %v2467 = vpop.f32.mrf.mxu0
        %2468 = vmatprep.mubr.bf16.mxu0 0
        %2469 = vmatmul.mubr.bf16.gmra.mxu0 %v2374
        %v2470 = vpop.f32.mrf.mxu0
        %v2471 = vadd.f32 0.0, %v2470
        %v2472 = vpop.f32.mrf.mxu0
        %v2473 = vpop.f32.mrf.mxu0
        %v2474 = vadd.f32 0.0, %v2473
        %v2475 = vpop.f32.mrf.mxu0
        %2476 = vmatprep.mubr.bf16.mxu0 0
        %2477 = vmatmul.mubr.bf16.gmra.mxu0 %v2377
        %v2478 = vpop.f32.mrf.mxu0
        %v2479 = vadd.f32 0.0, %v2478
        %v2480 = vpop.f32.mrf.mxu0
        %v2481 = vpop.f32.mrf.mxu0
        %v2482 = vadd.f32 0.0, %v2481
        %v2483 = vpop.f32.mrf.mxu0
        %2484 = vmatprep.mubr.bf16.mxu0 0
        %2485 = vmatmul.mubr.bf16.gmra.mxu0 %v2380
        %v2486 = vpop.f32.mrf.mxu0
        %v2487 = vadd.f32 0.0, %v2486
        %v2488 = vpop.f32.mrf.mxu0
        %v2489 = vpop.f32.mrf.mxu0
        %v2490 = vadd.f32 0.0, %v2489
        %v2491 = vpop.f32.mrf.mxu0
        %2492 = vmatprep.mubr.bf16.mxu0 0
        %2493 = vmatmul.mubr.bf16.gmra.mxu0 %v2383
        %v2494 = vpop.f32.mrf.mxu0
        %v2495 = vadd.f32 0.0, %v2494
        %v2496 = vpop.f32.mrf.mxu0
        %v2497 = vpop.f32.mrf.mxu0
        %v2498 = vadd.f32 0.0, %v2497
        %v2499 = vpop.f32.mrf.mxu0
        %2500 = vmatprep.mubr.bf16.mxu0 0
        %2501 = vmatmul.mubr.bf16.gmra.mxu0 %v2386
        %v2502 = vpop.f32.mrf.mxu0
        %v2503 = vadd.f32 0.0, %v2502
        %v2504 = vpop.f32.mrf.mxu0
        %v2505 = vpop.f32.mrf.mxu0
        %v2506 = vadd.f32 0.0, %v2505
        %v2507 = vpop.f32.mrf.mxu0
        %2508 = vmatprep.mubr.bf16.mxu0 0
        %2509 = vmatmul.mubr.bf16.gmra.mxu0 %v2389
        %v2510 = vpop.f32.mrf.mxu0
        %v2511 = vadd.f32 0.0, %v2510
        %v2512 = vpop.f32.mrf.mxu0
        %v2513 = vpop.f32.mrf.mxu0
        %v2514 = vadd.f32 0.0, %v2513
        %v2515 = vpop.f32.mrf.mxu0
        %2516 = vmatprep.mubr.bf16.mxu0 0
        %2517 = vmatmul.mubr.bf16.gmra.mxu0 %v2392
        %v2518 = vpop.f32.mrf.mxu0
        %v2519 = vadd.f32 0.0, %v2518
        %v2520 = vpop.f32.mrf.mxu0
        %v2521 = vpop.f32.mrf.mxu0
        %v2522 = vadd.f32 0.0, %v2521
        %v2523 = vpop.f32.mrf.mxu0
        %2524 = vmatprep.mubr.bf16.mxu0 0
        %2525 = vmatmul.mubr.bf16.gmra.mxu0 %v2395
        %v2526 = vpop.f32.mrf.mxu0
        %v2527 = vadd.f32 0.0, %v2526
        %v2528 = vpop.f32.mrf.mxu0
        %v2529 = vpop.f32.mrf.mxu0
        %v2530 = vadd.f32 0.0, %v2529
        %v2531 = vpop.f32.mrf.mxu0
        %2532 = vmatprep.mubr.bf16.mxu0 0
        %2533 = vmatmul.mubr.bf16.gmra.mxu0 %v2398
        %v2534 = vpop.f32.mrf.mxu0
        %v2535 = vadd.f32 0.0, %v2534
        %v2536 = vpop.f32.mrf.mxu0
        %v2537 = vpop.f32.mrf.mxu0
        %v2538 = vadd.f32 0.0, %v2537
        %v2539 = vpop.f32.mrf.mxu0
        %2540 = vmatprep.mubr.bf16.mxu0 0
        %2541 = vmatmul.mubr.bf16.gmra.mxu0 %v2401
        %v2542 = vpop.f32.mrf.mxu0
        %v2543 = vadd.f32 0.0, %v2542
        %v2544 = vpop.f32.mrf.mxu0
        %v2545 = vpop.f32.mrf.mxu0
        %v2546 = vadd.f32 0.0, %v2545
        %v2547 = vpop.f32.mrf.mxu0
        %2548 = vmatprep.mubr.bf16.mxu0 0
        %2549 = vmatmul.mubr.bf16.gmra.mxu0 %v2404
        %v2550 = vpop.f32.mrf.mxu0
        %v2551 = vadd.f32 0.0, %v2550
        %v2552 = vpop.f32.mrf.mxu0
        %v2553 = vpop.f32.mrf.mxu0
        %v2554 = vadd.f32 0.0, %v2553
        %v2555 = vpop.f32.mrf.mxu0
        %2556 = vmatprep.mubr.bf16.mxu0 0
        %2557 = vmatmul.mubr.bf16.gmra.mxu0 %v2407
        %v2558 = vpop.f32.mrf.mxu0
        %v2559 = vadd.f32 0.0, %v2558
        %v2560 = vpop.f32.mrf.mxu0
        %v2561 = vpop.f32.mrf.mxu0
        %v2562 = vadd.f32 0.0, %v2561
        %v2563 = vpop.f32.mrf.mxu0
        %2564 = vmatprep.mubr.bf16.mxu0 0
        %2565 = vmatmul.mubr.bf16.gmra.mxu0 %v2410
        %v2566 = vpop.f32.mrf.mxu0
        %v2567 = vadd.f32 0.0, %v2566
        %v2568 = vpop.f32.mrf.mxu0
        %v2569 = vpop.f32.mrf.mxu0
        %v2570 = vadd.f32 0.0, %v2569
        %v2571 = vpop.f32.mrf.mxu0
        %2572 = vdwg.mxu0
        %v2573 = vadd.f32 %v2275, %v2447
        %v2574 = vadd.f32 %v2276, %v2450
        %v2575 = vadd.f32 %v2277, %v2455
        %v2576 = vadd.f32 %v2278, %v2458
        %v2577 = vadd.f32 %v2279, %v2463
        %v2578 = vadd.f32 %v2280, %v2466
        %v2579 = vadd.f32 %v2281, %v2471
        %v2580 = vadd.f32 %v2282, %v2474
        %v2581 = vadd.f32 %v2283, %v2479
        %v2582 = vadd.f32 %v2284, %v2482
        %v2583 = vadd.f32 %v2285, %v2487
        %v2584 = vadd.f32 %v2286, %v2490
        %v2585 = vadd.f32 %v2287, %v2495
        %v2586 = vadd.f32 %v2288, %v2498
        %v2587 = vadd.f32 %v2289, %v2503
        %v2588 = vadd.f32 %v2290, %v2506
        %v2589 = vadd.f32 %v2291, %v2511
        %v2590 = vadd.f32 %v2292, %v2514
        %v2591 = vadd.f32 %v2293, %v2519
        %v2592 = vadd.f32 %v2294, %v2522
        %v2593 = vadd.f32 %v2295, %v2527
        %v2594 = vadd.f32 %v2296, %v2530
        %v2595 = vadd.f32 %v2297, %v2535
        %v2596 = vadd.f32 %v2298, %v2538
        %v2597 = vadd.f32 %v2299, %v2543
        %v2598 = vadd.f32 %v2300, %v2546
        %v2599 = vadd.f32 %v2301, %v2551
        %v2600 = vadd.f32 %v2302, %v2554
        %v2601 = vadd.f32 %v2303, %v2559
        %v2602 = vadd.f32 %v2304, %v2562
        %v2603 = vadd.f32 %v2305, %v2567
        %v2604 = vadd.f32 %v2306, %v2570
        %v2605 = vld [vmem:[%s1710 + $0x3] sm:$0xff]
        %v2606 = vld [vmem:[%s1710 + $0xb] sm:$0xff]
        %v2607 = vld [vmem:[%s1710 + $0x1b] sm:$0xff]
        %v2608 = vld [vmem:[%s1710 + $0x23] sm:$0xff]
        %v2609 = vld [vmem:[%s1710 + $0x33] sm:$0xff]
        %v2610 = vld [vmem:[%s1710 + $0x3b] sm:$0xff]
        %v2611 = vld [vmem:[%s1710 + $0x4b] sm:$0xff]
        %v2612 = vld [vmem:[%s1710 + $0x53] sm:$0xff]
        %v2613 = vld [vmem:[%s1710 + $0x63] sm:$0xff]
        %v2614 = vld [vmem:[%s1710 + $0x6b] sm:$0xff]
        %v2615 = vld [vmem:[%s1710 + $0x7b] sm:$0xff]
        %v2616 = vld [vmem:[%s1710 + $0x83] sm:$0xff]
        %v2617 = vld [vmem:[%s1710 + $0x93] sm:$0xff]
        %v2618 = vld [vmem:[%s1710 + $0x9b] sm:$0xff]
        %v2619 = vld [vmem:[%s1710 + $0xab] sm:$0xff]
        %v2620 = vld [vmem:[%s1710 + $0xb3] sm:$0xff]
        %v2621 = vld [vmem:[%s1710 + $0xc3] sm:$0xff]
        %v2622 = vld [vmem:[%s1710 + $0xcb] sm:$0xff]
        %v2623 = vld [vmem:[%s1710 + $0xdb] sm:$0xff]
        %v2624 = vld [vmem:[%s1710 + $0xe3] sm:$0xff]
        %v2625 = vld [vmem:[%s1710 + $0xf3] sm:$0xff]
        %v2626 = vld [vmem:[%s1710 + $0xfb] sm:$0xff]
        %v2627 = vld [vmem:[%s1710 + $0x10b] sm:$0xff]
        %v2628 = vld [vmem:[%s1710 + $0x113] sm:$0xff]
        %v2629 = vld [vmem:[%s1710 + $0x123] sm:$0xff]
        %v2630 = vld [vmem:[%s1710 + $0x12b] sm:$0xff]
        %v2631 = vld [vmem:[%s1710 + $0x13b] sm:$0xff]
        %v2632 = vld [vmem:[%s1710 + $0x143] sm:$0xff]
        %v2633 = vld [vmem:[%s1710 + $0x153] sm:$0xff]
        %v2634 = vld [vmem:[%s1710 + $0x15b] sm:$0xff]
        %v2635 = vld [vmem:[%s1710 + $0x16b] sm:$0xff]
        %v2636 = vld [vmem:[%s1710 + $0x173] sm:$0xff]
        %v2637 = vpack.c.bf16 %v2606, %v2605
        %v2638 = vpack.c.bf16 %v2608, %v2607
        %v2639 = vpack.c.bf16 %v2610, %v2609
        %v2640 = vpack.c.bf16 %v2612, %v2611
        %v2641 = vpack.c.bf16 %v2614, %v2613
        %v2642 = vpack.c.bf16 %v2616, %v2615
        %v2643 = vpack.c.bf16 %v2618, %v2617
        %v2644 = vpack.c.bf16 %v2620, %v2619
        %v2645 = vpack.c.bf16 %v2622, %v2621
        %v2646 = vpack.c.bf16 %v2624, %v2623
        %v2647 = vpack.c.bf16 %v2626, %v2625
        %v2648 = vpack.c.bf16 %v2628, %v2627
        %v2649 = vpack.c.bf16 %v2630, %v2629
        %v2650 = vpack.c.bf16 %v2632, %v2631
        %v2651 = vpack.c.bf16 %v2634, %v2633
        %v2652 = vpack.c.bf16 %v2636, %v2635
        %s2653 = scalar_lea.vmem %s2, 64
        %v2654 = vld [vmem:[%s2653] sm:$0xf]
        %v2655 = vld [vmem:[%s2653 + $0x4] sm:$0xf]
        %v2658 = vunpack.c.l.b16 %v2654
        %v2659 = vunpack.c.l.b16 %v2655
        %v2660 = vpack.c.b16 %v2659, %v2658
        %v2663 = vsel %vm391, %v2637, 0
        %v2666 = vsel %vm391, %v2638, 0
        %v2669 = vsel %vm391, %v2639, 0
        %v2672 = vsel %vm391, %v2640, 0
        %v2675 = vsel %vm391, %v2641, 0
        %v2678 = vsel %vm391, %v2642, 0
        %v2681 = vsel %vm391, %v2643, 0
        %v2684 = vsel %vm391, %v2644, 0
        %v2687 = vsel %vm391, %v2645, 0
        %v2690 = vsel %vm391, %v2646, 0
        %v2693 = vsel %vm391, %v2647, 0
        %v2696 = vsel %vm391, %v2648, 0
        %v2699 = vsel %vm391, %v2649, 0
        %v2702 = vsel %vm391, %v2650, 0
        %v2705 = vsel %vm391, %v2651, 0
        %v2708 = vsel %vm391, %v2652, 0
        %2710 = vmatprep.subr.bf16.mxu0 0
        %2711 = vmatpush1.bf16.msra.mxu0 0
        %2712 = vmatprep.subr.bf16.mxu0 0
        %2713 = vmatpush1.bf16.msra.mxu0 0
        %2714 = vmatprep.subr.bf16.mxu0 0
        %2715 = vmatpush1.bf16.msra.mxu0 0
        %2716 = vmatprep.subr.bf16.mxu0 0
        %2717 = vmatpush1.bf16.msra.mxu0 0
        %2718 = vmatprep.subr.bf16.mxu0 0
        %2719 = vmatpush1.bf16.msra.mxu0 0
        %2720 = vmatprep.subr.bf16.mxu0 0
        %2721 = vmatpush1.bf16.msra.mxu0 0
        %2722 = vmatprep.subr.bf16.mxu0 0
        %2723 = vmatpush1.bf16.msra.mxu0 0
        %2724 = vmatprep.subr.bf16.mxu0 0
        %2725 = vmatpush1.bf16.msra.mxu0 %v2660
        %2726 = vmatprep.subr.bf16.mxu0 0
        %2727 = vmatpush2.bf16.msra.mxu0 0
        %2728 = vmatprep.subr.bf16.mxu0 0
        %2729 = vmatpush2.bf16.msra.mxu0 0
        %2730 = vmatprep.subr.bf16.mxu0 0
        %2731 = vmatpush2.bf16.msra.mxu0 0
        %2732 = vmatprep.subr.bf16.mxu0 0
        %2733 = vmatpush2.bf16.msra.mxu0 0
        %2734 = vmatprep.subr.bf16.mxu0 0
        %2735 = vmatpush2.bf16.msra.mxu0 0
        %2736 = vmatprep.subr.bf16.mxu0 0
        %2737 = vmatpush2.bf16.msra.mxu0 0
        %2738 = vmatprep.subr.bf16.mxu0 0
        %2739 = vmatpush2.bf16.msra.mxu0 0
        %2740 = vmatprep.subr.bf16.mxu0 0
        %2741 = vmatpush2.bf16.msra.mxu0 0
        %2742 = vmatprep.mubr.bf16.mxu0 0
        %2743 = vmatmul.mubr.bf16.gmra.mxu0 %v2663
        %v2744 = vpop.f32.mrf.mxu0
        %v2745 = vadd.f32 0.0, %v2744
        %v2746 = vpop.f32.mrf.mxu0
        %v2747 = vpop.f32.mrf.mxu0
        %v2748 = vadd.f32 0.0, %v2747
        %v2749 = vpop.f32.mrf.mxu0
        %2750 = vmatprep.mubr.bf16.mxu0 0
        %2751 = vmatmul.mubr.bf16.gmra.mxu0 %v2666
        %v2752 = vpop.f32.mrf.mxu0
        %v2753 = vadd.f32 0.0, %v2752
        %v2754 = vpop.f32.mrf.mxu0
        %v2755 = vpop.f32.mrf.mxu0
        %v2756 = vadd.f32 0.0, %v2755
        %v2757 = vpop.f32.mrf.mxu0
        %2758 = vmatprep.mubr.bf16.mxu0 0
        %2759 = vmatmul.mubr.bf16.gmra.mxu0 %v2669
        %v2760 = vpop.f32.mrf.mxu0
        %v2761 = vadd.f32 0.0, %v2760
        %v2762 = vpop.f32.mrf.mxu0
        %v2763 = vpop.f32.mrf.mxu0
        %v2764 = vadd.f32 0.0, %v2763
        %v2765 = vpop.f32.mrf.mxu0
        %2766 = vmatprep.mubr.bf16.mxu0 0
        %2767 = vmatmul.mubr.bf16.gmra.mxu0 %v2672
        %v2768 = vpop.f32.mrf.mxu0
        %v2769 = vadd.f32 0.0, %v2768
        %v2770 = vpop.f32.mrf.mxu0
        %v2771 = vpop.f32.mrf.mxu0
        %v2772 = vadd.f32 0.0, %v2771
        %v2773 = vpop.f32.mrf.mxu0
        %2774 = vmatprep.mubr.bf16.mxu0 0
        %2775 = vmatmul.mubr.bf16.gmra.mxu0 %v2675
        %v2776 = vpop.f32.mrf.mxu0
        %v2777 = vadd.f32 0.0, %v2776
        %v2778 = vpop.f32.mrf.mxu0
        %v2779 = vpop.f32.mrf.mxu0
        %v2780 = vadd.f32 0.0, %v2779
        %v2781 = vpop.f32.mrf.mxu0
        %2782 = vmatprep.mubr.bf16.mxu0 0
        %2783 = vmatmul.mubr.bf16.gmra.mxu0 %v2678
        %v2784 = vpop.f32.mrf.mxu0
        %v2785 = vadd.f32 0.0, %v2784
        %v2786 = vpop.f32.mrf.mxu0
        %v2787 = vpop.f32.mrf.mxu0
        %v2788 = vadd.f32 0.0, %v2787
        %v2789 = vpop.f32.mrf.mxu0
        %2790 = vmatprep.mubr.bf16.mxu0 0
        %2791 = vmatmul.mubr.bf16.gmra.mxu0 %v2681
        %v2792 = vpop.f32.mrf.mxu0
        %v2793 = vadd.f32 0.0, %v2792
        %v2794 = vpop.f32.mrf.mxu0
        %v2795 = vpop.f32.mrf.mxu0
        %v2796 = vadd.f32 0.0, %v2795
        %v2797 = vpop.f32.mrf.mxu0
        %2798 = vmatprep.mubr.bf16.mxu0 0
        %2799 = vmatmul.mubr.bf16.gmra.mxu0 %v2684
        %v2800 = vpop.f32.mrf.mxu0
        %v2801 = vadd.f32 0.0, %v2800
        %v2802 = vpop.f32.mrf.mxu0
        %v2803 = vpop.f32.mrf.mxu0
        %v2804 = vadd.f32 0.0, %v2803
        %v2805 = vpop.f32.mrf.mxu0
        %2806 = vmatprep.mubr.bf16.mxu0 0
        %2807 = vmatmul.mubr.bf16.gmra.mxu0 %v2687
        %v2808 = vpop.f32.mrf.mxu0
        %v2809 = vadd.f32 0.0, %v2808
        %v2810 = vpop.f32.mrf.mxu0
        %v2811 = vpop.f32.mrf.mxu0
        %v2812 = vadd.f32 0.0, %v2811
        %v2813 = vpop.f32.mrf.mxu0
        %2814 = vmatprep.mubr.bf16.mxu0 0
        %2815 = vmatmul.mubr.bf16.gmra.mxu0 %v2690
        %v2816 = vpop.f32.mrf.mxu0
        %v2817 = vadd.f32 0.0, %v2816
        %v2818 = vpop.f32.mrf.mxu0
        %v2819 = vpop.f32.mrf.mxu0
        %v2820 = vadd.f32 0.0, %v2819
        %v2821 = vpop.f32.mrf.mxu0
        %2822 = vmatprep.mubr.bf16.mxu0 0
        %2823 = vmatmul.mubr.bf16.gmra.mxu0 %v2693
        %v2824 = vpop.f32.mrf.mxu0
        %v2825 = vadd.f32 0.0, %v2824
        %v2826 = vpop.f32.mrf.mxu0
        %v2827 = vpop.f32.mrf.mxu0
        %v2828 = vadd.f32 0.0, %v2827
        %v2829 = vpop.f32.mrf.mxu0
        %2830 = vmatprep.mubr.bf16.mxu0 0
        %2831 = vmatmul.mubr.bf16.gmra.mxu0 %v2696
        %v2832 = vpop.f32.mrf.mxu0
        %v2833 = vadd.f32 0.0, %v2832
        %v2834 = vpop.f32.mrf.mxu0
        %v2835 = vpop.f32.mrf.mxu0
        %v2836 = vadd.f32 0.0, %v2835
        %v2837 = vpop.f32.mrf.mxu0
        %2838 = vmatprep.mubr.bf16.mxu0 0
        %2839 = vmatmul.mubr.bf16.gmra.mxu0 %v2699
        %v2840 = vpop.f32.mrf.mxu0
        %v2841 = vadd.f32 0.0, %v2840
        %v2842 = vpop.f32.mrf.mxu0
        %v2843 = vpop.f32.mrf.mxu0
        %v2844 = vadd.f32 0.0, %v2843
        %v2845 = vpop.f32.mrf.mxu0
        %2846 = vmatprep.mubr.bf16.mxu0 0
        %2847 = vmatmul.mubr.bf16.gmra.mxu0 %v2702
        %v2848 = vpop.f32.mrf.mxu0
        %v2849 = vadd.f32 0.0, %v2848
        %v2850 = vpop.f32.mrf.mxu0
        %v2851 = vpop.f32.mrf.mxu0
        %v2852 = vadd.f32 0.0, %v2851
        %v2853 = vpop.f32.mrf.mxu0
        %2854 = vmatprep.mubr.bf16.mxu0 0
        %2855 = vmatmul.mubr.bf16.gmra.mxu0 %v2705
        %v2856 = vpop.f32.mrf.mxu0
        %v2857 = vadd.f32 0.0, %v2856
        %v2858 = vpop.f32.mrf.mxu0
        %v2859 = vpop.f32.mrf.mxu0
        %v2860 = vadd.f32 0.0, %v2859
        %v2861 = vpop.f32.mrf.mxu0
        %2862 = vmatprep.mubr.bf16.mxu0 0
        %2863 = vmatmul.mubr.bf16.gmra.mxu0 %v2708
        %v2864 = vpop.f32.mrf.mxu0
        %v2865 = vadd.f32 0.0, %v2864
        %v2866 = vpop.f32.mrf.mxu0
        %v2867 = vpop.f32.mrf.mxu0
        %v2868 = vadd.f32 0.0, %v2867
        %v2869 = vpop.f32.mrf.mxu0
        %2870 = vdwg.mxu0
        %v2871 = vadd.f32 %v2573, %v2745
        %v2872 = vadd.f32 %v2574, %v2748
        %v2873 = vadd.f32 %v2575, %v2753
        %v2874 = vadd.f32 %v2576, %v2756
        %v2875 = vadd.f32 %v2577, %v2761
        %v2876 = vadd.f32 %v2578, %v2764
        %v2877 = vadd.f32 %v2579, %v2769
        %v2878 = vadd.f32 %v2580, %v2772
        %v2879 = vadd.f32 %v2581, %v2777
        %v2880 = vadd.f32 %v2582, %v2780
        %v2881 = vadd.f32 %v2583, %v2785
        %v2882 = vadd.f32 %v2584, %v2788
        %v2883 = vadd.f32 %v2585, %v2793
        %v2884 = vadd.f32 %v2586, %v2796
        %v2885 = vadd.f32 %v2587, %v2801
        %v2886 = vadd.f32 %v2588, %v2804
        %v2887 = vadd.f32 %v2589, %v2809
        %v2888 = vadd.f32 %v2590, %v2812
        %v2889 = vadd.f32 %v2591, %v2817
        %v2890 = vadd.f32 %v2592, %v2820
        %v2891 = vadd.f32 %v2593, %v2825
        %v2892 = vadd.f32 %v2594, %v2828
        %v2893 = vadd.f32 %v2595, %v2833
        %v2894 = vadd.f32 %v2596, %v2836
        %v2895 = vadd.f32 %v2597, %v2841
        %v2896 = vadd.f32 %v2598, %v2844
        %v2897 = vadd.f32 %v2599, %v2849
        %v2898 = vadd.f32 %v2600, %v2852
        %v2899 = vadd.f32 %v2601, %v2857
        %v2900 = vadd.f32 %v2602, %v2860
        %v2901 = vadd.f32 %v2603, %v2865
        %v2902 = vadd.f32 %v2604, %v2868
        %v2903 = vld [vmem:[%s1710 + $0x4] sm:$0xff]
        %v2904 = vld [vmem:[%s1710 + $0xc] sm:$0xff]
        %v2905 = vld [vmem:[%s1710 + $0x1c] sm:$0xff]
        %v2906 = vld [vmem:[%s1710 + $0x24] sm:$0xff]
        %v2907 = vld [vmem:[%s1710 + $0x34] sm:$0xff]
        %v2908 = vld [vmem:[%s1710 + $0x3c] sm:$0xff]
        %v2909 = vld [vmem:[%s1710 + $0x4c] sm:$0xff]
        %v2910 = vld [vmem:[%s1710 + $0x54] sm:$0xff]
        %v2911 = vld [vmem:[%s1710 + $0x64] sm:$0xff]
        %v2912 = vld [vmem:[%s1710 + $0x6c] sm:$0xff]
        %v2913 = vld [vmem:[%s1710 + $0x7c] sm:$0xff]
        %v2914 = vld [vmem:[%s1710 + $0x84] sm:$0xff]
        %v2915 = vld [vmem:[%s1710 + $0x94] sm:$0xff]
        %v2916 = vld [vmem:[%s1710 + $0x9c] sm:$0xff]
        %v2917 = vld [vmem:[%s1710 + $0xac] sm:$0xff]
        %v2918 = vld [vmem:[%s1710 + $0xb4] sm:$0xff]
        %v2919 = vld [vmem:[%s1710 + $0xc4] sm:$0xff]
        %v2920 = vld [vmem:[%s1710 + $0xcc] sm:$0xff]
        %v2921 = vld [vmem:[%s1710 + $0xdc] sm:$0xff]
        %v2922 = vld [vmem:[%s1710 + $0xe4] sm:$0xff]
        %v2923 = vld [vmem:[%s1710 + $0xf4] sm:$0xff]
        %v2924 = vld [vmem:[%s1710 + $0xfc] sm:$0xff]
        %v2925 = vld [vmem:[%s1710 + $0x10c] sm:$0xff]
        %v2926 = vld [vmem:[%s1710 + $0x114] sm:$0xff]
        %v2927 = vld [vmem:[%s1710 + $0x124] sm:$0xff]
        %v2928 = vld [vmem:[%s1710 + $0x12c] sm:$0xff]
        %v2929 = vld [vmem:[%s1710 + $0x13c] sm:$0xff]
        %v2930 = vld [vmem:[%s1710 + $0x144] sm:$0xff]
        %v2931 = vld [vmem:[%s1710 + $0x154] sm:$0xff]
        %v2932 = vld [vmem:[%s1710 + $0x15c] sm:$0xff]
        %v2933 = vld [vmem:[%s1710 + $0x16c] sm:$0xff]
        %v2934 = vld [vmem:[%s1710 + $0x174] sm:$0xff]
        %v2935 = vpack.c.bf16 %v2904, %v2903
        %v2936 = vpack.c.bf16 %v2906, %v2905
        %v2937 = vpack.c.bf16 %v2908, %v2907
        %v2938 = vpack.c.bf16 %v2910, %v2909
        %v2939 = vpack.c.bf16 %v2912, %v2911
        %v2940 = vpack.c.bf16 %v2914, %v2913
        %v2941 = vpack.c.bf16 %v2916, %v2915
        %v2942 = vpack.c.bf16 %v2918, %v2917
        %v2943 = vpack.c.bf16 %v2920, %v2919
        %v2944 = vpack.c.bf16 %v2922, %v2921
        %v2945 = vpack.c.bf16 %v2924, %v2923
        %v2946 = vpack.c.bf16 %v2926, %v2925
        %v2947 = vpack.c.bf16 %v2928, %v2927
        %v2948 = vpack.c.bf16 %v2930, %v2929
        %v2949 = vpack.c.bf16 %v2932, %v2931
        %v2950 = vpack.c.bf16 %v2934, %v2933
        %s2951 = scalar_lea.vmem %s2, 72
        %v2952 = vld [vmem:[%s2951] sm:$0xf]
        %v2953 = vld [vmem:[%s2951 + $0x4] sm:$0xf]
        %v2956 = vunpack.c.l.b16 %v2952
        %v2957 = vunpack.c.l.b16 %v2953
        %v2958 = vpack.c.b16 %v2957, %v2956
        %v2961 = vsel %vm391, %v2935, 0
        %v2964 = vsel %vm391, %v2936, 0
        %v2967 = vsel %vm391, %v2937, 0
        %v2970 = vsel %vm391, %v2938, 0
        %v2973 = vsel %vm391, %v2939, 0
        %v2976 = vsel %vm391, %v2940, 0
        %v2979 = vsel %vm391, %v2941, 0
        %v2982 = vsel %vm391, %v2942, 0
        %v2985 = vsel %vm391, %v2943, 0
        %v2988 = vsel %vm391, %v2944, 0
        %v2991 = vsel %vm391, %v2945, 0
        %v2994 = vsel %vm391, %v2946, 0
        %v2997 = vsel %vm391, %v2947, 0
        %v3000 = vsel %vm391, %v2948, 0
        %v3003 = vsel %vm391, %v2949, 0
        %v3006 = vsel %vm391, %v2950, 0
        %3008 = vmatprep.subr.bf16.mxu0 0
        %3009 = vmatpush1.bf16.msra.mxu0 0
        %3010 = vmatprep.subr.bf16.mxu0 0
        %3011 = vmatpush1.bf16.msra.mxu0 0
        %3012 = vmatprep.subr.bf16.mxu0 0
        %3013 = vmatpush1.bf16.msra.mxu0 0
        %3014 = vmatprep.subr.bf16.mxu0 0
        %3015 = vmatpush1.bf16.msra.mxu0 0
        %3016 = vmatprep.subr.bf16.mxu0 0
        %3017 = vmatpush1.bf16.msra.mxu0 0
        %3018 = vmatprep.subr.bf16.mxu0 0
        %3019 = vmatpush1.bf16.msra.mxu0 0
        %3020 = vmatprep.subr.bf16.mxu0 0
        %3021 = vmatpush1.bf16.msra.mxu0 0
        %3022 = vmatprep.subr.bf16.mxu0 0
        %3023 = vmatpush1.bf16.msra.mxu0 %v2958
        %3024 = vmatprep.subr.bf16.mxu0 0
        %3025 = vmatpush2.bf16.msra.mxu0 0
        %3026 = vmatprep.subr.bf16.mxu0 0
        %3027 = vmatpush2.bf16.msra.mxu0 0
        %3028 = vmatprep.subr.bf16.mxu0 0
        %3029 = vmatpush2.bf16.msra.mxu0 0
        %3030 = vmatprep.subr.bf16.mxu0 0
        %3031 = vmatpush2.bf16.msra.mxu0 0
        %3032 = vmatprep.subr.bf16.mxu0 0
        %3033 = vmatpush2.bf16.msra.mxu0 0
        %3034 = vmatprep.subr.bf16.mxu0 0
        %3035 = vmatpush2.bf16.msra.mxu0 0
        %3036 = vmatprep.subr.bf16.mxu0 0
        %3037 = vmatpush2.bf16.msra.mxu0 0
        %3038 = vmatprep.subr.bf16.mxu0 0
        %3039 = vmatpush2.bf16.msra.mxu0 0
        %3040 = vmatprep.mubr.bf16.mxu0 0
        %3041 = vmatmul.mubr.bf16.gmra.mxu0 %v2961
        %v3042 = vpop.f32.mrf.mxu0
        %v3043 = vadd.f32 0.0, %v3042
        %v3044 = vpop.f32.mrf.mxu0
        %v3045 = vpop.f32.mrf.mxu0
        %v3046 = vadd.f32 0.0, %v3045
        %v3047 = vpop.f32.mrf.mxu0
        %3048 = vmatprep.mubr.bf16.mxu0 0
        %3049 = vmatmul.mubr.bf16.gmra.mxu0 %v2964
        %v3050 = vpop.f32.mrf.mxu0
        %v3051 = vadd.f32 0.0, %v3050
        %v3052 = vpop.f32.mrf.mxu0
        %v3053 = vpop.f32.mrf.mxu0
        %v3054 = vadd.f32 0.0, %v3053
        %v3055 = vpop.f32.mrf.mxu0
        %3056 = vmatprep.mubr.bf16.mxu0 0
        %3057 = vmatmul.mubr.bf16.gmra.mxu0 %v2967
        %v3058 = vpop.f32.mrf.mxu0
        %v3059 = vadd.f32 0.0, %v3058
        %v3060 = vpop.f32.mrf.mxu0
        %v3061 = vpop.f32.mrf.mxu0
        %v3062 = vadd.f32 0.0, %v3061
        %v3063 = vpop.f32.mrf.mxu0
        %3064 = vmatprep.mubr.bf16.mxu0 0
        %3065 = vmatmul.mubr.bf16.gmra.mxu0 %v2970
        %v3066 = vpop.f32.mrf.mxu0
        %v3067 = vadd.f32 0.0, %v3066
        %v3068 = vpop.f32.mrf.mxu0
        %v3069 = vpop.f32.mrf.mxu0
        %v3070 = vadd.f32 0.0, %v3069
        %v3071 = vpop.f32.mrf.mxu0
        %3072 = vmatprep.mubr.bf16.mxu0 0
        %3073 = vmatmul.mubr.bf16.gmra.mxu0 %v2973
        %v3074 = vpop.f32.mrf.mxu0
        %v3075 = vadd.f32 0.0, %v3074
        %v3076 = vpop.f32.mrf.mxu0
        %v3077 = vpop.f32.mrf.mxu0
        %v3078 = vadd.f32 0.0, %v3077
        %v3079 = vpop.f32.mrf.mxu0
        %3080 = vmatprep.mubr.bf16.mxu0 0
        %3081 = vmatmul.mubr.bf16.gmra.mxu0 %v2976
        %v3082 = vpop.f32.mrf.mxu0
        %v3083 = vadd.f32 0.0, %v3082
        %v3084 = vpop.f32.mrf.mxu0
        %v3085 = vpop.f32.mrf.mxu0
        %v3086 = vadd.f32 0.0, %v3085
        %v3087 = vpop.f32.mrf.mxu0
        %3088 = vmatprep.mubr.bf16.mxu0 0
        %3089 = vmatmul.mubr.bf16.gmra.mxu0 %v2979
        %v3090 = vpop.f32.mrf.mxu0
        %v3091 = vadd.f32 0.0, %v3090
        %v3092 = vpop.f32.mrf.mxu0
        %v3093 = vpop.f32.mrf.mxu0
        %v3094 = vadd.f32 0.0, %v3093
        %v3095 = vpop.f32.mrf.mxu0
        %3096 = vmatprep.mubr.bf16.mxu0 0
        %3097 = vmatmul.mubr.bf16.gmra.mxu0 %v2982
        %v3098 = vpop.f32.mrf.mxu0
        %v3099 = vadd.f32 0.0, %v3098
        %v3100 = vpop.f32.mrf.mxu0
        %v3101 = vpop.f32.mrf.mxu0
        %v3102 = vadd.f32 0.0, %v3101
        %v3103 = vpop.f32.mrf.mxu0
        %3104 = vmatprep.mubr.bf16.mxu0 0
        %3105 = vmatmul.mubr.bf16.gmra.mxu0 %v2985
        %v3106 = vpop.f32.mrf.mxu0
        %v3107 = vadd.f32 0.0, %v3106
        %v3108 = vpop.f32.mrf.mxu0
        %v3109 = vpop.f32.mrf.mxu0
        %v3110 = vadd.f32 0.0, %v3109
        %v3111 = vpop.f32.mrf.mxu0
        %3112 = vmatprep.mubr.bf16.mxu0 0
        %3113 = vmatmul.mubr.bf16.gmra.mxu0 %v2988
        %v3114 = vpop.f32.mrf.mxu0
        %v3115 = vadd.f32 0.0, %v3114
        %v3116 = vpop.f32.mrf.mxu0
        %v3117 = vpop.f32.mrf.mxu0
        %v3118 = vadd.f32 0.0, %v3117
        %v3119 = vpop.f32.mrf.mxu0
        %3120 = vmatprep.mubr.bf16.mxu0 0
        %3121 = vmatmul.mubr.bf16.gmra.mxu0 %v2991
        %v3122 = vpop.f32.mrf.mxu0
        %v3123 = vadd.f32 0.0, %v3122
        %v3124 = vpop.f32.mrf.mxu0
        %v3125 = vpop.f32.mrf.mxu0
        %v3126 = vadd.f32 0.0, %v3125
        %v3127 = vpop.f32.mrf.mxu0
        %3128 = vmatprep.mubr.bf16.mxu0 0
        %3129 = vmatmul.mubr.bf16.gmra.mxu0 %v2994
        %v3130 = vpop.f32.mrf.mxu0
        %v3131 = vadd.f32 0.0, %v3130
        %v3132 = vpop.f32.mrf.mxu0
        %v3133 = vpop.f32.mrf.mxu0
        %v3134 = vadd.f32 0.0, %v3133
        %v3135 = vpop.f32.mrf.mxu0
        %3136 = vmatprep.mubr.bf16.mxu0 0
        %3137 = vmatmul.mubr.bf16.gmra.mxu0 %v2997
        %v3138 = vpop.f32.mrf.mxu0
        %v3139 = vadd.f32 0.0, %v3138
        %v3140 = vpop.f32.mrf.mxu0
        %v3141 = vpop.f32.mrf.mxu0
        %v3142 = vadd.f32 0.0, %v3141
        %v3143 = vpop.f32.mrf.mxu0
        %3144 = vmatprep.mubr.bf16.mxu0 0
        %3145 = vmatmul.mubr.bf16.gmra.mxu0 %v3000
        %v3146 = vpop.f32.mrf.mxu0
        %v3147 = vadd.f32 0.0, %v3146
        %v3148 = vpop.f32.mrf.mxu0
        %v3149 = vpop.f32.mrf.mxu0
        %v3150 = vadd.f32 0.0, %v3149
        %v3151 = vpop.f32.mrf.mxu0
        %3152 = vmatprep.mubr.bf16.mxu0 0
        %3153 = vmatmul.mubr.bf16.gmra.mxu0 %v3003
        %v3154 = vpop.f32.mrf.mxu0
        %v3155 = vadd.f32 0.0, %v3154
        %v3156 = vpop.f32.mrf.mxu0
        %v3157 = vpop.f32.mrf.mxu0
        %v3158 = vadd.f32 0.0, %v3157
        %v3159 = vpop.f32.mrf.mxu0
        %3160 = vmatprep.mubr.bf16.mxu0 0
        %3161 = vmatmul.mubr.bf16.gmra.mxu0 %v3006
        %v3162 = vpop.f32.mrf.mxu0
        %v3163 = vadd.f32 0.0, %v3162
        %v3164 = vpop.f32.mrf.mxu0
        %v3165 = vpop.f32.mrf.mxu0
        %v3166 = vadd.f32 0.0, %v3165
        %v3167 = vpop.f32.mrf.mxu0
        %3168 = vdwg.mxu0
        %v3169 = vadd.f32 %v2871, %v3043
        %v3170 = vadd.f32 %v2872, %v3046
        %v3171 = vadd.f32 %v2873, %v3051
        %v3172 = vadd.f32 %v2874, %v3054
        %v3173 = vadd.f32 %v2875, %v3059
        %v3174 = vadd.f32 %v2876, %v3062
        %v3175 = vadd.f32 %v2877, %v3067
        %v3176 = vadd.f32 %v2878, %v3070
        %v3177 = vadd.f32 %v2879, %v3075
        %v3178 = vadd.f32 %v2880, %v3078
        %v3179 = vadd.f32 %v2881, %v3083
        %v3180 = vadd.f32 %v2882, %v3086
        %v3181 = vadd.f32 %v2883, %v3091
        %v3182 = vadd.f32 %v2884, %v3094
        %v3183 = vadd.f32 %v2885, %v3099
        %v3184 = vadd.f32 %v2886, %v3102
        %v3185 = vadd.f32 %v2887, %v3107
        %v3186 = vadd.f32 %v2888, %v3110
        %v3187 = vadd.f32 %v2889, %v3115
        %v3188 = vadd.f32 %v2890, %v3118
        %v3189 = vadd.f32 %v2891, %v3123
        %v3190 = vadd.f32 %v2892, %v3126
        %v3191 = vadd.f32 %v2893, %v3131
        %v3192 = vadd.f32 %v2894, %v3134
        %v3193 = vadd.f32 %v2895, %v3139
        %v3194 = vadd.f32 %v2896, %v3142
        %v3195 = vadd.f32 %v2897, %v3147
        %v3196 = vadd.f32 %v2898, %v3150
        %v3197 = vadd.f32 %v2899, %v3155
        %v3198 = vadd.f32 %v2900, %v3158
        %v3199 = vadd.f32 %v2901, %v3163
        %v3200 = vadd.f32 %v2902, %v3166
        %s3201 = scalar_lea.vmem %s272, 48
        %v3202 = vld [vmem:[%s3201] sm:$0xff]
        %v3203 = vld [vmem:[%s3201 + $0x8] sm:$0xff]
        %v3204 = vld [vmem:[%s3201 + $0x18] sm:$0xff]
        %v3205 = vld [vmem:[%s3201 + $0x20] sm:$0xff]
        %v3206 = vld [vmem:[%s3201 + $0x30] sm:$0xff]
        %v3207 = vld [vmem:[%s3201 + $0x38] sm:$0xff]
        %v3208 = vld [vmem:[%s3201 + $0x48] sm:$0xff]
        %v3209 = vld [vmem:[%s3201 + $0x50] sm:$0xff]
        %v3210 = vld [vmem:[%s3201 + $0x60] sm:$0xff]
        %v3211 = vld [vmem:[%s3201 + $0x68] sm:$0xff]
        %v3212 = vld [vmem:[%s3201 + $0x78] sm:$0xff]
        %v3213 = vld [vmem:[%s3201 + $0x80] sm:$0xff]
        %v3214 = vld [vmem:[%s3201 + $0x90] sm:$0xff]
        %v3215 = vld [vmem:[%s3201 + $0x98] sm:$0xff]
        %v3216 = vld [vmem:[%s3201 + $0xa8] sm:$0xff]
        %v3217 = vld [vmem:[%s3201 + $0xb0] sm:$0xff]
        %v3218 = vld [vmem:[%s3201 + $0xc0] sm:$0xff]
        %v3219 = vld [vmem:[%s3201 + $0xc8] sm:$0xff]
        %v3220 = vld [vmem:[%s3201 + $0xd8] sm:$0xff]
        %v3221 = vld [vmem:[%s3201 + $0xe0] sm:$0xff]
        %v3222 = vld [vmem:[%s3201 + $0xf0] sm:$0xff]
        %v3223 = vld [vmem:[%s3201 + $0xf8] sm:$0xff]
        %v3224 = vld [vmem:[%s3201 + $0x108] sm:$0xff]
        %v3225 = vld [vmem:[%s3201 + $0x110] sm:$0xff]
        %v3226 = vld [vmem:[%s3201 + $0x120] sm:$0xff]
        %v3227 = vld [vmem:[%s3201 + $0x128] sm:$0xff]
        %v3228 = vld [vmem:[%s3201 + $0x138] sm:$0xff]
        %v3229 = vld [vmem:[%s3201 + $0x140] sm:$0xff]
        %v3230 = vld [vmem:[%s3201 + $0x150] sm:$0xff]
        %v3231 = vld [vmem:[%s3201 + $0x158] sm:$0xff]
        %v3232 = vld [vmem:[%s3201 + $0x168] sm:$0xff]
        %v3233 = vld [vmem:[%s3201 + $0x170] sm:$0xff]
        %v3234 = vpack.c.bf16 %v3203, %v3202
        %v3235 = vpack.c.bf16 %v3205, %v3204
        %v3236 = vpack.c.bf16 %v3207, %v3206
        %v3237 = vpack.c.bf16 %v3209, %v3208
        %v3238 = vpack.c.bf16 %v3211, %v3210
        %v3239 = vpack.c.bf16 %v3213, %v3212
        %v3240 = vpack.c.bf16 %v3215, %v3214
        %v3241 = vpack.c.bf16 %v3217, %v3216
        %v3242 = vpack.c.bf16 %v3219, %v3218
        %v3243 = vpack.c.bf16 %v3221, %v3220
        %v3244 = vpack.c.bf16 %v3223, %v3222
        %v3245 = vpack.c.bf16 %v3225, %v3224
        %v3246 = vpack.c.bf16 %v3227, %v3226
        %v3247 = vpack.c.bf16 %v3229, %v3228
        %v3248 = vpack.c.bf16 %v3231, %v3230
        %v3249 = vpack.c.bf16 %v3233, %v3232
        %s3250 = scalar_lea.vmem %s2, 80
        %v3251 = vld [vmem:[%s3250] sm:$0xf]
        %v3252 = vld [vmem:[%s3250 + $0x4] sm:$0xf]
        %v3255 = vunpack.c.l.b16 %v3251
        %v3256 = vunpack.c.l.b16 %v3252
        %v3257 = vpack.c.b16 %v3256, %v3255
        %v3260 = vsel %vm391, %v3234, 0
        %v3263 = vsel %vm391, %v3235, 0
        %v3266 = vsel %vm391, %v3236, 0
        %v3269 = vsel %vm391, %v3237, 0
        %v3272 = vsel %vm391, %v3238, 0
        %v3275 = vsel %vm391, %v3239, 0
        %v3278 = vsel %vm391, %v3240, 0
        %v3281 = vsel %vm391, %v3241, 0
        %v3284 = vsel %vm391, %v3242, 0
        %v3287 = vsel %vm391, %v3243, 0
        %v3290 = vsel %vm391, %v3244, 0
        %v3293 = vsel %vm391, %v3245, 0
        %v3296 = vsel %vm391, %v3246, 0
        %v3299 = vsel %vm391, %v3247, 0
        %v3302 = vsel %vm391, %v3248, 0
        %v3305 = vsel %vm391, %v3249, 0
        %3307 = vmatprep.subr.bf16.mxu0 0
        %3308 = vmatpush1.bf16.msra.mxu0 0
        %3309 = vmatprep.subr.bf16.mxu0 0
        %3310 = vmatpush1.bf16.msra.mxu0 0
        %3311 = vmatprep.subr.bf16.mxu0 0
        %3312 = vmatpush1.bf16.msra.mxu0 0
        %3313 = vmatprep.subr.bf16.mxu0 0
        %3314 = vmatpush1.bf16.msra.mxu0 0
        %3315 = vmatprep.subr.bf16.mxu0 0
        %3316 = vmatpush1.bf16.msra.mxu0 0
        %3317 = vmatprep.subr.bf16.mxu0 0
        %3318 = vmatpush1.bf16.msra.mxu0 0
        %3319 = vmatprep.subr.bf16.mxu0 0
        %3320 = vmatpush1.bf16.msra.mxu0 0
        %3321 = vmatprep.subr.bf16.mxu0 0
        %3322 = vmatpush1.bf16.msra.mxu0 %v3257
        %3323 = vmatprep.subr.bf16.mxu0 0
        %3324 = vmatpush2.bf16.msra.mxu0 0
        %3325 = vmatprep.subr.bf16.mxu0 0
        %3326 = vmatpush2.bf16.msra.mxu0 0
        %3327 = vmatprep.subr.bf16.mxu0 0
        %3328 = vmatpush2.bf16.msra.mxu0 0
        %3329 = vmatprep.subr.bf16.mxu0 0
        %3330 = vmatpush2.bf16.msra.mxu0 0
        %3331 = vmatprep.subr.bf16.mxu0 0
        %3332 = vmatpush2.bf16.msra.mxu0 0
        %3333 = vmatprep.subr.bf16.mxu0 0
        %3334 = vmatpush2.bf16.msra.mxu0 0
        %3335 = vmatprep.subr.bf16.mxu0 0
        %3336 = vmatpush2.bf16.msra.mxu0 0
        %3337 = vmatprep.subr.bf16.mxu0 0
        %3338 = vmatpush2.bf16.msra.mxu0 0
        %3339 = vmatprep.mubr.bf16.mxu0 0
        %3340 = vmatmul.mubr.bf16.gmra.mxu0 %v3260
        %v3341 = vpop.f32.mrf.mxu0
        %v3342 = vadd.f32 0.0, %v3341
        %v3343 = vpop.f32.mrf.mxu0
        %v3344 = vpop.f32.mrf.mxu0
        %v3345 = vadd.f32 0.0, %v3344
        %v3346 = vpop.f32.mrf.mxu0
        %3347 = vmatprep.mubr.bf16.mxu0 0
        %3348 = vmatmul.mubr.bf16.gmra.mxu0 %v3263
        %v3349 = vpop.f32.mrf.mxu0
        %v3350 = vadd.f32 0.0, %v3349
        %v3351 = vpop.f32.mrf.mxu0
        %v3352 = vpop.f32.mrf.mxu0
        %v3353 = vadd.f32 0.0, %v3352
        %v3354 = vpop.f32.mrf.mxu0
        %3355 = vmatprep.mubr.bf16.mxu0 0
        %3356 = vmatmul.mubr.bf16.gmra.mxu0 %v3266
        %v3357 = vpop.f32.mrf.mxu0
        %v3358 = vadd.f32 0.0, %v3357
        %v3359 = vpop.f32.mrf.mxu0
        %v3360 = vpop.f32.mrf.mxu0
        %v3361 = vadd.f32 0.0, %v3360
        %v3362 = vpop.f32.mrf.mxu0
        %3363 = vmatprep.mubr.bf16.mxu0 0
        %3364 = vmatmul.mubr.bf16.gmra.mxu0 %v3269
        %v3365 = vpop.f32.mrf.mxu0
        %v3366 = vadd.f32 0.0, %v3365
        %v3367 = vpop.f32.mrf.mxu0
        %v3368 = vpop.f32.mrf.mxu0
        %v3369 = vadd.f32 0.0, %v3368
        %v3370 = vpop.f32.mrf.mxu0
        %3371 = vmatprep.mubr.bf16.mxu0 0
        %3372 = vmatmul.mubr.bf16.gmra.mxu0 %v3272
        %v3373 = vpop.f32.mrf.mxu0
        %v3374 = vadd.f32 0.0, %v3373
        %v3375 = vpop.f32.mrf.mxu0
        %v3376 = vpop.f32.mrf.mxu0
        %v3377 = vadd.f32 0.0, %v3376
        %v3378 = vpop.f32.mrf.mxu0
        %3379 = vmatprep.mubr.bf16.mxu0 0
        %3380 = vmatmul.mubr.bf16.gmra.mxu0 %v3275
        %v3381 = vpop.f32.mrf.mxu0
        %v3382 = vadd.f32 0.0, %v3381
        %v3383 = vpop.f32.mrf.mxu0
        %v3384 = vpop.f32.mrf.mxu0
        %v3385 = vadd.f32 0.0, %v3384
        %v3386 = vpop.f32.mrf.mxu0
        %3387 = vmatprep.mubr.bf16.mxu0 0
        %3388 = vmatmul.mubr.bf16.gmra.mxu0 %v3278
        %v3389 = vpop.f32.mrf.mxu0
        %v3390 = vadd.f32 0.0, %v3389
        %v3391 = vpop.f32.mrf.mxu0
        %v3392 = vpop.f32.mrf.mxu0
        %v3393 = vadd.f32 0.0, %v3392
        %v3394 = vpop.f32.mrf.mxu0
        %3395 = vmatprep.mubr.bf16.mxu0 0
        %3396 = vmatmul.mubr.bf16.gmra.mxu0 %v3281
        %v3397 = vpop.f32.mrf.mxu0
        %v3398 = vadd.f32 0.0, %v3397
        %v3399 = vpop.f32.mrf.mxu0
        %v3400 = vpop.f32.mrf.mxu0
        %v3401 = vadd.f32 0.0, %v3400
        %v3402 = vpop.f32.mrf.mxu0
        %3403 = vmatprep.mubr.bf16.mxu0 0
        %3404 = vmatmul.mubr.bf16.gmra.mxu0 %v3284
        %v3405 = vpop.f32.mrf.mxu0
        %v3406 = vadd.f32 0.0, %v3405
        %v3407 = vpop.f32.mrf.mxu0
        %v3408 = vpop.f32.mrf.mxu0
        %v3409 = vadd.f32 0.0, %v3408
        %v3410 = vpop.f32.mrf.mxu0
        %3411 = vmatprep.mubr.bf16.mxu0 0
        %3412 = vmatmul.mubr.bf16.gmra.mxu0 %v3287
        %v3413 = vpop.f32.mrf.mxu0
        %v3414 = vadd.f32 0.0, %v3413
        %v3415 = vpop.f32.mrf.mxu0
        %v3416 = vpop.f32.mrf.mxu0
        %v3417 = vadd.f32 0.0, %v3416
        %v3418 = vpop.f32.mrf.mxu0
        %3419 = vmatprep.mubr.bf16.mxu0 0
        %3420 = vmatmul.mubr.bf16.gmra.mxu0 %v3290
        %v3421 = vpop.f32.mrf.mxu0
        %v3422 = vadd.f32 0.0, %v3421
        %v3423 = vpop.f32.mrf.mxu0
        %v3424 = vpop.f32.mrf.mxu0
        %v3425 = vadd.f32 0.0, %v3424
        %v3426 = vpop.f32.mrf.mxu0
        %3427 = vmatprep.mubr.bf16.mxu0 0
        %3428 = vmatmul.mubr.bf16.gmra.mxu0 %v3293
        %v3429 = vpop.f32.mrf.mxu0
        %v3430 = vadd.f32 0.0, %v3429
        %v3431 = vpop.f32.mrf.mxu0
        %v3432 = vpop.f32.mrf.mxu0
        %v3433 = vadd.f32 0.0, %v3432
        %v3434 = vpop.f32.mrf.mxu0
        %3435 = vmatprep.mubr.bf16.mxu0 0
        %3436 = vmatmul.mubr.bf16.gmra.mxu0 %v3296
        %v3437 = vpop.f32.mrf.mxu0
        %v3438 = vadd.f32 0.0, %v3437
        %v3439 = vpop.f32.mrf.mxu0
        %v3440 = vpop.f32.mrf.mxu0
        %v3441 = vadd.f32 0.0, %v3440
        %v3442 = vpop.f32.mrf.mxu0
        %3443 = vmatprep.mubr.bf16.mxu0 0
        %3444 = vmatmul.mubr.bf16.gmra.mxu0 %v3299
        %v3445 = vpop.f32.mrf.mxu0
        %v3446 = vadd.f32 0.0, %v3445
        %v3447 = vpop.f32.mrf.mxu0
        %v3448 = vpop.f32.mrf.mxu0
        %v3449 = vadd.f32 0.0, %v3448
        %v3450 = vpop.f32.mrf.mxu0
        %3451 = vmatprep.mubr.bf16.mxu0 0
        %3452 = vmatmul.mubr.bf16.gmra.mxu0 %v3302
        %v3453 = vpop.f32.mrf.mxu0
        %v3454 = vadd.f32 0.0, %v3453
        %v3455 = vpop.f32.mrf.mxu0
        %v3456 = vpop.f32.mrf.mxu0
        %v3457 = vadd.f32 0.0, %v3456
        %v3458 = vpop.f32.mrf.mxu0
        %3459 = vmatprep.mubr.bf16.mxu0 0
        %3460 = vmatmul.mubr.bf16.gmra.mxu0 %v3305
        %v3461 = vpop.f32.mrf.mxu0
        %v3462 = vadd.f32 0.0, %v3461
        %v3463 = vpop.f32.mrf.mxu0
        %v3464 = vpop.f32.mrf.mxu0
        %v3465 = vadd.f32 0.0, %v3464
        %v3466 = vpop.f32.mrf.mxu0
        %3467 = vdwg.mxu0
        %v3468 = vadd.f32 %v3169, %v3342
        %v3469 = vadd.f32 %v3170, %v3345
        %v3470 = vadd.f32 %v3171, %v3350
        %v3471 = vadd.f32 %v3172, %v3353
        %v3472 = vadd.f32 %v3173, %v3358
        %v3473 = vadd.f32 %v3174, %v3361
        %v3474 = vadd.f32 %v3175, %v3366
        %v3475 = vadd.f32 %v3176, %v3369
        %v3476 = vadd.f32 %v3177, %v3374
        %v3477 = vadd.f32 %v3178, %v3377
        %v3478 = vadd.f32 %v3179, %v3382
        %v3479 = vadd.f32 %v3180, %v3385
        %v3480 = vadd.f32 %v3181, %v3390
        %v3481 = vadd.f32 %v3182, %v3393
        %v3482 = vadd.f32 %v3183, %v3398
        %v3483 = vadd.f32 %v3184, %v3401
        %v3484 = vadd.f32 %v3185, %v3406
        %v3485 = vadd.f32 %v3186, %v3409
        %v3486 = vadd.f32 %v3187, %v3414
        %v3487 = vadd.f32 %v3188, %v3417
        %v3488 = vadd.f32 %v3189, %v3422
        %v3489 = vadd.f32 %v3190, %v3425
        %v3490 = vadd.f32 %v3191, %v3430
        %v3491 = vadd.f32 %v3192, %v3433
        %v3492 = vadd.f32 %v3193, %v3438
        %v3493 = vadd.f32 %v3194, %v3441
        %v3494 = vadd.f32 %v3195, %v3446
        %v3495 = vadd.f32 %v3196, %v3449
        %v3496 = vadd.f32 %v3197, %v3454
        %v3497 = vadd.f32 %v3198, %v3457
        %v3498 = vadd.f32 %v3199, %v3462
        %v3499 = vadd.f32 %v3200, %v3465
        %v3500 = vld [vmem:[%s3201 + $0x1] sm:$0xff]
        %v3501 = vld [vmem:[%s3201 + $0x9] sm:$0xff]
        %v3502 = vld [vmem:[%s3201 + $0x19] sm:$0xff]
        %v3503 = vld [vmem:[%s3201 + $0x21] sm:$0xff]
        %v3504 = vld [vmem:[%s3201 + $0x31] sm:$0xff]
        %v3505 = vld [vmem:[%s3201 + $0x39] sm:$0xff]
        %v3506 = vld [vmem:[%s3201 + $0x49] sm:$0xff]
        %v3507 = vld [vmem:[%s3201 + $0x51] sm:$0xff]
        %v3508 = vld [vmem:[%s3201 + $0x61] sm:$0xff]
        %v3509 = vld [vmem:[%s3201 + $0x69] sm:$0xff]
        %v3510 = vld [vmem:[%s3201 + $0x79] sm:$0xff]
        %v3511 = vld [vmem:[%s3201 + $0x81] sm:$0xff]
        %v3512 = vld [vmem:[%s3201 + $0x91] sm:$0xff]
        %v3513 = vld [vmem:[%s3201 + $0x99] sm:$0xff]
        %v3514 = vld [vmem:[%s3201 + $0xa9] sm:$0xff]
        %v3515 = vld [vmem:[%s3201 + $0xb1] sm:$0xff]
        %v3516 = vld [vmem:[%s3201 + $0xc1] sm:$0xff]
        %v3517 = vld [vmem:[%s3201 + $0xc9] sm:$0xff]
        %v3518 = vld [vmem:[%s3201 + $0xd9] sm:$0xff]
        %v3519 = vld [vmem:[%s3201 + $0xe1] sm:$0xff]
        %v3520 = vld [vmem:[%s3201 + $0xf1] sm:$0xff]
        %v3521 = vld [vmem:[%s3201 + $0xf9] sm:$0xff]
        %v3522 = vld [vmem:[%s3201 + $0x109] sm:$0xff]
        %v3523 = vld [vmem:[%s3201 + $0x111] sm:$0xff]
        %v3524 = vld [vmem:[%s3201 + $0x121] sm:$0xff]
        %v3525 = vld [vmem:[%s3201 + $0x129] sm:$0xff]
        %v3526 = vld [vmem:[%s3201 + $0x139] sm:$0xff]
        %v3527 = vld [vmem:[%s3201 + $0x141] sm:$0xff]
        %v3528 = vld [vmem:[%s3201 + $0x151] sm:$0xff]
        %v3529 = vld [vmem:[%s3201 + $0x159] sm:$0xff]
        %v3530 = vld [vmem:[%s3201 + $0x169] sm:$0xff]
        %v3531 = vld [vmem:[%s3201 + $0x171] sm:$0xff]
        %v3532 = vpack.c.bf16 %v3501, %v3500
        %v3533 = vpack.c.bf16 %v3503, %v3502
        %v3534 = vpack.c.bf16 %v3505, %v3504
        %v3535 = vpack.c.bf16 %v3507, %v3506
        %v3536 = vpack.c.bf16 %v3509, %v3508
        %v3537 = vpack.c.bf16 %v3511, %v3510
        %v3538 = vpack.c.bf16 %v3513, %v3512
        %v3539 = vpack.c.bf16 %v3515, %v3514
        %v3540 = vpack.c.bf16 %v3517, %v3516
        %v3541 = vpack.c.bf16 %v3519, %v3518
        %v3542 = vpack.c.bf16 %v3521, %v3520
        %v3543 = vpack.c.bf16 %v3523, %v3522
        %v3544 = vpack.c.bf16 %v3525, %v3524
        %v3545 = vpack.c.bf16 %v3527, %v3526
        %v3546 = vpack.c.bf16 %v3529, %v3528
        %v3547 = vpack.c.bf16 %v3531, %v3530
        %s3548 = scalar_lea.vmem %s2, 88
        %v3549 = vld [vmem:[%s3548] sm:$0xf]
        %v3550 = vld [vmem:[%s3548 + $0x4] sm:$0xf]
        %v3553 = vunpack.c.l.b16 %v3549
        %v3554 = vunpack.c.l.b16 %v3550
        %v3555 = vpack.c.b16 %v3554, %v3553
        %v3558 = vsel %vm391, %v3532, 0
        %v3561 = vsel %vm391, %v3533, 0
        %v3564 = vsel %vm391, %v3534, 0
        %v3567 = vsel %vm391, %v3535, 0
        %v3570 = vsel %vm391, %v3536, 0
        %v3573 = vsel %vm391, %v3537, 0
        %v3576 = vsel %vm391, %v3538, 0
        %v3579 = vsel %vm391, %v3539, 0
        %v3582 = vsel %vm391, %v3540, 0
        %v3585 = vsel %vm391, %v3541, 0
        %v3588 = vsel %vm391, %v3542, 0
        %v3591 = vsel %vm391, %v3543, 0
        %v3594 = vsel %vm391, %v3544, 0
        %v3597 = vsel %vm391, %v3545, 0
        %v3600 = vsel %vm391, %v3546, 0
        %v3603 = vsel %vm391, %v3547, 0
        %3605 = vmatprep.subr.bf16.mxu0 0
        %3606 = vmatpush1.bf16.msra.mxu0 0
        %3607 = vmatprep.subr.bf16.mxu0 0
        %3608 = vmatpush1.bf16.msra.mxu0 0
        %3609 = vmatprep.subr.bf16.mxu0 0
        %3610 = vmatpush1.bf16.msra.mxu0 0
        %3611 = vmatprep.subr.bf16.mxu0 0
        %3612 = vmatpush1.bf16.msra.mxu0 0
        %3613 = vmatprep.subr.bf16.mxu0 0
        %3614 = vmatpush1.bf16.msra.mxu0 0
        %3615 = vmatprep.subr.bf16.mxu0 0
        %3616 = vmatpush1.bf16.msra.mxu0 0
        %3617 = vmatprep.subr.bf16.mxu0 0
        %3618 = vmatpush1.bf16.msra.mxu0 0
        %3619 = vmatprep.subr.bf16.mxu0 0
        %3620 = vmatpush1.bf16.msra.mxu0 %v3555
        %3621 = vmatprep.subr.bf16.mxu0 0
        %3622 = vmatpush2.bf16.msra.mxu0 0
        %3623 = vmatprep.subr.bf16.mxu0 0
        %3624 = vmatpush2.bf16.msra.mxu0 0
        %3625 = vmatprep.subr.bf16.mxu0 0
        %3626 = vmatpush2.bf16.msra.mxu0 0
        %3627 = vmatprep.subr.bf16.mxu0 0
        %3628 = vmatpush2.bf16.msra.mxu0 0
        %3629 = vmatprep.subr.bf16.mxu0 0
        %3630 = vmatpush2.bf16.msra.mxu0 0
        %3631 = vmatprep.subr.bf16.mxu0 0
        %3632 = vmatpush2.bf16.msra.mxu0 0
        %3633 = vmatprep.subr.bf16.mxu0 0
        %3634 = vmatpush2.bf16.msra.mxu0 0
        %3635 = vmatprep.subr.bf16.mxu0 0
        %3636 = vmatpush2.bf16.msra.mxu0 0
        %3637 = vmatprep.mubr.bf16.mxu0 0
        %3638 = vmatmul.mubr.bf16.gmra.mxu0 %v3558
        %v3639 = vpop.f32.mrf.mxu0
        %v3640 = vadd.f32 0.0, %v3639
        %v3641 = vpop.f32.mrf.mxu0
        %v3642 = vpop.f32.mrf.mxu0
        %v3643 = vadd.f32 0.0, %v3642
        %v3644 = vpop.f32.mrf.mxu0
        %3645 = vmatprep.mubr.bf16.mxu0 0
        %3646 = vmatmul.mubr.bf16.gmra.mxu0 %v3561
        %v3647 = vpop.f32.mrf.mxu0
        %v3648 = vadd.f32 0.0, %v3647
        %v3649 = vpop.f32.mrf.mxu0
        %v3650 = vpop.f32.mrf.mxu0
        %v3651 = vadd.f32 0.0, %v3650
        %v3652 = vpop.f32.mrf.mxu0
        %3653 = vmatprep.mubr.bf16.mxu0 0
        %3654 = vmatmul.mubr.bf16.gmra.mxu0 %v3564
        %v3655 = vpop.f32.mrf.mxu0
        %v3656 = vadd.f32 0.0, %v3655
        %v3657 = vpop.f32.mrf.mxu0
        %v3658 = vpop.f32.mrf.mxu0
        %v3659 = vadd.f32 0.0, %v3658
        %v3660 = vpop.f32.mrf.mxu0
        %3661 = vmatprep.mubr.bf16.mxu0 0
        %3662 = vmatmul.mubr.bf16.gmra.mxu0 %v3567
        %v3663 = vpop.f32.mrf.mxu0
        %v3664 = vadd.f32 0.0, %v3663
        %v3665 = vpop.f32.mrf.mxu0
        %v3666 = vpop.f32.mrf.mxu0
        %v3667 = vadd.f32 0.0, %v3666
        %v3668 = vpop.f32.mrf.mxu0
        %3669 = vmatprep.mubr.bf16.mxu0 0
        %3670 = vmatmul.mubr.bf16.gmra.mxu0 %v3570
        %v3671 = vpop.f32.mrf.mxu0
        %v3672 = vadd.f32 0.0, %v3671
        %v3673 = vpop.f32.mrf.mxu0
        %v3674 = vpop.f32.mrf.mxu0
        %v3675 = vadd.f32 0.0, %v3674
        %v3676 = vpop.f32.mrf.mxu0
        %3677 = vmatprep.mubr.bf16.mxu0 0
        %3678 = vmatmul.mubr.bf16.gmra.mxu0 %v3573
        %v3679 = vpop.f32.mrf.mxu0
        %v3680 = vadd.f32 0.0, %v3679
        %v3681 = vpop.f32.mrf.mxu0
        %v3682 = vpop.f32.mrf.mxu0
        %v3683 = vadd.f32 0.0, %v3682
        %v3684 = vpop.f32.mrf.mxu0
        %3685 = vmatprep.mubr.bf16.mxu0 0
        %3686 = vmatmul.mubr.bf16.gmra.mxu0 %v3576
        %v3687 = vpop.f32.mrf.mxu0
        %v3688 = vadd.f32 0.0, %v3687
        %v3689 = vpop.f32.mrf.mxu0
        %v3690 = vpop.f32.mrf.mxu0
        %v3691 = vadd.f32 0.0, %v3690
        %v3692 = vpop.f32.mrf.mxu0
        %3693 = vmatprep.mubr.bf16.mxu0 0
        %3694 = vmatmul.mubr.bf16.gmra.mxu0 %v3579
        %v3695 = vpop.f32.mrf.mxu0
        %v3696 = vadd.f32 0.0, %v3695
        %v3697 = vpop.f32.mrf.mxu0
        %v3698 = vpop.f32.mrf.mxu0
        %v3699 = vadd.f32 0.0, %v3698
        %v3700 = vpop.f32.mrf.mxu0
        %3701 = vmatprep.mubr.bf16.mxu0 0
        %3702 = vmatmul.mubr.bf16.gmra.mxu0 %v3582
        %v3703 = vpop.f32.mrf.mxu0
        %v3704 = vadd.f32 0.0, %v3703
        %v3705 = vpop.f32.mrf.mxu0
        %v3706 = vpop.f32.mrf.mxu0
        %v3707 = vadd.f32 0.0, %v3706
        %v3708 = vpop.f32.mrf.mxu0
        %3709 = vmatprep.mubr.bf16.mxu0 0
        %3710 = vmatmul.mubr.bf16.gmra.mxu0 %v3585
        %v3711 = vpop.f32.mrf.mxu0
        %v3712 = vadd.f32 0.0, %v3711
        %v3713 = vpop.f32.mrf.mxu0
        %v3714 = vpop.f32.mrf.mxu0
        %v3715 = vadd.f32 0.0, %v3714
        %v3716 = vpop.f32.mrf.mxu0
        %3717 = vmatprep.mubr.bf16.mxu0 0
        %3718 = vmatmul.mubr.bf16.gmra.mxu0 %v3588
        %v3719 = vpop.f32.mrf.mxu0
        %v3720 = vadd.f32 0.0, %v3719
        %v3721 = vpop.f32.mrf.mxu0
        %v3722 = vpop.f32.mrf.mxu0
        %v3723 = vadd.f32 0.0, %v3722
        %v3724 = vpop.f32.mrf.mxu0
        %3725 = vmatprep.mubr.bf16.mxu0 0
        %3726 = vmatmul.mubr.bf16.gmra.mxu0 %v3591
        %v3727 = vpop.f32.mrf.mxu0
        %v3728 = vadd.f32 0.0, %v3727
        %v3729 = vpop.f32.mrf.mxu0
        %v3730 = vpop.f32.mrf.mxu0
        %v3731 = vadd.f32 0.0, %v3730
        %v3732 = vpop.f32.mrf.mxu0
        %3733 = vmatprep.mubr.bf16.mxu0 0
        %3734 = vmatmul.mubr.bf16.gmra.mxu0 %v3594
        %v3735 = vpop.f32.mrf.mxu0
        %v3736 = vadd.f32 0.0, %v3735
        %v3737 = vpop.f32.mrf.mxu0
        %v3738 = vpop.f32.mrf.mxu0
        %v3739 = vadd.f32 0.0, %v3738
        %v3740 = vpop.f32.mrf.mxu0
        %3741 = vmatprep.mubr.bf16.mxu0 0
        %3742 = vmatmul.mubr.bf16.gmra.mxu0 %v3597
        %v3743 = vpop.f32.mrf.mxu0
        %v3744 = vadd.f32 0.0, %v3743
        %v3745 = vpop.f32.mrf.mxu0
        %v3746 = vpop.f32.mrf.mxu0
        %v3747 = vadd.f32 0.0, %v3746
        %v3748 = vpop.f32.mrf.mxu0
        %3749 = vmatprep.mubr.bf16.mxu0 0
        %3750 = vmatmul.mubr.bf16.gmra.mxu0 %v3600
        %v3751 = vpop.f32.mrf.mxu0
        %v3752 = vadd.f32 0.0, %v3751
        %v3753 = vpop.f32.mrf.mxu0
        %v3754 = vpop.f32.mrf.mxu0
        %v3755 = vadd.f32 0.0, %v3754
        %v3756 = vpop.f32.mrf.mxu0
        %3757 = vmatprep.mubr.bf16.mxu0 0
        %3758 = vmatmul.mubr.bf16.gmra.mxu0 %v3603
        %v3759 = vpop.f32.mrf.mxu0
        %v3760 = vadd.f32 0.0, %v3759
        %v3761 = vpop.f32.mrf.mxu0
        %v3762 = vpop.f32.mrf.mxu0
        %v3763 = vadd.f32 0.0, %v3762
        %v3764 = vpop.f32.mrf.mxu0
        %3765 = vdwg.mxu0
        %v3766 = vadd.f32 %v3468, %v3640
        %v3767 = vadd.f32 %v3469, %v3643
        %v3768 = vadd.f32 %v3470, %v3648
        %v3769 = vadd.f32 %v3471, %v3651
        %v3770 = vadd.f32 %v3472, %v3656
        %v3771 = vadd.f32 %v3473, %v3659
        %v3772 = vadd.f32 %v3474, %v3664
        %v3773 = vadd.f32 %v3475, %v3667
        %v3774 = vadd.f32 %v3476, %v3672
        %v3775 = vadd.f32 %v3477, %v3675
        %v3776 = vadd.f32 %v3478, %v3680
        %v3777 = vadd.f32 %v3479, %v3683
        %v3778 = vadd.f32 %v3480, %v3688
        %v3779 = vadd.f32 %v3481, %v3691
        %v3780 = vadd.f32 %v3482, %v3696
        %v3781 = vadd.f32 %v3483, %v3699
        %v3782 = vadd.f32 %v3484, %v3704
        %v3783 = vadd.f32 %v3485, %v3707
        %v3784 = vadd.f32 %v3486, %v3712
        %v3785 = vadd.f32 %v3487, %v3715
        %v3786 = vadd.f32 %v3488, %v3720
        %v3787 = vadd.f32 %v3489, %v3723
        %v3788 = vadd.f32 %v3490, %v3728
        %v3789 = vadd.f32 %v3491, %v3731
        %v3790 = vadd.f32 %v3492, %v3736
        %v3791 = vadd.f32 %v3493, %v3739
        %v3792 = vadd.f32 %v3494, %v3744
        %v3793 = vadd.f32 %v3495, %v3747
        %v3794 = vadd.f32 %v3496, %v3752
        %v3795 = vadd.f32 %v3497, %v3755
        %v3796 = vadd.f32 %v3498, %v3760
        %v3797 = vadd.f32 %v3499, %v3763
        %v3798 = vld [vmem:[%s3201 + $0x2] sm:$0xff]
        %v3799 = vld [vmem:[%s3201 + $0xa] sm:$0xff]
        %v3800 = vld [vmem:[%s3201 + $0x1a] sm:$0xff]
        %v3801 = vld [vmem:[%s3201 + $0x22] sm:$0xff]
        %v3802 = vld [vmem:[%s3201 + $0x32] sm:$0xff]
        %v3803 = vld [vmem:[%s3201 + $0x3a] sm:$0xff]
        %v3804 = vld [vmem:[%s3201 + $0x4a] sm:$0xff]
        %v3805 = vld [vmem:[%s3201 + $0x52] sm:$0xff]
        %v3806 = vld [vmem:[%s3201 + $0x62] sm:$0xff]
        %v3807 = vld [vmem:[%s3201 + $0x6a] sm:$0xff]
        %v3808 = vld [vmem:[%s3201 + $0x7a] sm:$0xff]
        %v3809 = vld [vmem:[%s3201 + $0x82] sm:$0xff]
        %v3810 = vld [vmem:[%s3201 + $0x92] sm:$0xff]
        %v3811 = vld [vmem:[%s3201 + $0x9a] sm:$0xff]
        %v3812 = vld [vmem:[%s3201 + $0xaa] sm:$0xff]
        %v3813 = vld [vmem:[%s3201 + $0xb2] sm:$0xff]
        %v3814 = vld [vmem:[%s3201 + $0xc2] sm:$0xff]
        %v3815 = vld [vmem:[%s3201 + $0xca] sm:$0xff]
        %v3816 = vld [vmem:[%s3201 + $0xda] sm:$0xff]
        %v3817 = vld [vmem:[%s3201 + $0xe2] sm:$0xff]
        %v3818 = vld [vmem:[%s3201 + $0xf2] sm:$0xff]
        %v3819 = vld [vmem:[%s3201 + $0xfa] sm:$0xff]
        %v3820 = vld [vmem:[%s3201 + $0x10a] sm:$0xff]
        %v3821 = vld [vmem:[%s3201 + $0x112] sm:$0xff]
        %v3822 = vld [vmem:[%s3201 + $0x122] sm:$0xff]
        %v3823 = vld [vmem:[%s3201 + $0x12a] sm:$0xff]
        %v3824 = vld [vmem:[%s3201 + $0x13a] sm:$0xff]
        %v3825 = vld [vmem:[%s3201 + $0x142] sm:$0xff]
        %v3826 = vld [vmem:[%s3201 + $0x152] sm:$0xff]
        %v3827 = vld [vmem:[%s3201 + $0x15a] sm:$0xff]
        %v3828 = vld [vmem:[%s3201 + $0x16a] sm:$0xff]
        %v3829 = vld [vmem:[%s3201 + $0x172] sm:$0xff]
        %v3830 = vpack.c.bf16 %v3799, %v3798
        %v3831 = vpack.c.bf16 %v3801, %v3800
        %v3832 = vpack.c.bf16 %v3803, %v3802
        %v3833 = vpack.c.bf16 %v3805, %v3804
        %v3834 = vpack.c.bf16 %v3807, %v3806
        %v3835 = vpack.c.bf16 %v3809, %v3808
        %v3836 = vpack.c.bf16 %v3811, %v3810
        %v3837 = vpack.c.bf16 %v3813, %v3812
        %v3838 = vpack.c.bf16 %v3815, %v3814
        %v3839 = vpack.c.bf16 %v3817, %v3816
        %v3840 = vpack.c.bf16 %v3819, %v3818
        %v3841 = vpack.c.bf16 %v3821, %v3820
        %v3842 = vpack.c.bf16 %v3823, %v3822
        %v3843 = vpack.c.bf16 %v3825, %v3824
        %v3844 = vpack.c.bf16 %v3827, %v3826
        %v3845 = vpack.c.bf16 %v3829, %v3828
        %s3846 = scalar_lea.vmem %s2, 96
        %v3847 = vld [vmem:[%s3846] sm:$0xf]
        %v3848 = vld [vmem:[%s3846 + $0x4] sm:$0xf]
        %v3851 = vunpack.c.l.b16 %v3847
        %v3852 = vunpack.c.l.b16 %v3848
        %v3853 = vpack.c.b16 %v3852, %v3851
        %v3856 = vsel %vm391, %v3830, 0
        %v3859 = vsel %vm391, %v3831, 0
        %v3862 = vsel %vm391, %v3832, 0
        %v3865 = vsel %vm391, %v3833, 0
        %v3868 = vsel %vm391, %v3834, 0
        %v3871 = vsel %vm391, %v3835, 0
        %v3874 = vsel %vm391, %v3836, 0
        %v3877 = vsel %vm391, %v3837, 0
        %v3880 = vsel %vm391, %v3838, 0
        %v3883 = vsel %vm391, %v3839, 0
        %v3886 = vsel %vm391, %v3840, 0
        %v3889 = vsel %vm391, %v3841, 0
        %v3892 = vsel %vm391, %v3842, 0
        %v3895 = vsel %vm391, %v3843, 0
        %v3898 = vsel %vm391, %v3844, 0
        %v3901 = vsel %vm391, %v3845, 0
        %3903 = vmatprep.subr.bf16.mxu0 0
        %3904 = vmatpush1.bf16.msra.mxu0 0
        %3905 = vmatprep.subr.bf16.mxu0 0
        %3906 = vmatpush1.bf16.msra.mxu0 0
        %3907 = vmatprep.subr.bf16.mxu0 0
        %3908 = vmatpush1.bf16.msra.mxu0 0
        %3909 = vmatprep.subr.bf16.mxu0 0
        %3910 = vmatpush1.bf16.msra.mxu0 0
        %3911 = vmatprep.subr.bf16.mxu0 0
        %3912 = vmatpush1.bf16.msra.mxu0 0
        %3913 = vmatprep.subr.bf16.mxu0 0
        %3914 = vmatpush1.bf16.msra.mxu0 0
        %3915 = vmatprep.subr.bf16.mxu0 0
        %3916 = vmatpush1.bf16.msra.mxu0 0
        %3917 = vmatprep.subr.bf16.mxu0 0
        %3918 = vmatpush1.bf16.msra.mxu0 %v3853
        %3919 = vmatprep.subr.bf16.mxu0 0
        %3920 = vmatpush2.bf16.msra.mxu0 0
        %3921 = vmatprep.subr.bf16.mxu0 0
        %3922 = vmatpush2.bf16.msra.mxu0 0
        %3923 = vmatprep.subr.bf16.mxu0 0
        %3924 = vmatpush2.bf16.msra.mxu0 0
        %3925 = vmatprep.subr.bf16.mxu0 0
        %3926 = vmatpush2.bf16.msra.mxu0 0
        %3927 = vmatprep.subr.bf16.mxu0 0
        %3928 = vmatpush2.bf16.msra.mxu0 0
        %3929 = vmatprep.subr.bf16.mxu0 0
        %3930 = vmatpush2.bf16.msra.mxu0 0
        %3931 = vmatprep.subr.bf16.mxu0 0
        %3932 = vmatpush2.bf16.msra.mxu0 0
        %3933 = vmatprep.subr.bf16.mxu0 0
        %3934 = vmatpush2.bf16.msra.mxu0 0
        %3935 = vmatprep.mubr.bf16.mxu0 0
        %3936 = vmatmul.mubr.bf16.gmra.mxu0 %v3856
        %v3937 = vpop.f32.mrf.mxu0
        %v3938 = vadd.f32 0.0, %v3937
        %v3939 = vpop.f32.mrf.mxu0
        %v3940 = vpop.f32.mrf.mxu0
        %v3941 = vadd.f32 0.0, %v3940
        %v3942 = vpop.f32.mrf.mxu0
        %3943 = vmatprep.mubr.bf16.mxu0 0
        %3944 = vmatmul.mubr.bf16.gmra.mxu0 %v3859
        %v3945 = vpop.f32.mrf.mxu0
        %v3946 = vadd.f32 0.0, %v3945
        %v3947 = vpop.f32.mrf.mxu0
        %v3948 = vpop.f32.mrf.mxu0
        %v3949 = vadd.f32 0.0, %v3948
        %v3950 = vpop.f32.mrf.mxu0
        %3951 = vmatprep.mubr.bf16.mxu0 0
        %3952 = vmatmul.mubr.bf16.gmra.mxu0 %v3862
        %v3953 = vpop.f32.mrf.mxu0
        %v3954 = vadd.f32 0.0, %v3953
        %v3955 = vpop.f32.mrf.mxu0
        %v3956 = vpop.f32.mrf.mxu0
        %v3957 = vadd.f32 0.0, %v3956
        %v3958 = vpop.f32.mrf.mxu0
        %3959 = vmatprep.mubr.bf16.mxu0 0
        %3960 = vmatmul.mubr.bf16.gmra.mxu0 %v3865
        %v3961 = vpop.f32.mrf.mxu0
        %v3962 = vadd.f32 0.0, %v3961
        %v3963 = vpop.f32.mrf.mxu0
        %v3964 = vpop.f32.mrf.mxu0
        %v3965 = vadd.f32 0.0, %v3964
        %v3966 = vpop.f32.mrf.mxu0
        %3967 = vmatprep.mubr.bf16.mxu0 0
        %3968 = vmatmul.mubr.bf16.gmra.mxu0 %v3868
        %v3969 = vpop.f32.mrf.mxu0
        %v3970 = vadd.f32 0.0, %v3969
        %v3971 = vpop.f32.mrf.mxu0
        %v3972 = vpop.f32.mrf.mxu0
        %v3973 = vadd.f32 0.0, %v3972
        %v3974 = vpop.f32.mrf.mxu0
        %3975 = vmatprep.mubr.bf16.mxu0 0
        %3976 = vmatmul.mubr.bf16.gmra.mxu0 %v3871
        %v3977 = vpop.f32.mrf.mxu0
        %v3978 = vadd.f32 0.0, %v3977
        %v3979 = vpop.f32.mrf.mxu0
        %v3980 = vpop.f32.mrf.mxu0
        %v3981 = vadd.f32 0.0, %v3980
        %v3982 = vpop.f32.mrf.mxu0
        %3983 = vmatprep.mubr.bf16.mxu0 0
        %3984 = vmatmul.mubr.bf16.gmra.mxu0 %v3874
        %v3985 = vpop.f32.mrf.mxu0
        %v3986 = vadd.f32 0.0, %v3985
        %v3987 = vpop.f32.mrf.mxu0
        %v3988 = vpop.f32.mrf.mxu0
        %v3989 = vadd.f32 0.0, %v3988
        %v3990 = vpop.f32.mrf.mxu0
        %3991 = vmatprep.mubr.bf16.mxu0 0
        %3992 = vmatmul.mubr.bf16.gmra.mxu0 %v3877
        %v3993 = vpop.f32.mrf.mxu0
        %v3994 = vadd.f32 0.0, %v3993
        %v3995 = vpop.f32.mrf.mxu0
        %v3996 = vpop.f32.mrf.mxu0
        %v3997 = vadd.f32 0.0, %v3996
        %v3998 = vpop.f32.mrf.mxu0
        %3999 = vmatprep.mubr.bf16.mxu0 0
        %4000 = vmatmul.mubr.bf16.gmra.mxu0 %v3880
        %v4001 = vpop.f32.mrf.mxu0
        %v4002 = vadd.f32 0.0, %v4001
        %v4003 = vpop.f32.mrf.mxu0
        %v4004 = vpop.f32.mrf.mxu0
        %v4005 = vadd.f32 0.0, %v4004
        %v4006 = vpop.f32.mrf.mxu0
        %4007 = vmatprep.mubr.bf16.mxu0 0
        %4008 = vmatmul.mubr.bf16.gmra.mxu0 %v3883
        %v4009 = vpop.f32.mrf.mxu0
        %v4010 = vadd.f32 0.0, %v4009
        %v4011 = vpop.f32.mrf.mxu0
        %v4012 = vpop.f32.mrf.mxu0
        %v4013 = vadd.f32 0.0, %v4012
        %v4014 = vpop.f32.mrf.mxu0
        %4015 = vmatprep.mubr.bf16.mxu0 0
        %4016 = vmatmul.mubr.bf16.gmra.mxu0 %v3886
        %v4017 = vpop.f32.mrf.mxu0
        %v4018 = vadd.f32 0.0, %v4017
        %v4019 = vpop.f32.mrf.mxu0
        %v4020 = vpop.f32.mrf.mxu0
        %v4021 = vadd.f32 0.0, %v4020
        %v4022 = vpop.f32.mrf.mxu0
        %4023 = vmatprep.mubr.bf16.mxu0 0
        %4024 = vmatmul.mubr.bf16.gmra.mxu0 %v3889
        %v4025 = vpop.f32.mrf.mxu0
        %v4026 = vadd.f32 0.0, %v4025
        %v4027 = vpop.f32.mrf.mxu0
        %v4028 = vpop.f32.mrf.mxu0
        %v4029 = vadd.f32 0.0, %v4028
        %v4030 = vpop.f32.mrf.mxu0
        %4031 = vmatprep.mubr.bf16.mxu0 0
        %4032 = vmatmul.mubr.bf16.gmra.mxu0 %v3892
        %v4033 = vpop.f32.mrf.mxu0
        %v4034 = vadd.f32 0.0, %v4033
        %v4035 = vpop.f32.mrf.mxu0
        %v4036 = vpop.f32.mrf.mxu0
        %v4037 = vadd.f32 0.0, %v4036
        %v4038 = vpop.f32.mrf.mxu0
        %4039 = vmatprep.mubr.bf16.mxu0 0
        %4040 = vmatmul.mubr.bf16.gmra.mxu0 %v3895
        %v4041 = vpop.f32.mrf.mxu0
        %v4042 = vadd.f32 0.0, %v4041
        %v4043 = vpop.f32.mrf.mxu0
        %v4044 = vpop.f32.mrf.mxu0
        %v4045 = vadd.f32 0.0, %v4044
        %v4046 = vpop.f32.mrf.mxu0
        %4047 = vmatprep.mubr.bf16.mxu0 0
        %4048 = vmatmul.mubr.bf16.gmra.mxu0 %v3898
        %v4049 = vpop.f32.mrf.mxu0
        %v4050 = vadd.f32 0.0, %v4049
        %v4051 = vpop.f32.mrf.mxu0
        %v4052 = vpop.f32.mrf.mxu0
        %v4053 = vadd.f32 0.0, %v4052
        %v4054 = vpop.f32.mrf.mxu0
        %4055 = vmatprep.mubr.bf16.mxu0 0
        %4056 = vmatmul.mubr.bf16.gmra.mxu0 %v3901
        %v4057 = vpop.f32.mrf.mxu0
        %v4058 = vadd.f32 0.0, %v4057
        %v4059 = vpop.f32.mrf.mxu0
        %v4060 = vpop.f32.mrf.mxu0
        %v4061 = vadd.f32 0.0, %v4060
        %v4062 = vpop.f32.mrf.mxu0
        %4063 = vdwg.mxu0
        %v4064 = vadd.f32 %v3766, %v3938
        %v4065 = vadd.f32 %v3767, %v3941
        %v4066 = vadd.f32 %v3768, %v3946
        %v4067 = vadd.f32 %v3769, %v3949
        %v4068 = vadd.f32 %v3770, %v3954
        %v4069 = vadd.f32 %v3771, %v3957
        %v4070 = vadd.f32 %v3772, %v3962
        %v4071 = vadd.f32 %v3773, %v3965
        %v4072 = vadd.f32 %v3774, %v3970
        %v4073 = vadd.f32 %v3775, %v3973
        %v4074 = vadd.f32 %v3776, %v3978
        %v4075 = vadd.f32 %v3777, %v3981
        %v4076 = vadd.f32 %v3778, %v3986
        %v4077 = vadd.f32 %v3779, %v3989
        %v4078 = vadd.f32 %v3780, %v3994
        %v4079 = vadd.f32 %v3781, %v3997
        %v4080 = vadd.f32 %v3782, %v4002
        %v4081 = vadd.f32 %v3783, %v4005
        %v4082 = vadd.f32 %v3784, %v4010
        %v4083 = vadd.f32 %v3785, %v4013
        %v4084 = vadd.f32 %v3786, %v4018
        %v4085 = vadd.f32 %v3787, %v4021
        %v4086 = vadd.f32 %v3788, %v4026
        %v4087 = vadd.f32 %v3789, %v4029
        %v4088 = vadd.f32 %v3790, %v4034
        %v4089 = vadd.f32 %v3791, %v4037
        %v4090 = vadd.f32 %v3792, %v4042
        %v4091 = vadd.f32 %v3793, %v4045
        %v4092 = vadd.f32 %v3794, %v4050
        %v4093 = vadd.f32 %v3795, %v4053
        %v4094 = vadd.f32 %v3796, %v4058
        %v4095 = vadd.f32 %v3797, %v4061
        %v4096 = vld [vmem:[%s3201 + $0x3] sm:$0xff]
        %v4097 = vld [vmem:[%s3201 + $0xb] sm:$0xff]
        %v4098 = vld [vmem:[%s3201 + $0x1b] sm:$0xff]
        %v4099 = vld [vmem:[%s3201 + $0x23] sm:$0xff]
        %v4100 = vld [vmem:[%s3201 + $0x33] sm:$0xff]
        %v4101 = vld [vmem:[%s3201 + $0x3b] sm:$0xff]
        %v4102 = vld [vmem:[%s3201 + $0x4b] sm:$0xff]
        %v4103 = vld [vmem:[%s3201 + $0x53] sm:$0xff]
        %v4104 = vld [vmem:[%s3201 + $0x63] sm:$0xff]
        %v4105 = vld [vmem:[%s3201 + $0x6b] sm:$0xff]
        %v4106 = vld [vmem:[%s3201 + $0x7b] sm:$0xff]
        %v4107 = vld [vmem:[%s3201 + $0x83] sm:$0xff]
        %v4108 = vld [vmem:[%s3201 + $0x93] sm:$0xff]
        %v4109 = vld [vmem:[%s3201 + $0x9b] sm:$0xff]
        %v4110 = vld [vmem:[%s3201 + $0xab] sm:$0xff]
        %v4111 = vld [vmem:[%s3201 + $0xb3] sm:$0xff]
        %v4112 = vld [vmem:[%s3201 + $0xc3] sm:$0xff]
        %v4113 = vld [vmem:[%s3201 + $0xcb] sm:$0xff]
        %v4114 = vld [vmem:[%s3201 + $0xdb] sm:$0xff]
        %v4115 = vld [vmem:[%s3201 + $0xe3] sm:$0xff]
        %v4116 = vld [vmem:[%s3201 + $0xf3] sm:$0xff]
        %v4117 = vld [vmem:[%s3201 + $0xfb] sm:$0xff]
        %v4118 = vld [vmem:[%s3201 + $0x10b] sm:$0xff]
        %v4119 = vld [vmem:[%s3201 + $0x113] sm:$0xff]
        %v4120 = vld [vmem:[%s3201 + $0x123] sm:$0xff]
        %v4121 = vld [vmem:[%s3201 + $0x12b] sm:$0xff]
        %v4122 = vld [vmem:[%s3201 + $0x13b] sm:$0xff]
        %v4123 = vld [vmem:[%s3201 + $0x143] sm:$0xff]
        %v4124 = vld [vmem:[%s3201 + $0x153] sm:$0xff]
        %v4125 = vld [vmem:[%s3201 + $0x15b] sm:$0xff]
        %v4126 = vld [vmem:[%s3201 + $0x16b] sm:$0xff]
        %v4127 = vld [vmem:[%s3201 + $0x173] sm:$0xff]
        %v4128 = vpack.c.bf16 %v4097, %v4096
        %v4129 = vpack.c.bf16 %v4099, %v4098
        %v4130 = vpack.c.bf16 %v4101, %v4100
        %v4131 = vpack.c.bf16 %v4103, %v4102
        %v4132 = vpack.c.bf16 %v4105, %v4104
        %v4133 = vpack.c.bf16 %v4107, %v4106
        %v4134 = vpack.c.bf16 %v4109, %v4108
        %v4135 = vpack.c.bf16 %v4111, %v4110
        %v4136 = vpack.c.bf16 %v4113, %v4112
        %v4137 = vpack.c.bf16 %v4115, %v4114
        %v4138 = vpack.c.bf16 %v4117, %v4116
        %v4139 = vpack.c.bf16 %v4119, %v4118
        %v4140 = vpack.c.bf16 %v4121, %v4120
        %v4141 = vpack.c.bf16 %v4123, %v4122
        %v4142 = vpack.c.bf16 %v4125, %v4124
        %v4143 = vpack.c.bf16 %v4127, %v4126
        %s4144 = scalar_lea.vmem %s2, 104
        %v4145 = vld [vmem:[%s4144] sm:$0xf]
        %v4146 = vld [vmem:[%s4144 + $0x4] sm:$0xf]
        %v4149 = vunpack.c.l.b16 %v4145
        %v4150 = vunpack.c.l.b16 %v4146
        %v4151 = vpack.c.b16 %v4150, %v4149
        %v4154 = vsel %vm391, %v4128, 0
        %v4157 = vsel %vm391, %v4129, 0
        %v4160 = vsel %vm391, %v4130, 0
        %v4163 = vsel %vm391, %v4131, 0
        %v4166 = vsel %vm391, %v4132, 0
        %v4169 = vsel %vm391, %v4133, 0
        %v4172 = vsel %vm391, %v4134, 0
        %v4175 = vsel %vm391, %v4135, 0
        %v4178 = vsel %vm391, %v4136, 0
        %v4181 = vsel %vm391, %v4137, 0
        %v4184 = vsel %vm391, %v4138, 0
        %v4187 = vsel %vm391, %v4139, 0
        %v4190 = vsel %vm391, %v4140, 0
        %v4193 = vsel %vm391, %v4141, 0
        %v4196 = vsel %vm391, %v4142, 0
        %v4199 = vsel %vm391, %v4143, 0
        %4201 = vmatprep.subr.bf16.mxu0 0
        %4202 = vmatpush1.bf16.msra.mxu0 0
        %4203 = vmatprep.subr.bf16.mxu0 0
        %4204 = vmatpush1.bf16.msra.mxu0 0
        %4205 = vmatprep.subr.bf16.mxu0 0
        %4206 = vmatpush1.bf16.msra.mxu0 0
        %4207 = vmatprep.subr.bf16.mxu0 0
        %4208 = vmatpush1.bf16.msra.mxu0 0
        %4209 = vmatprep.subr.bf16.mxu0 0
        %4210 = vmatpush1.bf16.msra.mxu0 0
        %4211 = vmatprep.subr.bf16.mxu0 0
        %4212 = vmatpush1.bf16.msra.mxu0 0
        %4213 = vmatprep.subr.bf16.mxu0 0
        %4214 = vmatpush1.bf16.msra.mxu0 0
        %4215 = vmatprep.subr.bf16.mxu0 0
        %4216 = vmatpush1.bf16.msra.mxu0 %v4151
        %4217 = vmatprep.subr.bf16.mxu0 0
        %4218 = vmatpush2.bf16.msra.mxu0 0
        %4219 = vmatprep.subr.bf16.mxu0 0
        %4220 = vmatpush2.bf16.msra.mxu0 0
        %4221 = vmatprep.subr.bf16.mxu0 0
        %4222 = vmatpush2.bf16.msra.mxu0 0
        %4223 = vmatprep.subr.bf16.mxu0 0
        %4224 = vmatpush2.bf16.msra.mxu0 0
        %4225 = vmatprep.subr.bf16.mxu0 0
        %4226 = vmatpush2.bf16.msra.mxu0 0
        %4227 = vmatprep.subr.bf16.mxu0 0
        %4228 = vmatpush2.bf16.msra.mxu0 0
        %4229 = vmatprep.subr.bf16.mxu0 0
        %4230 = vmatpush2.bf16.msra.mxu0 0
        %4231 = vmatprep.subr.bf16.mxu0 0
        %4232 = vmatpush2.bf16.msra.mxu0 0
        %4233 = vmatprep.mubr.bf16.mxu0 0
        %4234 = vmatmul.mubr.bf16.gmra.mxu0 %v4154
        %v4235 = vpop.f32.mrf.mxu0
        %v4236 = vadd.f32 0.0, %v4235
        %v4237 = vpop.f32.mrf.mxu0
        %v4238 = vpop.f32.mrf.mxu0
        %v4239 = vadd.f32 0.0, %v4238
        %v4240 = vpop.f32.mrf.mxu0
        %4241 = vmatprep.mubr.bf16.mxu0 0
        %4242 = vmatmul.mubr.bf16.gmra.mxu0 %v4157
        %v4243 = vpop.f32.mrf.mxu0
        %v4244 = vadd.f32 0.0, %v4243
        %v4245 = vpop.f32.mrf.mxu0
        %v4246 = vpop.f32.mrf.mxu0
        %v4247 = vadd.f32 0.0, %v4246
        %v4248 = vpop.f32.mrf.mxu0
        %4249 = vmatprep.mubr.bf16.mxu0 0
        %4250 = vmatmul.mubr.bf16.gmra.mxu0 %v4160
        %v4251 = vpop.f32.mrf.mxu0
        %v4252 = vadd.f32 0.0, %v4251
        %v4253 = vpop.f32.mrf.mxu0
        %v4254 = vpop.f32.mrf.mxu0
        %v4255 = vadd.f32 0.0, %v4254
        %v4256 = vpop.f32.mrf.mxu0
        %4257 = vmatprep.mubr.bf16.mxu0 0
        %4258 = vmatmul.mubr.bf16.gmra.mxu0 %v4163
        %v4259 = vpop.f32.mrf.mxu0
        %v4260 = vadd.f32 0.0, %v4259
        %v4261 = vpop.f32.mrf.mxu0
        %v4262 = vpop.f32.mrf.mxu0
        %v4263 = vadd.f32 0.0, %v4262
        %v4264 = vpop.f32.mrf.mxu0
        %4265 = vmatprep.mubr.bf16.mxu0 0
        %4266 = vmatmul.mubr.bf16.gmra.mxu0 %v4166
        %v4267 = vpop.f32.mrf.mxu0
        %v4268 = vadd.f32 0.0, %v4267
        %v4269 = vpop.f32.mrf.mxu0
        %v4270 = vpop.f32.mrf.mxu0
        %v4271 = vadd.f32 0.0, %v4270
        %v4272 = vpop.f32.mrf.mxu0
        %4273 = vmatprep.mubr.bf16.mxu0 0
        %4274 = vmatmul.mubr.bf16.gmra.mxu0 %v4169
        %v4275 = vpop.f32.mrf.mxu0
        %v4276 = vadd.f32 0.0, %v4275
        %v4277 = vpop.f32.mrf.mxu0
        %v4278 = vpop.f32.mrf.mxu0
        %v4279 = vadd.f32 0.0, %v4278
        %v4280 = vpop.f32.mrf.mxu0
        %4281 = vmatprep.mubr.bf16.mxu0 0
        %4282 = vmatmul.mubr.bf16.gmra.mxu0 %v4172
        %v4283 = vpop.f32.mrf.mxu0
        %v4284 = vadd.f32 0.0, %v4283
        %v4285 = vpop.f32.mrf.mxu0
        %v4286 = vpop.f32.mrf.mxu0
        %v4287 = vadd.f32 0.0, %v4286
        %v4288 = vpop.f32.mrf.mxu0
        %4289 = vmatprep.mubr.bf16.mxu0 0
        %4290 = vmatmul.mubr.bf16.gmra.mxu0 %v4175
        %v4291 = vpop.f32.mrf.mxu0
        %v4292 = vadd.f32 0.0, %v4291
        %v4293 = vpop.f32.mrf.mxu0
        %v4294 = vpop.f32.mrf.mxu0
        %v4295 = vadd.f32 0.0, %v4294
        %v4296 = vpop.f32.mrf.mxu0
        %4297 = vmatprep.mubr.bf16.mxu0 0
        %4298 = vmatmul.mubr.bf16.gmra.mxu0 %v4178
        %v4299 = vpop.f32.mrf.mxu0
        %v4300 = vadd.f32 0.0, %v4299
        %v4301 = vpop.f32.mrf.mxu0
        %v4302 = vpop.f32.mrf.mxu0
        %v4303 = vadd.f32 0.0, %v4302
        %v4304 = vpop.f32.mrf.mxu0
        %4305 = vmatprep.mubr.bf16.mxu0 0
        %4306 = vmatmul.mubr.bf16.gmra.mxu0 %v4181
        %v4307 = vpop.f32.mrf.mxu0
        %v4308 = vadd.f32 0.0, %v4307
        %v4309 = vpop.f32.mrf.mxu0
        %v4310 = vpop.f32.mrf.mxu0
        %v4311 = vadd.f32 0.0, %v4310
        %v4312 = vpop.f32.mrf.mxu0
        %4313 = vmatprep.mubr.bf16.mxu0 0
        %4314 = vmatmul.mubr.bf16.gmra.mxu0 %v4184
        %v4315 = vpop.f32.mrf.mxu0
        %v4316 = vadd.f32 0.0, %v4315
        %v4317 = vpop.f32.mrf.mxu0
        %v4318 = vpop.f32.mrf.mxu0
        %v4319 = vadd.f32 0.0, %v4318
        %v4320 = vpop.f32.mrf.mxu0
        %4321 = vmatprep.mubr.bf16.mxu0 0
        %4322 = vmatmul.mubr.bf16.gmra.mxu0 %v4187
        %v4323 = vpop.f32.mrf.mxu0
        %v4324 = vadd.f32 0.0, %v4323
        %v4325 = vpop.f32.mrf.mxu0
        %v4326 = vpop.f32.mrf.mxu0
        %v4327 = vadd.f32 0.0, %v4326
        %v4328 = vpop.f32.mrf.mxu0
        %4329 = vmatprep.mubr.bf16.mxu0 0
        %4330 = vmatmul.mubr.bf16.gmra.mxu0 %v4190
        %v4331 = vpop.f32.mrf.mxu0
        %v4332 = vadd.f32 0.0, %v4331
        %v4333 = vpop.f32.mrf.mxu0
        %v4334 = vpop.f32.mrf.mxu0
        %v4335 = vadd.f32 0.0, %v4334
        %v4336 = vpop.f32.mrf.mxu0
        %4337 = vmatprep.mubr.bf16.mxu0 0
        %4338 = vmatmul.mubr.bf16.gmra.mxu0 %v4193
        %v4339 = vpop.f32.mrf.mxu0
        %v4340 = vadd.f32 0.0, %v4339
        %v4341 = vpop.f32.mrf.mxu0
        %v4342 = vpop.f32.mrf.mxu0
        %v4343 = vadd.f32 0.0, %v4342
        %v4344 = vpop.f32.mrf.mxu0
        %4345 = vmatprep.mubr.bf16.mxu0 0
        %4346 = vmatmul.mubr.bf16.gmra.mxu0 %v4196
        %v4347 = vpop.f32.mrf.mxu0
        %v4348 = vadd.f32 0.0, %v4347
        %v4349 = vpop.f32.mrf.mxu0
        %v4350 = vpop.f32.mrf.mxu0
        %v4351 = vadd.f32 0.0, %v4350
        %v4352 = vpop.f32.mrf.mxu0
        %4353 = vmatprep.mubr.bf16.mxu0 0
        %4354 = vmatmul.mubr.bf16.gmra.mxu0 %v4199
        %v4355 = vpop.f32.mrf.mxu0
        %v4356 = vadd.f32 0.0, %v4355
        %v4357 = vpop.f32.mrf.mxu0
        %v4358 = vpop.f32.mrf.mxu0
        %v4359 = vadd.f32 0.0, %v4358
        %v4360 = vpop.f32.mrf.mxu0
        %4361 = vdwg.mxu0
        %v4362 = vadd.f32 %v4064, %v4236
        %v4363 = vadd.f32 %v4065, %v4239
        %v4364 = vadd.f32 %v4066, %v4244
        %v4365 = vadd.f32 %v4067, %v4247
        %v4366 = vadd.f32 %v4068, %v4252
        %v4367 = vadd.f32 %v4069, %v4255
        %v4368 = vadd.f32 %v4070, %v4260
        %v4369 = vadd.f32 %v4071, %v4263
        %v4370 = vadd.f32 %v4072, %v4268
        %v4371 = vadd.f32 %v4073, %v4271
        %v4372 = vadd.f32 %v4074, %v4276
        %v4373 = vadd.f32 %v4075, %v4279
        %v4374 = vadd.f32 %v4076, %v4284
        %v4375 = vadd.f32 %v4077, %v4287
        %v4376 = vadd.f32 %v4078, %v4292
        %v4377 = vadd.f32 %v4079, %v4295
        %v4378 = vadd.f32 %v4080, %v4300
        %v4379 = vadd.f32 %v4081, %v4303
        %v4380 = vadd.f32 %v4082, %v4308
        %v4381 = vadd.f32 %v4083, %v4311
        %v4382 = vadd.f32 %v4084, %v4316
        %v4383 = vadd.f32 %v4085, %v4319
        %v4384 = vadd.f32 %v4086, %v4324
        %v4385 = vadd.f32 %v4087, %v4327
        %v4386 = vadd.f32 %v4088, %v4332
        %v4387 = vadd.f32 %v4089, %v4335
        %v4388 = vadd.f32 %v4090, %v4340
        %v4389 = vadd.f32 %v4091, %v4343
        %v4390 = vadd.f32 %v4092, %v4348
        %v4391 = vadd.f32 %v4093, %v4351
        %v4392 = vadd.f32 %v4094, %v4356
        %v4393 = vadd.f32 %v4095, %v4359
        %v4394 = vld [vmem:[%s3201 + $0x4] sm:$0xff]
        %v4395 = vld [vmem:[%s3201 + $0xc] sm:$0xff]
        %v4396 = vld [vmem:[%s3201 + $0x1c] sm:$0xff]
        %v4397 = vld [vmem:[%s3201 + $0x24] sm:$0xff]
        %v4398 = vld [vmem:[%s3201 + $0x34] sm:$0xff]
        %v4399 = vld [vmem:[%s3201 + $0x3c] sm:$0xff]
        %v4400 = vld [vmem:[%s3201 + $0x4c] sm:$0xff]
        %v4401 = vld [vmem:[%s3201 + $0x54] sm:$0xff]
        %v4402 = vld [vmem:[%s3201 + $0x64] sm:$0xff]
        %v4403 = vld [vmem:[%s3201 + $0x6c] sm:$0xff]
        %v4404 = vld [vmem:[%s3201 + $0x7c] sm:$0xff]
        %v4405 = vld [vmem:[%s3201 + $0x84] sm:$0xff]
        %v4406 = vld [vmem:[%s3201 + $0x94] sm:$0xff]
        %v4407 = vld [vmem:[%s3201 + $0x9c] sm:$0xff]
        %v4408 = vld [vmem:[%s3201 + $0xac] sm:$0xff]
        %v4409 = vld [vmem:[%s3201 + $0xb4] sm:$0xff]
        %v4410 = vld [vmem:[%s3201 + $0xc4] sm:$0xff]
        %v4411 = vld [vmem:[%s3201 + $0xcc] sm:$0xff]
        %v4412 = vld [vmem:[%s3201 + $0xdc] sm:$0xff]
        %v4413 = vld [vmem:[%s3201 + $0xe4] sm:$0xff]
        %v4414 = vld [vmem:[%s3201 + $0xf4] sm:$0xff]
        %v4415 = vld [vmem:[%s3201 + $0xfc] sm:$0xff]
        %v4416 = vld [vmem:[%s3201 + $0x10c] sm:$0xff]
        %v4417 = vld [vmem:[%s3201 + $0x114] sm:$0xff]
        %v4418 = vld [vmem:[%s3201 + $0x124] sm:$0xff]
        %v4419 = vld [vmem:[%s3201 + $0x12c] sm:$0xff]
        %v4420 = vld [vmem:[%s3201 + $0x13c] sm:$0xff]
        %v4421 = vld [vmem:[%s3201 + $0x144] sm:$0xff]
        %v4422 = vld [vmem:[%s3201 + $0x154] sm:$0xff]
        %v4423 = vld [vmem:[%s3201 + $0x15c] sm:$0xff]
        %v4424 = vld [vmem:[%s3201 + $0x16c] sm:$0xff]
        %v4425 = vld [vmem:[%s3201 + $0x174] sm:$0xff]
        %v4426 = vpack.c.bf16 %v4395, %v4394
        %v4427 = vpack.c.bf16 %v4397, %v4396
        %v4428 = vpack.c.bf16 %v4399, %v4398
        %v4429 = vpack.c.bf16 %v4401, %v4400
        %v4430 = vpack.c.bf16 %v4403, %v4402
        %v4431 = vpack.c.bf16 %v4405, %v4404
        %v4432 = vpack.c.bf16 %v4407, %v4406
        %v4433 = vpack.c.bf16 %v4409, %v4408
        %v4434 = vpack.c.bf16 %v4411, %v4410
        %v4435 = vpack.c.bf16 %v4413, %v4412
        %v4436 = vpack.c.bf16 %v4415, %v4414
        %v4437 = vpack.c.bf16 %v4417, %v4416
        %v4438 = vpack.c.bf16 %v4419, %v4418
        %v4439 = vpack.c.bf16 %v4421, %v4420
        %v4440 = vpack.c.bf16 %v4423, %v4422
        %v4441 = vpack.c.bf16 %v4425, %v4424
        %s4442 = scalar_lea.vmem %s2, 112
        %v4443 = vld [vmem:[%s4442] sm:$0xf]
        %v4444 = vld [vmem:[%s4442 + $0x4] sm:$0xf]
        %v4447 = vunpack.c.l.b16 %v4443
        %v4448 = vunpack.c.l.b16 %v4444
        %v4449 = vpack.c.b16 %v4448, %v4447
        %v4452 = vsel %vm391, %v4426, 0
        %v4455 = vsel %vm391, %v4427, 0
        %v4458 = vsel %vm391, %v4428, 0
        %v4461 = vsel %vm391, %v4429, 0
        %v4464 = vsel %vm391, %v4430, 0
        %v4467 = vsel %vm391, %v4431, 0
        %v4470 = vsel %vm391, %v4432, 0
        %v4473 = vsel %vm391, %v4433, 0
        %v4476 = vsel %vm391, %v4434, 0
        %v4479 = vsel %vm391, %v4435, 0
        %v4482 = vsel %vm391, %v4436, 0
        %v4485 = vsel %vm391, %v4437, 0
        %v4488 = vsel %vm391, %v4438, 0
        %v4491 = vsel %vm391, %v4439, 0
        %v4494 = vsel %vm391, %v4440, 0
        %v4497 = vsel %vm391, %v4441, 0
        %4499 = vmatprep.subr.bf16.mxu0 0
        %4500 = vmatpush1.bf16.msra.mxu0 0
        %4501 = vmatprep.subr.bf16.mxu0 0
        %4502 = vmatpush1.bf16.msra.mxu0 0
        %4503 = vmatprep.subr.bf16.mxu0 0
        %4504 = vmatpush1.bf16.msra.mxu0 0
        %4505 = vmatprep.subr.bf16.mxu0 0
        %4506 = vmatpush1.bf16.msra.mxu0 0
        %4507 = vmatprep.subr.bf16.mxu0 0
        %4508 = vmatpush1.bf16.msra.mxu0 0
        %4509 = vmatprep.subr.bf16.mxu0 0
        %4510 = vmatpush1.bf16.msra.mxu0 0
        %4511 = vmatprep.subr.bf16.mxu0 0
        %4512 = vmatpush1.bf16.msra.mxu0 0
        %4513 = vmatprep.subr.bf16.mxu0 0
        %4514 = vmatpush1.bf16.msra.mxu0 %v4449
        %4515 = vmatprep.subr.bf16.mxu0 0
        %4516 = vmatpush2.bf16.msra.mxu0 0
        %4517 = vmatprep.subr.bf16.mxu0 0
        %4518 = vmatpush2.bf16.msra.mxu0 0
        %4519 = vmatprep.subr.bf16.mxu0 0
        %4520 = vmatpush2.bf16.msra.mxu0 0
        %4521 = vmatprep.subr.bf16.mxu0 0
        %4522 = vmatpush2.bf16.msra.mxu0 0
        %4523 = vmatprep.subr.bf16.mxu0 0
        %4524 = vmatpush2.bf16.msra.mxu0 0
        %4525 = vmatprep.subr.bf16.mxu0 0
        %4526 = vmatpush2.bf16.msra.mxu0 0
        %4527 = vmatprep.subr.bf16.mxu0 0
        %4528 = vmatpush2.bf16.msra.mxu0 0
        %4529 = vmatprep.subr.bf16.mxu0 0
        %4530 = vmatpush2.bf16.msra.mxu0 0
        %4531 = vmatprep.mubr.bf16.mxu0 0
        %4532 = vmatmul.mubr.bf16.gmra.mxu0 %v4452
        %v4533 = vpop.f32.mrf.mxu0
        %v4534 = vadd.f32 0.0, %v4533
        %v4535 = vpop.f32.mrf.mxu0
        %v4536 = vpop.f32.mrf.mxu0
        %v4537 = vadd.f32 0.0, %v4536
        %v4538 = vpop.f32.mrf.mxu0
        %4539 = vmatprep.mubr.bf16.mxu0 0
        %4540 = vmatmul.mubr.bf16.gmra.mxu0 %v4455
        %v4541 = vpop.f32.mrf.mxu0
        %v4542 = vadd.f32 0.0, %v4541
        %v4543 = vpop.f32.mrf.mxu0
        %v4544 = vpop.f32.mrf.mxu0
        %v4545 = vadd.f32 0.0, %v4544
        %v4546 = vpop.f32.mrf.mxu0
        %4547 = vmatprep.mubr.bf16.mxu0 0
        %4548 = vmatmul.mubr.bf16.gmra.mxu0 %v4458
        %v4549 = vpop.f32.mrf.mxu0
        %v4550 = vadd.f32 0.0, %v4549
        %v4551 = vpop.f32.mrf.mxu0
        %v4552 = vpop.f32.mrf.mxu0
        %v4553 = vadd.f32 0.0, %v4552
        %v4554 = vpop.f32.mrf.mxu0
        %4555 = vmatprep.mubr.bf16.mxu0 0
        %4556 = vmatmul.mubr.bf16.gmra.mxu0 %v4461
        %v4557 = vpop.f32.mrf.mxu0
        %v4558 = vadd.f32 0.0, %v4557
        %v4559 = vpop.f32.mrf.mxu0
        %v4560 = vpop.f32.mrf.mxu0
        %v4561 = vadd.f32 0.0, %v4560
        %v4562 = vpop.f32.mrf.mxu0
        %4563 = vmatprep.mubr.bf16.mxu0 0
        %4564 = vmatmul.mubr.bf16.gmra.mxu0 %v4464
        %v4565 = vpop.f32.mrf.mxu0
        %v4566 = vadd.f32 0.0, %v4565
        %v4567 = vpop.f32.mrf.mxu0
        %v4568 = vpop.f32.mrf.mxu0
        %v4569 = vadd.f32 0.0, %v4568
        %v4570 = vpop.f32.mrf.mxu0
        %4571 = vmatprep.mubr.bf16.mxu0 0
        %4572 = vmatmul.mubr.bf16.gmra.mxu0 %v4467
        %v4573 = vpop.f32.mrf.mxu0
        %v4574 = vadd.f32 0.0, %v4573
        %v4575 = vpop.f32.mrf.mxu0
        %v4576 = vpop.f32.mrf.mxu0
        %v4577 = vadd.f32 0.0, %v4576
        %v4578 = vpop.f32.mrf.mxu0
        %4579 = vmatprep.mubr.bf16.mxu0 0
        %4580 = vmatmul.mubr.bf16.gmra.mxu0 %v4470
        %v4581 = vpop.f32.mrf.mxu0
        %v4582 = vadd.f32 0.0, %v4581
        %v4583 = vpop.f32.mrf.mxu0
        %v4584 = vpop.f32.mrf.mxu0
        %v4585 = vadd.f32 0.0, %v4584
        %v4586 = vpop.f32.mrf.mxu0
        %4587 = vmatprep.mubr.bf16.mxu0 0
        %4588 = vmatmul.mubr.bf16.gmra.mxu0 %v4473
        %v4589 = vpop.f32.mrf.mxu0
        %v4590 = vadd.f32 0.0, %v4589
        %v4591 = vpop.f32.mrf.mxu0
        %v4592 = vpop.f32.mrf.mxu0
        %v4593 = vadd.f32 0.0, %v4592
        %v4594 = vpop.f32.mrf.mxu0
        %4595 = vmatprep.mubr.bf16.mxu0 0
        %4596 = vmatmul.mubr.bf16.gmra.mxu0 %v4476
        %v4597 = vpop.f32.mrf.mxu0
        %v4598 = vadd.f32 0.0, %v4597
        %v4599 = vpop.f32.mrf.mxu0
        %v4600 = vpop.f32.mrf.mxu0
        %v4601 = vadd.f32 0.0, %v4600
        %v4602 = vpop.f32.mrf.mxu0
        %4603 = vmatprep.mubr.bf16.mxu0 0
        %4604 = vmatmul.mubr.bf16.gmra.mxu0 %v4479
        %v4605 = vpop.f32.mrf.mxu0
        %v4606 = vadd.f32 0.0, %v4605
        %v4607 = vpop.f32.mrf.mxu0
        %v4608 = vpop.f32.mrf.mxu0
        %v4609 = vadd.f32 0.0, %v4608
        %v4610 = vpop.f32.mrf.mxu0
        %4611 = vmatprep.mubr.bf16.mxu0 0
        %4612 = vmatmul.mubr.bf16.gmra.mxu0 %v4482
        %v4613 = vpop.f32.mrf.mxu0
        %v4614 = vadd.f32 0.0, %v4613
        %v4615 = vpop.f32.mrf.mxu0
        %v4616 = vpop.f32.mrf.mxu0
        %v4617 = vadd.f32 0.0, %v4616
        %v4618 = vpop.f32.mrf.mxu0
        %4619 = vmatprep.mubr.bf16.mxu0 0
        %4620 = vmatmul.mubr.bf16.gmra.mxu0 %v4485
        %v4621 = vpop.f32.mrf.mxu0
        %v4622 = vadd.f32 0.0, %v4621
        %v4623 = vpop.f32.mrf.mxu0
        %v4624 = vpop.f32.mrf.mxu0
        %v4625 = vadd.f32 0.0, %v4624
        %v4626 = vpop.f32.mrf.mxu0
        %4627 = vmatprep.mubr.bf16.mxu0 0
        %4628 = vmatmul.mubr.bf16.gmra.mxu0 %v4488
        %v4629 = vpop.f32.mrf.mxu0
        %v4630 = vadd.f32 0.0, %v4629
        %v4631 = vpop.f32.mrf.mxu0
        %v4632 = vpop.f32.mrf.mxu0
        %v4633 = vadd.f32 0.0, %v4632
        %v4634 = vpop.f32.mrf.mxu0
        %4635 = vmatprep.mubr.bf16.mxu0 0
        %4636 = vmatmul.mubr.bf16.gmra.mxu0 %v4491
        %v4637 = vpop.f32.mrf.mxu0
        %v4638 = vadd.f32 0.0, %v4637
        %v4639 = vpop.f32.mrf.mxu0
        %v4640 = vpop.f32.mrf.mxu0
        %v4641 = vadd.f32 0.0, %v4640
        %v4642 = vpop.f32.mrf.mxu0
        %4643 = vmatprep.mubr.bf16.mxu0 0
        %4644 = vmatmul.mubr.bf16.gmra.mxu0 %v4494
        %v4645 = vpop.f32.mrf.mxu0
        %v4646 = vadd.f32 0.0, %v4645
        %v4647 = vpop.f32.mrf.mxu0
        %v4648 = vpop.f32.mrf.mxu0
        %v4649 = vadd.f32 0.0, %v4648
        %v4650 = vpop.f32.mrf.mxu0
        %4651 = vmatprep.mubr.bf16.mxu0 0
        %4652 = vmatmul.mubr.bf16.gmra.mxu0 %v4497
        %v4653 = vpop.f32.mrf.mxu0
        %v4654 = vadd.f32 0.0, %v4653
        %v4655 = vpop.f32.mrf.mxu0
        %v4656 = vpop.f32.mrf.mxu0
        %v4657 = vadd.f32 0.0, %v4656
        %v4658 = vpop.f32.mrf.mxu0
        %4659 = vdwg.mxu0
        %v4660 = vadd.f32 %v4362, %v4534
        %v4661 = vadd.f32 %v4363, %v4537
        %v4662 = vadd.f32 %v4364, %v4542
        %v4663 = vadd.f32 %v4365, %v4545
        %v4664 = vadd.f32 %v4366, %v4550
        %v4665 = vadd.f32 %v4367, %v4553
        %v4666 = vadd.f32 %v4368, %v4558
        %v4667 = vadd.f32 %v4369, %v4561
        %v4668 = vadd.f32 %v4370, %v4566
        %v4669 = vadd.f32 %v4371, %v4569
        %v4670 = vadd.f32 %v4372, %v4574
        %v4671 = vadd.f32 %v4373, %v4577
        %v4672 = vadd.f32 %v4374, %v4582
        %v4673 = vadd.f32 %v4375, %v4585
        %v4674 = vadd.f32 %v4376, %v4590
        %v4675 = vadd.f32 %v4377, %v4593
        %v4676 = vadd.f32 %v4378, %v4598
        %v4677 = vadd.f32 %v4379, %v4601
        %v4678 = vadd.f32 %v4380, %v4606
        %v4679 = vadd.f32 %v4381, %v4609
        %v4680 = vadd.f32 %v4382, %v4614
        %v4681 = vadd.f32 %v4383, %v4617
        %v4682 = vadd.f32 %v4384, %v4622
        %v4683 = vadd.f32 %v4385, %v4625
        %v4684 = vadd.f32 %v4386, %v4630
        %v4685 = vadd.f32 %v4387, %v4633
        %v4686 = vadd.f32 %v4388, %v4638
        %v4687 = vadd.f32 %v4389, %v4641
        %v4688 = vadd.f32 %v4390, %v4646
        %v4689 = vadd.f32 %v4391, %v4649
        %v4690 = vadd.f32 %v4392, %v4654
        %v4691 = vadd.f32 %v4393, %v4657
        %s4692 = scalar_lea.vmem %s272, 72
        %v4693 = vld [vmem:[%s4692] sm:$0xff]
        %v4694 = vld [vmem:[%s4692 + $0x8] sm:$0xff]
        %v4695 = vld [vmem:[%s4692 + $0x18] sm:$0xff]
        %v4696 = vld [vmem:[%s4692 + $0x20] sm:$0xff]
        %v4697 = vld [vmem:[%s4692 + $0x30] sm:$0xff]
        %v4698 = vld [vmem:[%s4692 + $0x38] sm:$0xff]
        %v4699 = vld [vmem:[%s4692 + $0x48] sm:$0xff]
        %v4700 = vld [vmem:[%s4692 + $0x50] sm:$0xff]
        %v4701 = vld [vmem:[%s4692 + $0x60] sm:$0xff]
        %v4702 = vld [vmem:[%s4692 + $0x68] sm:$0xff]
        %v4703 = vld [vmem:[%s4692 + $0x78] sm:$0xff]
        %v4704 = vld [vmem:[%s4692 + $0x80] sm:$0xff]
        %v4705 = vld [vmem:[%s4692 + $0x90] sm:$0xff]
        %v4706 = vld [vmem:[%s4692 + $0x98] sm:$0xff]
        %v4707 = vld [vmem:[%s4692 + $0xa8] sm:$0xff]
        %v4708 = vld [vmem:[%s4692 + $0xb0] sm:$0xff]
        %v4709 = vld [vmem:[%s4692 + $0xc0] sm:$0xff]
        %v4710 = vld [vmem:[%s4692 + $0xc8] sm:$0xff]
        %v4711 = vld [vmem:[%s4692 + $0xd8] sm:$0xff]
        %v4712 = vld [vmem:[%s4692 + $0xe0] sm:$0xff]
        %v4713 = vld [vmem:[%s4692 + $0xf0] sm:$0xff]
        %v4714 = vld [vmem:[%s4692 + $0xf8] sm:$0xff]
        %v4715 = vld [vmem:[%s4692 + $0x108] sm:$0xff]
        %v4716 = vld [vmem:[%s4692 + $0x110] sm:$0xff]
        %v4717 = vld [vmem:[%s4692 + $0x120] sm:$0xff]
        %v4718 = vld [vmem:[%s4692 + $0x128] sm:$0xff]
        %v4719 = vld [vmem:[%s4692 + $0x138] sm:$0xff]
        %v4720 = vld [vmem:[%s4692 + $0x140] sm:$0xff]
        %v4721 = vld [vmem:[%s4692 + $0x150] sm:$0xff]
        %v4722 = vld [vmem:[%s4692 + $0x158] sm:$0xff]
        %v4723 = vld [vmem:[%s4692 + $0x168] sm:$0xff]
        %v4724 = vld [vmem:[%s4692 + $0x170] sm:$0xff]
        %v4725 = vpack.c.bf16 %v4694, %v4693
        %v4726 = vpack.c.bf16 %v4696, %v4695
        %v4727 = vpack.c.bf16 %v4698, %v4697
        %v4728 = vpack.c.bf16 %v4700, %v4699
        %v4729 = vpack.c.bf16 %v4702, %v4701
        %v4730 = vpack.c.bf16 %v4704, %v4703
        %v4731 = vpack.c.bf16 %v4706, %v4705
        %v4732 = vpack.c.bf16 %v4708, %v4707
        %v4733 = vpack.c.bf16 %v4710, %v4709
        %v4734 = vpack.c.bf16 %v4712, %v4711
        %v4735 = vpack.c.bf16 %v4714, %v4713
        %v4736 = vpack.c.bf16 %v4716, %v4715
        %v4737 = vpack.c.bf16 %v4718, %v4717
        %v4738 = vpack.c.bf16 %v4720, %v4719
        %v4739 = vpack.c.bf16 %v4722, %v4721
        %v4740 = vpack.c.bf16 %v4724, %v4723
        %s4741 = scalar_lea.vmem %s2, 120
        %v4742 = vld [vmem:[%s4741] sm:$0xf]
        %v4743 = vld [vmem:[%s4741 + $0x4] sm:$0xf]
        %v4746 = vunpack.c.l.b16 %v4742
        %v4747 = vunpack.c.l.b16 %v4743
        %v4748 = vpack.c.b16 %v4747, %v4746
        %v4751 = vsel %vm391, %v4725, 0
        %v4754 = vsel %vm391, %v4726, 0
        %v4757 = vsel %vm391, %v4727, 0
        %v4760 = vsel %vm391, %v4728, 0
        %v4763 = vsel %vm391, %v4729, 0
        %v4766 = vsel %vm391, %v4730, 0
        %v4769 = vsel %vm391, %v4731, 0
        %v4772 = vsel %vm391, %v4732, 0
        %v4775 = vsel %vm391, %v4733, 0
        %v4778 = vsel %vm391, %v4734, 0
        %v4781 = vsel %vm391, %v4735, 0
        %v4784 = vsel %vm391, %v4736, 0
        %v4787 = vsel %vm391, %v4737, 0
        %v4790 = vsel %vm391, %v4738, 0
        %v4793 = vsel %vm391, %v4739, 0
        %v4796 = vsel %vm391, %v4740, 0
        %4798 = vmatprep.subr.bf16.mxu0 0
        %4799 = vmatpush1.bf16.msra.mxu0 0
        %4800 = vmatprep.subr.bf16.mxu0 0
        %4801 = vmatpush1.bf16.msra.mxu0 0
        %4802 = vmatprep.subr.bf16.mxu0 0
        %4803 = vmatpush1.bf16.msra.mxu0 0
        %4804 = vmatprep.subr.bf16.mxu0 0
        %4805 = vmatpush1.bf16.msra.mxu0 0
        %4806 = vmatprep.subr.bf16.mxu0 0
        %4807 = vmatpush1.bf16.msra.mxu0 0
        %4808 = vmatprep.subr.bf16.mxu0 0
        %4809 = vmatpush1.bf16.msra.mxu0 0
        %4810 = vmatprep.subr.bf16.mxu0 0
        %4811 = vmatpush1.bf16.msra.mxu0 0
        %4812 = vmatprep.subr.bf16.mxu0 0
        %4813 = vmatpush1.bf16.msra.mxu0 %v4748
        %4814 = vmatprep.subr.bf16.mxu0 0
        %4815 = vmatpush2.bf16.msra.mxu0 0
        %4816 = vmatprep.subr.bf16.mxu0 0
        %4817 = vmatpush2.bf16.msra.mxu0 0
        %4818 = vmatprep.subr.bf16.mxu0 0
        %4819 = vmatpush2.bf16.msra.mxu0 0
        %4820 = vmatprep.subr.bf16.mxu0 0
        %4821 = vmatpush2.bf16.msra.mxu0 0
        %4822 = vmatprep.subr.bf16.mxu0 0
        %4823 = vmatpush2.bf16.msra.mxu0 0
        %4824 = vmatprep.subr.bf16.mxu0 0
        %4825 = vmatpush2.bf16.msra.mxu0 0
        %4826 = vmatprep.subr.bf16.mxu0 0
        %4827 = vmatpush2.bf16.msra.mxu0 0
        %4828 = vmatprep.subr.bf16.mxu0 0
        %4829 = vmatpush2.bf16.msra.mxu0 0
        %4830 = vmatprep.mubr.bf16.mxu0 0
        %4831 = vmatmul.mubr.bf16.gmra.mxu0 %v4751
        %v4832 = vpop.f32.mrf.mxu0
        %v4833 = vadd.f32 0.0, %v4832
        %v4834 = vpop.f32.mrf.mxu0
        %v4835 = vpop.f32.mrf.mxu0
        %v4836 = vadd.f32 0.0, %v4835
        %v4837 = vpop.f32.mrf.mxu0
        %4838 = vmatprep.mubr.bf16.mxu0 0
        %4839 = vmatmul.mubr.bf16.gmra.mxu0 %v4754
        %v4840 = vpop.f32.mrf.mxu0
        %v4841 = vadd.f32 0.0, %v4840
        %v4842 = vpop.f32.mrf.mxu0
        %v4843 = vpop.f32.mrf.mxu0
        %v4844 = vadd.f32 0.0, %v4843
        %v4845 = vpop.f32.mrf.mxu0
        %4846 = vmatprep.mubr.bf16.mxu0 0
        %4847 = vmatmul.mubr.bf16.gmra.mxu0 %v4757
        %v4848 = vpop.f32.mrf.mxu0
        %v4849 = vadd.f32 0.0, %v4848
        %v4850 = vpop.f32.mrf.mxu0
        %v4851 = vpop.f32.mrf.mxu0
        %v4852 = vadd.f32 0.0, %v4851
        %v4853 = vpop.f32.mrf.mxu0
        %4854 = vmatprep.mubr.bf16.mxu0 0
        %4855 = vmatmul.mubr.bf16.gmra.mxu0 %v4760
        %v4856 = vpop.f32.mrf.mxu0
        %v4857 = vadd.f32 0.0, %v4856
        %v4858 = vpop.f32.mrf.mxu0
        %v4859 = vpop.f32.mrf.mxu0
        %v4860 = vadd.f32 0.0, %v4859
        %v4861 = vpop.f32.mrf.mxu0
        %4862 = vmatprep.mubr.bf16.mxu0 0
        %4863 = vmatmul.mubr.bf16.gmra.mxu0 %v4763
        %v4864 = vpop.f32.mrf.mxu0
        %v4865 = vadd.f32 0.0, %v4864
        %v4866 = vpop.f32.mrf.mxu0
        %v4867 = vpop.f32.mrf.mxu0
        %v4868 = vadd.f32 0.0, %v4867
        %v4869 = vpop.f32.mrf.mxu0
        %4870 = vmatprep.mubr.bf16.mxu0 0
        %4871 = vmatmul.mubr.bf16.gmra.mxu0 %v4766
        %v4872 = vpop.f32.mrf.mxu0
        %v4873 = vadd.f32 0.0, %v4872
        %v4874 = vpop.f32.mrf.mxu0
        %v4875 = vpop.f32.mrf.mxu0
        %v4876 = vadd.f32 0.0, %v4875
        %v4877 = vpop.f32.mrf.mxu0
        %4878 = vmatprep.mubr.bf16.mxu0 0
        %4879 = vmatmul.mubr.bf16.gmra.mxu0 %v4769
        %v4880 = vpop.f32.mrf.mxu0
        %v4881 = vadd.f32 0.0, %v4880
        %v4882 = vpop.f32.mrf.mxu0
        %v4883 = vpop.f32.mrf.mxu0
        %v4884 = vadd.f32 0.0, %v4883
        %v4885 = vpop.f32.mrf.mxu0
        %4886 = vmatprep.mubr.bf16.mxu0 0
        %4887 = vmatmul.mubr.bf16.gmra.mxu0 %v4772
        %v4888 = vpop.f32.mrf.mxu0
        %v4889 = vadd.f32 0.0, %v4888
        %v4890 = vpop.f32.mrf.mxu0
        %v4891 = vpop.f32.mrf.mxu0
        %v4892 = vadd.f32 0.0, %v4891
        %v4893 = vpop.f32.mrf.mxu0
        %4894 = vmatprep.mubr.bf16.mxu0 0
        %4895 = vmatmul.mubr.bf16.gmra.mxu0 %v4775
        %v4896 = vpop.f32.mrf.mxu0
        %v4897 = vadd.f32 0.0, %v4896
        %v4898 = vpop.f32.mrf.mxu0
        %v4899 = vpop.f32.mrf.mxu0
        %v4900 = vadd.f32 0.0, %v4899
        %v4901 = vpop.f32.mrf.mxu0
        %4902 = vmatprep.mubr.bf16.mxu0 0
        %4903 = vmatmul.mubr.bf16.gmra.mxu0 %v4778
        %v4904 = vpop.f32.mrf.mxu0
        %v4905 = vadd.f32 0.0, %v4904
        %v4906 = vpop.f32.mrf.mxu0
        %v4907 = vpop.f32.mrf.mxu0
        %v4908 = vadd.f32 0.0, %v4907
        %v4909 = vpop.f32.mrf.mxu0
        %4910 = vmatprep.mubr.bf16.mxu0 0
        %4911 = vmatmul.mubr.bf16.gmra.mxu0 %v4781
        %v4912 = vpop.f32.mrf.mxu0
        %v4913 = vadd.f32 0.0, %v4912
        %v4914 = vpop.f32.mrf.mxu0
        %v4915 = vpop.f32.mrf.mxu0
        %v4916 = vadd.f32 0.0, %v4915
        %v4917 = vpop.f32.mrf.mxu0
        %4918 = vmatprep.mubr.bf16.mxu0 0
        %4919 = vmatmul.mubr.bf16.gmra.mxu0 %v4784
        %v4920 = vpop.f32.mrf.mxu0
        %v4921 = vadd.f32 0.0, %v4920
        %v4922 = vpop.f32.mrf.mxu0
        %v4923 = vpop.f32.mrf.mxu0
        %v4924 = vadd.f32 0.0, %v4923
        %v4925 = vpop.f32.mrf.mxu0
        %4926 = vmatprep.mubr.bf16.mxu0 0
        %4927 = vmatmul.mubr.bf16.gmra.mxu0 %v4787
        %v4928 = vpop.f32.mrf.mxu0
        %v4929 = vadd.f32 0.0, %v4928
        %v4930 = vpop.f32.mrf.mxu0
        %v4931 = vpop.f32.mrf.mxu0
        %v4932 = vadd.f32 0.0, %v4931
        %v4933 = vpop.f32.mrf.mxu0
        %4934 = vmatprep.mubr.bf16.mxu0 0
        %4935 = vmatmul.mubr.bf16.gmra.mxu0 %v4790
        %v4936 = vpop.f32.mrf.mxu0
        %v4937 = vadd.f32 0.0, %v4936
        %v4938 = vpop.f32.mrf.mxu0
        %v4939 = vpop.f32.mrf.mxu0
        %v4940 = vadd.f32 0.0, %v4939
        %v4941 = vpop.f32.mrf.mxu0
        %4942 = vmatprep.mubr.bf16.mxu0 0
        %4943 = vmatmul.mubr.bf16.gmra.mxu0 %v4793
        %v4944 = vpop.f32.mrf.mxu0
        %v4945 = vadd.f32 0.0, %v4944
        %v4946 = vpop.f32.mrf.mxu0
        %v4947 = vpop.f32.mrf.mxu0
        %v4948 = vadd.f32 0.0, %v4947
        %v4949 = vpop.f32.mrf.mxu0
        %4950 = vmatprep.mubr.bf16.mxu0 0
        %4951 = vmatmul.mubr.bf16.gmra.mxu0 %v4796
        %v4952 = vpop.f32.mrf.mxu0
        %v4953 = vadd.f32 0.0, %v4952
        %v4954 = vpop.f32.mrf.mxu0
        %v4955 = vpop.f32.mrf.mxu0
        %v4956 = vadd.f32 0.0, %v4955
        %v4957 = vpop.f32.mrf.mxu0
        %4958 = vdwg.mxu0
        %v4959 = vadd.f32 %v4660, %v4833
        %v4960 = vadd.f32 %v4661, %v4836
        %v4961 = vadd.f32 %v4662, %v4841
        %v4962 = vadd.f32 %v4663, %v4844
        %v4963 = vadd.f32 %v4664, %v4849
        %v4964 = vadd.f32 %v4665, %v4852
        %v4965 = vadd.f32 %v4666, %v4857
        %v4966 = vadd.f32 %v4667, %v4860
        %v4967 = vadd.f32 %v4668, %v4865
        %v4968 = vadd.f32 %v4669, %v4868
        %v4969 = vadd.f32 %v4670, %v4873
        %v4970 = vadd.f32 %v4671, %v4876
        %v4971 = vadd.f32 %v4672, %v4881
        %v4972 = vadd.f32 %v4673, %v4884
        %v4973 = vadd.f32 %v4674, %v4889
        %v4974 = vadd.f32 %v4675, %v4892
        %v4975 = vadd.f32 %v4676, %v4897
        %v4976 = vadd.f32 %v4677, %v4900
        %v4977 = vadd.f32 %v4678, %v4905
        %v4978 = vadd.f32 %v4679, %v4908
        %v4979 = vadd.f32 %v4680, %v4913
        %v4980 = vadd.f32 %v4681, %v4916
        %v4981 = vadd.f32 %v4682, %v4921
        %v4982 = vadd.f32 %v4683, %v4924
        %v4983 = vadd.f32 %v4684, %v4929
        %v4984 = vadd.f32 %v4685, %v4932
        %v4985 = vadd.f32 %v4686, %v4937
        %v4986 = vadd.f32 %v4687, %v4940
        %v4987 = vadd.f32 %v4688, %v4945
        %v4988 = vadd.f32 %v4689, %v4948
        %v4989 = vadd.f32 %v4690, %v4953
        %v4990 = vadd.f32 %v4691, %v4956
        %v4991 = vld [vmem:[%s4692 + $0x1] sm:$0xff]
        %v4992 = vld [vmem:[%s4692 + $0x9] sm:$0xff]
        %v4993 = vld [vmem:[%s4692 + $0x19] sm:$0xff]
        %v4994 = vld [vmem:[%s4692 + $0x21] sm:$0xff]
        %v4995 = vld [vmem:[%s4692 + $0x31] sm:$0xff]
        %v4996 = vld [vmem:[%s4692 + $0x39] sm:$0xff]
        %v4997 = vld [vmem:[%s4692 + $0x49] sm:$0xff]
        %v4998 = vld [vmem:[%s4692 + $0x51] sm:$0xff]
        %v4999 = vld [vmem:[%s4692 + $0x61] sm:$0xff]
        %v5000 = vld [vmem:[%s4692 + $0x69] sm:$0xff]
        %v5001 = vld [vmem:[%s4692 + $0x79] sm:$0xff]
        %v5002 = vld [vmem:[%s4692 + $0x81] sm:$0xff]
        %v5003 = vld [vmem:[%s4692 + $0x91] sm:$0xff]
        %v5004 = vld [vmem:[%s4692 + $0x99] sm:$0xff]
        %v5005 = vld [vmem:[%s4692 + $0xa9] sm:$0xff]
        %v5006 = vld [vmem:[%s4692 + $0xb1] sm:$0xff]
        %v5007 = vld [vmem:[%s4692 + $0xc1] sm:$0xff]
        %v5008 = vld [vmem:[%s4692 + $0xc9] sm:$0xff]
        %v5009 = vld [vmem:[%s4692 + $0xd9] sm:$0xff]
        %v5010 = vld [vmem:[%s4692 + $0xe1] sm:$0xff]
        %v5011 = vld [vmem:[%s4692 + $0xf1] sm:$0xff]
        %v5012 = vld [vmem:[%s4692 + $0xf9] sm:$0xff]
        %v5013 = vld [vmem:[%s4692 + $0x109] sm:$0xff]
        %v5014 = vld [vmem:[%s4692 + $0x111] sm:$0xff]
        %v5015 = vld [vmem:[%s4692 + $0x121] sm:$0xff]
        %v5016 = vld [vmem:[%s4692 + $0x129] sm:$0xff]
        %v5017 = vld [vmem:[%s4692 + $0x139] sm:$0xff]
        %v5018 = vld [vmem:[%s4692 + $0x141] sm:$0xff]
        %v5019 = vld [vmem:[%s4692 + $0x151] sm:$0xff]
        %v5020 = vld [vmem:[%s4692 + $0x159] sm:$0xff]
        %v5021 = vld [vmem:[%s4692 + $0x169] sm:$0xff]
        %v5022 = vld [vmem:[%s4692 + $0x171] sm:$0xff]
        %v5023 = vpack.c.bf16 %v4992, %v4991
        %v5024 = vpack.c.bf16 %v4994, %v4993
        %v5025 = vpack.c.bf16 %v4996, %v4995
        %v5026 = vpack.c.bf16 %v4998, %v4997
        %v5027 = vpack.c.bf16 %v5000, %v4999
        %v5028 = vpack.c.bf16 %v5002, %v5001
        %v5029 = vpack.c.bf16 %v5004, %v5003
        %v5030 = vpack.c.bf16 %v5006, %v5005
        %v5031 = vpack.c.bf16 %v5008, %v5007
        %v5032 = vpack.c.bf16 %v5010, %v5009
        %v5033 = vpack.c.bf16 %v5012, %v5011
        %v5034 = vpack.c.bf16 %v5014, %v5013
        %v5035 = vpack.c.bf16 %v5016, %v5015
        %v5036 = vpack.c.bf16 %v5018, %v5017
        %v5037 = vpack.c.bf16 %v5020, %v5019
        %v5038 = vpack.c.bf16 %v5022, %v5021
        %s5039 = scalar_lea.vmem %s2, 128
        %v5040 = vld [vmem:[%s5039] sm:$0xf]
        %v5041 = vld [vmem:[%s5039 + $0x4] sm:$0xf]
        %v5044 = vunpack.c.l.b16 %v5040
        %v5045 = vunpack.c.l.b16 %v5041
        %v5046 = vpack.c.b16 %v5045, %v5044
        %v5049 = vsel %vm391, %v5023, 0
        %v5052 = vsel %vm391, %v5024, 0
        %v5055 = vsel %vm391, %v5025, 0
        %v5058 = vsel %vm391, %v5026, 0
        %v5061 = vsel %vm391, %v5027, 0
        %v5064 = vsel %vm391, %v5028, 0
        %v5067 = vsel %vm391, %v5029, 0
        %v5070 = vsel %vm391, %v5030, 0
        %v5073 = vsel %vm391, %v5031, 0
        %v5076 = vsel %vm391, %v5032, 0
        %v5079 = vsel %vm391, %v5033, 0
        %v5082 = vsel %vm391, %v5034, 0
        %v5085 = vsel %vm391, %v5035, 0
        %v5088 = vsel %vm391, %v5036, 0
        %v5091 = vsel %vm391, %v5037, 0
        %v5094 = vsel %vm391, %v5038, 0
        %5096 = vmatprep.subr.bf16.mxu0 0
        %5097 = vmatpush1.bf16.msra.mxu0 0
        %5098 = vmatprep.subr.bf16.mxu0 0
        %5099 = vmatpush1.bf16.msra.mxu0 0
        %5100 = vmatprep.subr.bf16.mxu0 0
        %5101 = vmatpush1.bf16.msra.mxu0 0
        %5102 = vmatprep.subr.bf16.mxu0 0
        %5103 = vmatpush1.bf16.msra.mxu0 0
        %5104 = vmatprep.subr.bf16.mxu0 0
        %5105 = vmatpush1.bf16.msra.mxu0 0
        %5106 = vmatprep.subr.bf16.mxu0 0
        %5107 = vmatpush1.bf16.msra.mxu0 0
        %5108 = vmatprep.subr.bf16.mxu0 0
        %5109 = vmatpush1.bf16.msra.mxu0 0
        %5110 = vmatprep.subr.bf16.mxu0 0
        %5111 = vmatpush1.bf16.msra.mxu0 %v5046
        %5112 = vmatprep.subr.bf16.mxu0 0
        %5113 = vmatpush2.bf16.msra.mxu0 0
        %5114 = vmatprep.subr.bf16.mxu0 0
        %5115 = vmatpush2.bf16.msra.mxu0 0
        %5116 = vmatprep.subr.bf16.mxu0 0
        %5117 = vmatpush2.bf16.msra.mxu0 0
        %5118 = vmatprep.subr.bf16.mxu0 0
        %5119 = vmatpush2.bf16.msra.mxu0 0
        %5120 = vmatprep.subr.bf16.mxu0 0
        %5121 = vmatpush2.bf16.msra.mxu0 0
        %5122 = vmatprep.subr.bf16.mxu0 0
        %5123 = vmatpush2.bf16.msra.mxu0 0
        %5124 = vmatprep.subr.bf16.mxu0 0
        %5125 = vmatpush2.bf16.msra.mxu0 0
        %5126 = vmatprep.subr.bf16.mxu0 0
        %5127 = vmatpush2.bf16.msra.mxu0 0
        %5128 = vmatprep.mubr.bf16.mxu0 0
        %5129 = vmatmul.mubr.bf16.gmra.mxu0 %v5049
        %v5130 = vpop.f32.mrf.mxu0
        %v5131 = vadd.f32 0.0, %v5130
        %v5132 = vpop.f32.mrf.mxu0
        %v5133 = vpop.f32.mrf.mxu0
        %v5134 = vadd.f32 0.0, %v5133
        %v5135 = vpop.f32.mrf.mxu0
        %5136 = vmatprep.mubr.bf16.mxu0 0
        %5137 = vmatmul.mubr.bf16.gmra.mxu0 %v5052
        %v5138 = vpop.f32.mrf.mxu0
        %v5139 = vadd.f32 0.0, %v5138
        %v5140 = vpop.f32.mrf.mxu0
        %v5141 = vpop.f32.mrf.mxu0
        %v5142 = vadd.f32 0.0, %v5141
        %v5143 = vpop.f32.mrf.mxu0
        %5144 = vmatprep.mubr.bf16.mxu0 0
        %5145 = vmatmul.mubr.bf16.gmra.mxu0 %v5055
        %v5146 = vpop.f32.mrf.mxu0
        %v5147 = vadd.f32 0.0, %v5146
        %v5148 = vpop.f32.mrf.mxu0
        %v5149 = vpop.f32.mrf.mxu0
        %v5150 = vadd.f32 0.0, %v5149
        %v5151 = vpop.f32.mrf.mxu0
        %5152 = vmatprep.mubr.bf16.mxu0 0
        %5153 = vmatmul.mubr.bf16.gmra.mxu0 %v5058
        %v5154 = vpop.f32.mrf.mxu0
        %v5155 = vadd.f32 0.0, %v5154
        %v5156 = vpop.f32.mrf.mxu0
        %v5157 = vpop.f32.mrf.mxu0
        %v5158 = vadd.f32 0.0, %v5157
        %v5159 = vpop.f32.mrf.mxu0
        %5160 = vmatprep.mubr.bf16.mxu0 0
        %5161 = vmatmul.mubr.bf16.gmra.mxu0 %v5061
        %v5162 = vpop.f32.mrf.mxu0
        %v5163 = vadd.f32 0.0, %v5162
        %v5164 = vpop.f32.mrf.mxu0
        %v5165 = vpop.f32.mrf.mxu0
        %v5166 = vadd.f32 0.0, %v5165
        %v5167 = vpop.f32.mrf.mxu0
        %5168 = vmatprep.mubr.bf16.mxu0 0
        %5169 = vmatmul.mubr.bf16.gmra.mxu0 %v5064
        %v5170 = vpop.f32.mrf.mxu0
        %v5171 = vadd.f32 0.0, %v5170
        %v5172 = vpop.f32.mrf.mxu0
        %v5173 = vpop.f32.mrf.mxu0
        %v5174 = vadd.f32 0.0, %v5173
        %v5175 = vpop.f32.mrf.mxu0
        %5176 = vmatprep.mubr.bf16.mxu0 0
        %5177 = vmatmul.mubr.bf16.gmra.mxu0 %v5067
        %v5178 = vpop.f32.mrf.mxu0
        %v5179 = vadd.f32 0.0, %v5178
        %v5180 = vpop.f32.mrf.mxu0
        %v5181 = vpop.f32.mrf.mxu0
        %v5182 = vadd.f32 0.0, %v5181
        %v5183 = vpop.f32.mrf.mxu0
        %5184 = vmatprep.mubr.bf16.mxu0 0
        %5185 = vmatmul.mubr.bf16.gmra.mxu0 %v5070
        %v5186 = vpop.f32.mrf.mxu0
        %v5187 = vadd.f32 0.0, %v5186
        %v5188 = vpop.f32.mrf.mxu0
        %v5189 = vpop.f32.mrf.mxu0
        %v5190 = vadd.f32 0.0, %v5189
        %v5191 = vpop.f32.mrf.mxu0
        %5192 = vmatprep.mubr.bf16.mxu0 0
        %5193 = vmatmul.mubr.bf16.gmra.mxu0 %v5073
        %v5194 = vpop.f32.mrf.mxu0
        %v5195 = vadd.f32 0.0, %v5194
        %v5196 = vpop.f32.mrf.mxu0
        %v5197 = vpop.f32.mrf.mxu0
        %v5198 = vadd.f32 0.0, %v5197
        %v5199 = vpop.f32.mrf.mxu0
        %5200 = vmatprep.mubr.bf16.mxu0 0
        %5201 = vmatmul.mubr.bf16.gmra.mxu0 %v5076
        %v5202 = vpop.f32.mrf.mxu0
        %v5203 = vadd.f32 0.0, %v5202
        %v5204 = vpop.f32.mrf.mxu0
        %v5205 = vpop.f32.mrf.mxu0
        %v5206 = vadd.f32 0.0, %v5205
        %v5207 = vpop.f32.mrf.mxu0
        %5208 = vmatprep.mubr.bf16.mxu0 0
        %5209 = vmatmul.mubr.bf16.gmra.mxu0 %v5079
        %v5210 = vpop.f32.mrf.mxu0
        %v5211 = vadd.f32 0.0, %v5210
        %v5212 = vpop.f32.mrf.mxu0
        %v5213 = vpop.f32.mrf.mxu0
        %v5214 = vadd.f32 0.0, %v5213
        %v5215 = vpop.f32.mrf.mxu0
        %5216 = vmatprep.mubr.bf16.mxu0 0
        %5217 = vmatmul.mubr.bf16.gmra.mxu0 %v5082
        %v5218 = vpop.f32.mrf.mxu0
        %v5219 = vadd.f32 0.0, %v5218
        %v5220 = vpop.f32.mrf.mxu0
        %v5221 = vpop.f32.mrf.mxu0
        %v5222 = vadd.f32 0.0, %v5221
        %v5223 = vpop.f32.mrf.mxu0
        %5224 = vmatprep.mubr.bf16.mxu0 0
        %5225 = vmatmul.mubr.bf16.gmra.mxu0 %v5085
        %v5226 = vpop.f32.mrf.mxu0
        %v5227 = vadd.f32 0.0, %v5226
        %v5228 = vpop.f32.mrf.mxu0
        %v5229 = vpop.f32.mrf.mxu0
        %v5230 = vadd.f32 0.0, %v5229
        %v5231 = vpop.f32.mrf.mxu0
        %5232 = vmatprep.mubr.bf16.mxu0 0
        %5233 = vmatmul.mubr.bf16.gmra.mxu0 %v5088
        %v5234 = vpop.f32.mrf.mxu0
        %v5235 = vadd.f32 0.0, %v5234
        %v5236 = vpop.f32.mrf.mxu0
        %v5237 = vpop.f32.mrf.mxu0
        %v5238 = vadd.f32 0.0, %v5237
        %v5239 = vpop.f32.mrf.mxu0
        %5240 = vmatprep.mubr.bf16.mxu0 0
        %5241 = vmatmul.mubr.bf16.gmra.mxu0 %v5091
        %v5242 = vpop.f32.mrf.mxu0
        %v5243 = vadd.f32 0.0, %v5242
        %v5244 = vpop.f32.mrf.mxu0
        %v5245 = vpop.f32.mrf.mxu0
        %v5246 = vadd.f32 0.0, %v5245
        %v5247 = vpop.f32.mrf.mxu0
        %5248 = vmatprep.mubr.bf16.mxu0 0
        %5249 = vmatmul.mubr.bf16.gmra.mxu0 %v5094
        %v5250 = vpop.f32.mrf.mxu0
        %v5251 = vadd.f32 0.0, %v5250
        %v5252 = vpop.f32.mrf.mxu0
        %v5253 = vpop.f32.mrf.mxu0
        %v5254 = vadd.f32 0.0, %v5253
        %v5255 = vpop.f32.mrf.mxu0
        %5256 = vdwg.mxu0
        %v5257 = vadd.f32 %v4959, %v5131
        %v5258 = vadd.f32 %v4960, %v5134
        %v5259 = vadd.f32 %v4961, %v5139
        %v5260 = vadd.f32 %v4962, %v5142
        %v5261 = vadd.f32 %v4963, %v5147
        %v5262 = vadd.f32 %v4964, %v5150
        %v5263 = vadd.f32 %v4965, %v5155
        %v5264 = vadd.f32 %v4966, %v5158
        %v5265 = vadd.f32 %v4967, %v5163
        %v5266 = vadd.f32 %v4968, %v5166
        %v5267 = vadd.f32 %v4969, %v5171
        %v5268 = vadd.f32 %v4970, %v5174
        %v5269 = vadd.f32 %v4971, %v5179
        %v5270 = vadd.f32 %v4972, %v5182
        %v5271 = vadd.f32 %v4973, %v5187
        %v5272 = vadd.f32 %v4974, %v5190
        %v5273 = vadd.f32 %v4975, %v5195
        %v5274 = vadd.f32 %v4976, %v5198
        %v5275 = vadd.f32 %v4977, %v5203
        %v5276 = vadd.f32 %v4978, %v5206
        %v5277 = vadd.f32 %v4979, %v5211
        %v5278 = vadd.f32 %v4980, %v5214
        %v5279 = vadd.f32 %v4981, %v5219
        %v5280 = vadd.f32 %v4982, %v5222
        %v5281 = vadd.f32 %v4983, %v5227
        %v5282 = vadd.f32 %v4984, %v5230
        %v5283 = vadd.f32 %v4985, %v5235
        %v5284 = vadd.f32 %v4986, %v5238
        %v5285 = vadd.f32 %v4987, %v5243
        %v5286 = vadd.f32 %v4988, %v5246
        %v5287 = vadd.f32 %v4989, %v5251
        %v5288 = vadd.f32 %v4990, %v5254
        %v5289 = vld [vmem:[%s4692 + $0x2] sm:$0xff]
        %v5290 = vld [vmem:[%s4692 + $0xa] sm:$0xff]
        %v5291 = vld [vmem:[%s4692 + $0x1a] sm:$0xff]
        %v5292 = vld [vmem:[%s4692 + $0x22] sm:$0xff]
        %v5293 = vld [vmem:[%s4692 + $0x32] sm:$0xff]
        %v5294 = vld [vmem:[%s4692 + $0x3a] sm:$0xff]
        %v5295 = vld [vmem:[%s4692 + $0x4a] sm:$0xff]
        %v5296 = vld [vmem:[%s4692 + $0x52] sm:$0xff]
        %v5297 = vld [vmem:[%s4692 + $0x62] sm:$0xff]
        %v5298 = vld [vmem:[%s4692 + $0x6a] sm:$0xff]
        %v5299 = vld [vmem:[%s4692 + $0x7a] sm:$0xff]
        %v5300 = vld [vmem:[%s4692 + $0x82] sm:$0xff]
        %v5301 = vld [vmem:[%s4692 + $0x92] sm:$0xff]
        %v5302 = vld [vmem:[%s4692 + $0x9a] sm:$0xff]
        %v5303 = vld [vmem:[%s4692 + $0xaa] sm:$0xff]
        %v5304 = vld [vmem:[%s4692 + $0xb2] sm:$0xff]
        %v5305 = vld [vmem:[%s4692 + $0xc2] sm:$0xff]
        %v5306 = vld [vmem:[%s4692 + $0xca] sm:$0xff]
        %v5307 = vld [vmem:[%s4692 + $0xda] sm:$0xff]
        %v5308 = vld [vmem:[%s4692 + $0xe2] sm:$0xff]
        %v5309 = vld [vmem:[%s4692 + $0xf2] sm:$0xff]
        %v5310 = vld [vmem:[%s4692 + $0xfa] sm:$0xff]
        %v5311 = vld [vmem:[%s4692 + $0x10a] sm:$0xff]
        %v5312 = vld [vmem:[%s4692 + $0x112] sm:$0xff]
        %v5313 = vld [vmem:[%s4692 + $0x122] sm:$0xff]
        %v5314 = vld [vmem:[%s4692 + $0x12a] sm:$0xff]
        %v5315 = vld [vmem:[%s4692 + $0x13a] sm:$0xff]
        %v5316 = vld [vmem:[%s4692 + $0x142] sm:$0xff]
        %v5317 = vld [vmem:[%s4692 + $0x152] sm:$0xff]
        %v5318 = vld [vmem:[%s4692 + $0x15a] sm:$0xff]
        %v5319 = vld [vmem:[%s4692 + $0x16a] sm:$0xff]
        %v5320 = vld [vmem:[%s4692 + $0x172] sm:$0xff]
        %v5321 = vpack.c.bf16 %v5290, %v5289
        %v5322 = vpack.c.bf16 %v5292, %v5291
        %v5323 = vpack.c.bf16 %v5294, %v5293
        %v5324 = vpack.c.bf16 %v5296, %v5295
        %v5325 = vpack.c.bf16 %v5298, %v5297
        %v5326 = vpack.c.bf16 %v5300, %v5299
        %v5327 = vpack.c.bf16 %v5302, %v5301
        %v5328 = vpack.c.bf16 %v5304, %v5303
        %v5329 = vpack.c.bf16 %v5306, %v5305
        %v5330 = vpack.c.bf16 %v5308, %v5307
        %v5331 = vpack.c.bf16 %v5310, %v5309
        %v5332 = vpack.c.bf16 %v5312, %v5311
        %v5333 = vpack.c.bf16 %v5314, %v5313
        %v5334 = vpack.c.bf16 %v5316, %v5315
        %v5335 = vpack.c.bf16 %v5318, %v5317
        %v5336 = vpack.c.bf16 %v5320, %v5319
        %s5337 = scalar_lea.vmem %s2, 136
        %v5338 = vld [vmem:[%s5337] sm:$0xf]
        %v5339 = vld [vmem:[%s5337 + $0x4] sm:$0xf]
        %v5342 = vunpack.c.l.b16 %v5338
        %v5343 = vunpack.c.l.b16 %v5339
        %v5344 = vpack.c.b16 %v5343, %v5342
        %v5347 = vsel %vm391, %v5321, 0
        %v5350 = vsel %vm391, %v5322, 0
        %v5353 = vsel %vm391, %v5323, 0
        %v5356 = vsel %vm391, %v5324, 0
        %v5359 = vsel %vm391, %v5325, 0
        %v5362 = vsel %vm391, %v5326, 0
        %v5365 = vsel %vm391, %v5327, 0
        %v5368 = vsel %vm391, %v5328, 0
        %v5371 = vsel %vm391, %v5329, 0
        %v5374 = vsel %vm391, %v5330, 0
        %v5377 = vsel %vm391, %v5331, 0
        %v5380 = vsel %vm391, %v5332, 0
        %v5383 = vsel %vm391, %v5333, 0
        %v5386 = vsel %vm391, %v5334, 0
        %v5389 = vsel %vm391, %v5335, 0
        %v5392 = vsel %vm391, %v5336, 0
        %5394 = vmatprep.subr.bf16.mxu0 0
        %5395 = vmatpush1.bf16.msra.mxu0 0
        %5396 = vmatprep.subr.bf16.mxu0 0
        %5397 = vmatpush1.bf16.msra.mxu0 0
        %5398 = vmatprep.subr.bf16.mxu0 0
        %5399 = vmatpush1.bf16.msra.mxu0 0
        %5400 = vmatprep.subr.bf16.mxu0 0
        %5401 = vmatpush1.bf16.msra.mxu0 0
        %5402 = vmatprep.subr.bf16.mxu0 0
        %5403 = vmatpush1.bf16.msra.mxu0 0
        %5404 = vmatprep.subr.bf16.mxu0 0
        %5405 = vmatpush1.bf16.msra.mxu0 0
        %5406 = vmatprep.subr.bf16.mxu0 0
        %5407 = vmatpush1.bf16.msra.mxu0 0
        %5408 = vmatprep.subr.bf16.mxu0 0
        %5409 = vmatpush1.bf16.msra.mxu0 %v5344
        %5410 = vmatprep.subr.bf16.mxu0 0
        %5411 = vmatpush2.bf16.msra.mxu0 0
        %5412 = vmatprep.subr.bf16.mxu0 0
        %5413 = vmatpush2.bf16.msra.mxu0 0
        %5414 = vmatprep.subr.bf16.mxu0 0
        %5415 = vmatpush2.bf16.msra.mxu0 0
        %5416 = vmatprep.subr.bf16.mxu0 0
        %5417 = vmatpush2.bf16.msra.mxu0 0
        %5418 = vmatprep.subr.bf16.mxu0 0
        %5419 = vmatpush2.bf16.msra.mxu0 0
        %5420 = vmatprep.subr.bf16.mxu0 0
        %5421 = vmatpush2.bf16.msra.mxu0 0
        %5422 = vmatprep.subr.bf16.mxu0 0
        %5423 = vmatpush2.bf16.msra.mxu0 0
        %5424 = vmatprep.subr.bf16.mxu0 0
        %5425 = vmatpush2.bf16.msra.mxu0 0
        %5426 = vmatprep.mubr.bf16.mxu0 0
        %5427 = vmatmul.mubr.bf16.gmra.mxu0 %v5347
        %v5428 = vpop.f32.mrf.mxu0
        %v5429 = vadd.f32 0.0, %v5428
        %v5430 = vpop.f32.mrf.mxu0
        %v5431 = vpop.f32.mrf.mxu0
        %v5432 = vadd.f32 0.0, %v5431
        %v5433 = vpop.f32.mrf.mxu0
        %5434 = vmatprep.mubr.bf16.mxu0 0
        %5435 = vmatmul.mubr.bf16.gmra.mxu0 %v5350
        %v5436 = vpop.f32.mrf.mxu0
        %v5437 = vadd.f32 0.0, %v5436
        %v5438 = vpop.f32.mrf.mxu0
        %v5439 = vpop.f32.mrf.mxu0
        %v5440 = vadd.f32 0.0, %v5439
        %v5441 = vpop.f32.mrf.mxu0
        %5442 = vmatprep.mubr.bf16.mxu0 0
        %5443 = vmatmul.mubr.bf16.gmra.mxu0 %v5353
        %v5444 = vpop.f32.mrf.mxu0
        %v5445 = vadd.f32 0.0, %v5444
        %v5446 = vpop.f32.mrf.mxu0
        %v5447 = vpop.f32.mrf.mxu0
        %v5448 = vadd.f32 0.0, %v5447
        %v5449 = vpop.f32.mrf.mxu0
        %5450 = vmatprep.mubr.bf16.mxu0 0
        %5451 = vmatmul.mubr.bf16.gmra.mxu0 %v5356
        %v5452 = vpop.f32.mrf.mxu0
        %v5453 = vadd.f32 0.0, %v5452
        %v5454 = vpop.f32.mrf.mxu0
        %v5455 = vpop.f32.mrf.mxu0
        %v5456 = vadd.f32 0.0, %v5455
        %v5457 = vpop.f32.mrf.mxu0
        %5458 = vmatprep.mubr.bf16.mxu0 0
        %5459 = vmatmul.mubr.bf16.gmra.mxu0 %v5359
        %v5460 = vpop.f32.mrf.mxu0
        %v5461 = vadd.f32 0.0, %v5460
        %v5462 = vpop.f32.mrf.mxu0
        %v5463 = vpop.f32.mrf.mxu0
        %v5464 = vadd.f32 0.0, %v5463
        %v5465 = vpop.f32.mrf.mxu0
        %5466 = vmatprep.mubr.bf16.mxu0 0
        %5467 = vmatmul.mubr.bf16.gmra.mxu0 %v5362
        %v5468 = vpop.f32.mrf.mxu0
        %v5469 = vadd.f32 0.0, %v5468
        %v5470 = vpop.f32.mrf.mxu0
        %v5471 = vpop.f32.mrf.mxu0
        %v5472 = vadd.f32 0.0, %v5471
        %v5473 = vpop.f32.mrf.mxu0
        %5474 = vmatprep.mubr.bf16.mxu0 0
        %5475 = vmatmul.mubr.bf16.gmra.mxu0 %v5365
        %v5476 = vpop.f32.mrf.mxu0
        %v5477 = vadd.f32 0.0, %v5476
        %v5478 = vpop.f32.mrf.mxu0
        %v5479 = vpop.f32.mrf.mxu0
        %v5480 = vadd.f32 0.0, %v5479
        %v5481 = vpop.f32.mrf.mxu0
        %5482 = vmatprep.mubr.bf16.mxu0 0
        %5483 = vmatmul.mubr.bf16.gmra.mxu0 %v5368
        %v5484 = vpop.f32.mrf.mxu0
        %v5485 = vadd.f32 0.0, %v5484
        %v5486 = vpop.f32.mrf.mxu0
        %v5487 = vpop.f32.mrf.mxu0
        %v5488 = vadd.f32 0.0, %v5487
        %v5489 = vpop.f32.mrf.mxu0
        %5490 = vmatprep.mubr.bf16.mxu0 0
        %5491 = vmatmul.mubr.bf16.gmra.mxu0 %v5371
        %v5492 = vpop.f32.mrf.mxu0
        %v5493 = vadd.f32 0.0, %v5492
        %v5494 = vpop.f32.mrf.mxu0
        %v5495 = vpop.f32.mrf.mxu0
        %v5496 = vadd.f32 0.0, %v5495
        %v5497 = vpop.f32.mrf.mxu0
        %5498 = vmatprep.mubr.bf16.mxu0 0
        %5499 = vmatmul.mubr.bf16.gmra.mxu0 %v5374
        %v5500 = vpop.f32.mrf.mxu0
        %v5501 = vadd.f32 0.0, %v5500
        %v5502 = vpop.f32.mrf.mxu0
        %v5503 = vpop.f32.mrf.mxu0
        %v5504 = vadd.f32 0.0, %v5503
        %v5505 = vpop.f32.mrf.mxu0
        %5506 = vmatprep.mubr.bf16.mxu0 0
        %5507 = vmatmul.mubr.bf16.gmra.mxu0 %v5377
        %v5508 = vpop.f32.mrf.mxu0
        %v5509 = vadd.f32 0.0, %v5508
        %v5510 = vpop.f32.mrf.mxu0
        %v5511 = vpop.f32.mrf.mxu0
        %v5512 = vadd.f32 0.0, %v5511
        %v5513 = vpop.f32.mrf.mxu0
        %5514 = vmatprep.mubr.bf16.mxu0 0
        %5515 = vmatmul.mubr.bf16.gmra.mxu0 %v5380
        %v5516 = vpop.f32.mrf.mxu0
        %v5517 = vadd.f32 0.0, %v5516
        %v5518 = vpop.f32.mrf.mxu0
        %v5519 = vpop.f32.mrf.mxu0
        %v5520 = vadd.f32 0.0, %v5519
        %v5521 = vpop.f32.mrf.mxu0
        %5522 = vmatprep.mubr.bf16.mxu0 0
        %5523 = vmatmul.mubr.bf16.gmra.mxu0 %v5383
        %v5524 = vpop.f32.mrf.mxu0
        %v5525 = vadd.f32 0.0, %v5524
        %v5526 = vpop.f32.mrf.mxu0
        %v5527 = vpop.f32.mrf.mxu0
        %v5528 = vadd.f32 0.0, %v5527
        %v5529 = vpop.f32.mrf.mxu0
        %5530 = vmatprep.mubr.bf16.mxu0 0
        %5531 = vmatmul.mubr.bf16.gmra.mxu0 %v5386
        %v5532 = vpop.f32.mrf.mxu0
        %v5533 = vadd.f32 0.0, %v5532
        %v5534 = vpop.f32.mrf.mxu0
        %v5535 = vpop.f32.mrf.mxu0
        %v5536 = vadd.f32 0.0, %v5535
        %v5537 = vpop.f32.mrf.mxu0
        %5538 = vmatprep.mubr.bf16.mxu0 0
        %5539 = vmatmul.mubr.bf16.gmra.mxu0 %v5389
        %v5540 = vpop.f32.mrf.mxu0
        %v5541 = vadd.f32 0.0, %v5540
        %v5542 = vpop.f32.mrf.mxu0
        %v5543 = vpop.f32.mrf.mxu0
        %v5544 = vadd.f32 0.0, %v5543
        %v5545 = vpop.f32.mrf.mxu0
        %5546 = vmatprep.mubr.bf16.mxu0 0
        %5547 = vmatmul.mubr.bf16.gmra.mxu0 %v5392
        %v5548 = vpop.f32.mrf.mxu0
        %v5549 = vadd.f32 0.0, %v5548
        %v5550 = vpop.f32.mrf.mxu0
        %v5551 = vpop.f32.mrf.mxu0
        %v5552 = vadd.f32 0.0, %v5551
        %v5553 = vpop.f32.mrf.mxu0
        %5554 = vdwg.mxu0
        %v5555 = vadd.f32 %v5257, %v5429
        %v5556 = vadd.f32 %v5258, %v5432
        %v5557 = vadd.f32 %v5259, %v5437
        %v5558 = vadd.f32 %v5260, %v5440
        %v5559 = vadd.f32 %v5261, %v5445
        %v5560 = vadd.f32 %v5262, %v5448
        %v5561 = vadd.f32 %v5263, %v5453
        %v5562 = vadd.f32 %v5264, %v5456
        %v5563 = vadd.f32 %v5265, %v5461
        %v5564 = vadd.f32 %v5266, %v5464
        %v5565 = vadd.f32 %v5267, %v5469
        %v5566 = vadd.f32 %v5268, %v5472
        %v5567 = vadd.f32 %v5269, %v5477
        %v5568 = vadd.f32 %v5270, %v5480
        %v5569 = vadd.f32 %v5271, %v5485
        %v5570 = vadd.f32 %v5272, %v5488
        %v5571 = vadd.f32 %v5273, %v5493
        %v5572 = vadd.f32 %v5274, %v5496
        %v5573 = vadd.f32 %v5275, %v5501
        %v5574 = vadd.f32 %v5276, %v5504
        %v5575 = vadd.f32 %v5277, %v5509
        %v5576 = vadd.f32 %v5278, %v5512
        %v5577 = vadd.f32 %v5279, %v5517
        %v5578 = vadd.f32 %v5280, %v5520
        %v5579 = vadd.f32 %v5281, %v5525
        %v5580 = vadd.f32 %v5282, %v5528
        %v5581 = vadd.f32 %v5283, %v5533
        %v5582 = vadd.f32 %v5284, %v5536
        %v5583 = vadd.f32 %v5285, %v5541
        %v5584 = vadd.f32 %v5286, %v5544
        %v5585 = vadd.f32 %v5287, %v5549
        %v5586 = vadd.f32 %v5288, %v5552
        %v5587 = vld [vmem:[%s4692 + $0x3] sm:$0xff]
        %v5588 = vld [vmem:[%s4692 + $0xb] sm:$0xff]
        %v5589 = vld [vmem:[%s4692 + $0x1b] sm:$0xff]
        %v5590 = vld [vmem:[%s4692 + $0x23] sm:$0xff]
        %v5591 = vld [vmem:[%s4692 + $0x33] sm:$0xff]
        %v5592 = vld [vmem:[%s4692 + $0x3b] sm:$0xff]
        %v5593 = vld [vmem:[%s4692 + $0x4b] sm:$0xff]
        %v5594 = vld [vmem:[%s4692 + $0x53] sm:$0xff]
        %v5595 = vld [vmem:[%s4692 + $0x63] sm:$0xff]
        %v5596 = vld [vmem:[%s4692 + $0x6b] sm:$0xff]
        %v5597 = vld [vmem:[%s4692 + $0x7b] sm:$0xff]
        %v5598 = vld [vmem:[%s4692 + $0x83] sm:$0xff]
        %v5599 = vld [vmem:[%s4692 + $0x93] sm:$0xff]
        %v5600 = vld [vmem:[%s4692 + $0x9b] sm:$0xff]
        %v5601 = vld [vmem:[%s4692 + $0xab] sm:$0xff]
        %v5602 = vld [vmem:[%s4692 + $0xb3] sm:$0xff]
        %v5603 = vld [vmem:[%s4692 + $0xc3] sm:$0xff]
        %v5604 = vld [vmem:[%s4692 + $0xcb] sm:$0xff]
        %v5605 = vld [vmem:[%s4692 + $0xdb] sm:$0xff]
        %v5606 = vld [vmem:[%s4692 + $0xe3] sm:$0xff]
        %v5607 = vld [vmem:[%s4692 + $0xf3] sm:$0xff]
        %v5608 = vld [vmem:[%s4692 + $0xfb] sm:$0xff]
        %v5609 = vld [vmem:[%s4692 + $0x10b] sm:$0xff]
        %v5610 = vld [vmem:[%s4692 + $0x113] sm:$0xff]
        %v5611 = vld [vmem:[%s4692 + $0x123] sm:$0xff]
        %v5612 = vld [vmem:[%s4692 + $0x12b] sm:$0xff]
        %v5613 = vld [vmem:[%s4692 + $0x13b] sm:$0xff]
        %v5614 = vld [vmem:[%s4692 + $0x143] sm:$0xff]
        %v5615 = vld [vmem:[%s4692 + $0x153] sm:$0xff]
        %v5616 = vld [vmem:[%s4692 + $0x15b] sm:$0xff]
        %v5617 = vld [vmem:[%s4692 + $0x16b] sm:$0xff]
        %v5618 = vld [vmem:[%s4692 + $0x173] sm:$0xff]
        %v5619 = vpack.c.bf16 %v5588, %v5587
        %v5620 = vpack.c.bf16 %v5590, %v5589
        %v5621 = vpack.c.bf16 %v5592, %v5591
        %v5622 = vpack.c.bf16 %v5594, %v5593
        %v5623 = vpack.c.bf16 %v5596, %v5595
        %v5624 = vpack.c.bf16 %v5598, %v5597
        %v5625 = vpack.c.bf16 %v5600, %v5599
        %v5626 = vpack.c.bf16 %v5602, %v5601
        %v5627 = vpack.c.bf16 %v5604, %v5603
        %v5628 = vpack.c.bf16 %v5606, %v5605
        %v5629 = vpack.c.bf16 %v5608, %v5607
        %v5630 = vpack.c.bf16 %v5610, %v5609
        %v5631 = vpack.c.bf16 %v5612, %v5611
        %v5632 = vpack.c.bf16 %v5614, %v5613
        %v5633 = vpack.c.bf16 %v5616, %v5615
        %v5634 = vpack.c.bf16 %v5618, %v5617
        %s5635 = scalar_lea.vmem %s2, 144
        %v5636 = vld [vmem:[%s5635] sm:$0xf]
        %v5637 = vld [vmem:[%s5635 + $0x4] sm:$0xf]
        %v5640 = vunpack.c.l.b16 %v5636
        %v5641 = vunpack.c.l.b16 %v5637
        %v5642 = vpack.c.b16 %v5641, %v5640
        %v5645 = vsel %vm391, %v5619, 0
        %v5648 = vsel %vm391, %v5620, 0
        %v5651 = vsel %vm391, %v5621, 0
        %v5654 = vsel %vm391, %v5622, 0
        %v5657 = vsel %vm391, %v5623, 0
        %v5660 = vsel %vm391, %v5624, 0
        %v5663 = vsel %vm391, %v5625, 0
        %v5666 = vsel %vm391, %v5626, 0
        %v5669 = vsel %vm391, %v5627, 0
        %v5672 = vsel %vm391, %v5628, 0
        %v5675 = vsel %vm391, %v5629, 0
        %v5678 = vsel %vm391, %v5630, 0
        %v5681 = vsel %vm391, %v5631, 0
        %v5684 = vsel %vm391, %v5632, 0
        %v5687 = vsel %vm391, %v5633, 0
        %v5690 = vsel %vm391, %v5634, 0
        %5692 = vmatprep.subr.bf16.mxu0 0
        %5693 = vmatpush1.bf16.msra.mxu0 0
        %5694 = vmatprep.subr.bf16.mxu0 0
        %5695 = vmatpush1.bf16.msra.mxu0 0
        %5696 = vmatprep.subr.bf16.mxu0 0
        %5697 = vmatpush1.bf16.msra.mxu0 0
        %5698 = vmatprep.subr.bf16.mxu0 0
        %5699 = vmatpush1.bf16.msra.mxu0 0
        %5700 = vmatprep.subr.bf16.mxu0 0
        %5701 = vmatpush1.bf16.msra.mxu0 0
        %5702 = vmatprep.subr.bf16.mxu0 0
        %5703 = vmatpush1.bf16.msra.mxu0 0
        %5704 = vmatprep.subr.bf16.mxu0 0
        %5705 = vmatpush1.bf16.msra.mxu0 0
        %5706 = vmatprep.subr.bf16.mxu0 0
        %5707 = vmatpush1.bf16.msra.mxu0 %v5642
        %5708 = vmatprep.subr.bf16.mxu0 0
        %5709 = vmatpush2.bf16.msra.mxu0 0
        %5710 = vmatprep.subr.bf16.mxu0 0
        %5711 = vmatpush2.bf16.msra.mxu0 0
        %5712 = vmatprep.subr.bf16.mxu0 0
        %5713 = vmatpush2.bf16.msra.mxu0 0
        %5714 = vmatprep.subr.bf16.mxu0 0
        %5715 = vmatpush2.bf16.msra.mxu0 0
        %5716 = vmatprep.subr.bf16.mxu0 0
        %5717 = vmatpush2.bf16.msra.mxu0 0
        %5718 = vmatprep.subr.bf16.mxu0 0
        %5719 = vmatpush2.bf16.msra.mxu0 0
        %5720 = vmatprep.subr.bf16.mxu0 0
        %5721 = vmatpush2.bf16.msra.mxu0 0
        %5722 = vmatprep.subr.bf16.mxu0 0
        %5723 = vmatpush2.bf16.msra.mxu0 0
        %5724 = vmatprep.mubr.bf16.mxu0 0
        %5725 = vmatmul.mubr.bf16.gmra.mxu0 %v5645
        %v5726 = vpop.f32.mrf.mxu0
        %v5727 = vadd.f32 0.0, %v5726
        %v5728 = vpop.f32.mrf.mxu0
        %v5729 = vpop.f32.mrf.mxu0
        %v5730 = vadd.f32 0.0, %v5729
        %v5731 = vpop.f32.mrf.mxu0
        %5732 = vmatprep.mubr.bf16.mxu0 0
        %5733 = vmatmul.mubr.bf16.gmra.mxu0 %v5648
        %v5734 = vpop.f32.mrf.mxu0
        %v5735 = vadd.f32 0.0, %v5734
        %v5736 = vpop.f32.mrf.mxu0
        %v5737 = vpop.f32.mrf.mxu0
        %v5738 = vadd.f32 0.0, %v5737
        %v5739 = vpop.f32.mrf.mxu0
        %5740 = vmatprep.mubr.bf16.mxu0 0
        %5741 = vmatmul.mubr.bf16.gmra.mxu0 %v5651
        %v5742 = vpop.f32.mrf.mxu0
        %v5743 = vadd.f32 0.0, %v5742
        %v5744 = vpop.f32.mrf.mxu0
        %v5745 = vpop.f32.mrf.mxu0
        %v5746 = vadd.f32 0.0, %v5745
        %v5747 = vpop.f32.mrf.mxu0
        %5748 = vmatprep.mubr.bf16.mxu0 0
        %5749 = vmatmul.mubr.bf16.gmra.mxu0 %v5654
        %v5750 = vpop.f32.mrf.mxu0
        %v5751 = vadd.f32 0.0, %v5750
        %v5752 = vpop.f32.mrf.mxu0
        %v5753 = vpop.f32.mrf.mxu0
        %v5754 = vadd.f32 0.0, %v5753
        %v5755 = vpop.f32.mrf.mxu0
        %5756 = vmatprep.mubr.bf16.mxu0 0
        %5757 = vmatmul.mubr.bf16.gmra.mxu0 %v5657
        %v5758 = vpop.f32.mrf.mxu0
        %v5759 = vadd.f32 0.0, %v5758
        %v5760 = vpop.f32.mrf.mxu0
        %v5761 = vpop.f32.mrf.mxu0
        %v5762 = vadd.f32 0.0, %v5761
        %v5763 = vpop.f32.mrf.mxu0
        %5764 = vmatprep.mubr.bf16.mxu0 0
        %5765 = vmatmul.mubr.bf16.gmra.mxu0 %v5660
        %v5766 = vpop.f32.mrf.mxu0
        %v5767 = vadd.f32 0.0, %v5766
        %v5768 = vpop.f32.mrf.mxu0
        %v5769 = vpop.f32.mrf.mxu0
        %v5770 = vadd.f32 0.0, %v5769
        %v5771 = vpop.f32.mrf.mxu0
        %5772 = vmatprep.mubr.bf16.mxu0 0
        %5773 = vmatmul.mubr.bf16.gmra.mxu0 %v5663
        %v5774 = vpop.f32.mrf.mxu0
        %v5775 = vadd.f32 0.0, %v5774
        %v5776 = vpop.f32.mrf.mxu0
        %v5777 = vpop.f32.mrf.mxu0
        %v5778 = vadd.f32 0.0, %v5777
        %v5779 = vpop.f32.mrf.mxu0
        %5780 = vmatprep.mubr.bf16.mxu0 0
        %5781 = vmatmul.mubr.bf16.gmra.mxu0 %v5666
        %v5782 = vpop.f32.mrf.mxu0
        %v5783 = vadd.f32 0.0, %v5782
        %v5784 = vpop.f32.mrf.mxu0
        %v5785 = vpop.f32.mrf.mxu0
        %v5786 = vadd.f32 0.0, %v5785
        %v5787 = vpop.f32.mrf.mxu0
        %5788 = vmatprep.mubr.bf16.mxu0 0
        %5789 = vmatmul.mubr.bf16.gmra.mxu0 %v5669
        %v5790 = vpop.f32.mrf.mxu0
        %v5791 = vadd.f32 0.0, %v5790
        %v5792 = vpop.f32.mrf.mxu0
        %v5793 = vpop.f32.mrf.mxu0
        %v5794 = vadd.f32 0.0, %v5793
        %v5795 = vpop.f32.mrf.mxu0
        %5796 = vmatprep.mubr.bf16.mxu0 0
        %5797 = vmatmul.mubr.bf16.gmra.mxu0 %v5672
        %v5798 = vpop.f32.mrf.mxu0
        %v5799 = vadd.f32 0.0, %v5798
        %v5800 = vpop.f32.mrf.mxu0
        %v5801 = vpop.f32.mrf.mxu0
        %v5802 = vadd.f32 0.0, %v5801
        %v5803 = vpop.f32.mrf.mxu0
        %5804 = vmatprep.mubr.bf16.mxu0 0
        %5805 = vmatmul.mubr.bf16.gmra.mxu0 %v5675
        %v5806 = vpop.f32.mrf.mxu0
        %v5807 = vadd.f32 0.0, %v5806
        %v5808 = vpop.f32.mrf.mxu0
        %v5809 = vpop.f32.mrf.mxu0
        %v5810 = vadd.f32 0.0, %v5809
        %v5811 = vpop.f32.mrf.mxu0
        %5812 = vmatprep.mubr.bf16.mxu0 0
        %5813 = vmatmul.mubr.bf16.gmra.mxu0 %v5678
        %v5814 = vpop.f32.mrf.mxu0
        %v5815 = vadd.f32 0.0, %v5814
        %v5816 = vpop.f32.mrf.mxu0
        %v5817 = vpop.f32.mrf.mxu0
        %v5818 = vadd.f32 0.0, %v5817
        %v5819 = vpop.f32.mrf.mxu0
        %5820 = vmatprep.mubr.bf16.mxu0 0
        %5821 = vmatmul.mubr.bf16.gmra.mxu0 %v5681
        %v5822 = vpop.f32.mrf.mxu0
        %v5823 = vadd.f32 0.0, %v5822
        %v5824 = vpop.f32.mrf.mxu0
        %v5825 = vpop.f32.mrf.mxu0
        %v5826 = vadd.f32 0.0, %v5825
        %v5827 = vpop.f32.mrf.mxu0
        %5828 = vmatprep.mubr.bf16.mxu0 0
        %5829 = vmatmul.mubr.bf16.gmra.mxu0 %v5684
        %v5830 = vpop.f32.mrf.mxu0
        %v5831 = vadd.f32 0.0, %v5830
        %v5832 = vpop.f32.mrf.mxu0
        %v5833 = vpop.f32.mrf.mxu0
        %v5834 = vadd.f32 0.0, %v5833
        %v5835 = vpop.f32.mrf.mxu0
        %5836 = vmatprep.mubr.bf16.mxu0 0
        %5837 = vmatmul.mubr.bf16.gmra.mxu0 %v5687
        %v5838 = vpop.f32.mrf.mxu0
        %v5839 = vadd.f32 0.0, %v5838
        %v5840 = vpop.f32.mrf.mxu0
        %v5841 = vpop.f32.mrf.mxu0
        %v5842 = vadd.f32 0.0, %v5841
        %v5843 = vpop.f32.mrf.mxu0
        %5844 = vmatprep.mubr.bf16.mxu0 0
        %5845 = vmatmul.mubr.bf16.gmra.mxu0 %v5690
        %v5846 = vpop.f32.mrf.mxu0
        %v5847 = vadd.f32 0.0, %v5846
        %v5848 = vpop.f32.mrf.mxu0
        %v5849 = vpop.f32.mrf.mxu0
        %v5850 = vadd.f32 0.0, %v5849
        %v5851 = vpop.f32.mrf.mxu0
        %5852 = vdwg.mxu0
        %v5853 = vadd.f32 %v5555, %v5727
        %v5854 = vadd.f32 %v5556, %v5730
        %v5855 = vadd.f32 %v5557, %v5735
        %v5856 = vadd.f32 %v5558, %v5738
        %v5857 = vadd.f32 %v5559, %v5743
        %v5858 = vadd.f32 %v5560, %v5746
        %v5859 = vadd.f32 %v5561, %v5751
        %v5860 = vadd.f32 %v5562, %v5754
        %v5861 = vadd.f32 %v5563, %v5759
        %v5862 = vadd.f32 %v5564, %v5762
        %v5863 = vadd.f32 %v5565, %v5767
        %v5864 = vadd.f32 %v5566, %v5770
        %v5865 = vadd.f32 %v5567, %v5775
        %v5866 = vadd.f32 %v5568, %v5778
        %v5867 = vadd.f32 %v5569, %v5783
        %v5868 = vadd.f32 %v5570, %v5786
        %v5869 = vadd.f32 %v5571, %v5791
        %v5870 = vadd.f32 %v5572, %v5794
        %v5871 = vadd.f32 %v5573, %v5799
        %v5872 = vadd.f32 %v5574, %v5802
        %v5873 = vadd.f32 %v5575, %v5807
        %v5874 = vadd.f32 %v5576, %v5810
        %v5875 = vadd.f32 %v5577, %v5815
        %v5876 = vadd.f32 %v5578, %v5818
        %v5877 = vadd.f32 %v5579, %v5823
        %v5878 = vadd.f32 %v5580, %v5826
        %v5879 = vadd.f32 %v5581, %v5831
        %v5880 = vadd.f32 %v5582, %v5834
        %v5881 = vadd.f32 %v5583, %v5839
        %v5882 = vadd.f32 %v5584, %v5842
        %v5883 = vadd.f32 %v5585, %v5847
        %v5884 = vadd.f32 %v5586, %v5850
        %v5885 = vld [vmem:[%s4692 + $0x4] sm:$0xff]
        %v5886 = vld [vmem:[%s4692 + $0xc] sm:$0xff]
        %v5887 = vld [vmem:[%s4692 + $0x1c] sm:$0xff]
        %v5888 = vld [vmem:[%s4692 + $0x24] sm:$0xff]
        %v5889 = vld [vmem:[%s4692 + $0x34] sm:$0xff]
        %v5890 = vld [vmem:[%s4692 + $0x3c] sm:$0xff]
        %v5891 = vld [vmem:[%s4692 + $0x4c] sm:$0xff]
        %v5892 = vld [vmem:[%s4692 + $0x54] sm:$0xff]
        %v5893 = vld [vmem:[%s4692 + $0x64] sm:$0xff]
        %v5894 = vld [vmem:[%s4692 + $0x6c] sm:$0xff]
        %v5895 = vld [vmem:[%s4692 + $0x7c] sm:$0xff]
        %v5896 = vld [vmem:[%s4692 + $0x84] sm:$0xff]
        %v5897 = vld [vmem:[%s4692 + $0x94] sm:$0xff]
        %v5898 = vld [vmem:[%s4692 + $0x9c] sm:$0xff]
        %v5899 = vld [vmem:[%s4692 + $0xac] sm:$0xff]
        %v5900 = vld [vmem:[%s4692 + $0xb4] sm:$0xff]
        %v5901 = vld [vmem:[%s4692 + $0xc4] sm:$0xff]
        %v5902 = vld [vmem:[%s4692 + $0xcc] sm:$0xff]
        %v5903 = vld [vmem:[%s4692 + $0xdc] sm:$0xff]
        %v5904 = vld [vmem:[%s4692 + $0xe4] sm:$0xff]
        %v5905 = vld [vmem:[%s4692 + $0xf4] sm:$0xff]
        %v5906 = vld [vmem:[%s4692 + $0xfc] sm:$0xff]
        %v5907 = vld [vmem:[%s4692 + $0x10c] sm:$0xff]
        %v5908 = vld [vmem:[%s4692 + $0x114] sm:$0xff]
        %v5909 = vld [vmem:[%s4692 + $0x124] sm:$0xff]
        %v5910 = vld [vmem:[%s4692 + $0x12c] sm:$0xff]
        %v5911 = vld [vmem:[%s4692 + $0x13c] sm:$0xff]
        %v5912 = vld [vmem:[%s4692 + $0x144] sm:$0xff]
        %v5913 = vld [vmem:[%s4692 + $0x154] sm:$0xff]
        %v5914 = vld [vmem:[%s4692 + $0x15c] sm:$0xff]
        %v5915 = vld [vmem:[%s4692 + $0x16c] sm:$0xff]
        %v5916 = vld [vmem:[%s4692 + $0x174] sm:$0xff]
        %v5917 = vpack.c.bf16 %v5886, %v5885
        %v5918 = vpack.c.bf16 %v5888, %v5887
        %v5919 = vpack.c.bf16 %v5890, %v5889
        %v5920 = vpack.c.bf16 %v5892, %v5891
        %v5921 = vpack.c.bf16 %v5894, %v5893
        %v5922 = vpack.c.bf16 %v5896, %v5895
        %v5923 = vpack.c.bf16 %v5898, %v5897
        %v5924 = vpack.c.bf16 %v5900, %v5899
        %v5925 = vpack.c.bf16 %v5902, %v5901
        %v5926 = vpack.c.bf16 %v5904, %v5903
        %v5927 = vpack.c.bf16 %v5906, %v5905
        %v5928 = vpack.c.bf16 %v5908, %v5907
        %v5929 = vpack.c.bf16 %v5910, %v5909
        %v5930 = vpack.c.bf16 %v5912, %v5911
        %v5931 = vpack.c.bf16 %v5914, %v5913
        %v5932 = vpack.c.bf16 %v5916, %v5915
        %s5933 = scalar_lea.vmem %s2, 152
        %v5934 = vld [vmem:[%s5933] sm:$0xf]
        %v5935 = vld [vmem:[%s5933 + $0x4] sm:$0xf]
        %v5938 = vunpack.c.l.b16 %v5934
        %v5939 = vunpack.c.l.b16 %v5935
        %v5940 = vpack.c.b16 %v5939, %v5938
        %v5943 = vsel %vm391, %v5917, 0
        %v5946 = vsel %vm391, %v5918, 0
        %v5949 = vsel %vm391, %v5919, 0
        %v5952 = vsel %vm391, %v5920, 0
        %v5955 = vsel %vm391, %v5921, 0
        %v5958 = vsel %vm391, %v5922, 0
        %v5961 = vsel %vm391, %v5923, 0
        %v5964 = vsel %vm391, %v5924, 0
        %v5967 = vsel %vm391, %v5925, 0
        %v5970 = vsel %vm391, %v5926, 0
        %v5973 = vsel %vm391, %v5927, 0
        %v5976 = vsel %vm391, %v5928, 0
        %v5979 = vsel %vm391, %v5929, 0
        %v5982 = vsel %vm391, %v5930, 0
        %v5985 = vsel %vm391, %v5931, 0
        %v5988 = vsel %vm391, %v5932, 0
        %5990 = vmatprep.subr.bf16.mxu0 0
        %5991 = vmatpush1.bf16.msra.mxu0 0
        %5992 = vmatprep.subr.bf16.mxu0 0
        %5993 = vmatpush1.bf16.msra.mxu0 0
        %5994 = vmatprep.subr.bf16.mxu0 0
        %5995 = vmatpush1.bf16.msra.mxu0 0
        %5996 = vmatprep.subr.bf16.mxu0 0
        %5997 = vmatpush1.bf16.msra.mxu0 0
        %5998 = vmatprep.subr.bf16.mxu0 0
        %5999 = vmatpush1.bf16.msra.mxu0 0
        %6000 = vmatprep.subr.bf16.mxu0 0
        %6001 = vmatpush1.bf16.msra.mxu0 0
        %6002 = vmatprep.subr.bf16.mxu0 0
        %6003 = vmatpush1.bf16.msra.mxu0 0
        %6004 = vmatprep.subr.bf16.mxu0 0
        %6005 = vmatpush1.bf16.msra.mxu0 %v5940
        %6006 = vmatprep.subr.bf16.mxu0 0
        %6007 = vmatpush2.bf16.msra.mxu0 0
        %6008 = vmatprep.subr.bf16.mxu0 0
        %6009 = vmatpush2.bf16.msra.mxu0 0
        %6010 = vmatprep.subr.bf16.mxu0 0
        %6011 = vmatpush2.bf16.msra.mxu0 0
        %6012 = vmatprep.subr.bf16.mxu0 0
        %6013 = vmatpush2.bf16.msra.mxu0 0
        %6014 = vmatprep.subr.bf16.mxu0 0
        %6015 = vmatpush2.bf16.msra.mxu0 0
        %6016 = vmatprep.subr.bf16.mxu0 0
        %6017 = vmatpush2.bf16.msra.mxu0 0
        %6018 = vmatprep.subr.bf16.mxu0 0
        %6019 = vmatpush2.bf16.msra.mxu0 0
        %6020 = vmatprep.subr.bf16.mxu0 0
        %6021 = vmatpush2.bf16.msra.mxu0 0
        %6022 = vmatprep.mubr.bf16.mxu0 0
        %6023 = vmatmul.mubr.bf16.gmra.mxu0 %v5943
        %v6024 = vpop.f32.mrf.mxu0
        %v6025 = vadd.f32 0.0, %v6024
        %v6026 = vpop.f32.mrf.mxu0
        %v6027 = vpop.f32.mrf.mxu0
        %v6028 = vadd.f32 0.0, %v6027
        %v6029 = vpop.f32.mrf.mxu0
        %6030 = vmatprep.mubr.bf16.mxu0 0
        %6031 = vmatmul.mubr.bf16.gmra.mxu0 %v5946
        %v6032 = vpop.f32.mrf.mxu0
        %v6033 = vadd.f32 0.0, %v6032
        %v6034 = vpop.f32.mrf.mxu0
        %v6035 = vpop.f32.mrf.mxu0
        %v6036 = vadd.f32 0.0, %v6035
        %v6037 = vpop.f32.mrf.mxu0
        %6038 = vmatprep.mubr.bf16.mxu0 0
        %6039 = vmatmul.mubr.bf16.gmra.mxu0 %v5949
        %v6040 = vpop.f32.mrf.mxu0
        %v6041 = vadd.f32 0.0, %v6040
        %v6042 = vpop.f32.mrf.mxu0
        %v6043 = vpop.f32.mrf.mxu0
        %v6044 = vadd.f32 0.0, %v6043
        %v6045 = vpop.f32.mrf.mxu0
        %6046 = vmatprep.mubr.bf16.mxu0 0
        %6047 = vmatmul.mubr.bf16.gmra.mxu0 %v5952
        %v6048 = vpop.f32.mrf.mxu0
        %v6049 = vadd.f32 0.0, %v6048
        %v6050 = vpop.f32.mrf.mxu0
        %v6051 = vpop.f32.mrf.mxu0
        %v6052 = vadd.f32 0.0, %v6051
        %v6053 = vpop.f32.mrf.mxu0
        %6054 = vmatprep.mubr.bf16.mxu0 0
        %6055 = vmatmul.mubr.bf16.gmra.mxu0 %v5955
        %v6056 = vpop.f32.mrf.mxu0
        %v6057 = vadd.f32 0.0, %v6056
        %v6058 = vpop.f32.mrf.mxu0
        %v6059 = vpop.f32.mrf.mxu0
        %v6060 = vadd.f32 0.0, %v6059
        %v6061 = vpop.f32.mrf.mxu0
        %6062 = vmatprep.mubr.bf16.mxu0 0
        %6063 = vmatmul.mubr.bf16.gmra.mxu0 %v5958
        %v6064 = vpop.f32.mrf.mxu0
        %v6065 = vadd.f32 0.0, %v6064
        %v6066 = vpop.f32.mrf.mxu0
        %v6067 = vpop.f32.mrf.mxu0
        %v6068 = vadd.f32 0.0, %v6067
        %v6069 = vpop.f32.mrf.mxu0
        %6070 = vmatprep.mubr.bf16.mxu0 0
        %6071 = vmatmul.mubr.bf16.gmra.mxu0 %v5961
        %v6072 = vpop.f32.mrf.mxu0
        %v6073 = vadd.f32 0.0, %v6072
        %v6074 = vpop.f32.mrf.mxu0
        %v6075 = vpop.f32.mrf.mxu0
        %v6076 = vadd.f32 0.0, %v6075
        %v6077 = vpop.f32.mrf.mxu0
        %6078 = vmatprep.mubr.bf16.mxu0 0
        %6079 = vmatmul.mubr.bf16.gmra.mxu0 %v5964
        %v6080 = vpop.f32.mrf.mxu0
        %v6081 = vadd.f32 0.0, %v6080
        %v6082 = vpop.f32.mrf.mxu0
        %v6083 = vpop.f32.mrf.mxu0
        %v6084 = vadd.f32 0.0, %v6083
        %v6085 = vpop.f32.mrf.mxu0
        %6086 = vmatprep.mubr.bf16.mxu0 0
        %6087 = vmatmul.mubr.bf16.gmra.mxu0 %v5967
        %v6088 = vpop.f32.mrf.mxu0
        %v6089 = vadd.f32 0.0, %v6088
        %v6090 = vpop.f32.mrf.mxu0
        %v6091 = vpop.f32.mrf.mxu0
        %v6092 = vadd.f32 0.0, %v6091
        %v6093 = vpop.f32.mrf.mxu0
        %6094 = vmatprep.mubr.bf16.mxu0 0
        %6095 = vmatmul.mubr.bf16.gmra.mxu0 %v5970
        %v6096 = vpop.f32.mrf.mxu0
        %v6097 = vadd.f32 0.0, %v6096
        %v6098 = vpop.f32.mrf.mxu0
        %v6099 = vpop.f32.mrf.mxu0
        %v6100 = vadd.f32 0.0, %v6099
        %v6101 = vpop.f32.mrf.mxu0
        %6102 = vmatprep.mubr.bf16.mxu0 0
        %6103 = vmatmul.mubr.bf16.gmra.mxu0 %v5973
        %v6104 = vpop.f32.mrf.mxu0
        %v6105 = vadd.f32 0.0, %v6104
        %v6106 = vpop.f32.mrf.mxu0
        %v6107 = vpop.f32.mrf.mxu0
        %v6108 = vadd.f32 0.0, %v6107
        %v6109 = vpop.f32.mrf.mxu0
        %6110 = vmatprep.mubr.bf16.mxu0 0
        %6111 = vmatmul.mubr.bf16.gmra.mxu0 %v5976
        %v6112 = vpop.f32.mrf.mxu0
        %v6113 = vadd.f32 0.0, %v6112
        %v6114 = vpop.f32.mrf.mxu0
        %v6115 = vpop.f32.mrf.mxu0
        %v6116 = vadd.f32 0.0, %v6115
        %v6117 = vpop.f32.mrf.mxu0
        %6118 = vmatprep.mubr.bf16.mxu0 0
        %6119 = vmatmul.mubr.bf16.gmra.mxu0 %v5979
        %v6120 = vpop.f32.mrf.mxu0
        %v6121 = vadd.f32 0.0, %v6120
        %v6122 = vpop.f32.mrf.mxu0
        %v6123 = vpop.f32.mrf.mxu0
        %v6124 = vadd.f32 0.0, %v6123
        %v6125 = vpop.f32.mrf.mxu0
        %6126 = vmatprep.mubr.bf16.mxu0 0
        %6127 = vmatmul.mubr.bf16.gmra.mxu0 %v5982
        %v6128 = vpop.f32.mrf.mxu0
        %v6129 = vadd.f32 0.0, %v6128
        %v6130 = vpop.f32.mrf.mxu0
        %v6131 = vpop.f32.mrf.mxu0
        %v6132 = vadd.f32 0.0, %v6131
        %v6133 = vpop.f32.mrf.mxu0
        %6134 = vmatprep.mubr.bf16.mxu0 0
        %6135 = vmatmul.mubr.bf16.gmra.mxu0 %v5985
        %v6136 = vpop.f32.mrf.mxu0
        %v6137 = vadd.f32 0.0, %v6136
        %v6138 = vpop.f32.mrf.mxu0
        %v6139 = vpop.f32.mrf.mxu0
        %v6140 = vadd.f32 0.0, %v6139
        %v6141 = vpop.f32.mrf.mxu0
        %6142 = vmatprep.mubr.bf16.mxu0 0
        %6143 = vmatmul.mubr.bf16.gmra.mxu0 %v5988
        %v6144 = vpop.f32.mrf.mxu0
        %v6145 = vadd.f32 0.0, %v6144
        %v6146 = vpop.f32.mrf.mxu0
        %v6147 = vpop.f32.mrf.mxu0
        %v6148 = vadd.f32 0.0, %v6147
        %v6149 = vpop.f32.mrf.mxu0
        %6150 = vdwg.mxu0
        %v6151 = vadd.f32 %v5853, %v6025
        %v6152 = vadd.f32 %v5854, %v6028
        %v6153 = vadd.f32 %v5855, %v6033
        %v6154 = vadd.f32 %v5856, %v6036
        %v6155 = vadd.f32 %v5857, %v6041
        %v6156 = vadd.f32 %v5858, %v6044
        %v6157 = vadd.f32 %v5859, %v6049
        %v6158 = vadd.f32 %v5860, %v6052
        %v6159 = vadd.f32 %v5861, %v6057
        %v6160 = vadd.f32 %v5862, %v6060
        %v6161 = vadd.f32 %v5863, %v6065
        %v6162 = vadd.f32 %v5864, %v6068
        %v6163 = vadd.f32 %v5865, %v6073
        %v6164 = vadd.f32 %v5866, %v6076
        %v6165 = vadd.f32 %v5867, %v6081
        %v6166 = vadd.f32 %v5868, %v6084
        %v6167 = vadd.f32 %v5869, %v6089
        %v6168 = vadd.f32 %v5870, %v6092
        %v6169 = vadd.f32 %v5871, %v6097
        %v6170 = vadd.f32 %v5872, %v6100
        %v6171 = vadd.f32 %v5873, %v6105
        %v6172 = vadd.f32 %v5874, %v6108
        %v6173 = vadd.f32 %v5875, %v6113
        %v6174 = vadd.f32 %v5876, %v6116
        %v6175 = vadd.f32 %v5877, %v6121
        %v6176 = vadd.f32 %v5878, %v6124
        %v6177 = vadd.f32 %v5879, %v6129
        %v6178 = vadd.f32 %v5880, %v6132
        %v6179 = vadd.f32 %v5881, %v6137
        %v6180 = vadd.f32 %v5882, %v6140
        %v6181 = vadd.f32 %v5883, %v6145
        %v6182 = vadd.f32 %v5884, %v6148
        %s6183 = scalar_lea.vmem %s272, 96
        %v6184 = vld [vmem:[%s6183] sm:$0xff]
        %v6185 = vld [vmem:[%s6183 + $0x8] sm:$0xff]
        %v6186 = vld [vmem:[%s6183 + $0x18] sm:$0xff]
        %v6187 = vld [vmem:[%s6183 + $0x20] sm:$0xff]
        %v6188 = vld [vmem:[%s6183 + $0x30] sm:$0xff]
        %v6189 = vld [vmem:[%s6183 + $0x38] sm:$0xff]
        %v6190 = vld [vmem:[%s6183 + $0x48] sm:$0xff]
        %v6191 = vld [vmem:[%s6183 + $0x50] sm:$0xff]
        %v6192 = vld [vmem:[%s6183 + $0x60] sm:$0xff]
        %v6193 = vld [vmem:[%s6183 + $0x68] sm:$0xff]
        %v6194 = vld [vmem:[%s6183 + $0x78] sm:$0xff]
        %v6195 = vld [vmem:[%s6183 + $0x80] sm:$0xff]
        %v6196 = vld [vmem:[%s6183 + $0x90] sm:$0xff]
        %v6197 = vld [vmem:[%s6183 + $0x98] sm:$0xff]
        %v6198 = vld [vmem:[%s6183 + $0xa8] sm:$0xff]
        %v6199 = vld [vmem:[%s6183 + $0xb0] sm:$0xff]
        %v6200 = vld [vmem:[%s6183 + $0xc0] sm:$0xff]
        %v6201 = vld [vmem:[%s6183 + $0xc8] sm:$0xff]
        %v6202 = vld [vmem:[%s6183 + $0xd8] sm:$0xff]
        %v6203 = vld [vmem:[%s6183 + $0xe0] sm:$0xff]
        %v6204 = vld [vmem:[%s6183 + $0xf0] sm:$0xff]
        %v6205 = vld [vmem:[%s6183 + $0xf8] sm:$0xff]
        %v6206 = vld [vmem:[%s6183 + $0x108] sm:$0xff]
        %v6207 = vld [vmem:[%s6183 + $0x110] sm:$0xff]
        %v6208 = vld [vmem:[%s6183 + $0x120] sm:$0xff]
        %v6209 = vld [vmem:[%s6183 + $0x128] sm:$0xff]
        %v6210 = vld [vmem:[%s6183 + $0x138] sm:$0xff]
        %v6211 = vld [vmem:[%s6183 + $0x140] sm:$0xff]
        %v6212 = vld [vmem:[%s6183 + $0x150] sm:$0xff]
        %v6213 = vld [vmem:[%s6183 + $0x158] sm:$0xff]
        %v6214 = vld [vmem:[%s6183 + $0x168] sm:$0xff]
        %v6215 = vld [vmem:[%s6183 + $0x170] sm:$0xff]
        %v6216 = vpack.c.bf16 %v6185, %v6184
        %v6217 = vpack.c.bf16 %v6187, %v6186
        %v6218 = vpack.c.bf16 %v6189, %v6188
        %v6219 = vpack.c.bf16 %v6191, %v6190
        %v6220 = vpack.c.bf16 %v6193, %v6192
        %v6221 = vpack.c.bf16 %v6195, %v6194
        %v6222 = vpack.c.bf16 %v6197, %v6196
        %v6223 = vpack.c.bf16 %v6199, %v6198
        %v6224 = vpack.c.bf16 %v6201, %v6200
        %v6225 = vpack.c.bf16 %v6203, %v6202
        %v6226 = vpack.c.bf16 %v6205, %v6204
        %v6227 = vpack.c.bf16 %v6207, %v6206
        %v6228 = vpack.c.bf16 %v6209, %v6208
        %v6229 = vpack.c.bf16 %v6211, %v6210
        %v6230 = vpack.c.bf16 %v6213, %v6212
        %v6231 = vpack.c.bf16 %v6215, %v6214
        %s6232 = scalar_lea.vmem %s2, 160
        %v6233 = vld [vmem:[%s6232] sm:$0xf]
        %v6234 = vld [vmem:[%s6232 + $0x4] sm:$0xf]
        %v6237 = vunpack.c.l.b16 %v6233
        %v6238 = vunpack.c.l.b16 %v6234
        %v6239 = vpack.c.b16 %v6238, %v6237
        %v6242 = vsel %vm391, %v6216, 0
        %v6245 = vsel %vm391, %v6217, 0
        %v6248 = vsel %vm391, %v6218, 0
        %v6251 = vsel %vm391, %v6219, 0
        %v6254 = vsel %vm391, %v6220, 0
        %v6257 = vsel %vm391, %v6221, 0
        %v6260 = vsel %vm391, %v6222, 0
        %v6263 = vsel %vm391, %v6223, 0
        %v6266 = vsel %vm391, %v6224, 0
        %v6269 = vsel %vm391, %v6225, 0
        %v6272 = vsel %vm391, %v6226, 0
        %v6275 = vsel %vm391, %v6227, 0
        %v6278 = vsel %vm391, %v6228, 0
        %v6281 = vsel %vm391, %v6229, 0
        %v6284 = vsel %vm391, %v6230, 0
        %v6287 = vsel %vm391, %v6231, 0
        %6289 = vmatprep.subr.bf16.mxu0 0
        %6290 = vmatpush1.bf16.msra.mxu0 0
        %6291 = vmatprep.subr.bf16.mxu0 0
        %6292 = vmatpush1.bf16.msra.mxu0 0
        %6293 = vmatprep.subr.bf16.mxu0 0
        %6294 = vmatpush1.bf16.msra.mxu0 0
        %6295 = vmatprep.subr.bf16.mxu0 0
        %6296 = vmatpush1.bf16.msra.mxu0 0
        %6297 = vmatprep.subr.bf16.mxu0 0
        %6298 = vmatpush1.bf16.msra.mxu0 0
        %6299 = vmatprep.subr.bf16.mxu0 0
        %6300 = vmatpush1.bf16.msra.mxu0 0
        %6301 = vmatprep.subr.bf16.mxu0 0
        %6302 = vmatpush1.bf16.msra.mxu0 0
        %6303 = vmatprep.subr.bf16.mxu0 0
        %6304 = vmatpush1.bf16.msra.mxu0 %v6239
        %6305 = vmatprep.subr.bf16.mxu0 0
        %6306 = vmatpush2.bf16.msra.mxu0 0
        %6307 = vmatprep.subr.bf16.mxu0 0
        %6308 = vmatpush2.bf16.msra.mxu0 0
        %6309 = vmatprep.subr.bf16.mxu0 0
        %6310 = vmatpush2.bf16.msra.mxu0 0
        %6311 = vmatprep.subr.bf16.mxu0 0
        %6312 = vmatpush2.bf16.msra.mxu0 0
        %6313 = vmatprep.subr.bf16.mxu0 0
        %6314 = vmatpush2.bf16.msra.mxu0 0
        %6315 = vmatprep.subr.bf16.mxu0 0
        %6316 = vmatpush2.bf16.msra.mxu0 0
        %6317 = vmatprep.subr.bf16.mxu0 0
        %6318 = vmatpush2.bf16.msra.mxu0 0
        %6319 = vmatprep.subr.bf16.mxu0 0
        %6320 = vmatpush2.bf16.msra.mxu0 0
        %6321 = vmatprep.mubr.bf16.mxu0 0
        %6322 = vmatmul.mubr.bf16.gmra.mxu0 %v6242
        %v6323 = vpop.f32.mrf.mxu0
        %v6324 = vadd.f32 0.0, %v6323
        %v6325 = vpop.f32.mrf.mxu0
        %v6326 = vpop.f32.mrf.mxu0
        %v6327 = vadd.f32 0.0, %v6326
        %v6328 = vpop.f32.mrf.mxu0
        %6329 = vmatprep.mubr.bf16.mxu0 0
        %6330 = vmatmul.mubr.bf16.gmra.mxu0 %v6245
        %v6331 = vpop.f32.mrf.mxu0
        %v6332 = vadd.f32 0.0, %v6331
        %v6333 = vpop.f32.mrf.mxu0
        %v6334 = vpop.f32.mrf.mxu0
        %v6335 = vadd.f32 0.0, %v6334
        %v6336 = vpop.f32.mrf.mxu0
        %6337 = vmatprep.mubr.bf16.mxu0 0
        %6338 = vmatmul.mubr.bf16.gmra.mxu0 %v6248
        %v6339 = vpop.f32.mrf.mxu0
        %v6340 = vadd.f32 0.0, %v6339
        %v6341 = vpop.f32.mrf.mxu0
        %v6342 = vpop.f32.mrf.mxu0
        %v6343 = vadd.f32 0.0, %v6342
        %v6344 = vpop.f32.mrf.mxu0
        %6345 = vmatprep.mubr.bf16.mxu0 0
        %6346 = vmatmul.mubr.bf16.gmra.mxu0 %v6251
        %v6347 = vpop.f32.mrf.mxu0
        %v6348 = vadd.f32 0.0, %v6347
        %v6349 = vpop.f32.mrf.mxu0
        %v6350 = vpop.f32.mrf.mxu0
        %v6351 = vadd.f32 0.0, %v6350
        %v6352 = vpop.f32.mrf.mxu0
        %6353 = vmatprep.mubr.bf16.mxu0 0
        %6354 = vmatmul.mubr.bf16.gmra.mxu0 %v6254
        %v6355 = vpop.f32.mrf.mxu0
        %v6356 = vadd.f32 0.0, %v6355
        %v6357 = vpop.f32.mrf.mxu0
        %v6358 = vpop.f32.mrf.mxu0
        %v6359 = vadd.f32 0.0, %v6358
        %v6360 = vpop.f32.mrf.mxu0
        %6361 = vmatprep.mubr.bf16.mxu0 0
        %6362 = vmatmul.mubr.bf16.gmra.mxu0 %v6257
        %v6363 = vpop.f32.mrf.mxu0
        %v6364 = vadd.f32 0.0, %v6363
        %v6365 = vpop.f32.mrf.mxu0
        %v6366 = vpop.f32.mrf.mxu0
        %v6367 = vadd.f32 0.0, %v6366
        %v6368 = vpop.f32.mrf.mxu0
        %6369 = vmatprep.mubr.bf16.mxu0 0
        %6370 = vmatmul.mubr.bf16.gmra.mxu0 %v6260
        %v6371 = vpop.f32.mrf.mxu0
        %v6372 = vadd.f32 0.0, %v6371
        %v6373 = vpop.f32.mrf.mxu0
        %v6374 = vpop.f32.mrf.mxu0
        %v6375 = vadd.f32 0.0, %v6374
        %v6376 = vpop.f32.mrf.mxu0
        %6377 = vmatprep.mubr.bf16.mxu0 0
        %6378 = vmatmul.mubr.bf16.gmra.mxu0 %v6263
        %v6379 = vpop.f32.mrf.mxu0
        %v6380 = vadd.f32 0.0, %v6379
        %v6381 = vpop.f32.mrf.mxu0
        %v6382 = vpop.f32.mrf.mxu0
        %v6383 = vadd.f32 0.0, %v6382
        %v6384 = vpop.f32.mrf.mxu0
        %6385 = vmatprep.mubr.bf16.mxu0 0
        %6386 = vmatmul.mubr.bf16.gmra.mxu0 %v6266
        %v6387 = vpop.f32.mrf.mxu0
        %v6388 = vadd.f32 0.0, %v6387
        %v6389 = vpop.f32.mrf.mxu0
        %v6390 = vpop.f32.mrf.mxu0
        %v6391 = vadd.f32 0.0, %v6390
        %v6392 = vpop.f32.mrf.mxu0
        %6393 = vmatprep.mubr.bf16.mxu0 0
        %6394 = vmatmul.mubr.bf16.gmra.mxu0 %v6269
        %v6395 = vpop.f32.mrf.mxu0
        %v6396 = vadd.f32 0.0, %v6395
        %v6397 = vpop.f32.mrf.mxu0
        %v6398 = vpop.f32.mrf.mxu0
        %v6399 = vadd.f32 0.0, %v6398
        %v6400 = vpop.f32.mrf.mxu0
        %6401 = vmatprep.mubr.bf16.mxu0 0
        %6402 = vmatmul.mubr.bf16.gmra.mxu0 %v6272
        %v6403 = vpop.f32.mrf.mxu0
        %v6404 = vadd.f32 0.0, %v6403
        %v6405 = vpop.f32.mrf.mxu0
        %v6406 = vpop.f32.mrf.mxu0
        %v6407 = vadd.f32 0.0, %v6406
        %v6408 = vpop.f32.mrf.mxu0
        %6409 = vmatprep.mubr.bf16.mxu0 0
        %6410 = vmatmul.mubr.bf16.gmra.mxu0 %v6275
        %v6411 = vpop.f32.mrf.mxu0
        %v6412 = vadd.f32 0.0, %v6411
        %v6413 = vpop.f32.mrf.mxu0
        %v6414 = vpop.f32.mrf.mxu0
        %v6415 = vadd.f32 0.0, %v6414
        %v6416 = vpop.f32.mrf.mxu0
        %6417 = vmatprep.mubr.bf16.mxu0 0
        %6418 = vmatmul.mubr.bf16.gmra.mxu0 %v6278
        %v6419 = vpop.f32.mrf.mxu0
        %v6420 = vadd.f32 0.0, %v6419
        %v6421 = vpop.f32.mrf.mxu0
        %v6422 = vpop.f32.mrf.mxu0
        %v6423 = vadd.f32 0.0, %v6422
        %v6424 = vpop.f32.mrf.mxu0
        %6425 = vmatprep.mubr.bf16.mxu0 0
        %6426 = vmatmul.mubr.bf16.gmra.mxu0 %v6281
        %v6427 = vpop.f32.mrf.mxu0
        %v6428 = vadd.f32 0.0, %v6427
        %v6429 = vpop.f32.mrf.mxu0
        %v6430 = vpop.f32.mrf.mxu0
        %v6431 = vadd.f32 0.0, %v6430
        %v6432 = vpop.f32.mrf.mxu0
        %6433 = vmatprep.mubr.bf16.mxu0 0
        %6434 = vmatmul.mubr.bf16.gmra.mxu0 %v6284
        %v6435 = vpop.f32.mrf.mxu0
        %v6436 = vadd.f32 0.0, %v6435
        %v6437 = vpop.f32.mrf.mxu0
        %v6438 = vpop.f32.mrf.mxu0
        %v6439 = vadd.f32 0.0, %v6438
        %v6440 = vpop.f32.mrf.mxu0
        %6441 = vmatprep.mubr.bf16.mxu0 0
        %6442 = vmatmul.mubr.bf16.gmra.mxu0 %v6287
        %v6443 = vpop.f32.mrf.mxu0
        %v6444 = vadd.f32 0.0, %v6443
        %v6445 = vpop.f32.mrf.mxu0
        %v6446 = vpop.f32.mrf.mxu0
        %v6447 = vadd.f32 0.0, %v6446
        %v6448 = vpop.f32.mrf.mxu0
        %6449 = vdwg.mxu0
        %v6450 = vadd.f32 %v6151, %v6324
        %v6451 = vadd.f32 %v6152, %v6327
        %v6452 = vadd.f32 %v6153, %v6332
        %v6453 = vadd.f32 %v6154, %v6335
        %v6454 = vadd.f32 %v6155, %v6340
        %v6455 = vadd.f32 %v6156, %v6343
        %v6456 = vadd.f32 %v6157, %v6348
        %v6457 = vadd.f32 %v6158, %v6351
        %v6458 = vadd.f32 %v6159, %v6356
        %v6459 = vadd.f32 %v6160, %v6359
        %v6460 = vadd.f32 %v6161, %v6364
        %v6461 = vadd.f32 %v6162, %v6367
        %v6462 = vadd.f32 %v6163, %v6372
        %v6463 = vadd.f32 %v6164, %v6375
        %v6464 = vadd.f32 %v6165, %v6380
        %v6465 = vadd.f32 %v6166, %v6383
        %v6466 = vadd.f32 %v6167, %v6388
        %v6467 = vadd.f32 %v6168, %v6391
        %v6468 = vadd.f32 %v6169, %v6396
        %v6469 = vadd.f32 %v6170, %v6399
        %v6470 = vadd.f32 %v6171, %v6404
        %v6471 = vadd.f32 %v6172, %v6407
        %v6472 = vadd.f32 %v6173, %v6412
        %v6473 = vadd.f32 %v6174, %v6415
        %v6474 = vadd.f32 %v6175, %v6420
        %v6475 = vadd.f32 %v6176, %v6423
        %v6476 = vadd.f32 %v6177, %v6428
        %v6477 = vadd.f32 %v6178, %v6431
        %v6478 = vadd.f32 %v6179, %v6436
        %v6479 = vadd.f32 %v6180, %v6439
        %v6480 = vadd.f32 %v6181, %v6444
        %v6481 = vadd.f32 %v6182, %v6447
        %v6482 = vld [vmem:[%s6183 + $0x1] sm:$0xff]
        %v6483 = vld [vmem:[%s6183 + $0x9] sm:$0xff]
        %v6484 = vld [vmem:[%s6183 + $0x19] sm:$0xff]
        %v6485 = vld [vmem:[%s6183 + $0x21] sm:$0xff]
        %v6486 = vld [vmem:[%s6183 + $0x31] sm:$0xff]
        %v6487 = vld [vmem:[%s6183 + $0x39] sm:$0xff]
        %v6488 = vld [vmem:[%s6183 + $0x49] sm:$0xff]
        %v6489 = vld [vmem:[%s6183 + $0x51] sm:$0xff]
        %v6490 = vld [vmem:[%s6183 + $0x61] sm:$0xff]
        %v6491 = vld [vmem:[%s6183 + $0x69] sm:$0xff]
        %v6492 = vld [vmem:[%s6183 + $0x79] sm:$0xff]
        %v6493 = vld [vmem:[%s6183 + $0x81] sm:$0xff]
        %v6494 = vld [vmem:[%s6183 + $0x91] sm:$0xff]
        %v6495 = vld [vmem:[%s6183 + $0x99] sm:$0xff]
        %v6496 = vld [vmem:[%s6183 + $0xa9] sm:$0xff]
        %v6497 = vld [vmem:[%s6183 + $0xb1] sm:$0xff]
        %v6498 = vld [vmem:[%s6183 + $0xc1] sm:$0xff]
        %v6499 = vld [vmem:[%s6183 + $0xc9] sm:$0xff]
        %v6500 = vld [vmem:[%s6183 + $0xd9] sm:$0xff]
        %v6501 = vld [vmem:[%s6183 + $0xe1] sm:$0xff]
        %v6502 = vld [vmem:[%s6183 + $0xf1] sm:$0xff]
        %v6503 = vld [vmem:[%s6183 + $0xf9] sm:$0xff]
        %v6504 = vld [vmem:[%s6183 + $0x109] sm:$0xff]
        %v6505 = vld [vmem:[%s6183 + $0x111] sm:$0xff]
        %v6506 = vld [vmem:[%s6183 + $0x121] sm:$0xff]
        %v6507 = vld [vmem:[%s6183 + $0x129] sm:$0xff]
        %v6508 = vld [vmem:[%s6183 + $0x139] sm:$0xff]
        %v6509 = vld [vmem:[%s6183 + $0x141] sm:$0xff]
        %v6510 = vld [vmem:[%s6183 + $0x151] sm:$0xff]
        %v6511 = vld [vmem:[%s6183 + $0x159] sm:$0xff]
        %v6512 = vld [vmem:[%s6183 + $0x169] sm:$0xff]
        %v6513 = vld [vmem:[%s6183 + $0x171] sm:$0xff]
        %v6514 = vpack.c.bf16 %v6483, %v6482
        %v6515 = vpack.c.bf16 %v6485, %v6484
        %v6516 = vpack.c.bf16 %v6487, %v6486
        %v6517 = vpack.c.bf16 %v6489, %v6488
        %v6518 = vpack.c.bf16 %v6491, %v6490
        %v6519 = vpack.c.bf16 %v6493, %v6492
        %v6520 = vpack.c.bf16 %v6495, %v6494
        %v6521 = vpack.c.bf16 %v6497, %v6496
        %v6522 = vpack.c.bf16 %v6499, %v6498
        %v6523 = vpack.c.bf16 %v6501, %v6500
        %v6524 = vpack.c.bf16 %v6503, %v6502
        %v6525 = vpack.c.bf16 %v6505, %v6504
        %v6526 = vpack.c.bf16 %v6507, %v6506
        %v6527 = vpack.c.bf16 %v6509, %v6508
        %v6528 = vpack.c.bf16 %v6511, %v6510
        %v6529 = vpack.c.bf16 %v6513, %v6512
        %s6530 = scalar_lea.vmem %s2, 168
        %v6531 = vld [vmem:[%s6530] sm:$0xf]
        %v6532 = vld [vmem:[%s6530 + $0x4] sm:$0xf]
        %v6535 = vunpack.c.l.b16 %v6531
        %v6536 = vunpack.c.l.b16 %v6532
        %v6537 = vpack.c.b16 %v6536, %v6535
        %v6540 = vsel %vm391, %v6514, 0
        %v6543 = vsel %vm391, %v6515, 0
        %v6546 = vsel %vm391, %v6516, 0
        %v6549 = vsel %vm391, %v6517, 0
        %v6552 = vsel %vm391, %v6518, 0
        %v6555 = vsel %vm391, %v6519, 0
        %v6558 = vsel %vm391, %v6520, 0
        %v6561 = vsel %vm391, %v6521, 0
        %v6564 = vsel %vm391, %v6522, 0
        %v6567 = vsel %vm391, %v6523, 0
        %v6570 = vsel %vm391, %v6524, 0
        %v6573 = vsel %vm391, %v6525, 0
        %v6576 = vsel %vm391, %v6526, 0
        %v6579 = vsel %vm391, %v6527, 0
        %v6582 = vsel %vm391, %v6528, 0
        %v6585 = vsel %vm391, %v6529, 0
        %6587 = vmatprep.subr.bf16.mxu0 0
        %6588 = vmatpush1.bf16.msra.mxu0 0
        %6589 = vmatprep.subr.bf16.mxu0 0
        %6590 = vmatpush1.bf16.msra.mxu0 0
        %6591 = vmatprep.subr.bf16.mxu0 0
        %6592 = vmatpush1.bf16.msra.mxu0 0
        %6593 = vmatprep.subr.bf16.mxu0 0
        %6594 = vmatpush1.bf16.msra.mxu0 0
        %6595 = vmatprep.subr.bf16.mxu0 0
        %6596 = vmatpush1.bf16.msra.mxu0 0
        %6597 = vmatprep.subr.bf16.mxu0 0
        %6598 = vmatpush1.bf16.msra.mxu0 0
        %6599 = vmatprep.subr.bf16.mxu0 0
        %6600 = vmatpush1.bf16.msra.mxu0 0
        %6601 = vmatprep.subr.bf16.mxu0 0
        %6602 = vmatpush1.bf16.msra.mxu0 %v6537
        %6603 = vmatprep.subr.bf16.mxu0 0
        %6604 = vmatpush2.bf16.msra.mxu0 0
        %6605 = vmatprep.subr.bf16.mxu0 0
        %6606 = vmatpush2.bf16.msra.mxu0 0
        %6607 = vmatprep.subr.bf16.mxu0 0
        %6608 = vmatpush2.bf16.msra.mxu0 0
        %6609 = vmatprep.subr.bf16.mxu0 0
        %6610 = vmatpush2.bf16.msra.mxu0 0
        %6611 = vmatprep.subr.bf16.mxu0 0
        %6612 = vmatpush2.bf16.msra.mxu0 0
        %6613 = vmatprep.subr.bf16.mxu0 0
        %6614 = vmatpush2.bf16.msra.mxu0 0
        %6615 = vmatprep.subr.bf16.mxu0 0
        %6616 = vmatpush2.bf16.msra.mxu0 0
        %6617 = vmatprep.subr.bf16.mxu0 0
        %6618 = vmatpush2.bf16.msra.mxu0 0
        %6619 = vmatprep.mubr.bf16.mxu0 0
        %6620 = vmatmul.mubr.bf16.gmra.mxu0 %v6540
        %v6621 = vpop.f32.mrf.mxu0
        %v6622 = vadd.f32 0.0, %v6621
        %v6623 = vpop.f32.mrf.mxu0
        %v6624 = vpop.f32.mrf.mxu0
        %v6625 = vadd.f32 0.0, %v6624
        %v6626 = vpop.f32.mrf.mxu0
        %6627 = vmatprep.mubr.bf16.mxu0 0
        %6628 = vmatmul.mubr.bf16.gmra.mxu0 %v6543
        %v6629 = vpop.f32.mrf.mxu0
        %v6630 = vadd.f32 0.0, %v6629
        %v6631 = vpop.f32.mrf.mxu0
        %v6632 = vpop.f32.mrf.mxu0
        %v6633 = vadd.f32 0.0, %v6632
        %v6634 = vpop.f32.mrf.mxu0
        %6635 = vmatprep.mubr.bf16.mxu0 0
        %6636 = vmatmul.mubr.bf16.gmra.mxu0 %v6546
        %v6637 = vpop.f32.mrf.mxu0
        %v6638 = vadd.f32 0.0, %v6637
        %v6639 = vpop.f32.mrf.mxu0
        %v6640 = vpop.f32.mrf.mxu0
        %v6641 = vadd.f32 0.0, %v6640
        %v6642 = vpop.f32.mrf.mxu0
        %6643 = vmatprep.mubr.bf16.mxu0 0
        %6644 = vmatmul.mubr.bf16.gmra.mxu0 %v6549
        %v6645 = vpop.f32.mrf.mxu0
        %v6646 = vadd.f32 0.0, %v6645
        %v6647 = vpop.f32.mrf.mxu0
        %v6648 = vpop.f32.mrf.mxu0
        %v6649 = vadd.f32 0.0, %v6648
        %v6650 = vpop.f32.mrf.mxu0
        %6651 = vmatprep.mubr.bf16.mxu0 0
        %6652 = vmatmul.mubr.bf16.gmra.mxu0 %v6552
        %v6653 = vpop.f32.mrf.mxu0
        %v6654 = vadd.f32 0.0, %v6653
        %v6655 = vpop.f32.mrf.mxu0
        %v6656 = vpop.f32.mrf.mxu0
        %v6657 = vadd.f32 0.0, %v6656
        %v6658 = vpop.f32.mrf.mxu0
        %6659 = vmatprep.mubr.bf16.mxu0 0
        %6660 = vmatmul.mubr.bf16.gmra.mxu0 %v6555
        %v6661 = vpop.f32.mrf.mxu0
        %v6662 = vadd.f32 0.0, %v6661
        %v6663 = vpop.f32.mrf.mxu0
        %v6664 = vpop.f32.mrf.mxu0
        %v6665 = vadd.f32 0.0, %v6664
        %v6666 = vpop.f32.mrf.mxu0
        %6667 = vmatprep.mubr.bf16.mxu0 0
        %6668 = vmatmul.mubr.bf16.gmra.mxu0 %v6558
        %v6669 = vpop.f32.mrf.mxu0
        %v6670 = vadd.f32 0.0, %v6669
        %v6671 = vpop.f32.mrf.mxu0
        %v6672 = vpop.f32.mrf.mxu0
        %v6673 = vadd.f32 0.0, %v6672
        %v6674 = vpop.f32.mrf.mxu0
        %6675 = vmatprep.mubr.bf16.mxu0 0
        %6676 = vmatmul.mubr.bf16.gmra.mxu0 %v6561
        %v6677 = vpop.f32.mrf.mxu0
        %v6678 = vadd.f32 0.0, %v6677
        %v6679 = vpop.f32.mrf.mxu0
        %v6680 = vpop.f32.mrf.mxu0
        %v6681 = vadd.f32 0.0, %v6680
        %v6682 = vpop.f32.mrf.mxu0
        %6683 = vmatprep.mubr.bf16.mxu0 0
        %6684 = vmatmul.mubr.bf16.gmra.mxu0 %v6564
        %v6685 = vpop.f32.mrf.mxu0
        %v6686 = vadd.f32 0.0, %v6685
        %v6687 = vpop.f32.mrf.mxu0
        %v6688 = vpop.f32.mrf.mxu0
        %v6689 = vadd.f32 0.0, %v6688
        %v6690 = vpop.f32.mrf.mxu0
        %6691 = vmatprep.mubr.bf16.mxu0 0
        %6692 = vmatmul.mubr.bf16.gmra.mxu0 %v6567
        %v6693 = vpop.f32.mrf.mxu0
        %v6694 = vadd.f32 0.0, %v6693
        %v6695 = vpop.f32.mrf.mxu0
        %v6696 = vpop.f32.mrf.mxu0
        %v6697 = vadd.f32 0.0, %v6696
        %v6698 = vpop.f32.mrf.mxu0
        %6699 = vmatprep.mubr.bf16.mxu0 0
        %6700 = vmatmul.mubr.bf16.gmra.mxu0 %v6570
        %v6701 = vpop.f32.mrf.mxu0
        %v6702 = vadd.f32 0.0, %v6701
        %v6703 = vpop.f32.mrf.mxu0
        %v6704 = vpop.f32.mrf.mxu0
        %v6705 = vadd.f32 0.0, %v6704
        %v6706 = vpop.f32.mrf.mxu0
        %6707 = vmatprep.mubr.bf16.mxu0 0
        %6708 = vmatmul.mubr.bf16.gmra.mxu0 %v6573
        %v6709 = vpop.f32.mrf.mxu0
        %v6710 = vadd.f32 0.0, %v6709
        %v6711 = vpop.f32.mrf.mxu0
        %v6712 = vpop.f32.mrf.mxu0
        %v6713 = vadd.f32 0.0, %v6712
        %v6714 = vpop.f32.mrf.mxu0
        %6715 = vmatprep.mubr.bf16.mxu0 0
        %6716 = vmatmul.mubr.bf16.gmra.mxu0 %v6576
        %v6717 = vpop.f32.mrf.mxu0
        %v6718 = vadd.f32 0.0, %v6717
        %v6719 = vpop.f32.mrf.mxu0
        %v6720 = vpop.f32.mrf.mxu0
        %v6721 = vadd.f32 0.0, %v6720
        %v6722 = vpop.f32.mrf.mxu0
        %6723 = vmatprep.mubr.bf16.mxu0 0
        %6724 = vmatmul.mubr.bf16.gmra.mxu0 %v6579
        %v6725 = vpop.f32.mrf.mxu0
        %v6726 = vadd.f32 0.0, %v6725
        %v6727 = vpop.f32.mrf.mxu0
        %v6728 = vpop.f32.mrf.mxu0
        %v6729 = vadd.f32 0.0, %v6728
        %v6730 = vpop.f32.mrf.mxu0
        %6731 = vmatprep.mubr.bf16.mxu0 0
        %6732 = vmatmul.mubr.bf16.gmra.mxu0 %v6582
        %v6733 = vpop.f32.mrf.mxu0
        %v6734 = vadd.f32 0.0, %v6733
        %v6735 = vpop.f32.mrf.mxu0
        %v6736 = vpop.f32.mrf.mxu0
        %v6737 = vadd.f32 0.0, %v6736
        %v6738 = vpop.f32.mrf.mxu0
        %6739 = vmatprep.mubr.bf16.mxu0 0
        %6740 = vmatmul.mubr.bf16.gmra.mxu0 %v6585
        %v6741 = vpop.f32.mrf.mxu0
        %v6742 = vadd.f32 0.0, %v6741
        %v6743 = vpop.f32.mrf.mxu0
        %v6744 = vpop.f32.mrf.mxu0
        %v6745 = vadd.f32 0.0, %v6744
        %v6746 = vpop.f32.mrf.mxu0
        %6747 = vdwg.mxu0
        %v6748 = vadd.f32 %v6450, %v6622
        %v6749 = vadd.f32 %v6451, %v6625
        %v6750 = vadd.f32 %v6452, %v6630
        %v6751 = vadd.f32 %v6453, %v6633
        %v6752 = vadd.f32 %v6454, %v6638
        %v6753 = vadd.f32 %v6455, %v6641
        %v6754 = vadd.f32 %v6456, %v6646
        %v6755 = vadd.f32 %v6457, %v6649
        %v6756 = vadd.f32 %v6458, %v6654
        %v6757 = vadd.f32 %v6459, %v6657
        %v6758 = vadd.f32 %v6460, %v6662
        %v6759 = vadd.f32 %v6461, %v6665
        %v6760 = vadd.f32 %v6462, %v6670
        %v6761 = vadd.f32 %v6463, %v6673
        %v6762 = vadd.f32 %v6464, %v6678
        %v6763 = vadd.f32 %v6465, %v6681
        %v6764 = vadd.f32 %v6466, %v6686
        %v6765 = vadd.f32 %v6467, %v6689
        %v6766 = vadd.f32 %v6468, %v6694
        %v6767 = vadd.f32 %v6469, %v6697
        %v6768 = vadd.f32 %v6470, %v6702
        %v6769 = vadd.f32 %v6471, %v6705
        %v6770 = vadd.f32 %v6472, %v6710
        %v6771 = vadd.f32 %v6473, %v6713
        %v6772 = vadd.f32 %v6474, %v6718
        %v6773 = vadd.f32 %v6475, %v6721
        %v6774 = vadd.f32 %v6476, %v6726
        %v6775 = vadd.f32 %v6477, %v6729
        %v6776 = vadd.f32 %v6478, %v6734
        %v6777 = vadd.f32 %v6479, %v6737
        %v6778 = vadd.f32 %v6480, %v6742
        %v6779 = vadd.f32 %v6481, %v6745
        %v6780 = vld [vmem:[%s6183 + $0x2] sm:$0xff]
        %v6781 = vld [vmem:[%s6183 + $0xa] sm:$0xff]
        %v6782 = vld [vmem:[%s6183 + $0x1a] sm:$0xff]
        %v6783 = vld [vmem:[%s6183 + $0x22] sm:$0xff]
        %v6784 = vld [vmem:[%s6183 + $0x32] sm:$0xff]
        %v6785 = vld [vmem:[%s6183 + $0x3a] sm:$0xff]
        %v6786 = vld [vmem:[%s6183 + $0x4a] sm:$0xff]
        %v6787 = vld [vmem:[%s6183 + $0x52] sm:$0xff]
        %v6788 = vld [vmem:[%s6183 + $0x62] sm:$0xff]
        %v6789 = vld [vmem:[%s6183 + $0x6a] sm:$0xff]
        %v6790 = vld [vmem:[%s6183 + $0x7a] sm:$0xff]
        %v6791 = vld [vmem:[%s6183 + $0x82] sm:$0xff]
        %v6792 = vld [vmem:[%s6183 + $0x92] sm:$0xff]
        %v6793 = vld [vmem:[%s6183 + $0x9a] sm:$0xff]
        %v6794 = vld [vmem:[%s6183 + $0xaa] sm:$0xff]
        %v6795 = vld [vmem:[%s6183 + $0xb2] sm:$0xff]
        %v6796 = vld [vmem:[%s6183 + $0xc2] sm:$0xff]
        %v6797 = vld [vmem:[%s6183 + $0xca] sm:$0xff]
        %v6798 = vld [vmem:[%s6183 + $0xda] sm:$0xff]
        %v6799 = vld [vmem:[%s6183 + $0xe2] sm:$0xff]
        %v6800 = vld [vmem:[%s6183 + $0xf2] sm:$0xff]
        %v6801 = vld [vmem:[%s6183 + $0xfa] sm:$0xff]
        %v6802 = vld [vmem:[%s6183 + $0x10a] sm:$0xff]
        %v6803 = vld [vmem:[%s6183 + $0x112] sm:$0xff]
        %v6804 = vld [vmem:[%s6183 + $0x122] sm:$0xff]
        %v6805 = vld [vmem:[%s6183 + $0x12a] sm:$0xff]
        %v6806 = vld [vmem:[%s6183 + $0x13a] sm:$0xff]
        %v6807 = vld [vmem:[%s6183 + $0x142] sm:$0xff]
        %v6808 = vld [vmem:[%s6183 + $0x152] sm:$0xff]
        %v6809 = vld [vmem:[%s6183 + $0x15a] sm:$0xff]
        %v6810 = vld [vmem:[%s6183 + $0x16a] sm:$0xff]
        %v6811 = vld [vmem:[%s6183 + $0x172] sm:$0xff]
        %v6812 = vpack.c.bf16 %v6781, %v6780
        %v6813 = vpack.c.bf16 %v6783, %v6782
        %v6814 = vpack.c.bf16 %v6785, %v6784
        %v6815 = vpack.c.bf16 %v6787, %v6786
        %v6816 = vpack.c.bf16 %v6789, %v6788
        %v6817 = vpack.c.bf16 %v6791, %v6790
        %v6818 = vpack.c.bf16 %v6793, %v6792
        %v6819 = vpack.c.bf16 %v6795, %v6794
        %v6820 = vpack.c.bf16 %v6797, %v6796
        %v6821 = vpack.c.bf16 %v6799, %v6798
        %v6822 = vpack.c.bf16 %v6801, %v6800
        %v6823 = vpack.c.bf16 %v6803, %v6802
        %v6824 = vpack.c.bf16 %v6805, %v6804
        %v6825 = vpack.c.bf16 %v6807, %v6806
        %v6826 = vpack.c.bf16 %v6809, %v6808
        %v6827 = vpack.c.bf16 %v6811, %v6810
        %s6828 = scalar_lea.vmem %s2, 176
        %v6829 = vld [vmem:[%s6828] sm:$0xf]
        %v6830 = vld [vmem:[%s6828 + $0x4] sm:$0xf]
        %v6833 = vunpack.c.l.b16 %v6829
        %v6834 = vunpack.c.l.b16 %v6830
        %v6835 = vpack.c.b16 %v6834, %v6833
        %v6838 = vsel %vm391, %v6812, 0
        %v6841 = vsel %vm391, %v6813, 0
        %v6844 = vsel %vm391, %v6814, 0
        %v6847 = vsel %vm391, %v6815, 0
        %v6850 = vsel %vm391, %v6816, 0
        %v6853 = vsel %vm391, %v6817, 0
        %v6856 = vsel %vm391, %v6818, 0
        %v6859 = vsel %vm391, %v6819, 0
        %v6862 = vsel %vm391, %v6820, 0
        %v6865 = vsel %vm391, %v6821, 0
        %v6868 = vsel %vm391, %v6822, 0
        %v6871 = vsel %vm391, %v6823, 0
        %v6874 = vsel %vm391, %v6824, 0
        %v6877 = vsel %vm391, %v6825, 0
        %v6880 = vsel %vm391, %v6826, 0
        %v6883 = vsel %vm391, %v6827, 0
        %6885 = vmatprep.subr.bf16.mxu0 0
        %6886 = vmatpush1.bf16.msra.mxu0 0
        %6887 = vmatprep.subr.bf16.mxu0 0
        %6888 = vmatpush1.bf16.msra.mxu0 0
        %6889 = vmatprep.subr.bf16.mxu0 0
        %6890 = vmatpush1.bf16.msra.mxu0 0
        %6891 = vmatprep.subr.bf16.mxu0 0
        %6892 = vmatpush1.bf16.msra.mxu0 0
        %6893 = vmatprep.subr.bf16.mxu0 0
        %6894 = vmatpush1.bf16.msra.mxu0 0
        %6895 = vmatprep.subr.bf16.mxu0 0
        %6896 = vmatpush1.bf16.msra.mxu0 0
        %6897 = vmatprep.subr.bf16.mxu0 0
        %6898 = vmatpush1.bf16.msra.mxu0 0
        %6899 = vmatprep.subr.bf16.mxu0 0
        %6900 = vmatpush1.bf16.msra.mxu0 %v6835
        %6901 = vmatprep.subr.bf16.mxu0 0
        %6902 = vmatpush2.bf16.msra.mxu0 0
        %6903 = vmatprep.subr.bf16.mxu0 0
        %6904 = vmatpush2.bf16.msra.mxu0 0
        %6905 = vmatprep.subr.bf16.mxu0 0
        %6906 = vmatpush2.bf16.msra.mxu0 0
        %6907 = vmatprep.subr.bf16.mxu0 0
        %6908 = vmatpush2.bf16.msra.mxu0 0
        %6909 = vmatprep.subr.bf16.mxu0 0
        %6910 = vmatpush2.bf16.msra.mxu0 0
        %6911 = vmatprep.subr.bf16.mxu0 0
        %6912 = vmatpush2.bf16.msra.mxu0 0
        %6913 = vmatprep.subr.bf16.mxu0 0
        %6914 = vmatpush2.bf16.msra.mxu0 0
        %6915 = vmatprep.subr.bf16.mxu0 0
        %6916 = vmatpush2.bf16.msra.mxu0 0
        %6917 = vmatprep.mubr.bf16.mxu0 0
        %6918 = vmatmul.mubr.bf16.gmra.mxu0 %v6838
        %v6919 = vpop.f32.mrf.mxu0
        %v6920 = vadd.f32 0.0, %v6919
        %v6921 = vpop.f32.mrf.mxu0
        %v6922 = vpop.f32.mrf.mxu0
        %v6923 = vadd.f32 0.0, %v6922
        %v6924 = vpop.f32.mrf.mxu0
        %6925 = vmatprep.mubr.bf16.mxu0 0
        %6926 = vmatmul.mubr.bf16.gmra.mxu0 %v6841
        %v6927 = vpop.f32.mrf.mxu0
        %v6928 = vadd.f32 0.0, %v6927
        %v6929 = vpop.f32.mrf.mxu0
        %v6930 = vpop.f32.mrf.mxu0
        %v6931 = vadd.f32 0.0, %v6930
        %v6932 = vpop.f32.mrf.mxu0
        %6933 = vmatprep.mubr.bf16.mxu0 0
        %6934 = vmatmul.mubr.bf16.gmra.mxu0 %v6844
        %v6935 = vpop.f32.mrf.mxu0
        %v6936 = vadd.f32 0.0, %v6935
        %v6937 = vpop.f32.mrf.mxu0
        %v6938 = vpop.f32.mrf.mxu0
        %v6939 = vadd.f32 0.0, %v6938
        %v6940 = vpop.f32.mrf.mxu0
        %6941 = vmatprep.mubr.bf16.mxu0 0
        %6942 = vmatmul.mubr.bf16.gmra.mxu0 %v6847
        %v6943 = vpop.f32.mrf.mxu0
        %v6944 = vadd.f32 0.0, %v6943
        %v6945 = vpop.f32.mrf.mxu0
        %v6946 = vpop.f32.mrf.mxu0
        %v6947 = vadd.f32 0.0, %v6946
        %v6948 = vpop.f32.mrf.mxu0
        %6949 = vmatprep.mubr.bf16.mxu0 0
        %6950 = vmatmul.mubr.bf16.gmra.mxu0 %v6850
        %v6951 = vpop.f32.mrf.mxu0
        %v6952 = vadd.f32 0.0, %v6951
        %v6953 = vpop.f32.mrf.mxu0
        %v6954 = vpop.f32.mrf.mxu0
        %v6955 = vadd.f32 0.0, %v6954
        %v6956 = vpop.f32.mrf.mxu0
        %6957 = vmatprep.mubr.bf16.mxu0 0
        %6958 = vmatmul.mubr.bf16.gmra.mxu0 %v6853
        %v6959 = vpop.f32.mrf.mxu0
        %v6960 = vadd.f32 0.0, %v6959
        %v6961 = vpop.f32.mrf.mxu0
        %v6962 = vpop.f32.mrf.mxu0
        %v6963 = vadd.f32 0.0, %v6962
        %v6964 = vpop.f32.mrf.mxu0
        %6965 = vmatprep.mubr.bf16.mxu0 0
        %6966 = vmatmul.mubr.bf16.gmra.mxu0 %v6856
        %v6967 = vpop.f32.mrf.mxu0
        %v6968 = vadd.f32 0.0, %v6967
        %v6969 = vpop.f32.mrf.mxu0
        %v6970 = vpop.f32.mrf.mxu0
        %v6971 = vadd.f32 0.0, %v6970
        %v6972 = vpop.f32.mrf.mxu0
        %6973 = vmatprep.mubr.bf16.mxu0 0
        %6974 = vmatmul.mubr.bf16.gmra.mxu0 %v6859
        %v6975 = vpop.f32.mrf.mxu0
        %v6976 = vadd.f32 0.0, %v6975
        %v6977 = vpop.f32.mrf.mxu0
        %v6978 = vpop.f32.mrf.mxu0
        %v6979 = vadd.f32 0.0, %v6978
        %v6980 = vpop.f32.mrf.mxu0
        %6981 = vmatprep.mubr.bf16.mxu0 0
        %6982 = vmatmul.mubr.bf16.gmra.mxu0 %v6862
        %v6983 = vpop.f32.mrf.mxu0
        %v6984 = vadd.f32 0.0, %v6983
        %v6985 = vpop.f32.mrf.mxu0
        %v6986 = vpop.f32.mrf.mxu0
        %v6987 = vadd.f32 0.0, %v6986
        %v6988 = vpop.f32.mrf.mxu0
        %6989 = vmatprep.mubr.bf16.mxu0 0
        %6990 = vmatmul.mubr.bf16.gmra.mxu0 %v6865
        %v6991 = vpop.f32.mrf.mxu0
        %v6992 = vadd.f32 0.0, %v6991
        %v6993 = vpop.f32.mrf.mxu0
        %v6994 = vpop.f32.mrf.mxu0
        %v6995 = vadd.f32 0.0, %v6994
        %v6996 = vpop.f32.mrf.mxu0
        %6997 = vmatprep.mubr.bf16.mxu0 0
        %6998 = vmatmul.mubr.bf16.gmra.mxu0 %v6868
        %v6999 = vpop.f32.mrf.mxu0
        %v7000 = vadd.f32 0.0, %v6999
        %v7001 = vpop.f32.mrf.mxu0
        %v7002 = vpop.f32.mrf.mxu0
        %v7003 = vadd.f32 0.0, %v7002
        %v7004 = vpop.f32.mrf.mxu0
        %7005 = vmatprep.mubr.bf16.mxu0 0
        %7006 = vmatmul.mubr.bf16.gmra.mxu0 %v6871
        %v7007 = vpop.f32.mrf.mxu0
        %v7008 = vadd.f32 0.0, %v7007
        %v7009 = vpop.f32.mrf.mxu0
        %v7010 = vpop.f32.mrf.mxu0
        %v7011 = vadd.f32 0.0, %v7010
        %v7012 = vpop.f32.mrf.mxu0
        %7013 = vmatprep.mubr.bf16.mxu0 0
        %7014 = vmatmul.mubr.bf16.gmra.mxu0 %v6874
        %v7015 = vpop.f32.mrf.mxu0
        %v7016 = vadd.f32 0.0, %v7015
        %v7017 = vpop.f32.mrf.mxu0
        %v7018 = vpop.f32.mrf.mxu0
        %v7019 = vadd.f32 0.0, %v7018
        %v7020 = vpop.f32.mrf.mxu0
        %7021 = vmatprep.mubr.bf16.mxu0 0
        %7022 = vmatmul.mubr.bf16.gmra.mxu0 %v6877
        %v7023 = vpop.f32.mrf.mxu0
        %v7024 = vadd.f32 0.0, %v7023
        %v7025 = vpop.f32.mrf.mxu0
        %v7026 = vpop.f32.mrf.mxu0
        %v7027 = vadd.f32 0.0, %v7026
        %v7028 = vpop.f32.mrf.mxu0
        %7029 = vmatprep.mubr.bf16.mxu0 0
        %7030 = vmatmul.mubr.bf16.gmra.mxu0 %v6880
        %v7031 = vpop.f32.mrf.mxu0
        %v7032 = vadd.f32 0.0, %v7031
        %v7033 = vpop.f32.mrf.mxu0
        %v7034 = vpop.f32.mrf.mxu0
        %v7035 = vadd.f32 0.0, %v7034
        %v7036 = vpop.f32.mrf.mxu0
        %7037 = vmatprep.mubr.bf16.mxu0 0
        %7038 = vmatmul.mubr.bf16.gmra.mxu0 %v6883
        %v7039 = vpop.f32.mrf.mxu0
        %v7040 = vadd.f32 0.0, %v7039
        %v7041 = vpop.f32.mrf.mxu0
        %v7042 = vpop.f32.mrf.mxu0
        %v7043 = vadd.f32 0.0, %v7042
        %v7044 = vpop.f32.mrf.mxu0
        %7045 = vdwg.mxu0
        %v7046 = vadd.f32 %v6748, %v6920
        %v7047 = vadd.f32 %v6749, %v6923
        %v7048 = vadd.f32 %v6750, %v6928
        %v7049 = vadd.f32 %v6751, %v6931
        %v7050 = vadd.f32 %v6752, %v6936
        %v7051 = vadd.f32 %v6753, %v6939
        %v7052 = vadd.f32 %v6754, %v6944
        %v7053 = vadd.f32 %v6755, %v6947
        %v7054 = vadd.f32 %v6756, %v6952
        %v7055 = vadd.f32 %v6757, %v6955
        %v7056 = vadd.f32 %v6758, %v6960
        %v7057 = vadd.f32 %v6759, %v6963
        %v7058 = vadd.f32 %v6760, %v6968
        %v7059 = vadd.f32 %v6761, %v6971
        %v7060 = vadd.f32 %v6762, %v6976
        %v7061 = vadd.f32 %v6763, %v6979
        %v7062 = vadd.f32 %v6764, %v6984
        %v7063 = vadd.f32 %v6765, %v6987
        %v7064 = vadd.f32 %v6766, %v6992
        %v7065 = vadd.f32 %v6767, %v6995
        %v7066 = vadd.f32 %v6768, %v7000
        %v7067 = vadd.f32 %v6769, %v7003
        %v7068 = vadd.f32 %v6770, %v7008
        %v7069 = vadd.f32 %v6771, %v7011
        %v7070 = vadd.f32 %v6772, %v7016
        %v7071 = vadd.f32 %v6773, %v7019
        %v7072 = vadd.f32 %v6774, %v7024
        %v7073 = vadd.f32 %v6775, %v7027
        %v7074 = vadd.f32 %v6776, %v7032
        %v7075 = vadd.f32 %v6777, %v7035
        %v7076 = vadd.f32 %v6778, %v7040
        %v7077 = vadd.f32 %v6779, %v7043
        %v7078 = vld [vmem:[%s6183 + $0x3] sm:$0xff]
        %v7079 = vld [vmem:[%s6183 + $0xb] sm:$0xff]
        %v7080 = vld [vmem:[%s6183 + $0x1b] sm:$0xff]
        %v7081 = vld [vmem:[%s6183 + $0x23] sm:$0xff]
        %v7082 = vld [vmem:[%s6183 + $0x33] sm:$0xff]
        %v7083 = vld [vmem:[%s6183 + $0x3b] sm:$0xff]
        %v7084 = vld [vmem:[%s6183 + $0x4b] sm:$0xff]
        %v7085 = vld [vmem:[%s6183 + $0x53] sm:$0xff]
        %v7086 = vld [vmem:[%s6183 + $0x63] sm:$0xff]
        %v7087 = vld [vmem:[%s6183 + $0x6b] sm:$0xff]
        %v7088 = vld [vmem:[%s6183 + $0x7b] sm:$0xff]
        %v7089 = vld [vmem:[%s6183 + $0x83] sm:$0xff]
        %v7090 = vld [vmem:[%s6183 + $0x93] sm:$0xff]
        %v7091 = vld [vmem:[%s6183 + $0x9b] sm:$0xff]
        %v7092 = vld [vmem:[%s6183 + $0xab] sm:$0xff]
        %v7093 = vld [vmem:[%s6183 + $0xb3] sm:$0xff]
        %v7094 = vld [vmem:[%s6183 + $0xc3] sm:$0xff]
        %v7095 = vld [vmem:[%s6183 + $0xcb] sm:$0xff]
        %v7096 = vld [vmem:[%s6183 + $0xdb] sm:$0xff]
        %v7097 = vld [vmem:[%s6183 + $0xe3] sm:$0xff]
        %v7098 = vld [vmem:[%s6183 + $0xf3] sm:$0xff]
        %v7099 = vld [vmem:[%s6183 + $0xfb] sm:$0xff]
        %v7100 = vld [vmem:[%s6183 + $0x10b] sm:$0xff]
        %v7101 = vld [vmem:[%s6183 + $0x113] sm:$0xff]
        %v7102 = vld [vmem:[%s6183 + $0x123] sm:$0xff]
        %v7103 = vld [vmem:[%s6183 + $0x12b] sm:$0xff]
        %v7104 = vld [vmem:[%s6183 + $0x13b] sm:$0xff]
        %v7105 = vld [vmem:[%s6183 + $0x143] sm:$0xff]
        %v7106 = vld [vmem:[%s6183 + $0x153] sm:$0xff]
        %v7107 = vld [vmem:[%s6183 + $0x15b] sm:$0xff]
        %v7108 = vld [vmem:[%s6183 + $0x16b] sm:$0xff]
        %v7109 = vld [vmem:[%s6183 + $0x173] sm:$0xff]
        %v7110 = vpack.c.bf16 %v7079, %v7078
        %v7111 = vpack.c.bf16 %v7081, %v7080
        %v7112 = vpack.c.bf16 %v7083, %v7082
        %v7113 = vpack.c.bf16 %v7085, %v7084
        %v7114 = vpack.c.bf16 %v7087, %v7086
        %v7115 = vpack.c.bf16 %v7089, %v7088
        %v7116 = vpack.c.bf16 %v7091, %v7090
        %v7117 = vpack.c.bf16 %v7093, %v7092
        %v7118 = vpack.c.bf16 %v7095, %v7094
        %v7119 = vpack.c.bf16 %v7097, %v7096
        %v7120 = vpack.c.bf16 %v7099, %v7098
        %v7121 = vpack.c.bf16 %v7101, %v7100
        %v7122 = vpack.c.bf16 %v7103, %v7102
        %v7123 = vpack.c.bf16 %v7105, %v7104
        %v7124 = vpack.c.bf16 %v7107, %v7106
        %v7125 = vpack.c.bf16 %v7109, %v7108
        %s7126 = scalar_lea.vmem %s2, 184
        %v7127 = vld [vmem:[%s7126] sm:$0xf]
        %v7128 = vld [vmem:[%s7126 + $0x4] sm:$0xf]
        %v7131 = vunpack.c.l.b16 %v7127
        %v7132 = vunpack.c.l.b16 %v7128
        %v7133 = vpack.c.b16 %v7132, %v7131
        %v7136 = vsel %vm391, %v7110, 0
        %v7139 = vsel %vm391, %v7111, 0
        %v7142 = vsel %vm391, %v7112, 0
        %v7145 = vsel %vm391, %v7113, 0
        %v7148 = vsel %vm391, %v7114, 0
        %v7151 = vsel %vm391, %v7115, 0
        %v7154 = vsel %vm391, %v7116, 0
        %v7157 = vsel %vm391, %v7117, 0
        %v7160 = vsel %vm391, %v7118, 0
        %v7163 = vsel %vm391, %v7119, 0
        %v7166 = vsel %vm391, %v7120, 0
        %v7169 = vsel %vm391, %v7121, 0
        %v7172 = vsel %vm391, %v7122, 0
        %v7175 = vsel %vm391, %v7123, 0
        %v7178 = vsel %vm391, %v7124, 0
        %v7181 = vsel %vm391, %v7125, 0
        %7183 = vmatprep.subr.bf16.mxu0 0
        %7184 = vmatpush1.bf16.msra.mxu0 0
        %7185 = vmatprep.subr.bf16.mxu0 0
        %7186 = vmatpush1.bf16.msra.mxu0 0
        %7187 = vmatprep.subr.bf16.mxu0 0
        %7188 = vmatpush1.bf16.msra.mxu0 0
        %7189 = vmatprep.subr.bf16.mxu0 0
        %7190 = vmatpush1.bf16.msra.mxu0 0
        %7191 = vmatprep.subr.bf16.mxu0 0
        %7192 = vmatpush1.bf16.msra.mxu0 0
        %7193 = vmatprep.subr.bf16.mxu0 0
        %7194 = vmatpush1.bf16.msra.mxu0 0
        %7195 = vmatprep.subr.bf16.mxu0 0
        %7196 = vmatpush1.bf16.msra.mxu0 0
        %7197 = vmatprep.subr.bf16.mxu0 0
        %7198 = vmatpush1.bf16.msra.mxu0 %v7133
        %7199 = vmatprep.subr.bf16.mxu0 0
        %7200 = vmatpush2.bf16.msra.mxu0 0
        %7201 = vmatprep.subr.bf16.mxu0 0
        %7202 = vmatpush2.bf16.msra.mxu0 0
        %7203 = vmatprep.subr.bf16.mxu0 0
        %7204 = vmatpush2.bf16.msra.mxu0 0
        %7205 = vmatprep.subr.bf16.mxu0 0
        %7206 = vmatpush2.bf16.msra.mxu0 0
        %7207 = vmatprep.subr.bf16.mxu0 0
        %7208 = vmatpush2.bf16.msra.mxu0 0
        %7209 = vmatprep.subr.bf16.mxu0 0
        %7210 = vmatpush2.bf16.msra.mxu0 0
        %7211 = vmatprep.subr.bf16.mxu0 0
        %7212 = vmatpush2.bf16.msra.mxu0 0
        %7213 = vmatprep.subr.bf16.mxu0 0
        %7214 = vmatpush2.bf16.msra.mxu0 0
        %7215 = vmatprep.mubr.bf16.mxu0 0
        %7216 = vmatmul.mubr.bf16.gmra.mxu0 %v7136
        %v7217 = vpop.f32.mrf.mxu0
        %v7218 = vadd.f32 0.0, %v7217
        %v7219 = vpop.f32.mrf.mxu0
        %v7220 = vpop.f32.mrf.mxu0
        %v7221 = vadd.f32 0.0, %v7220
        %v7222 = vpop.f32.mrf.mxu0
        %7223 = vmatprep.mubr.bf16.mxu0 0
        %7224 = vmatmul.mubr.bf16.gmra.mxu0 %v7139
        %v7225 = vpop.f32.mrf.mxu0
        %v7226 = vadd.f32 0.0, %v7225
        %v7227 = vpop.f32.mrf.mxu0
        %v7228 = vpop.f32.mrf.mxu0
        %v7229 = vadd.f32 0.0, %v7228
        %v7230 = vpop.f32.mrf.mxu0
        %7231 = vmatprep.mubr.bf16.mxu0 0
        %7232 = vmatmul.mubr.bf16.gmra.mxu0 %v7142
        %v7233 = vpop.f32.mrf.mxu0
        %v7234 = vadd.f32 0.0, %v7233
        %v7235 = vpop.f32.mrf.mxu0
        %v7236 = vpop.f32.mrf.mxu0
        %v7237 = vadd.f32 0.0, %v7236
        %v7238 = vpop.f32.mrf.mxu0
        %7239 = vmatprep.mubr.bf16.mxu0 0
        %7240 = vmatmul.mubr.bf16.gmra.mxu0 %v7145
        %v7241 = vpop.f32.mrf.mxu0
        %v7242 = vadd.f32 0.0, %v7241
        %v7243 = vpop.f32.mrf.mxu0
        %v7244 = vpop.f32.mrf.mxu0
        %v7245 = vadd.f32 0.0, %v7244
        %v7246 = vpop.f32.mrf.mxu0
        %7247 = vmatprep.mubr.bf16.mxu0 0
        %7248 = vmatmul.mubr.bf16.gmra.mxu0 %v7148
        %v7249 = vpop.f32.mrf.mxu0
        %v7250 = vadd.f32 0.0, %v7249
        %v7251 = vpop.f32.mrf.mxu0
        %v7252 = vpop.f32.mrf.mxu0
        %v7253 = vadd.f32 0.0, %v7252
        %v7254 = vpop.f32.mrf.mxu0
        %7255 = vmatprep.mubr.bf16.mxu0 0
        %7256 = vmatmul.mubr.bf16.gmra.mxu0 %v7151
        %v7257 = vpop.f32.mrf.mxu0
        %v7258 = vadd.f32 0.0, %v7257
        %v7259 = vpop.f32.mrf.mxu0
        %v7260 = vpop.f32.mrf.mxu0
        %v7261 = vadd.f32 0.0, %v7260
        %v7262 = vpop.f32.mrf.mxu0
        %7263 = vmatprep.mubr.bf16.mxu0 0
        %7264 = vmatmul.mubr.bf16.gmra.mxu0 %v7154
        %v7265 = vpop.f32.mrf.mxu0
        %v7266 = vadd.f32 0.0, %v7265
        %v7267 = vpop.f32.mrf.mxu0
        %v7268 = vpop.f32.mrf.mxu0
        %v7269 = vadd.f32 0.0, %v7268
        %v7270 = vpop.f32.mrf.mxu0
        %7271 = vmatprep.mubr.bf16.mxu0 0
        %7272 = vmatmul.mubr.bf16.gmra.mxu0 %v7157
        %v7273 = vpop.f32.mrf.mxu0
        %v7274 = vadd.f32 0.0, %v7273
        %v7275 = vpop.f32.mrf.mxu0
        %v7276 = vpop.f32.mrf.mxu0
        %v7277 = vadd.f32 0.0, %v7276
        %v7278 = vpop.f32.mrf.mxu0
        %7279 = vmatprep.mubr.bf16.mxu0 0
        %7280 = vmatmul.mubr.bf16.gmra.mxu0 %v7160
        %v7281 = vpop.f32.mrf.mxu0
        %v7282 = vadd.f32 0.0, %v7281
        %v7283 = vpop.f32.mrf.mxu0
        %v7284 = vpop.f32.mrf.mxu0
        %v7285 = vadd.f32 0.0, %v7284
        %v7286 = vpop.f32.mrf.mxu0
        %7287 = vmatprep.mubr.bf16.mxu0 0
        %7288 = vmatmul.mubr.bf16.gmra.mxu0 %v7163
        %v7289 = vpop.f32.mrf.mxu0
        %v7290 = vadd.f32 0.0, %v7289
        %v7291 = vpop.f32.mrf.mxu0
        %v7292 = vpop.f32.mrf.mxu0
        %v7293 = vadd.f32 0.0, %v7292
        %v7294 = vpop.f32.mrf.mxu0
        %7295 = vmatprep.mubr.bf16.mxu0 0
        %7296 = vmatmul.mubr.bf16.gmra.mxu0 %v7166
        %v7297 = vpop.f32.mrf.mxu0
        %v7298 = vadd.f32 0.0, %v7297
        %v7299 = vpop.f32.mrf.mxu0
        %v7300 = vpop.f32.mrf.mxu0
        %v7301 = vadd.f32 0.0, %v7300
        %v7302 = vpop.f32.mrf.mxu0
        %7303 = vmatprep.mubr.bf16.mxu0 0
        %7304 = vmatmul.mubr.bf16.gmra.mxu0 %v7169
        %v7305 = vpop.f32.mrf.mxu0
        %v7306 = vadd.f32 0.0, %v7305
        %v7307 = vpop.f32.mrf.mxu0
        %v7308 = vpop.f32.mrf.mxu0
        %v7309 = vadd.f32 0.0, %v7308
        %v7310 = vpop.f32.mrf.mxu0
        %7311 = vmatprep.mubr.bf16.mxu0 0
        %7312 = vmatmul.mubr.bf16.gmra.mxu0 %v7172
        %v7313 = vpop.f32.mrf.mxu0
        %v7314 = vadd.f32 0.0, %v7313
        %v7315 = vpop.f32.mrf.mxu0
        %v7316 = vpop.f32.mrf.mxu0
        %v7317 = vadd.f32 0.0, %v7316
        %v7318 = vpop.f32.mrf.mxu0
        %7319 = vmatprep.mubr.bf16.mxu0 0
        %7320 = vmatmul.mubr.bf16.gmra.mxu0 %v7175
        %v7321 = vpop.f32.mrf.mxu0
        %v7322 = vadd.f32 0.0, %v7321
        %v7323 = vpop.f32.mrf.mxu0
        %v7324 = vpop.f32.mrf.mxu0
        %v7325 = vadd.f32 0.0, %v7324
        %v7326 = vpop.f32.mrf.mxu0
        %7327 = vmatprep.mubr.bf16.mxu0 0
        %7328 = vmatmul.mubr.bf16.gmra.mxu0 %v7178
        %v7329 = vpop.f32.mrf.mxu0
        %v7330 = vadd.f32 0.0, %v7329
        %v7331 = vpop.f32.mrf.mxu0
        %v7332 = vpop.f32.mrf.mxu0
        %v7333 = vadd.f32 0.0, %v7332
        %v7334 = vpop.f32.mrf.mxu0
        %7335 = vmatprep.mubr.bf16.mxu0 0
        %7336 = vmatmul.mubr.bf16.gmra.mxu0 %v7181
        %v7337 = vpop.f32.mrf.mxu0
        %v7338 = vadd.f32 0.0, %v7337
        %v7339 = vpop.f32.mrf.mxu0
        %v7340 = vpop.f32.mrf.mxu0
        %v7341 = vadd.f32 0.0, %v7340
        %v7342 = vpop.f32.mrf.mxu0
        %7343 = vdwg.mxu0
        %v7344 = vadd.f32 %v7046, %v7218
        %v7345 = vadd.f32 %v7047, %v7221
        %v7346 = vadd.f32 %v7048, %v7226
        %v7347 = vadd.f32 %v7049, %v7229
        %v7348 = vadd.f32 %v7050, %v7234
        %v7349 = vadd.f32 %v7051, %v7237
        %v7350 = vadd.f32 %v7052, %v7242
        %v7351 = vadd.f32 %v7053, %v7245
        %v7352 = vadd.f32 %v7054, %v7250
        %v7353 = vadd.f32 %v7055, %v7253
        %v7354 = vadd.f32 %v7056, %v7258
        %v7355 = vadd.f32 %v7057, %v7261
        %v7356 = vadd.f32 %v7058, %v7266
        %v7357 = vadd.f32 %v7059, %v7269
        %v7358 = vadd.f32 %v7060, %v7274
        %v7359 = vadd.f32 %v7061, %v7277
        %v7360 = vadd.f32 %v7062, %v7282
        %v7361 = vadd.f32 %v7063, %v7285
        %v7362 = vadd.f32 %v7064, %v7290
        %v7363 = vadd.f32 %v7065, %v7293
        %v7364 = vadd.f32 %v7066, %v7298
        %v7365 = vadd.f32 %v7067, %v7301
        %v7366 = vadd.f32 %v7068, %v7306
        %v7367 = vadd.f32 %v7069, %v7309
        %v7368 = vadd.f32 %v7070, %v7314
        %v7369 = vadd.f32 %v7071, %v7317
        %v7370 = vadd.f32 %v7072, %v7322
        %v7371 = vadd.f32 %v7073, %v7325
        %v7372 = vadd.f32 %v7074, %v7330
        %v7373 = vadd.f32 %v7075, %v7333
        %v7374 = vadd.f32 %v7076, %v7338
        %v7375 = vadd.f32 %v7077, %v7341
        %v7376 = vld [vmem:[%s6183 + $0x4] sm:$0xff]
        %v7377 = vld [vmem:[%s6183 + $0xc] sm:$0xff]
        %v7378 = vld [vmem:[%s6183 + $0x1c] sm:$0xff]
        %v7379 = vld [vmem:[%s6183 + $0x24] sm:$0xff]
        %v7380 = vld [vmem:[%s6183 + $0x34] sm:$0xff]
        %v7381 = vld [vmem:[%s6183 + $0x3c] sm:$0xff]
        %v7382 = vld [vmem:[%s6183 + $0x4c] sm:$0xff]
        %v7383 = vld [vmem:[%s6183 + $0x54] sm:$0xff]
        %v7384 = vld [vmem:[%s6183 + $0x64] sm:$0xff]
        %v7385 = vld [vmem:[%s6183 + $0x6c] sm:$0xff]
        %v7386 = vld [vmem:[%s6183 + $0x7c] sm:$0xff]
        %v7387 = vld [vmem:[%s6183 + $0x84] sm:$0xff]
        %v7388 = vld [vmem:[%s6183 + $0x94] sm:$0xff]
        %v7389 = vld [vmem:[%s6183 + $0x9c] sm:$0xff]
        %v7390 = vld [vmem:[%s6183 + $0xac] sm:$0xff]
        %v7391 = vld [vmem:[%s6183 + $0xb4] sm:$0xff]
        %v7392 = vld [vmem:[%s6183 + $0xc4] sm:$0xff]
        %v7393 = vld [vmem:[%s6183 + $0xcc] sm:$0xff]
        %v7394 = vld [vmem:[%s6183 + $0xdc] sm:$0xff]
        %v7395 = vld [vmem:[%s6183 + $0xe4] sm:$0xff]
        %v7396 = vld [vmem:[%s6183 + $0xf4] sm:$0xff]
        %v7397 = vld [vmem:[%s6183 + $0xfc] sm:$0xff]
        %v7398 = vld [vmem:[%s6183 + $0x10c] sm:$0xff]
        %v7399 = vld [vmem:[%s6183 + $0x114] sm:$0xff]
        %v7400 = vld [vmem:[%s6183 + $0x124] sm:$0xff]
        %v7401 = vld [vmem:[%s6183 + $0x12c] sm:$0xff]
        %v7402 = vld [vmem:[%s6183 + $0x13c] sm:$0xff]
        %v7403 = vld [vmem:[%s6183 + $0x144] sm:$0xff]
        %v7404 = vld [vmem:[%s6183 + $0x154] sm:$0xff]
        %v7405 = vld [vmem:[%s6183 + $0x15c] sm:$0xff]
        %v7406 = vld [vmem:[%s6183 + $0x16c] sm:$0xff]
        %v7407 = vld [vmem:[%s6183 + $0x174] sm:$0xff]
        %v7408 = vpack.c.bf16 %v7377, %v7376
        %v7409 = vpack.c.bf16 %v7379, %v7378
        %v7410 = vpack.c.bf16 %v7381, %v7380
        %v7411 = vpack.c.bf16 %v7383, %v7382
        %v7412 = vpack.c.bf16 %v7385, %v7384
        %v7413 = vpack.c.bf16 %v7387, %v7386
        %v7414 = vpack.c.bf16 %v7389, %v7388
        %v7415 = vpack.c.bf16 %v7391, %v7390
        %v7416 = vpack.c.bf16 %v7393, %v7392
        %v7417 = vpack.c.bf16 %v7395, %v7394
        %v7418 = vpack.c.bf16 %v7397, %v7396
        %v7419 = vpack.c.bf16 %v7399, %v7398
        %v7420 = vpack.c.bf16 %v7401, %v7400
        %v7421 = vpack.c.bf16 %v7403, %v7402
        %v7422 = vpack.c.bf16 %v7405, %v7404
        %v7423 = vpack.c.bf16 %v7407, %v7406
        %s7424 = scalar_lea.vmem %s2, 192
        %v7425 = vld [vmem:[%s7424] sm:$0xf]
        %v7426 = vld [vmem:[%s7424 + $0x4] sm:$0xf]
        %v7429 = vunpack.c.l.b16 %v7425
        %v7430 = vunpack.c.l.b16 %v7426
        %v7431 = vpack.c.b16 %v7430, %v7429
        %v7434 = vsel %vm391, %v7408, 0
        %v7437 = vsel %vm391, %v7409, 0
        %v7440 = vsel %vm391, %v7410, 0
        %v7443 = vsel %vm391, %v7411, 0
        %v7446 = vsel %vm391, %v7412, 0
        %v7449 = vsel %vm391, %v7413, 0
        %v7452 = vsel %vm391, %v7414, 0
        %v7455 = vsel %vm391, %v7415, 0
        %v7458 = vsel %vm391, %v7416, 0
        %v7461 = vsel %vm391, %v7417, 0
        %v7464 = vsel %vm391, %v7418, 0
        %v7467 = vsel %vm391, %v7419, 0
        %v7470 = vsel %vm391, %v7420, 0
        %v7473 = vsel %vm391, %v7421, 0
        %v7476 = vsel %vm391, %v7422, 0
        %v7479 = vsel %vm391, %v7423, 0
        %7481 = vmatprep.subr.bf16.mxu0 0
        %7482 = vmatpush1.bf16.msra.mxu0 0
        %7483 = vmatprep.subr.bf16.mxu0 0
        %7484 = vmatpush1.bf16.msra.mxu0 0
        %7485 = vmatprep.subr.bf16.mxu0 0
        %7486 = vmatpush1.bf16.msra.mxu0 0
        %7487 = vmatprep.subr.bf16.mxu0 0
        %7488 = vmatpush1.bf16.msra.mxu0 0
        %7489 = vmatprep.subr.bf16.mxu0 0
        %7490 = vmatpush1.bf16.msra.mxu0 0
        %7491 = vmatprep.subr.bf16.mxu0 0
        %7492 = vmatpush1.bf16.msra.mxu0 0
        %7493 = vmatprep.subr.bf16.mxu0 0
        %7494 = vmatpush1.bf16.msra.mxu0 0
        %7495 = vmatprep.subr.bf16.mxu0 0
        %7496 = vmatpush1.bf16.msra.mxu0 %v7431
        %7497 = vmatprep.subr.bf16.mxu0 0
        %7498 = vmatpush2.bf16.msra.mxu0 0
        %7499 = vmatprep.subr.bf16.mxu0 0
        %7500 = vmatpush2.bf16.msra.mxu0 0
        %7501 = vmatprep.subr.bf16.mxu0 0
        %7502 = vmatpush2.bf16.msra.mxu0 0
        %7503 = vmatprep.subr.bf16.mxu0 0
        %7504 = vmatpush2.bf16.msra.mxu0 0
        %7505 = vmatprep.subr.bf16.mxu0 0
        %7506 = vmatpush2.bf16.msra.mxu0 0
        %7507 = vmatprep.subr.bf16.mxu0 0
        %7508 = vmatpush2.bf16.msra.mxu0 0
        %7509 = vmatprep.subr.bf16.mxu0 0
        %7510 = vmatpush2.bf16.msra.mxu0 0
        %7511 = vmatprep.subr.bf16.mxu0 0
        %7512 = vmatpush2.bf16.msra.mxu0 0
        %7513 = vmatprep.mubr.bf16.mxu0 0
        %7514 = vmatmul.mubr.bf16.gmra.mxu0 %v7434
        %v7515 = vpop.f32.mrf.mxu0
        %v7516 = vadd.f32 0.0, %v7515
        %v7517 = vpop.f32.mrf.mxu0
        %v7518 = vpop.f32.mrf.mxu0
        %v7519 = vadd.f32 0.0, %v7518
        %v7520 = vpop.f32.mrf.mxu0
        %7521 = vmatprep.mubr.bf16.mxu0 0
        %7522 = vmatmul.mubr.bf16.gmra.mxu0 %v7437
        %v7523 = vpop.f32.mrf.mxu0
        %v7524 = vadd.f32 0.0, %v7523
        %v7525 = vpop.f32.mrf.mxu0
        %v7526 = vpop.f32.mrf.mxu0
        %v7527 = vadd.f32 0.0, %v7526
        %v7528 = vpop.f32.mrf.mxu0
        %7529 = vmatprep.mubr.bf16.mxu0 0
        %7530 = vmatmul.mubr.bf16.gmra.mxu0 %v7440
        %v7531 = vpop.f32.mrf.mxu0
        %v7532 = vadd.f32 0.0, %v7531
        %v7533 = vpop.f32.mrf.mxu0
        %v7534 = vpop.f32.mrf.mxu0
        %v7535 = vadd.f32 0.0, %v7534
        %v7536 = vpop.f32.mrf.mxu0
        %7537 = vmatprep.mubr.bf16.mxu0 0
        %7538 = vmatmul.mubr.bf16.gmra.mxu0 %v7443
        %v7539 = vpop.f32.mrf.mxu0
        %v7540 = vadd.f32 0.0, %v7539
        %v7541 = vpop.f32.mrf.mxu0
        %v7542 = vpop.f32.mrf.mxu0
        %v7543 = vadd.f32 0.0, %v7542
        %v7544 = vpop.f32.mrf.mxu0
        %7545 = vmatprep.mubr.bf16.mxu0 0
        %7546 = vmatmul.mubr.bf16.gmra.mxu0 %v7446
        %v7547 = vpop.f32.mrf.mxu0
        %v7548 = vadd.f32 0.0, %v7547
        %v7549 = vpop.f32.mrf.mxu0
        %v7550 = vpop.f32.mrf.mxu0
        %v7551 = vadd.f32 0.0, %v7550
        %v7552 = vpop.f32.mrf.mxu0
        %7553 = vmatprep.mubr.bf16.mxu0 0
        %7554 = vmatmul.mubr.bf16.gmra.mxu0 %v7449
        %v7555 = vpop.f32.mrf.mxu0
        %v7556 = vadd.f32 0.0, %v7555
        %v7557 = vpop.f32.mrf.mxu0
        %v7558 = vpop.f32.mrf.mxu0
        %v7559 = vadd.f32 0.0, %v7558
        %v7560 = vpop.f32.mrf.mxu0
        %7561 = vmatprep.mubr.bf16.mxu0 0
        %7562 = vmatmul.mubr.bf16.gmra.mxu0 %v7452
        %v7563 = vpop.f32.mrf.mxu0
        %v7564 = vadd.f32 0.0, %v7563
        %v7565 = vpop.f32.mrf.mxu0
        %v7566 = vpop.f32.mrf.mxu0
        %v7567 = vadd.f32 0.0, %v7566
        %v7568 = vpop.f32.mrf.mxu0
        %7569 = vmatprep.mubr.bf16.mxu0 0
        %7570 = vmatmul.mubr.bf16.gmra.mxu0 %v7455
        %v7571 = vpop.f32.mrf.mxu0
        %v7572 = vadd.f32 0.0, %v7571
        %v7573 = vpop.f32.mrf.mxu0
        %v7574 = vpop.f32.mrf.mxu0
        %v7575 = vadd.f32 0.0, %v7574
        %v7576 = vpop.f32.mrf.mxu0
        %7577 = vmatprep.mubr.bf16.mxu0 0
        %7578 = vmatmul.mubr.bf16.gmra.mxu0 %v7458
        %v7579 = vpop.f32.mrf.mxu0
        %v7580 = vadd.f32 0.0, %v7579
        %v7581 = vpop.f32.mrf.mxu0
        %v7582 = vpop.f32.mrf.mxu0
        %v7583 = vadd.f32 0.0, %v7582
        %v7584 = vpop.f32.mrf.mxu0
        %7585 = vmatprep.mubr.bf16.mxu0 0
        %7586 = vmatmul.mubr.bf16.gmra.mxu0 %v7461
        %v7587 = vpop.f32.mrf.mxu0
        %v7588 = vadd.f32 0.0, %v7587
        %v7589 = vpop.f32.mrf.mxu0
        %v7590 = vpop.f32.mrf.mxu0
        %v7591 = vadd.f32 0.0, %v7590
        %v7592 = vpop.f32.mrf.mxu0
        %7593 = vmatprep.mubr.bf16.mxu0 0
        %7594 = vmatmul.mubr.bf16.gmra.mxu0 %v7464
        %v7595 = vpop.f32.mrf.mxu0
        %v7596 = vadd.f32 0.0, %v7595
        %v7597 = vpop.f32.mrf.mxu0
        %v7598 = vpop.f32.mrf.mxu0
        %v7599 = vadd.f32 0.0, %v7598
        %v7600 = vpop.f32.mrf.mxu0
        %7601 = vmatprep.mubr.bf16.mxu0 0
        %7602 = vmatmul.mubr.bf16.gmra.mxu0 %v7467
        %v7603 = vpop.f32.mrf.mxu0
        %v7604 = vadd.f32 0.0, %v7603
        %v7605 = vpop.f32.mrf.mxu0
        %v7606 = vpop.f32.mrf.mxu0
        %v7607 = vadd.f32 0.0, %v7606
        %v7608 = vpop.f32.mrf.mxu0
        %7609 = vmatprep.mubr.bf16.mxu0 0
        %7610 = vmatmul.mubr.bf16.gmra.mxu0 %v7470
        %v7611 = vpop.f32.mrf.mxu0
        %v7612 = vadd.f32 0.0, %v7611
        %v7613 = vpop.f32.mrf.mxu0
        %v7614 = vpop.f32.mrf.mxu0
        %v7615 = vadd.f32 0.0, %v7614
        %v7616 = vpop.f32.mrf.mxu0
        %7617 = vmatprep.mubr.bf16.mxu0 0
        %7618 = vmatmul.mubr.bf16.gmra.mxu0 %v7473
        %v7619 = vpop.f32.mrf.mxu0
        %v7620 = vadd.f32 0.0, %v7619
        %v7621 = vpop.f32.mrf.mxu0
        %v7622 = vpop.f32.mrf.mxu0
        %v7623 = vadd.f32 0.0, %v7622
        %v7624 = vpop.f32.mrf.mxu0
        %7625 = vmatprep.mubr.bf16.mxu0 0
        %7626 = vmatmul.mubr.bf16.gmra.mxu0 %v7476
        %v7627 = vpop.f32.mrf.mxu0
        %v7628 = vadd.f32 0.0, %v7627
        %v7629 = vpop.f32.mrf.mxu0
        %v7630 = vpop.f32.mrf.mxu0
        %v7631 = vadd.f32 0.0, %v7630
        %v7632 = vpop.f32.mrf.mxu0
        %7633 = vmatprep.mubr.bf16.mxu0 0
        %7634 = vmatmul.mubr.bf16.gmra.mxu0 %v7479
        %v7635 = vpop.f32.mrf.mxu0
        %v7636 = vadd.f32 0.0, %v7635
        %v7637 = vpop.f32.mrf.mxu0
        %v7638 = vpop.f32.mrf.mxu0
        %v7639 = vadd.f32 0.0, %v7638
        %v7640 = vpop.f32.mrf.mxu0
        %7641 = vdwg.mxu0
        %v7642 = vadd.f32 %v7344, %v7516
        %v7643 = vadd.f32 %v7345, %v7519
        %v7644 = vadd.f32 %v7346, %v7524
        %v7645 = vadd.f32 %v7347, %v7527
        %v7646 = vadd.f32 %v7348, %v7532
        %v7647 = vadd.f32 %v7349, %v7535
        %v7648 = vadd.f32 %v7350, %v7540
        %v7649 = vadd.f32 %v7351, %v7543
        %v7650 = vadd.f32 %v7352, %v7548
        %v7651 = vadd.f32 %v7353, %v7551
        %v7652 = vadd.f32 %v7354, %v7556
        %v7653 = vadd.f32 %v7355, %v7559
        %v7654 = vadd.f32 %v7356, %v7564
        %v7655 = vadd.f32 %v7357, %v7567
        %v7656 = vadd.f32 %v7358, %v7572
        %v7657 = vadd.f32 %v7359, %v7575
        %v7658 = vadd.f32 %v7360, %v7580
        %v7659 = vadd.f32 %v7361, %v7583
        %v7660 = vadd.f32 %v7362, %v7588
        %v7661 = vadd.f32 %v7363, %v7591
        %v7662 = vadd.f32 %v7364, %v7596
        %v7663 = vadd.f32 %v7365, %v7599
        %v7664 = vadd.f32 %v7366, %v7604
        %v7665 = vadd.f32 %v7367, %v7607
        %v7666 = vadd.f32 %v7368, %v7612
        %v7667 = vadd.f32 %v7369, %v7615
        %v7668 = vadd.f32 %v7370, %v7620
        %v7669 = vadd.f32 %v7371, %v7623
        %v7670 = vadd.f32 %v7372, %v7628
        %v7671 = vadd.f32 %v7373, %v7631
        %v7672 = vadd.f32 %v7374, %v7636
        %v7673 = vadd.f32 %v7375, %v7639
        %v7674 = vld [vmem:[%s277] sm:$0xff]
        %v7675 = vld [vmem:[%s277 + $0x8] sm:$0xff]
        %v7676 = vld [vmem:[%s277 + $0x18] sm:$0xff]
        %v7677 = vld [vmem:[%s277 + $0x20] sm:$0xff]
        %v7678 = vld [vmem:[%s277 + $0x30] sm:$0xff]
        %v7679 = vld [vmem:[%s277 + $0x38] sm:$0xff]
        %v7680 = vld [vmem:[%s277 + $0x48] sm:$0xff]
        %v7681 = vld [vmem:[%s277 + $0x50] sm:$0xff]
        %v7682 = vld [vmem:[%s277 + $0x60] sm:$0xff]
        %v7683 = vld [vmem:[%s277 + $0x68] sm:$0xff]
        %v7684 = vld [vmem:[%s277 + $0x78] sm:$0xff]
        %v7685 = vld [vmem:[%s277 + $0x80] sm:$0xff]
        %v7686 = vld [vmem:[%s277 + $0x90] sm:$0xff]
        %v7687 = vld [vmem:[%s277 + $0x98] sm:$0xff]
        %v7688 = vld [vmem:[%s277 + $0xa8] sm:$0xff]
        %v7689 = vld [vmem:[%s277 + $0xb0] sm:$0xff]
        %v7690 = vld [vmem:[%s277 + $0xc0] sm:$0xff]
        %v7691 = vld [vmem:[%s277 + $0xc8] sm:$0xff]
        %v7692 = vld [vmem:[%s277 + $0xd8] sm:$0xff]
        %v7693 = vld [vmem:[%s277 + $0xe0] sm:$0xff]
        %v7694 = vld [vmem:[%s277 + $0xf0] sm:$0xff]
        %v7695 = vld [vmem:[%s277 + $0xf8] sm:$0xff]
        %v7696 = vld [vmem:[%s277 + $0x108] sm:$0xff]
        %v7697 = vld [vmem:[%s277 + $0x110] sm:$0xff]
        %v7698 = vld [vmem:[%s277 + $0x120] sm:$0xff]
        %v7699 = vld [vmem:[%s277 + $0x128] sm:$0xff]
        %v7700 = vld [vmem:[%s277 + $0x138] sm:$0xff]
        %v7701 = vld [vmem:[%s277 + $0x140] sm:$0xff]
        %v7702 = vld [vmem:[%s277 + $0x150] sm:$0xff]
        %v7703 = vld [vmem:[%s277 + $0x158] sm:$0xff]
        %v7704 = vld [vmem:[%s277 + $0x168] sm:$0xff]
        %v7705 = vld [vmem:[%s277 + $0x170] sm:$0xff]
        %v7706 = vld [vmem:[%s277 + $0x180] sm:$0xff]
        %v7707 = vld [vmem:[%s277 + $0x188] sm:$0xff]
        %v7708 = vld [vmem:[%s277 + $0x198] sm:$0xff]
        %v7709 = vld [vmem:[%s277 + $0x1a0] sm:$0xff]
        %v7710 = vld [vmem:[%s277 + $0x1] sm:$0xff]
        %v7711 = vld [vmem:[%s277 + $0x9] sm:$0xff]
        %v7712 = vld [vmem:[%s277 + $0x19] sm:$0xff]
        %v7713 = vld [vmem:[%s277 + $0x21] sm:$0xff]
        %v7714 = vld [vmem:[%s277 + $0x31] sm:$0xff]
        %v7715 = vld [vmem:[%s277 + $0x39] sm:$0xff]
        %v7716 = vld [vmem:[%s277 + $0x49] sm:$0xff]
        %v7717 = vld [vmem:[%s277 + $0x51] sm:$0xff]
        %v7718 = vld [vmem:[%s277 + $0x61] sm:$0xff]
        %v7719 = vld [vmem:[%s277 + $0x69] sm:$0xff]
        %v7720 = vld [vmem:[%s277 + $0x79] sm:$0xff]
        %v7721 = vld [vmem:[%s277 + $0x81] sm:$0xff]
        %v7722 = vld [vmem:[%s277 + $0x91] sm:$0xff]
        %v7723 = vld [vmem:[%s277 + $0x99] sm:$0xff]
        %v7724 = vld [vmem:[%s277 + $0xa9] sm:$0xff]
        %v7725 = vld [vmem:[%s277 + $0xb1] sm:$0xff]
        %v7726 = vld [vmem:[%s277 + $0xc1] sm:$0xff]
        %v7727 = vld [vmem:[%s277 + $0xc9] sm:$0xff]
        %v7728 = vld [vmem:[%s277 + $0xd9] sm:$0xff]
        %v7729 = vld [vmem:[%s277 + $0xe1] sm:$0xff]
        %v7730 = vld [vmem:[%s277 + $0xf1] sm:$0xff]
        %v7731 = vld [vmem:[%s277 + $0xf9] sm:$0xff]
        %v7732 = vld [vmem:[%s277 + $0x109] sm:$0xff]
        %v7733 = vld [vmem:[%s277 + $0x111] sm:$0xff]
        %v7734 = vld [vmem:[%s277 + $0x121] sm:$0xff]
        %v7735 = vld [vmem:[%s277 + $0x129] sm:$0xff]
        %v7736 = vld [vmem:[%s277 + $0x139] sm:$0xff]
        %v7737 = vld [vmem:[%s277 + $0x141] sm:$0xff]
        %v7738 = vld [vmem:[%s277 + $0x151] sm:$0xff]
        %v7739 = vld [vmem:[%s277 + $0x159] sm:$0xff]
        %v7740 = vld [vmem:[%s277 + $0x169] sm:$0xff]
        %v7741 = vld [vmem:[%s277 + $0x171] sm:$0xff]
        %v7742 = vld [vmem:[%s277 + $0x181] sm:$0xff]
        %v7743 = vld [vmem:[%s277 + $0x189] sm:$0xff]
        %v7744 = vld [vmem:[%s277 + $0x199] sm:$0xff]
        %v7745 = vld [vmem:[%s277 + $0x1a1] sm:$0xff]
        %v7746 = vmax.f32 %v7674, %v7710
        %v7747 = vmax.f32 %v7675, %v7711
        %v7748 = vmax.f32 %v7676, %v7712
        %v7749 = vmax.f32 %v7677, %v7713
        %v7750 = vmax.f32 %v7678, %v7714
        %v7751 = vmax.f32 %v7679, %v7715
        %v7752 = vmax.f32 %v7680, %v7716
        %v7753 = vmax.f32 %v7681, %v7717
        %v7754 = vmax.f32 %v7682, %v7718
        %v7755 = vmax.f32 %v7683, %v7719
        %v7756 = vmax.f32 %v7684, %v7720
        %v7757 = vmax.f32 %v7685, %v7721
        %v7758 = vmax.f32 %v7686, %v7722
        %v7759 = vmax.f32 %v7687, %v7723
        %v7760 = vmax.f32 %v7688, %v7724
        %v7761 = vmax.f32 %v7689, %v7725
        %v7762 = vmax.f32 %v7690, %v7726
        %v7763 = vmax.f32 %v7691, %v7727
        %v7764 = vmax.f32 %v7692, %v7728
        %v7765 = vmax.f32 %v7693, %v7729
        %v7766 = vmax.f32 %v7694, %v7730
        %v7767 = vmax.f32 %v7695, %v7731
        %v7768 = vmax.f32 %v7696, %v7732
        %v7769 = vmax.f32 %v7697, %v7733
        %v7770 = vmax.f32 %v7698, %v7734
        %v7771 = vmax.f32 %v7699, %v7735
        %v7772 = vmax.f32 %v7700, %v7736
        %v7773 = vmax.f32 %v7701, %v7737
        %v7774 = vmax.f32 %v7702, %v7738
        %v7775 = vmax.f32 %v7703, %v7739
        %v7776 = vmax.f32 %v7704, %v7740
        %v7777 = vmax.f32 %v7705, %v7741
        %v7778 = vmax.f32 %v7706, %v7742
        %v7779 = vmax.f32 %v7707, %v7743
        %v7780 = vmax.f32 %v7708, %v7744
        %v7781 = vmax.f32 %v7709, %v7745
        %v7782 = vld [vmem:[%s277 + $0x2] sm:$0xff]
        %v7783 = vld [vmem:[%s277 + $0xa] sm:$0xff]
        %v7784 = vld [vmem:[%s277 + $0x1a] sm:$0xff]
        %v7785 = vld [vmem:[%s277 + $0x22] sm:$0xff]
        %v7786 = vld [vmem:[%s277 + $0x32] sm:$0xff]
        %v7787 = vld [vmem:[%s277 + $0x3a] sm:$0xff]
        %v7788 = vld [vmem:[%s277 + $0x4a] sm:$0xff]
        %v7789 = vld [vmem:[%s277 + $0x52] sm:$0xff]
        %v7790 = vld [vmem:[%s277 + $0x62] sm:$0xff]
        %v7791 = vld [vmem:[%s277 + $0x6a] sm:$0xff]
        %v7792 = vld [vmem:[%s277 + $0x7a] sm:$0xff]
        %v7793 = vld [vmem:[%s277 + $0x82] sm:$0xff]
        %v7794 = vld [vmem:[%s277 + $0x92] sm:$0xff]
        %v7795 = vld [vmem:[%s277 + $0x9a] sm:$0xff]
        %v7796 = vld [vmem:[%s277 + $0xaa] sm:$0xff]
        %v7797 = vld [vmem:[%s277 + $0xb2] sm:$0xff]
        %v7798 = vld [vmem:[%s277 + $0xc2] sm:$0xff]
        %v7799 = vld [vmem:[%s277 + $0xca] sm:$0xff]
        %v7800 = vld [vmem:[%s277 + $0xda] sm:$0xff]
        %v7801 = vld [vmem:[%s277 + $0xe2] sm:$0xff]
        %v7802 = vld [vmem:[%s277 + $0xf2] sm:$0xff]
        %v7803 = vld [vmem:[%s277 + $0xfa] sm:$0xff]
        %v7804 = vld [vmem:[%s277 + $0x10a] sm:$0xff]
        %v7805 = vld [vmem:[%s277 + $0x112] sm:$0xff]
        %v7806 = vld [vmem:[%s277 + $0x122] sm:$0xff]
        %v7807 = vld [vmem:[%s277 + $0x12a] sm:$0xff]
        %v7808 = vld [vmem:[%s277 + $0x13a] sm:$0xff]
        %v7809 = vld [vmem:[%s277 + $0x142] sm:$0xff]
        %v7810 = vld [vmem:[%s277 + $0x152] sm:$0xff]
        %v7811 = vld [vmem:[%s277 + $0x15a] sm:$0xff]
        %v7812 = vld [vmem:[%s277 + $0x16a] sm:$0xff]
        %v7813 = vld [vmem:[%s277 + $0x172] sm:$0xff]
        %v7814 = vld [vmem:[%s277 + $0x182] sm:$0xff]
        %v7815 = vld [vmem:[%s277 + $0x18a] sm:$0xff]
        %v7816 = vld [vmem:[%s277 + $0x19a] sm:$0xff]
        %v7817 = vld [vmem:[%s277 + $0x1a2] sm:$0xff]
        %v7818 = vmax.f32 %v7746, %v7782
        %v7819 = vmax.f32 %v7747, %v7783
        %v7820 = vmax.f32 %v7748, %v7784
        %v7821 = vmax.f32 %v7749, %v7785
        %v7822 = vmax.f32 %v7750, %v7786
        %v7823 = vmax.f32 %v7751, %v7787
        %v7824 = vmax.f32 %v7752, %v7788
        %v7825 = vmax.f32 %v7753, %v7789
        %v7826 = vmax.f32 %v7754, %v7790
        %v7827 = vmax.f32 %v7755, %v7791
        %v7828 = vmax.f32 %v7756, %v7792
        %v7829 = vmax.f32 %v7757, %v7793
        %v7830 = vmax.f32 %v7758, %v7794
        %v7831 = vmax.f32 %v7759, %v7795
        %v7832 = vmax.f32 %v7760, %v7796
        %v7833 = vmax.f32 %v7761, %v7797
        %v7834 = vmax.f32 %v7762, %v7798
        %v7835 = vmax.f32 %v7763, %v7799
        %v7836 = vmax.f32 %v7764, %v7800
        %v7837 = vmax.f32 %v7765, %v7801
        %v7838 = vmax.f32 %v7766, %v7802
        %v7839 = vmax.f32 %v7767, %v7803
        %v7840 = vmax.f32 %v7768, %v7804
        %v7841 = vmax.f32 %v7769, %v7805
        %v7842 = vmax.f32 %v7770, %v7806
        %v7843 = vmax.f32 %v7771, %v7807
        %v7844 = vmax.f32 %v7772, %v7808
        %v7845 = vmax.f32 %v7773, %v7809
        %v7846 = vmax.f32 %v7774, %v7810
        %v7847 = vmax.f32 %v7775, %v7811
        %v7848 = vmax.f32 %v7776, %v7812
        %v7849 = vmax.f32 %v7777, %v7813
        %v7850 = vmax.f32 %v7778, %v7814
        %v7851 = vmax.f32 %v7779, %v7815
        %v7852 = vmax.f32 %v7780, %v7816
        %v7853 = vmax.f32 %v7781, %v7817
        %v7854 = vmax.f32 %v7818, %v7820
        %v7855 = vmax.f32 %v7819, %v7821
        %v7856 = vmax.f32 %v7820, %v7822
        %v7857 = vmax.f32 %v7821, %v7823
        %v7858 = vmax.f32 %v7822, %v7824
        %v7859 = vmax.f32 %v7823, %v7825
        %v7860 = vmax.f32 %v7824, %v7826
        %v7861 = vmax.f32 %v7825, %v7827
        %v7862 = vmax.f32 %v7826, %v7828
        %v7863 = vmax.f32 %v7827, %v7829
        %v7864 = vmax.f32 %v7828, %v7830
        %v7865 = vmax.f32 %v7829, %v7831
        %v7866 = vmax.f32 %v7830, %v7832
        %v7867 = vmax.f32 %v7831, %v7833
        %v7868 = vmax.f32 %v7832, %v7834
        %v7869 = vmax.f32 %v7833, %v7835
        %v7870 = vmax.f32 %v7834, %v7836
        %v7871 = vmax.f32 %v7835, %v7837
        %v7872 = vmax.f32 %v7836, %v7838
        %v7873 = vmax.f32 %v7837, %v7839
        %v7874 = vmax.f32 %v7838, %v7840
        %v7875 = vmax.f32 %v7839, %v7841
        %v7876 = vmax.f32 %v7840, %v7842
        %v7877 = vmax.f32 %v7841, %v7843
        %v7878 = vmax.f32 %v7842, %v7844
        %v7879 = vmax.f32 %v7843, %v7845
        %v7880 = vmax.f32 %v7844, %v7846
        %v7881 = vmax.f32 %v7845, %v7847
        %v7882 = vmax.f32 %v7846, %v7848
        %v7883 = vmax.f32 %v7847, %v7849
        %v7884 = vmax.f32 %v7848, %v7850
        %v7885 = vmax.f32 %v7849, %v7851
        %v7886 = vmax.f32 %v7854, %v7822
        %v7887 = vmax.f32 %v7855, %v7823
        %v7888 = vmax.f32 %v7856, %v7824
        %v7889 = vmax.f32 %v7857, %v7825
        %v7890 = vmax.f32 %v7858, %v7826
        %v7891 = vmax.f32 %v7859, %v7827
        %v7892 = vmax.f32 %v7860, %v7828
        %v7893 = vmax.f32 %v7861, %v7829
        %v7894 = vmax.f32 %v7862, %v7830
        %v7895 = vmax.f32 %v7863, %v7831
        %v7896 = vmax.f32 %v7864, %v7832
        %v7897 = vmax.f32 %v7865, %v7833
        %v7898 = vmax.f32 %v7866, %v7834
        %v7899 = vmax.f32 %v7867, %v7835
        %v7900 = vmax.f32 %v7868, %v7836
        %v7901 = vmax.f32 %v7869, %v7837
        %v7902 = vmax.f32 %v7870, %v7838
        %v7903 = vmax.f32 %v7871, %v7839
        %v7904 = vmax.f32 %v7872, %v7840
        %v7905 = vmax.f32 %v7873, %v7841
        %v7906 = vmax.f32 %v7874, %v7842
        %v7907 = vmax.f32 %v7875, %v7843
        %v7908 = vmax.f32 %v7876, %v7844
        %v7909 = vmax.f32 %v7877, %v7845
        %v7910 = vmax.f32 %v7878, %v7846
        %v7911 = vmax.f32 %v7879, %v7847
        %v7912 = vmax.f32 %v7880, %v7848
        %v7913 = vmax.f32 %v7881, %v7849
        %v7914 = vmax.f32 %v7882, %v7850
        %v7915 = vmax.f32 %v7883, %v7851
        %v7916 = vmax.f32 %v7884, %v7852
        %v7917 = vmax.f32 %v7885, %v7853
        %v7918 = vpack.c.bf16 %v7887, %v7886
        %v7919 = vpack.c.bf16 %v7889, %v7888
        %v7920 = vpack.c.bf16 %v7891, %v7890
        %v7921 = vpack.c.bf16 %v7893, %v7892
        %v7922 = vpack.c.bf16 %v7895, %v7894
        %v7923 = vpack.c.bf16 %v7897, %v7896
        %v7924 = vpack.c.bf16 %v7899, %v7898
        %v7925 = vpack.c.bf16 %v7901, %v7900
        %v7926 = vpack.c.bf16 %v7903, %v7902
        %v7927 = vpack.c.bf16 %v7905, %v7904
        %v7928 = vpack.c.bf16 %v7907, %v7906
        %v7929 = vpack.c.bf16 %v7909, %v7908
        %v7930 = vpack.c.bf16 %v7911, %v7910
        %v7931 = vpack.c.bf16 %v7913, %v7912
        %v7932 = vpack.c.bf16 %v7915, %v7914
        %v7933 = vpack.c.bf16 %v7917, %v7916
        %v7934 = vld [vmem:[%s3] sm:$0xf]
        %v7935 = vld [vmem:[%s3 + $0x4] sm:$0xf]
        %v7938 = vunpack.c.l.b16 %v7934
        %v7939 = vunpack.c.l.b16 %v7935
        %v7940 = vpack.c.b16 %v7939, %v7938
        %v7943 = vsel %vm391, %v7918, 0
        %v7946 = vsel %vm391, %v7919, 0
        %v7949 = vsel %vm391, %v7920, 0
        %v7952 = vsel %vm391, %v7921, 0
        %v7955 = vsel %vm391, %v7922, 0
        %v7958 = vsel %vm391, %v7923, 0
        %v7961 = vsel %vm391, %v7924, 0
        %v7964 = vsel %vm391, %v7925, 0
        %v7967 = vsel %vm391, %v7926, 0
        %v7970 = vsel %vm391, %v7927, 0
        %v7973 = vsel %vm391, %v7928, 0
        %v7976 = vsel %vm391, %v7929, 0
        %v7979 = vsel %vm391, %v7930, 0
        %v7982 = vsel %vm391, %v7931, 0
        %v7985 = vsel %vm391, %v7932, 0
        %v7988 = vsel %vm391, %v7933, 0
        %7990 = vmatprep.subr.bf16.mxu0 0
        %7991 = vmatpush1.bf16.msra.mxu0 0
        %7992 = vmatprep.subr.bf16.mxu0 0
        %7993 = vmatpush1.bf16.msra.mxu0 0
        %7994 = vmatprep.subr.bf16.mxu0 0
        %7995 = vmatpush1.bf16.msra.mxu0 0
        %7996 = vmatprep.subr.bf16.mxu0 0
        %7997 = vmatpush1.bf16.msra.mxu0 0
        %7998 = vmatprep.subr.bf16.mxu0 0
        %7999 = vmatpush1.bf16.msra.mxu0 0
        %8000 = vmatprep.subr.bf16.mxu0 0
        %8001 = vmatpush1.bf16.msra.mxu0 0
        %8002 = vmatprep.subr.bf16.mxu0 0
        %8003 = vmatpush1.bf16.msra.mxu0 0
        %8004 = vmatprep.subr.bf16.mxu0 0
        %8005 = vmatpush1.bf16.msra.mxu0 %v7940
        %8006 = vmatprep.subr.bf16.mxu0 0
        %8007 = vmatpush2.bf16.msra.mxu0 0
        %8008 = vmatprep.subr.bf16.mxu0 0
        %8009 = vmatpush2.bf16.msra.mxu0 0
        %8010 = vmatprep.subr.bf16.mxu0 0
        %8011 = vmatpush2.bf16.msra.mxu0 0
        %8012 = vmatprep.subr.bf16.mxu0 0
        %8013 = vmatpush2.bf16.msra.mxu0 0
        %8014 = vmatprep.subr.bf16.mxu0 0
        %8015 = vmatpush2.bf16.msra.mxu0 0
        %8016 = vmatprep.subr.bf16.mxu0 0
        %8017 = vmatpush2.bf16.msra.mxu0 0
        %8018 = vmatprep.subr.bf16.mxu0 0
        %8019 = vmatpush2.bf16.msra.mxu0 0
        %8020 = vmatprep.subr.bf16.mxu0 0
        %8021 = vmatpush2.bf16.msra.mxu0 0
        %8022 = vmatprep.mubr.bf16.mxu0 0
        %8023 = vmatmul.mubr.bf16.gmra.mxu0 %v7943
        %v8024 = vpop.f32.mrf.mxu0
        %v8025 = vadd.f32 0.0, %v8024
        %v8026 = vpop.f32.mrf.mxu0
        %v8027 = vpop.f32.mrf.mxu0
        %v8028 = vadd.f32 0.0, %v8027
        %v8029 = vpop.f32.mrf.mxu0
        %8030 = vmatprep.mubr.bf16.mxu0 0
        %8031 = vmatmul.mubr.bf16.gmra.mxu0 %v7946
        %v8032 = vpop.f32.mrf.mxu0
        %v8033 = vadd.f32 0.0, %v8032
        %v8034 = vpop.f32.mrf.mxu0
        %v8035 = vpop.f32.mrf.mxu0
        %v8036 = vadd.f32 0.0, %v8035
        %v8037 = vpop.f32.mrf.mxu0
        %8038 = vmatprep.mubr.bf16.mxu0 0
        %8039 = vmatmul.mubr.bf16.gmra.mxu0 %v7949
        %v8040 = vpop.f32.mrf.mxu0
        %v8041 = vadd.f32 0.0, %v8040
        %v8042 = vpop.f32.mrf.mxu0
        %v8043 = vpop.f32.mrf.mxu0
        %v8044 = vadd.f32 0.0, %v8043
        %v8045 = vpop.f32.mrf.mxu0
        %8046 = vmatprep.mubr.bf16.mxu0 0
        %8047 = vmatmul.mubr.bf16.gmra.mxu0 %v7952
        %v8048 = vpop.f32.mrf.mxu0
        %v8049 = vadd.f32 0.0, %v8048
        %v8050 = vpop.f32.mrf.mxu0
        %v8051 = vpop.f32.mrf.mxu0
        %v8052 = vadd.f32 0.0, %v8051
        %v8053 = vpop.f32.mrf.mxu0
        %8054 = vmatprep.mubr.bf16.mxu0 0
        %8055 = vmatmul.mubr.bf16.gmra.mxu0 %v7955
        %v8056 = vpop.f32.mrf.mxu0
        %v8057 = vadd.f32 0.0, %v8056
        %v8058 = vpop.f32.mrf.mxu0
        %v8059 = vpop.f32.mrf.mxu0
        %v8060 = vadd.f32 0.0, %v8059
        %v8061 = vpop.f32.mrf.mxu0
        %8062 = vmatprep.mubr.bf16.mxu0 0
        %8063 = vmatmul.mubr.bf16.gmra.mxu0 %v7958
        %v8064 = vpop.f32.mrf.mxu0
        %v8065 = vadd.f32 0.0, %v8064
        %v8066 = vpop.f32.mrf.mxu0
        %v8067 = vpop.f32.mrf.mxu0
        %v8068 = vadd.f32 0.0, %v8067
        %v8069 = vpop.f32.mrf.mxu0
        %8070 = vmatprep.mubr.bf16.mxu0 0
        %8071 = vmatmul.mubr.bf16.gmra.mxu0 %v7961
        %v8072 = vpop.f32.mrf.mxu0
        %v8073 = vadd.f32 0.0, %v8072
        %v8074 = vpop.f32.mrf.mxu0
        %v8075 = vpop.f32.mrf.mxu0
        %v8076 = vadd.f32 0.0, %v8075
        %v8077 = vpop.f32.mrf.mxu0
        %8078 = vmatprep.mubr.bf16.mxu0 0
        %8079 = vmatmul.mubr.bf16.gmra.mxu0 %v7964
        %v8080 = vpop.f32.mrf.mxu0
        %v8081 = vadd.f32 0.0, %v8080
        %v8082 = vpop.f32.mrf.mxu0
        %v8083 = vpop.f32.mrf.mxu0
        %v8084 = vadd.f32 0.0, %v8083
        %v8085 = vpop.f32.mrf.mxu0
        %8086 = vmatprep.mubr.bf16.mxu0 0
        %8087 = vmatmul.mubr.bf16.gmra.mxu0 %v7967
        %v8088 = vpop.f32.mrf.mxu0
        %v8089 = vadd.f32 0.0, %v8088
        %v8090 = vpop.f32.mrf.mxu0
        %v8091 = vpop.f32.mrf.mxu0
        %v8092 = vadd.f32 0.0, %v8091
        %v8093 = vpop.f32.mrf.mxu0
        %8094 = vmatprep.mubr.bf16.mxu0 0
        %8095 = vmatmul.mubr.bf16.gmra.mxu0 %v7970
        %v8096 = vpop.f32.mrf.mxu0
        %v8097 = vadd.f32 0.0, %v8096
        %v8098 = vpop.f32.mrf.mxu0
        %v8099 = vpop.f32.mrf.mxu0
        %v8100 = vadd.f32 0.0, %v8099
        %v8101 = vpop.f32.mrf.mxu0
        %8102 = vmatprep.mubr.bf16.mxu0 0
        %8103 = vmatmul.mubr.bf16.gmra.mxu0 %v7973
        %v8104 = vpop.f32.mrf.mxu0
        %v8105 = vadd.f32 0.0, %v8104
        %v8106 = vpop.f32.mrf.mxu0
        %v8107 = vpop.f32.mrf.mxu0
        %v8108 = vadd.f32 0.0, %v8107
        %v8109 = vpop.f32.mrf.mxu0
        %8110 = vmatprep.mubr.bf16.mxu0 0
        %8111 = vmatmul.mubr.bf16.gmra.mxu0 %v7976
        %v8112 = vpop.f32.mrf.mxu0
        %v8113 = vadd.f32 0.0, %v8112
        %v8114 = vpop.f32.mrf.mxu0
        %v8115 = vpop.f32.mrf.mxu0
        %v8116 = vadd.f32 0.0, %v8115
        %v8117 = vpop.f32.mrf.mxu0
        %8118 = vmatprep.mubr.bf16.mxu0 0
        %8119 = vmatmul.mubr.bf16.gmra.mxu0 %v7979
        %v8120 = vpop.f32.mrf.mxu0
        %v8121 = vadd.f32 0.0, %v8120
        %v8122 = vpop.f32.mrf.mxu0
        %v8123 = vpop.f32.mrf.mxu0
        %v8124 = vadd.f32 0.0, %v8123
        %v8125 = vpop.f32.mrf.mxu0
        %8126 = vmatprep.mubr.bf16.mxu0 0
        %8127 = vmatmul.mubr.bf16.gmra.mxu0 %v7982
        %v8128 = vpop.f32.mrf.mxu0
        %v8129 = vadd.f32 0.0, %v8128
        %v8130 = vpop.f32.mrf.mxu0
        %v8131 = vpop.f32.mrf.mxu0
        %v8132 = vadd.f32 0.0, %v8131
        %v8133 = vpop.f32.mrf.mxu0
        %8134 = vmatprep.mubr.bf16.mxu0 0
        %8135 = vmatmul.mubr.bf16.gmra.mxu0 %v7985
        %v8136 = vpop.f32.mrf.mxu0
        %v8137 = vadd.f32 0.0, %v8136
        %v8138 = vpop.f32.mrf.mxu0
        %v8139 = vpop.f32.mrf.mxu0
        %v8140 = vadd.f32 0.0, %v8139
        %v8141 = vpop.f32.mrf.mxu0
        %8142 = vmatprep.mubr.bf16.mxu0 0
        %8143 = vmatmul.mubr.bf16.gmra.mxu0 %v7988
        %v8144 = vpop.f32.mrf.mxu0
        %v8145 = vadd.f32 0.0, %v8144
        %v8146 = vpop.f32.mrf.mxu0
        %v8147 = vpop.f32.mrf.mxu0
        %v8148 = vadd.f32 0.0, %v8147
        %v8149 = vpop.f32.mrf.mxu0
        %8150 = vdwg.mxu0
        %v8151 = vadd.f32 %v7642, %v8025
        %v8152 = vadd.f32 %v7643, %v8028
        %v8153 = vadd.f32 %v7644, %v8033
        %v8154 = vadd.f32 %v7645, %v8036
        %v8155 = vadd.f32 %v7646, %v8041
        %v8156 = vadd.f32 %v7647, %v8044
        %v8157 = vadd.f32 %v7648, %v8049
        %v8158 = vadd.f32 %v7649, %v8052
        %v8159 = vadd.f32 %v7650, %v8057
        %v8160 = vadd.f32 %v7651, %v8060
        %v8161 = vadd.f32 %v7652, %v8065
        %v8162 = vadd.f32 %v7653, %v8068
        %v8163 = vadd.f32 %v7654, %v8073
        %v8164 = vadd.f32 %v7655, %v8076
        %v8165 = vadd.f32 %v7656, %v8081
        %v8166 = vadd.f32 %v7657, %v8084
        %v8167 = vadd.f32 %v7658, %v8089
        %v8168 = vadd.f32 %v7659, %v8092
        %v8169 = vadd.f32 %v7660, %v8097
        %v8170 = vadd.f32 %v7661, %v8100
        %v8171 = vadd.f32 %v7662, %v8105
        %v8172 = vadd.f32 %v7663, %v8108
        %v8173 = vadd.f32 %v7664, %v8113
        %v8174 = vadd.f32 %v7665, %v8116
        %v8175 = vadd.f32 %v7666, %v8121
        %v8176 = vadd.f32 %v7667, %v8124
        %v8177 = vadd.f32 %v7668, %v8129
        %v8178 = vadd.f32 %v7669, %v8132
        %v8179 = vadd.f32 %v7670, %v8137
        %v8180 = vadd.f32 %v7671, %v8140
        %v8181 = vadd.f32 %v7672, %v8145
        %v8182 = vadd.f32 %v7673, %v8148
        %v8183 = vld [vmem:[%s4] sm:$0xff]
        %v8184 = vld [vmem:[%s4 + $0x8] sm:$0xff]
        %v8185 = vld [vmem:[%s4 + $0x10] sm:$0xff]
        %v8186 = vld [vmem:[%s4 + $0x18] sm:$0xff]
        %v8187 = vld [vmem:[%s4 + $0x20] sm:$0xff]
        %v8188 = vld [vmem:[%s4 + $0x28] sm:$0xff]
        %v8189 = vld [vmem:[%s4 + $0x30] sm:$0xff]
        %v8190 = vld [vmem:[%s4 + $0x38] sm:$0xff]
        %v8191 = vld [vmem:[%s4 + $0x40] sm:$0xff]
        %v8192 = vld [vmem:[%s4 + $0x48] sm:$0xff]
        %v8193 = vld [vmem:[%s4 + $0x50] sm:$0xff]
        %v8194 = vld [vmem:[%s4 + $0x58] sm:$0xff]
        %v8195 = vld [vmem:[%s4 + $0x60] sm:$0xff]
        %v8196 = vld [vmem:[%s4 + $0x68] sm:$0xff]
        %v8197 = vld [vmem:[%s4 + $0x70] sm:$0xff]
        %v8198 = vld [vmem:[%s4 + $0x78] sm:$0xff]
        %v8199 = vld [vmem:[%s4 + $0x80] sm:$0xff]
        %v8200 = vld [vmem:[%s4 + $0x88] sm:$0xff]
        %v8201 = vld [vmem:[%s4 + $0x90] sm:$0xff]
        %v8202 = vld [vmem:[%s4 + $0x98] sm:$0xff]
        %v8203 = vld [vmem:[%s4 + $0xa0] sm:$0xff]
        %v8204 = vld [vmem:[%s4 + $0xa8] sm:$0xff]
        %v8205 = vld [vmem:[%s4 + $0xb0] sm:$0xff]
        %v8206 = vld [vmem:[%s4 + $0xb8] sm:$0xff]
        %v8207 = vld [vmem:[%s4 + $0xc0] sm:$0xff]
        %v8208 = vld [vmem:[%s4 + $0xc8] sm:$0xff]
        %v8209 = vld [vmem:[%s4 + $0xd0] sm:$0xff]
        %v8210 = vld [vmem:[%s4 + $0xd8] sm:$0xff]
        %v8211 = vld [vmem:[%s4 + $0xe0] sm:$0xff]
        %v8212 = vld [vmem:[%s4 + $0xe8] sm:$0xff]
        %v8213 = vld [vmem:[%s4 + $0xf0] sm:$0xff]
        %v8214 = vld [vmem:[%s4 + $0xf8] sm:$0xff]
        %v8215 = vadd.f32 %v8151, %v8183
        %v8216 = vadd.f32 %v8152, %v8184
        %v8217 = vadd.f32 %v8153, %v8185
        %v8218 = vadd.f32 %v8154, %v8186
        %v8219 = vadd.f32 %v8155, %v8187
        %v8220 = vadd.f32 %v8156, %v8188
        %v8221 = vadd.f32 %v8157, %v8189
        %v8222 = vadd.f32 %v8158, %v8190
        %v8223 = vadd.f32 %v8159, %v8191
        %v8224 = vadd.f32 %v8160, %v8192
        %v8225 = vadd.f32 %v8161, %v8193
        %v8226 = vadd.f32 %v8162, %v8194
        %v8227 = vadd.f32 %v8163, %v8195
        %v8228 = vadd.f32 %v8164, %v8196
        %v8229 = vadd.f32 %v8165, %v8197
        %v8230 = vadd.f32 %v8166, %v8198
        %v8231 = vadd.f32 %v8167, %v8199
        %v8232 = vadd.f32 %v8168, %v8200
        %v8233 = vadd.f32 %v8169, %v8201
        %v8234 = vadd.f32 %v8170, %v8202
        %v8235 = vadd.f32 %v8171, %v8203
        %v8236 = vadd.f32 %v8172, %v8204
        %v8237 = vadd.f32 %v8173, %v8205
        %v8238 = vadd.f32 %v8174, %v8206
        %v8239 = vadd.f32 %v8175, %v8207
        %v8240 = vadd.f32 %v8176, %v8208
        %v8241 = vadd.f32 %v8177, %v8209
        %v8242 = vadd.f32 %v8178, %v8210
        %v8243 = vadd.f32 %v8179, %v8211
        %v8244 = vadd.f32 %v8180, %v8212
        %v8245 = vadd.f32 %v8181, %v8213
        %v8246 = vadd.f32 %v8182, %v8214
        %8247 = vst.msk [vmem:[%s282] sm:$0xff] %vm391, %v8215
        %8248 = vst.msk [vmem:[%s282 + $0x8] sm:$0xff] %vm391, %v8216
        %8249 = vst.msk [vmem:[%s282 + $0x10] sm:$0xff] %vm391, %v8217
        %8250 = vst.msk [vmem:[%s282 + $0x18] sm:$0xff] %vm391, %v8218
        %8251 = vst.msk [vmem:[%s282 + $0x20] sm:$0xff] %vm391, %v8219
        %8252 = vst.msk [vmem:[%s282 + $0x28] sm:$0xff] %vm391, %v8220
        %8253 = vst.msk [vmem:[%s282 + $0x30] sm:$0xff] %vm391, %v8221
        %8254 = vst.msk [vmem:[%s282 + $0x38] sm:$0xff] %vm391, %v8222
        %8255 = vst.msk [vmem:[%s282 + $0x40] sm:$0xff] %vm391, %v8223
        %8256 = vst.msk [vmem:[%s282 + $0x48] sm:$0xff] %vm391, %v8224
        %8257 = vst.msk [vmem:[%s282 + $0x50] sm:$0xff] %vm391, %v8225
        %8258 = vst.msk [vmem:[%s282 + $0x58] sm:$0xff] %vm391, %v8226
        %8259 = vst.msk [vmem:[%s282 + $0x60] sm:$0xff] %vm391, %v8227
        %8260 = vst.msk [vmem:[%s282 + $0x68] sm:$0xff] %vm391, %v8228
        %8261 = vst.msk [vmem:[%s282 + $0x70] sm:$0xff] %vm391, %v8229
        %8262 = vst.msk [vmem:[%s282 + $0x78] sm:$0xff] %vm391, %v8230
        %8263 = vst.msk [vmem:[%s282 + $0x80] sm:$0xff] %vm391, %v8231
        %8264 = vst.msk [vmem:[%s282 + $0x88] sm:$0xff] %vm391, %v8232
        %8265 = vst.msk [vmem:[%s282 + $0x90] sm:$0xff] %vm391, %v8233
        %8266 = vst.msk [vmem:[%s282 + $0x98] sm:$0xff] %vm391, %v8234
        %8267 = vst.msk [vmem:[%s282 + $0xa0] sm:$0xff] %vm391, %v8235
        %8268 = vst.msk [vmem:[%s282 + $0xa8] sm:$0xff] %vm391, %v8236
        %8269 = vst.msk [vmem:[%s282 + $0xb0] sm:$0xff] %vm391, %v8237
        %8270 = vst.msk [vmem:[%s282 + $0xb8] sm:$0xff] %vm391, %v8238
        %8271 = vst.msk [vmem:[%s282 + $0xc0] sm:$0xff] %vm391, %v8239
        %8272 = vst.msk [vmem:[%s282 + $0xc8] sm:$0xff] %vm391, %v8240
        %8273 = vst.msk [vmem:[%s282 + $0xd0] sm:$0xff] %vm391, %v8241
        %8274 = vst.msk [vmem:[%s282 + $0xd8] sm:$0xff] %vm391, %v8242
        %8275 = vst.msk [vmem:[%s282 + $0xe0] sm:$0xff] %vm391, %v8243
        %8276 = vst.msk [vmem:[%s282 + $0xe8] sm:$0xff] %vm391, %v8244
        %8277 = vst.msk [vmem:[%s282 + $0xf0] sm:$0xff] %vm391, %v8245
        %8278 = vst.msk [vmem:[%s282 + $0xf8] sm:$0xff] %vm391, %v8246
        %v8279 = vsel %vm391, %v8215, 0.0
        %v8280 = vsel %vm391, %v8216, 0.0
        %v8281 = vadd.f32 %v8279, %v8280
        %v8282 = vsel %vm391, %v8217, 0.0
        %v8283 = vadd.f32 %v8281, %v8282
        %v8284 = vsel %vm391, %v8218, 0.0
        %v8285 = vadd.f32 %v8283, %v8284
        %v8286 = vsel %vm391, %v8219, 0.0
        %v8287 = vadd.f32 %v8285, %v8286
        %v8288 = vsel %vm391, %v8220, 0.0
        %v8289 = vadd.f32 %v8287, %v8288
        %v8290 = vsel %vm391, %v8221, 0.0
        %v8291 = vadd.f32 %v8289, %v8290
        %v8292 = vsel %vm391, %v8222, 0.0
        %v8293 = vadd.f32 %v8291, %v8292
        %v8294 = vsel %vm391, %v8223, 0.0
        %v8295 = vadd.f32 %v8293, %v8294
        %v8296 = vsel %vm391, %v8224, 0.0
        %v8297 = vadd.f32 %v8295, %v8296
        %v8298 = vsel %vm391, %v8225, 0.0
        %v8299 = vadd.f32 %v8297, %v8298
        %v8300 = vsel %vm391, %v8226, 0.0
        %v8301 = vadd.f32 %v8299, %v8300
        %v8302 = vsel %vm391, %v8227, 0.0
        %v8303 = vadd.f32 %v8301, %v8302
        %v8304 = vsel %vm391, %v8228, 0.0
        %v8305 = vadd.f32 %v8303, %v8304
        %v8306 = vsel %vm391, %v8229, 0.0
        %v8307 = vadd.f32 %v8305, %v8306
        %v8308 = vsel %vm391, %v8230, 0.0
        %v8309 = vadd.f32 %v8307, %v8308
        %v8310 = vsel %vm391, %v8231, 0.0
        %v8311 = vadd.f32 %v8309, %v8310
        %v8312 = vsel %vm391, %v8232, 0.0
        %v8313 = vadd.f32 %v8311, %v8312
        %v8314 = vsel %vm391, %v8233, 0.0
        %v8315 = vadd.f32 %v8313, %v8314
        %v8316 = vsel %vm391, %v8234, 0.0
        %v8317 = vadd.f32 %v8315, %v8316
        %v8318 = vsel %vm391, %v8235, 0.0
        %v8319 = vadd.f32 %v8317, %v8318
        %v8320 = vsel %vm391, %v8236, 0.0
        %v8321 = vadd.f32 %v8319, %v8320
        %v8322 = vsel %vm391, %v8237, 0.0
        %v8323 = vadd.f32 %v8321, %v8322
        %v8324 = vsel %vm391, %v8238, 0.0
        %v8325 = vadd.f32 %v8323, %v8324
        %v8326 = vsel %vm391, %v8239, 0.0
        %v8327 = vadd.f32 %v8325, %v8326
        %v8328 = vsel %vm391, %v8240, 0.0
        %v8329 = vadd.f32 %v8327, %v8328
        %v8330 = vsel %vm391, %v8241, 0.0
        %v8331 = vadd.f32 %v8329, %v8330
        %v8332 = vsel %vm391, %v8242, 0.0
        %v8333 = vadd.f32 %v8331, %v8332
        %v8334 = vsel %vm391, %v8243, 0.0
        %v8335 = vadd.f32 %v8333, %v8334
        %v8336 = vsel %vm391, %v8244, 0.0
        %v8337 = vadd.f32 %v8335, %v8336
        %v8338 = vsel %vm391, %v8245, 0.0
        %v8339 = vadd.f32 %v8337, %v8338
        %v8340 = vsel %vm391, %v8246, 0.0
        %v8341 = vadd.f32 %v8339, %v8340
        %v8342 = vrot.slane %v8341, 4
        %v8343 = vadd.f32 %v8341, %v8342
        %v8344 = vrot.slane %v8343, 2
        %v8345 = vadd.f32 %v8343, %v8344
        %v8346 = vrot.slane %v8345, 1
        %v8347 = vadd.f32 %v8345, %v8346
        %vm8348 = vcmask 122880
        %8349 = vst.msk [vmem:[%s267] sm:$0x1] %vm8348, %v8347
        %v8350 = vmul.f32 %v8215, %v8215
        %v8351 = vmul.f32 %v8216, %v8216
        %v8352 = vmul.f32 %v8217, %v8217
        %v8353 = vmul.f32 %v8218, %v8218
        %v8354 = vmul.f32 %v8219, %v8219
        %v8355 = vmul.f32 %v8220, %v8220
        %v8356 = vmul.f32 %v8221, %v8221
        %v8357 = vmul.f32 %v8222, %v8222
        %v8358 = vmul.f32 %v8223, %v8223
        %v8359 = vmul.f32 %v8224, %v8224
        %v8360 = vmul.f32 %v8225, %v8225
        %v8361 = vmul.f32 %v8226, %v8226
        %v8362 = vmul.f32 %v8227, %v8227
        %v8363 = vmul.f32 %v8228, %v8228
        %v8364 = vmul.f32 %v8229, %v8229
        %v8365 = vmul.f32 %v8230, %v8230
        %v8366 = vmul.f32 %v8231, %v8231
        %v8367 = vmul.f32 %v8232, %v8232
        %v8368 = vmul.f32 %v8233, %v8233
        %v8369 = vmul.f32 %v8234, %v8234
        %v8370 = vmul.f32 %v8235, %v8235
        %v8371 = vmul.f32 %v8236, %v8236
        %v8372 = vmul.f32 %v8237, %v8237
        %v8373 = vmul.f32 %v8238, %v8238
        %v8374 = vmul.f32 %v8239, %v8239
        %v8375 = vmul.f32 %v8240, %v8240
        %v8376 = vmul.f32 %v8241, %v8241
        %v8377 = vmul.f32 %v8242, %v8242
        %v8378 = vmul.f32 %v8243, %v8243
        %v8379 = vmul.f32 %v8244, %v8244
        %v8380 = vmul.f32 %v8245, %v8245
        %v8381 = vmul.f32 %v8246, %v8246
        %v8382 = vsel %vm391, %v8350, 0.0
        %v8383 = vsel %vm391, %v8351, 0.0
        %v8384 = vadd.f32 %v8382, %v8383
        %v8385 = vsel %vm391, %v8352, 0.0
        %v8386 = vadd.f32 %v8384, %v8385
        %v8387 = vsel %vm391, %v8353, 0.0
        %v8388 = vadd.f32 %v8386, %v8387
        %v8389 = vsel %vm391, %v8354, 0.0
        %v8390 = vadd.f32 %v8388, %v8389
        %v8391 = vsel %vm391, %v8355, 0.0
        %v8392 = vadd.f32 %v8390, %v8391
        %v8393 = vsel %vm391, %v8356, 0.0
        %v8394 = vadd.f32 %v8392, %v8393
        %v8395 = vsel %vm391, %v8357, 0.0
        %v8396 = vadd.f32 %v8394, %v8395
        %v8397 = vsel %vm391, %v8358, 0.0
        %v8398 = vadd.f32 %v8396, %v8397
        %v8399 = vsel %vm391, %v8359, 0.0
        %v8400 = vadd.f32 %v8398, %v8399
        %v8401 = vsel %vm391, %v8360, 0.0
        %v8402 = vadd.f32 %v8400, %v8401
        %v8403 = vsel %vm391, %v8361, 0.0
        %v8404 = vadd.f32 %v8402, %v8403
        %v8405 = vsel %vm391, %v8362, 0.0
        %v8406 = vadd.f32 %v8404, %v8405
        %v8407 = vsel %vm391, %v8363, 0.0
        %v8408 = vadd.f32 %v8406, %v8407
        %v8409 = vsel %vm391, %v8364, 0.0
        %v8410 = vadd.f32 %v8408, %v8409
        %v8411 = vsel %vm391, %v8365, 0.0
        %v8412 = vadd.f32 %v8410, %v8411
        %v8413 = vsel %vm391, %v8366, 0.0
        %v8414 = vadd.f32 %v8412, %v8413
        %v8415 = vsel %vm391, %v8367, 0.0
        %v8416 = vadd.f32 %v8414, %v8415
        %v8417 = vsel %vm391, %v8368, 0.0
        %v8418 = vadd.f32 %v8416, %v8417
        %v8419 = vsel %vm391, %v8369, 0.0
        %v8420 = vadd.f32 %v8418, %v8419
        %v8421 = vsel %vm391, %v8370, 0.0
        %v8422 = vadd.f32 %v8420, %v8421
        %v8423 = vsel %vm391, %v8371, 0.0
        %v8424 = vadd.f32 %v8422, %v8423
        %v8425 = vsel %vm391, %v8372, 0.0
        %v8426 = vadd.f32 %v8424, %v8425
        %v8427 = vsel %vm391, %v8373, 0.0
        %v8428 = vadd.f32 %v8426, %v8427
        %v8429 = vsel %vm391, %v8374, 0.0
        %v8430 = vadd.f32 %v8428, %v8429
        %v8431 = vsel %vm391, %v8375, 0.0
        %v8432 = vadd.f32 %v8430, %v8431
        %v8433 = vsel %vm391, %v8376, 0.0
        %v8434 = vadd.f32 %v8432, %v8433
        %v8435 = vsel %vm391, %v8377, 0.0
        %v8436 = vadd.f32 %v8434, %v8435
        %v8437 = vsel %vm391, %v8378, 0.0
        %v8438 = vadd.f32 %v8436, %v8437
        %v8439 = vsel %vm391, %v8379, 0.0
        %v8440 = vadd.f32 %v8438, %v8439
        %v8441 = vsel %vm391, %v8380, 0.0
        %v8442 = vadd.f32 %v8440, %v8441
        %v8443 = vsel %vm391, %v8381, 0.0
        %v8444 = vadd.f32 %v8442, %v8443
        %v8445 = vrot.slane %v8444, 4
        %v8446 = vadd.f32 %v8444, %v8445
        %v8447 = vrot.slane %v8446, 2
        %v8448 = vadd.f32 %v8446, %v8447
        %v8449 = vrot.slane %v8448, 1
        %v8450 = vadd.f32 %v8448, %v8449
        %8451 = vst.msk [vmem:[%s267 + $0x1] sm:$0x1] %vm8348, %v8450
        %p8452 = scmp.lt.s32.totalorder %s21, 1
        %s8453 = scalar_select %p8452, %s21, 1
        %s8454 = smul.addr %s8453, 32
        %s8455 = smul.addr %s8454, 8
        %s8456 = scalar_lea.vmem %s5, %s8455
        %s8457 = sand.u32 %s170, 1
        %s8458 = scalar_lea.sflag [#allocation3], %s8457
        %s8459 = sand.u32 %s170, 1
        %s8460 = smul.addr %s8459, 2
        %s8461 = scalar_lea.vmem [#allocation2], %s8460
        // Predicated region
        $region41: #{tpu_custom_call.1} parent=39 // pred_check
          %p8462 = pneg %p154
        $region42: #{tpu_custom_call.1} parent=39 // pred_check_branch
          %8464 = sbr.rel (%p8462) target = $region44
        $region43: #{tpu_custom_call.1} parent=39 // pred_region
          _
        $region44: #{tpu_custom_call.1} parent=39 // pred_fallthru
          _
        // Predicated region
        $region45: #{tpu_custom_call.1} parent=39 // pred_check
          %p8465 = pneg %p180
        $region46: #{tpu_custom_call.1} parent=39 // pred_check_branch
          %8467 = sbr.rel (%p8465) target = $region48
        $region47: #{tpu_custom_call.1} parent=39 // pred_region
          %s8469 = ssub.s32 32, 32
          %8470 = vsyncadd %s8458, %s8469
          %s8471 = smul.addr %s21, 32
          %s8472 = scalar_lea.hbm %s6, %s8471
          %s8474 = sshll.u32 %s8461, 4
          %s8475 = int_to_ptr.vmem [resolvable:$true] %s8474
          %8477 = dma.vmem_to_hbm [thread:$0]  %s8475, 32, %s8472, %s8458
        $region48: #{tpu_custom_call.1} parent=39 // pred_fallthru
          _
      $region40: #{tpu_custom_call.1} parent=5 // pred_fallthru
        _
      %p8478 = scmp.le.s32.totalorder 2, %s16
      // Predicated region
      $region49: #{tpu_custom_call.1} parent=5 // pred_check
        %p8479 = pneg %p8478
      $region50: #{tpu_custom_call.1} parent=5 // pred_check_branch
        %8481 = sbr.rel (%p8479) target = $region52
      $region51: #{tpu_custom_call.1} parent=5 // pred_region
        %s8482 = ssub.s32 %s16, 2
        // Predicated region
        $region53: #{tpu_custom_call.1} parent=51 // pred_check
          %p8483 = pneg %p160
        $region54: #{tpu_custom_call.1} parent=51 // pred_check_branch
          %8485 = sbr.rel (%p8483) target = $region56
        $region55: #{tpu_custom_call.1} parent=51 // pred_region
          %p8486 = scmp.lt.s32.totalorder %s22, 1
          %s8487 = scalar_select %p8486, %s22, 1
          %s8488 = smul.addr %s8487, 32
          %s8489 = smul.addr %s8488, 8
          %s8490 = scalar_lea.vmem %s5, %s8489
        $region56: #{tpu_custom_call.1} parent=51 // pred_fallthru
          _
        // Predicated region
        $region57: #{tpu_custom_call.1} parent=51 // pred_check
          %p8491 = pneg %p186
        $region58: #{tpu_custom_call.1} parent=51 // pred_check_branch
          %8493 = sbr.rel (%p8491) target = $region60
        $region59: #{tpu_custom_call.1} parent=51 // pred_region
          %s8494 = sand.u32 %s171, 1
          %s8495 = scalar_lea.sflag [#allocation3], %s8494
          %s8496 = sand.u32 %s171, 1
          %s8497 = smul.addr %s8496, 2
          %s8498 = scalar_lea.vmem [#allocation2], %s8497
          %8499 = dma.done %s8495, 32
        $region60: #{tpu_custom_call.1} parent=51 // pred_fallthru
          _
      $region52: #{tpu_custom_call.1} parent=5 // pred_fallthru
        _
    $region6: #{tpu_custom_call.1} parent=1 // loop_footer
      %s20 = sadd.s32 1, %s16
    $region7: #{tpu_custom_call.1} parent=1 // loop_footer_branch
      %15 = sbr.rel target = $region3
    $region8: #{tpu_custom_call.1} parent=1 // loop_exit
      _
    %8500 = vsyncpa [#allocation3], 1
    %s8501 = scalar_lea.sflag [#allocation3], 1
    %8502 = vsyncpa %s8501, 1

</llo_original>
